<compile_context>
chip_gen: v6e
topology: v6e:2x2x1
jax: 0.10.0
libtpu: 0.0.40
codegen_flags: <defaults>
</compile_context>

<pallas_src>
import functools

import jax
import jax.numpy as jnp
import numpy as np
from jax.experimental import pallas as pl
from jax.experimental.pallas import tpu as pltpu

D = 8
W = 256
INPUT_CH = 3
INPUT_CH_VIEWS = 3
OUTPUT_CH = 4
SKIPS = (4,)


# --------------------------------------------------------------------------
# Parameter construction (deterministic, in-script)
# --------------------------------------------------------------------------
def init_params(key, use_viewdirs):
    """Weights in (in, out) orientation; biases as (1, out)."""
    params = {}
    keys = iter(jax.random.split(key, 64))

    def linear(fan_in, fan_out):
        k1 = next(keys)
        k2 = next(keys)
        w = jax.random.normal(k1, (fan_in, fan_out), jnp.float32) / np.sqrt(fan_in)
        b = jax.random.normal(k2, (1, fan_out), jnp.float32) * 0.01
        return w, b

    pts_w, pts_b = [], []
    w0, b0 = linear(INPUT_CH, W)
    pts_w.append(w0)
    pts_b.append(b0)
    for i in range(D - 1):
        fan_in = W + INPUT_CH if i in SKIPS else W
        w, b = linear(fan_in, W)
        pts_w.append(w)
        pts_b.append(b)
    params["pts_w"] = pts_w
    params["pts_b"] = pts_b

    if use_viewdirs:
        params["feature_w"], params["feature_b"] = linear(W, W)
        params["alpha_w"], params["alpha_b"] = linear(W, 1)
        params["views_w"], params["views_b"] = linear(INPUT_CH_VIEWS + W, W // 2)
        params["rgb_w"], params["rgb_b"] = linear(W // 2, 3)
    else:
        params["output_w"], params["output_b"] = linear(W, OUTPUT_CH)
    return params


# --------------------------------------------------------------------------
# Pure-JAX reference (mirrors the PyTorch forward exactly, full f32)
# --------------------------------------------------------------------------
def nerf_ref(params, x, use_viewdirs):
    input_pts = x[:, :INPUT_CH]
    input_views = x[:, INPUT_CH:INPUT_CH + INPUT_CH_VIEWS]
    h = input_pts
    for i in range(D):
        h = h @ params["pts_w"][i] + params["pts_b"][i]
        h = jnp.maximum(h, 0.0)
        if i in SKIPS:
            h = jnp.concatenate([input_pts, h], axis=-1)
    if use_viewdirs:
        alpha = h @ params["alpha_w"] + params["alpha_b"]
        feature = h @ params["feature_w"] + params["feature_b"]
        h = jnp.concatenate([feature, input_views], axis=-1)
        h = jnp.maximum(h @ params["views_w"] + params["views_b"], 0.0)
        rgb = h @ params["rgb_w"] + params["rgb_b"]
        return jnp.concatenate([rgb, alpha], axis=-1)
    else:
        return h @ params["output_w"] + params["output_b"]


# --------------------------------------------------------------------------
# Pallas kernels
# --------------------------------------------------------------------------
def _mxu(a, w_bf16):
    """MXU matmul: bf16 x bf16 inputs, f32 accumulation."""
    return jnp.dot(a.astype(jnp.bfloat16), w_bf16,
                   preferred_element_type=jnp.float32)


def _outer3(cols, w3_ref):
    """(TM, 3) @ (3, OUT) as 3 VPU broadcast-FMAs (avoids a K=3 MXU pass)."""
    return (cols[:, 0:1] * w3_ref[0:1, :]
            + cols[:, 1:2] * w3_ref[1:2, :]
            + cols[:, 2:3] * w3_ref[2:3, :])


def _lane_head(h, wT_ref, n_out):
    """(TM, K) x (n_out, K)^T via VPU multiply + XLU lane reductions.

    Used for the tiny (K=256->1 alpha, K=128->3 rgb, K=256->4 output) heads so
    no near-empty MXU pass is spent on them.
    """
    cols = [jnp.sum(h * wT_ref[j:j + 1, :], axis=-1, keepdims=True)
            for j in range(n_out)]
    return jnp.concatenate(cols, axis=-1) if n_out > 1 else cols[0]


def _trunk(pts, w0_ref, b0_ref, wh_ref, bh_ref, wskip_ref):
    """pts_linears[0..7]; the skip concat is a split (pts, h) matmul."""
    # layer 0: K=3 -> VPU outer product.
    h = jnp.maximum(_outer3(pts, w0_ref) + b0_ref[...], 0.0)
    # layers 1..4 -> wh_ref[0..3]  (MXU, bf16)
    for j in range(4):
        h = jnp.maximum(_mxu(h, wh_ref[j]) + bh_ref[j:j + 1, :], 0.0)
    # layer 5 on cat([pts, h]): pts part on VPU, h part on MXU.
    h = jnp.maximum(
        _mxu(h, wh_ref[4]) + _outer3(pts, wskip_ref) + bh_ref[4:5, :], 0.0)
    # layers 6, 7 -> wh_ref[5..6]
    for j in (5, 6):
        h = jnp.maximum(_mxu(h, wh_ref[j]) + bh_ref[j:j + 1, :], 0.0)
    return h


def nerf_kernel_no_viewdirs(x_ref, w0_ref, b0_ref, wh_ref, bh_ref,
                            wskip_ref, woutT_ref, bout_ref, o_ref):
    tm = x_ref.shape[0]
    half = tm // 2
    # Two independent half-tiles in the same basic block -> ILP for the
    # scheduler to hide per-layer VPU epilogues under the other half's MXU.
    for s in range(2):
        off = s * half
        pts = x_ref[pl.ds(off, half), 0:INPUT_CH]
        h = _trunk(pts, w0_ref, b0_ref, wh_ref, bh_ref, wskip_ref)
        out = _lane_head(h, woutT_ref, OUTPUT_CH) + bout_ref[...]
        o_ref[pl.ds(off, half), :] = out.astype(o_ref.dtype)


def nerf_kernel_viewdirs(x_ref, w0_ref, b0_ref, wh_ref, bh_ref, wskip_ref,
                         wfeat_ref, bfeat_ref, walphaT_ref,
                         wvh_ref, wvv_ref, bv_ref, wrgbT_ref, bout_ref, o_ref):
    tm = x_ref.shape[0]
    half = tm // 2
    for s in range(2):
        off = s * half
        pts = x_ref[pl.ds(off, half), 0:INPUT_CH]
        views = x_ref[pl.ds(off, half), INPUT_CH:INPUT_CH + INPUT_CH_VIEWS]
        h = _trunk(pts, w0_ref, b0_ref, wh_ref, bh_ref, wskip_ref)
        # alpha head (256 -> 1): VPU mul + lane reduce (no MXU pass).
        alpha = _lane_head(h, walphaT_ref, 1)
        # feature head (256 -> 256): MXU, no 384-lane padding.
        feature = _mxu(h, wfeat_ref[...]) + bfeat_ref[...]
        # views_linears[0] on cat([feature, views]): feature part MXU, views VPU.
        hv = jnp.maximum(
            _mxu(feature, wvh_ref[...]) + _outer3(views, wvv_ref) + bv_ref[...],
            0.0)
        # rgb head (128 -> 3): 3 lane reductions.
        rgb = _lane_head(hv, wrgbT_ref, 3)
        # Single lane-contiguous store of [rgb | alpha] + fused bias.
        out = jnp.concatenate([rgb, alpha], axis=-1) + bout_ref[...]
        o_ref[pl.ds(off, half), :] = out.astype(o_ref.dtype)


# --------------------------------------------------------------------------
# Wrapper
# --------------------------------------------------------------------------
def _weight_spec(arr):
    nd = arr.ndim
    return pl.BlockSpec(arr.shape, lambda i, _nd=nd: (0,) * _nd)


def _round_up(v, m):
    return ((v + m - 1) // m) * m


@functools.partial(jax.jit, static_argnames=("use_viewdirs", "tm"))
def _nerf_pallas_impl(params, x, use_viewdirs, tm):
    n, in_ch = x.shape
    assert in_ch == INPUT_CH + INPUT_CH_VIEWS, (
        "kernel is specialised for input_ch=3, input_ch_views=3")

    # Row tile: large (amortizes per-step overhead and MXU fill/drain on the
    # 8-layer serial chain), multiple of 16 so each in-kernel half is 8-aligned,
    # and the grid never collapses to a single program when n is big enough
    # (keeps both v7x TensorCores busy via dimension_semantics="parallel").
    tm = max(16, (tm // 16) * 16)
    if n > tm:
        tm_eff = tm
    elif n >= 32:
        tm_eff = _round_up((n + 1) // 2, 16)     # two balanced tiles
    else:
        tm_eff = _round_up(max(n, 1), 16)        # tiny batch: one padded tile
    n_pad = _round_up(n, tm_eff)
    if n_pad != n:
        x = jnp.pad(x, ((0, n_pad - n), (0, 0)))

    bf16 = jnp.bfloat16

    # ---- repack weights (bf16 for MXU operands, f32 for VPU/biases) -------
    w0 = params["pts_w"][0]                          # (3, W)    f32 (VPU)
    b0 = params["pts_b"][0]                          # (1, W)
    w5 = params["pts_w"][5]                          # (W+3, W)  skip layer
    wskip = w5[:INPUT_CH, :]                         # (3, W)    f32 (VPU)
    w5_h = w5[INPUT_CH:, :]                          # (W, W)
    # Stacked (W, W) MXU weights in application order: 1,2,3,4, 5(h part), 6, 7
    wh = jnp.stack([params["pts_w"][1], params["pts_w"][2], params["pts_w"][3],
                    params["pts_w"][4], w5_h,
                    params["pts_w"][6], params["pts_w"][7]], axis=0).astype(bf16)
    bh = jnp.concatenate([params["pts_b"][i] for i in range(1, D)], axis=0)  # (7, W)

    x_spec = pl.BlockSpec((tm_eff, in_ch), lambda i: (i, 0))
    out_spec = pl.BlockSpec((tm_eff, OUTPUT_CH), lambda i: (i, 0))

    if use_viewdirs:
        wfeat = params["feature_w"].astype(bf16)     # (W, W)     MXU
        bfeat = params["feature_b"]                  # (1, W)
        walphaT = params["alpha_w"].T                # (1, W)     f32 (VPU/XLU)
        wv = params["views_w"]                       # (W+3, W//2)
        wvh = wv[:W, :].astype(bf16)                 # (W, W//2)  MXU
        wvv = wv[W:, :]                              # (3, W//2)  f32 (VPU)
        bv = params["views_b"]                       # (1, W//2)
        wrgbT = params["rgb_w"].T                    # (3, W//2)  f32 (VPU/XLU)
        bout = jnp.concatenate([params["rgb_b"], params["alpha_b"]], axis=1)  # (1,4)
        operands = (x, w0, b0, wh, bh, wskip,
                    wfeat, bfeat, walphaT, wvh, wvv, bv, wrgbT, bout)
        kernel = nerf_kernel_viewdirs
        mxu_per_row = 2 * (7 * W * W + W * W + W * (W // 2))
        vpu_per_row = 2 * (3 * (2 * W + W // 2) + W + 3 * (W // 2))
    else:
        woutT = params["output_w"].T                 # (4, W)     f32 (VPU/XLU)
        bout = params["output_b"]                    # (1, 4)
        operands = (x, w0, b0, wh, bh, wskip, woutT, bout)
        kernel = nerf_kernel_no_viewdirs
        mxu_per_row = 2 * (7 * W * W)
        vpu_per_row = 2 * (3 * 2 * W + OUTPUT_CH * W)

    in_specs = [x_spec] + [_weight_spec(a) for a in operands[1:]]

    weight_bytes = sum(int(np.prod(a.shape)) * a.dtype.itemsize
                       for a in operands[1:])
    cost = pl.CostEstimate(
        flops=int(n_pad) * int(mxu_per_row + vpu_per_row),
        transcendentals=0,
        bytes_accessed=int(n_pad * in_ch * 4 + n_pad * OUTPUT_CH * 4
                           + weight_bytes))

    out = pl.pallas_call(
        kernel,
        out_shape=jax.ShapeDtypeStruct((n_pad, OUTPUT_CH), jnp.float32),
        grid_spec=pltpu.PrefetchScalarGridSpec(
            num_scalar_prefetch=0,
            grid=(n_pad // tm_eff,),
            in_specs=in_specs,
            out_specs=out_spec,
        ),
        compiler_params=pltpu.CompilerParams(
            dimension_semantics=("parallel",),
            # ~1.3 MiB weights + a few MiB of half-tile activations even at
            # tm=2048; 24 MiB leaves ample headroom on v7x's 64 MiB/TC VMEM.
            vmem_limit_bytes=24 * 1024 * 1024),
        cost_estimate=cost,
    )(*operands)
    return out[:n] if n_pad != n else out


def nerf_pallas(params, x, use_viewdirs=False, tm=1024):
    """`tm` is a sweep parameter: 1024-2048 on v6e/v7x, 512-1024 on v5e."""
    return _nerf_pallas_impl(params, x, use_viewdirs=use_viewdirs, tm=tm)


# --------------------------------------------------------------------------
if __name__ == "__main__":
    key = jax.random.PRNGKey(0)
    k_x1, k_x2, k_p0, k_p1 = jax.random.split(key, 4)

    # Config A: use_viewdirs=False (batch fits one tile -> split into 2 programs).
    n1 = 1024
    x1 = jax.random.normal(k_x1, (n1, INPUT_CH + INPUT_CH_VIEWS), jnp.float32)
    params0 = init_params(k_p0, use_viewdirs=False)
    out0 = jax.block_until_ready(nerf_pallas(params0, x1, use_viewdirs=False))
    ref0 = nerf_ref(params0, x1, use_viewdirs=False)
    np.testing.assert_allclose(np.asarray(out0), np.asarray(ref0),
                               rtol=3e-2, atol=3e-2)

    # Config B: use_viewdirs=True, batch not a multiple of 16*2 tiles
    # (exercises the tile-rounding / padding path).
    n2 = 896
    x2 = jax.random.normal(k_x2, (n2, INPUT_CH + INPUT_CH_VIEWS), jnp.float32)
    params1 = init_params(k_p1, use_viewdirs=True)
    out1 = jax.block_until_ready(nerf_pallas(params1, x2, use_viewdirs=True))
    ref1 = nerf_ref(params1, x2, use_viewdirs=True)
    np.testing.assert_allclose(np.asarray(out1), np.asarray(ref1),
                               rtol=3e-2, atol=3e-2)

    print("KERNEL_OK")
</pallas_src>

<mosaic_0001>
module attributes {stable_mosaic.version = 11 : i64} {
  func.func @nerf_kernel_no_viewdirs(%arg0: i32, %arg1: memref<512x6xf32, #tpu.memory_space<vmem>>, %arg2: memref<3x256xf32, #tpu.memory_space<vmem>>, %arg3: memref<1x256xf32, #tpu.memory_space<vmem>>, %arg4: memref<7x256x256xbf16, #tpu.memory_space<vmem>>, %arg5: memref<7x256xf32, #tpu.memory_space<vmem>>, %arg6: memref<3x256xf32, #tpu.memory_space<vmem>>, %arg7: memref<4x256xf32, #tpu.memory_space<vmem>>, %arg8: memref<1x4xf32, #tpu.memory_space<vmem>>, %arg9: memref<512x4xf32, #tpu.memory_space<vmem>>) attributes {dimension_semantics = [#tpu.dimension_semantics<parallel>], iteration_bounds = array<i64: 2>, scalar_prefetch = 0 : i64, scratch_operands = 0 : i64, tpu.core_type = #tpu.core_type<tc>, window_params = [{transform_indices = @transform_0, window_bounds = array<i64: 512, 6>}, {pipeline_mode = #tpu.pipeline_mode<synchronous>, transform_indices = @transform_1, window_bounds = array<i64: 3, 256>}, {pipeline_mode = #tpu.pipeline_mode<synchronous>, transform_indices = @transform_2, window_bounds = array<i64: 1, 256>}, {pipeline_mode = #tpu.pipeline_mode<synchronous>, transform_indices = @transform_3, window_bounds = array<i64: 7, 256, 256>}, {pipeline_mode = #tpu.pipeline_mode<synchronous>, transform_indices = @transform_4, window_bounds = array<i64: 7, 256>}, {pipeline_mode = #tpu.pipeline_mode<synchronous>, transform_indices = @transform_5, window_bounds = array<i64: 3, 256>}, {pipeline_mode = #tpu.pipeline_mode<synchronous>, transform_indices = @transform_6, window_bounds = array<i64: 4, 256>}, {pipeline_mode = #tpu.pipeline_mode<synchronous>, transform_indices = @transform_7, window_bounds = array<i64: 1, 4>}, {transform_indices = @transform_8, window_bounds = array<i64: 512, 4>}]} {
    %c0 = arith.constant 0 : index
    %c0_0 = arith.constant 0 : index
    %0 = vector.load %arg1[%c0, %c0_0] : memref<512x6xf32, #tpu.memory_space<vmem>>, vector<256x3xf32>
    %1 = vector.extract_strided_slice %0 {offsets = [0, 0], sizes = [256, 1], strides = [1, 1]} : vector<256x3xf32> to vector<256x1xf32>
    %c0_1 = arith.constant 0 : index
    %c0_2 = arith.constant 0 : index
    %2 = vector.load %arg2[%c0_1, %c0_2] : memref<3x256xf32, #tpu.memory_space<vmem>>, vector<1x256xf32>
    %3 = vector.broadcast %1 : vector<256x1xf32> to vector<256x256xf32>
    %4 = vector.broadcast %2 : vector<1x256xf32> to vector<256x256xf32>
    %5 = arith.mulf %3, %4 : vector<256x256xf32>
    %6 = vector.extract_strided_slice %0 {offsets = [0, 1], sizes = [256, 1], strides = [1, 1]} : vector<256x3xf32> to vector<256x1xf32>
    %c1 = arith.constant 1 : index
    %c0_3 = arith.constant 0 : index
    %7 = vector.load %arg2[%c1, %c0_3] : memref<3x256xf32, #tpu.memory_space<vmem>>, vector<1x256xf32>
    %8 = vector.broadcast %6 : vector<256x1xf32> to vector<256x256xf32>
    %9 = vector.broadcast %7 : vector<1x256xf32> to vector<256x256xf32>
    %10 = arith.mulf %8, %9 : vector<256x256xf32>
    %11 = arith.addf %5, %10 : vector<256x256xf32>
    %12 = vector.extract_strided_slice %0 {offsets = [0, 2], sizes = [256, 1], strides = [1, 1]} : vector<256x3xf32> to vector<256x1xf32>
    %c2 = arith.constant 2 : index
    %c0_4 = arith.constant 0 : index
    %13 = vector.load %arg2[%c2, %c0_4] : memref<3x256xf32, #tpu.memory_space<vmem>>, vector<1x256xf32>
    %14 = vector.broadcast %12 : vector<256x1xf32> to vector<256x256xf32>
    %15 = vector.broadcast %13 : vector<1x256xf32> to vector<256x256xf32>
    %16 = arith.mulf %14, %15 : vector<256x256xf32>
    %17 = arith.addf %11, %16 : vector<256x256xf32>
    %c0_5 = arith.constant 0 : index
    %c0_6 = arith.constant 0 : index
    %18 = vector.load %arg3[%c0_5, %c0_6] : memref<1x256xf32, #tpu.memory_space<vmem>>, vector<1x256xf32>
    %19 = vector.broadcast %18 : vector<1x256xf32> to vector<256x256xf32>
    %20 = arith.addf %17, %19 : vector<256x256xf32>
    %cst = arith.constant 0.000000e+00 : f32
    %21 = vector.broadcast %cst : f32 to vector<256x256xf32>
    %22 = arith.maximumf %20, %21 : vector<256x256xf32>
    %c0_7 = arith.constant 0 : index
    %c0_8 = arith.constant 0 : index
    %c0_9 = arith.constant 0 : index
    %23 = vector.load %arg4[%c0_7, %c0_8, %c0_9] : memref<7x256x256xbf16, #tpu.memory_space<vmem>>, vector<1x256x256xbf16>
    %24 = vector.shape_cast %23 : vector<1x256x256xbf16> to vector<256x256xbf16>
    %25 = arith.truncf %22 : vector<256x256xf32> to vector<256x256xbf16>
    %cst_10 = arith.constant dense<0.000000e+00> : vector<256x256xf32>
    %26 = tpu.matmul %25, %24, %cst_10 {dimension_numbers = #tpu.dot_dimension_numbers<[1], [0], [0], [1], [0, 0, 1, 1], [], []>} : vector<256x256xbf16>, vector<256x256xbf16>, vector<256x256xf32> -> vector<256x256xf32>
    %c0_11 = arith.constant 0 : index
    %c0_12 = arith.constant 0 : index
    %27 = vector.load %arg5[%c0_11, %c0_12] : memref<7x256xf32, #tpu.memory_space<vmem>>, vector<1x256xf32>
    %28 = vector.broadcast %27 : vector<1x256xf32> to vector<256x256xf32>
    %29 = arith.addf %26, %28 : vector<256x256xf32>
    %cst_13 = arith.constant 0.000000e+00 : f32
    %30 = vector.broadcast %cst_13 : f32 to vector<256x256xf32>
    %31 = arith.maximumf %29, %30 : vector<256x256xf32>
    %c1_14 = arith.constant 1 : index
    %c0_15 = arith.constant 0 : index
    %c0_16 = arith.constant 0 : index
    %32 = vector.load %arg4[%c1_14, %c0_15, %c0_16] : memref<7x256x256xbf16, #tpu.memory_space<vmem>>, vector<1x256x256xbf16>
    %33 = vector.shape_cast %32 : vector<1x256x256xbf16> to vector<256x256xbf16>
    %34 = arith.truncf %31 : vector<256x256xf32> to vector<256x256xbf16>
    %cst_17 = arith.constant dense<0.000000e+00> : vector<256x256xf32>
    %35 = tpu.matmul %34, %33, %cst_17 {dimension_numbers = #tpu.dot_dimension_numbers<[1], [0], [0], [1], [0, 0, 1, 1], [], []>} : vector<256x256xbf16>, vector<256x256xbf16>, vector<256x256xf32> -> vector<256x256xf32>
    %c1_18 = arith.constant 1 : index
    %c0_19 = arith.constant 0 : index
    %36 = vector.load %arg5[%c1_18, %c0_19] : memref<7x256xf32, #tpu.memory_space<vmem>>, vector<1x256xf32>
    %37 = vector.broadcast %36 : vector<1x256xf32> to vector<256x256xf32>
    %38 = arith.addf %35, %37 : vector<256x256xf32>
    %cst_20 = arith.constant 0.000000e+00 : f32
    %39 = vector.broadcast %cst_20 : f32 to vector<256x256xf32>
    %40 = arith.maximumf %38, %39 : vector<256x256xf32>
    %c2_21 = arith.constant 2 : index
    %c0_22 = arith.constant 0 : index
    %c0_23 = arith.constant 0 : index
    %41 = vector.load %arg4[%c2_21, %c0_22, %c0_23] : memref<7x256x256xbf16, #tpu.memory_space<vmem>>, vector<1x256x256xbf16>
    %42 = vector.shape_cast %41 : vector<1x256x256xbf16> to vector<256x256xbf16>
    %43 = arith.truncf %40 : vector<256x256xf32> to vector<256x256xbf16>
    %cst_24 = arith.constant dense<0.000000e+00> : vector<256x256xf32>
    %44 = tpu.matmul %43, %42, %cst_24 {dimension_numbers = #tpu.dot_dimension_numbers<[1], [0], [0], [1], [0, 0, 1, 1], [], []>} : vector<256x256xbf16>, vector<256x256xbf16>, vector<256x256xf32> -> vector<256x256xf32>
    %c2_25 = arith.constant 2 : index
    %c0_26 = arith.constant 0 : index
    %45 = vector.load %arg5[%c2_25, %c0_26] : memref<7x256xf32, #tpu.memory_space<vmem>>, vector<1x256xf32>
    %46 = vector.broadcast %45 : vector<1x256xf32> to vector<256x256xf32>
    %47 = arith.addf %44, %46 : vector<256x256xf32>
    %cst_27 = arith.constant 0.000000e+00 : f32
    %48 = vector.broadcast %cst_27 : f32 to vector<256x256xf32>
    %49 = arith.maximumf %47, %48 : vector<256x256xf32>
    %c3 = arith.constant 3 : index
    %c0_28 = arith.constant 0 : index
    %c0_29 = arith.constant 0 : index
    %50 = vector.load %arg4[%c3, %c0_28, %c0_29] : memref<7x256x256xbf16, #tpu.memory_space<vmem>>, vector<1x256x256xbf16>
    %51 = vector.shape_cast %50 : vector<1x256x256xbf16> to vector<256x256xbf16>
    %52 = arith.truncf %49 : vector<256x256xf32> to vector<256x256xbf16>
    %cst_30 = arith.constant dense<0.000000e+00> : vector<256x256xf32>
    %53 = tpu.matmul %52, %51, %cst_30 {dimension_numbers = #tpu.dot_dimension_numbers<[1], [0], [0], [1], [0, 0, 1, 1], [], []>} : vector<256x256xbf16>, vector<256x256xbf16>, vector<256x256xf32> -> vector<256x256xf32>
    %c3_31 = arith.constant 3 : index
    %c0_32 = arith.constant 0 : index
    %54 = vector.load %arg5[%c3_31, %c0_32] : memref<7x256xf32, #tpu.memory_space<vmem>>, vector<1x256xf32>
    %55 = vector.broadcast %54 : vector<1x256xf32> to vector<256x256xf32>
    %56 = arith.addf %53, %55 : vector<256x256xf32>
    %cst_33 = arith.constant 0.000000e+00 : f32
    %57 = vector.broadcast %cst_33 : f32 to vector<256x256xf32>
    %58 = arith.maximumf %56, %57 : vector<256x256xf32>
    %c4 = arith.constant 4 : index
    %c0_34 = arith.constant 0 : index
    %c0_35 = arith.constant 0 : index
    %59 = vector.load %arg4[%c4, %c0_34, %c0_35] : memref<7x256x256xbf16, #tpu.memory_space<vmem>>, vector<1x256x256xbf16>
    %60 = vector.shape_cast %59 : vector<1x256x256xbf16> to vector<256x256xbf16>
    %61 = arith.truncf %58 : vector<256x256xf32> to vector<256x256xbf16>
    %cst_36 = arith.constant dense<0.000000e+00> : vector<256x256xf32>
    %62 = tpu.matmul %61, %60, %cst_36 {dimension_numbers = #tpu.dot_dimension_numbers<[1], [0], [0], [1], [0, 0, 1, 1], [], []>} : vector<256x256xbf16>, vector<256x256xbf16>, vector<256x256xf32> -> vector<256x256xf32>
    %63 = vector.extract_strided_slice %0 {offsets = [0, 0], sizes = [256, 1], strides = [1, 1]} : vector<256x3xf32> to vector<256x1xf32>
    %c0_37 = arith.constant 0 : index
    %c0_38 = arith.constant 0 : index
    %64 = vector.load %arg6[%c0_37, %c0_38] : memref<3x256xf32, #tpu.memory_space<vmem>>, vector<1x256xf32>
    %65 = vector.broadcast %63 : vector<256x1xf32> to vector<256x256xf32>
    %66 = vector.broadcast %64 : vector<1x256xf32> to vector<256x256xf32>
    %67 = arith.mulf %65, %66 : vector<256x256xf32>
    %68 = vector.extract_strided_slice %0 {offsets = [0, 1], sizes = [256, 1], strides = [1, 1]} : vector<256x3xf32> to vector<256x1xf32>
    %c1_39 = arith.constant 1 : index
    %c0_40 = arith.constant 0 : index
    %69 = vector.load %arg6[%c1_39, %c0_40] : memref<3x256xf32, #tpu.memory_space<vmem>>, vector<1x256xf32>
    %70 = vector.broadcast %68 : vector<256x1xf32> to vector<256x256xf32>
    %71 = vector.broadcast %69 : vector<1x256xf32> to vector<256x256xf32>
    %72 = arith.mulf %70, %71 : vector<256x256xf32>
    %73 = arith.addf %67, %72 : vector<256x256xf32>
    %74 = vector.extract_strided_slice %0 {offsets = [0, 2], sizes = [256, 1], strides = [1, 1]} : vector<256x3xf32> to vector<256x1xf32>
    %c2_41 = arith.constant 2 : index
    %c0_42 = arith.constant 0 : index
    %75 = vector.load %arg6[%c2_41, %c0_42] : memref<3x256xf32, #tpu.memory_space<vmem>>, vector<1x256xf32>
    %76 = vector.broadcast %74 : vector<256x1xf32> to vector<256x256xf32>
    %77 = vector.broadcast %75 : vector<1x256xf32> to vector<256x256xf32>
    %78 = arith.mulf %76, %77 : vector<256x256xf32>
    %79 = arith.addf %73, %78 : vector<256x256xf32>
    %80 = arith.addf %62, %79 : vector<256x256xf32>
    %c4_43 = arith.constant 4 : index
    %c0_44 = arith.constant 0 : index
    %81 = vector.load %arg5[%c4_43, %c0_44] : memref<7x256xf32, #tpu.memory_space<vmem>>, vector<1x256xf32>
    %82 = vector.broadcast %81 : vector<1x256xf32> to vector<256x256xf32>
    %83 = arith.addf %80, %82 : vector<256x256xf32>
    %cst_45 = arith.constant 0.000000e+00 : f32
    %84 = vector.broadcast %cst_45 : f32 to vector<256x256xf32>
    %85 = arith.maximumf %83, %84 : vector<256x256xf32>
    %c5 = arith.constant 5 : index
    %c0_46 = arith.constant 0 : index
    %c0_47 = arith.constant 0 : index
    %86 = vector.load %arg4[%c5, %c0_46, %c0_47] : memref<7x256x256xbf16, #tpu.memory_space<vmem>>, vector<1x256x256xbf16>
    %87 = vector.shape_cast %86 : vector<1x256x256xbf16> to vector<256x256xbf16>
    %88 = arith.truncf %85 : vector<256x256xf32> to vector<256x256xbf16>
    %cst_48 = arith.constant dense<0.000000e+00> : vector<256x256xf32>
    %89 = tpu.matmul %88, %87, %cst_48 {dimension_numbers = #tpu.dot_dimension_numbers<[1], [0], [0], [1], [0, 0, 1, 1], [], []>} : vector<256x256xbf16>, vector<256x256xbf16>, vector<256x256xf32> -> vector<256x256xf32>
    %c5_49 = arith.constant 5 : index
    %c0_50 = arith.constant 0 : index
    %90 = vector.load %arg5[%c5_49, %c0_50] : memref<7x256xf32, #tpu.memory_space<vmem>>, vector<1x256xf32>
    %91 = vector.broadcast %90 : vector<1x256xf32> to vector<256x256xf32>
    %92 = arith.addf %89, %91 : vector<256x256xf32>
    %cst_51 = arith.constant 0.000000e+00 : f32
    %93 = vector.broadcast %cst_51 : f32 to vector<256x256xf32>
    %94 = arith.maximumf %92, %93 : vector<256x256xf32>
    %c6 = arith.constant 6 : index
    %c0_52 = arith.constant 0 : index
    %c0_53 = arith.constant 0 : index
    %95 = vector.load %arg4[%c6, %c0_52, %c0_53] : memref<7x256x256xbf16, #tpu.memory_space<vmem>>, vector<1x256x256xbf16>
    %96 = vector.shape_cast %95 : vector<1x256x256xbf16> to vector<256x256xbf16>
    %97 = arith.truncf %94 : vector<256x256xf32> to vector<256x256xbf16>
    %cst_54 = arith.constant dense<0.000000e+00> : vector<256x256xf32>
    %98 = tpu.matmul %97, %96, %cst_54 {dimension_numbers = #tpu.dot_dimension_numbers<[1], [0], [0], [1], [0, 0, 1, 1], [], []>} : vector<256x256xbf16>, vector<256x256xbf16>, vector<256x256xf32> -> vector<256x256xf32>
    %c6_55 = arith.constant 6 : index
    %c0_56 = arith.constant 0 : index
    %99 = vector.load %arg5[%c6_55, %c0_56] : memref<7x256xf32, #tpu.memory_space<vmem>>, vector<1x256xf32>
    %100 = vector.broadcast %99 : vector<1x256xf32> to vector<256x256xf32>
    %101 = arith.addf %98, %100 : vector<256x256xf32>
    %cst_57 = arith.constant 0.000000e+00 : f32
    %102 = vector.broadcast %cst_57 : f32 to vector<256x256xf32>
    %103 = arith.maximumf %101, %102 : vector<256x256xf32>
    %c0_58 = arith.constant 0 : index
    %c0_59 = arith.constant 0 : index
    %104 = vector.load %arg7[%c0_58, %c0_59] : memref<4x256xf32, #tpu.memory_space<vmem>>, vector<1x256xf32>
    %105 = vector.broadcast %104 : vector<1x256xf32> to vector<256x256xf32>
    %106 = arith.mulf %103, %105 : vector<256x256xf32>
    %cst_60 = arith.constant dense<0.000000e+00> : vector<256xf32>
    %107 = vector.multi_reduction <add>, %106, %cst_60 [1] : vector<256x256xf32> to vector<256xf32>
    %108 = vector.shape_cast %107 : vector<256xf32> to vector<256x1xf32>
    %c1_61 = arith.constant 1 : index
    %c0_62 = arith.constant 0 : index
    %109 = vector.load %arg7[%c1_61, %c0_62] : memref<4x256xf32, #tpu.memory_space<vmem>>, vector<1x256xf32>
    %110 = vector.broadcast %109 : vector<1x256xf32> to vector<256x256xf32>
    %111 = arith.mulf %103, %110 : vector<256x256xf32>
    %cst_63 = arith.constant dense<0.000000e+00> : vector<256xf32>
    %112 = vector.multi_reduction <add>, %111, %cst_63 [1] : vector<256x256xf32> to vector<256xf32>
    %113 = vector.shape_cast %112 : vector<256xf32> to vector<256x1xf32>
    %c2_64 = arith.constant 2 : index
    %c0_65 = arith.constant 0 : index
    %114 = vector.load %arg7[%c2_64, %c0_65] : memref<4x256xf32, #tpu.memory_space<vmem>>, vector<1x256xf32>
    %115 = vector.broadcast %114 : vector<1x256xf32> to vector<256x256xf32>
    %116 = arith.mulf %103, %115 : vector<256x256xf32>
    %cst_66 = arith.constant dense<0.000000e+00> : vector<256xf32>
    %117 = vector.multi_reduction <add>, %116, %cst_66 [1] : vector<256x256xf32> to vector<256xf32>
    %118 = vector.shape_cast %117 : vector<256xf32> to vector<256x1xf32>
    %c3_67 = arith.constant 3 : index
    %c0_68 = arith.constant 0 : index
    %119 = vector.load %arg7[%c3_67, %c0_68] : memref<4x256xf32, #tpu.memory_space<vmem>>, vector<1x256xf32>
    %120 = vector.broadcast %119 : vector<1x256xf32> to vector<256x256xf32>
    %121 = arith.mulf %103, %120 : vector<256x256xf32>
    %cst_69 = arith.constant dense<0.000000e+00> : vector<256xf32>
    %122 = vector.multi_reduction <add>, %121, %cst_69 [1] : vector<256x256xf32> to vector<256xf32>
    %123 = vector.shape_cast %122 : vector<256xf32> to vector<256x1xf32>
    %124 = tpu.concatenate %108, %113, %118, %123 in 1 : vector<256x1xf32>, vector<256x1xf32>, vector<256x1xf32>, vector<256x1xf32> -> vector<256x4xf32>
    %c0_70 = arith.constant 0 : index
    %c0_71 = arith.constant 0 : index
    %125 = vector.load %arg8[%c0_70, %c0_71] : memref<1x4xf32, #tpu.memory_space<vmem>>, vector<1x4xf32>
    %126 = vector.broadcast %125 : vector<1x4xf32> to vector<256x4xf32>
    %127 = arith.addf %124, %126 : vector<256x4xf32>
    %c0_72 = arith.constant 0 : index
    %c0_73 = arith.constant 0 : index
    %128 = vector.load %arg9[%c0_72, %c0_73] : memref<512x4xf32, #tpu.memory_space<vmem>>, vector<256x4xf32>
    tpu.vector_store %arg9[%c0_72, %c0_73], %127 {strides = array<i32>} : memref<512x4xf32, #tpu.memory_space<vmem>>, vector<256x4xf32>,
    %c256 = arith.constant 256 : index
    %c0_74 = arith.constant 0 : index
    %129 = vector.load %arg1[%c256, %c0_74] : memref<512x6xf32, #tpu.memory_space<vmem>>, vector<256x3xf32>
    %130 = vector.extract_strided_slice %129 {offsets = [0, 0], sizes = [256, 1], strides = [1, 1]} : vector<256x3xf32> to vector<256x1xf32>
    %c0_75 = arith.constant 0 : index
    %c0_76 = arith.constant 0 : index
    %131 = vector.load %arg2[%c0_75, %c0_76] : memref<3x256xf32, #tpu.memory_space<vmem>>, vector<1x256xf32>
    %132 = vector.broadcast %130 : vector<256x1xf32> to vector<256x256xf32>
    %133 = vector.broadcast %131 : vector<1x256xf32> to vector<256x256xf32>
    %134 = arith.mulf %132, %133 : vector<256x256xf32>
    %135 = vector.extract_strided_slice %129 {offsets = [0, 1], sizes = [256, 1], strides = [1, 1]} : vector<256x3xf32> to vector<256x1xf32>
    %c1_77 = arith.constant 1 : index
    %c0_78 = arith.constant 0 : index
    %136 = vector.load %arg2[%c1_77, %c0_78] : memref<3x256xf32, #tpu.memory_space<vmem>>, vector<1x256xf32>
    %137 = vector.broadcast %135 : vector<256x1xf32> to vector<256x256xf32>
    %138 = vector.broadcast %136 : vector<1x256xf32> to vector<256x256xf32>
    %139 = arith.mulf %137, %138 : vector<256x256xf32>
    %140 = arith.addf %134, %139 : vector<256x256xf32>
    %141 = vector.extract_strided_slice %129 {offsets = [0, 2], sizes = [256, 1], strides = [1, 1]} : vector<256x3xf32> to vector<256x1xf32>
    %c2_79 = arith.constant 2 : index
    %c0_80 = arith.constant 0 : index
    %142 = vector.load %arg2[%c2_79, %c0_80] : memref<3x256xf32, #tpu.memory_space<vmem>>, vector<1x256xf32>
    %143 = vector.broadcast %141 : vector<256x1xf32> to vector<256x256xf32>
    %144 = vector.broadcast %142 : vector<1x256xf32> to vector<256x256xf32>
    %145 = arith.mulf %143, %144 : vector<256x256xf32>
    %146 = arith.addf %140, %145 : vector<256x256xf32>
    %c0_81 = arith.constant 0 : index
    %c0_82 = arith.constant 0 : index
    %147 = vector.load %arg3[%c0_81, %c0_82] : memref<1x256xf32, #tpu.memory_space<vmem>>, vector<1x256xf32>
    %148 = vector.broadcast %147 : vector<1x256xf32> to vector<256x256xf32>
    %149 = arith.addf %146, %148 : vector<256x256xf32>
    %cst_83 = arith.constant 0.000000e+00 : f32
    %150 = vector.broadcast %cst_83 : f32 to vector<256x256xf32>
    %151 = arith.maximumf %149, %150 : vector<256x256xf32>
    %c0_84 = arith.constant 0 : index
    %c0_85 = arith.constant 0 : index
    %c0_86 = arith.constant 0 : index
    %152 = vector.load %arg4[%c0_84, %c0_85, %c0_86] : memref<7x256x256xbf16, #tpu.memory_space<vmem>>, vector<1x256x256xbf16>
    %153 = vector.shape_cast %152 : vector<1x256x256xbf16> to vector<256x256xbf16>
    %154 = arith.truncf %151 : vector<256x256xf32> to vector<256x256xbf16>
    %cst_87 = arith.constant dense<0.000000e+00> : vector<256x256xf32>
    %155 = tpu.matmul %154, %153, %cst_87 {dimension_numbers = #tpu.dot_dimension_numbers<[1], [0], [0], [1], [0, 0, 1, 1], [], []>} : vector<256x256xbf16>, vector<256x256xbf16>, vector<256x256xf32> -> vector<256x256xf32>
    %c0_88 = arith.constant 0 : index
    %c0_89 = arith.constant 0 : index
    %156 = vector.load %arg5[%c0_88, %c0_89] : memref<7x256xf32, #tpu.memory_space<vmem>>, vector<1x256xf32>
    %157 = vector.broadcast %156 : vector<1x256xf32> to vector<256x256xf32>
    %158 = arith.addf %155, %157 : vector<256x256xf32>
    %cst_90 = arith.constant 0.000000e+00 : f32
    %159 = vector.broadcast %cst_90 : f32 to vector<256x256xf32>
    %160 = arith.maximumf %158, %159 : vector<256x256xf32>
    %c1_91 = arith.constant 1 : index
    %c0_92 = arith.constant 0 : index
    %c0_93 = arith.constant 0 : index
    %161 = vector.load %arg4[%c1_91, %c0_92, %c0_93] : memref<7x256x256xbf16, #tpu.memory_space<vmem>>, vector<1x256x256xbf16>
    %162 = vector.shape_cast %161 : vector<1x256x256xbf16> to vector<256x256xbf16>
    %163 = arith.truncf %160 : vector<256x256xf32> to vector<256x256xbf16>
    %cst_94 = arith.constant dense<0.000000e+00> : vector<256x256xf32>
    %164 = tpu.matmul %163, %162, %cst_94 {dimension_numbers = #tpu.dot_dimension_numbers<[1], [0], [0], [1], [0, 0, 1, 1], [], []>} : vector<256x256xbf16>, vector<256x256xbf16>, vector<256x256xf32> -> vector<256x256xf32>
    %c1_95 = arith.constant 1 : index
    %c0_96 = arith.constant 0 : index
    %165 = vector.load %arg5[%c1_95, %c0_96] : memref<7x256xf32, #tpu.memory_space<vmem>>, vector<1x256xf32>
    %166 = vector.broadcast %165 : vector<1x256xf32> to vector<256x256xf32>
    %167 = arith.addf %164, %166 : vector<256x256xf32>
    %cst_97 = arith.constant 0.000000e+00 : f32
    %168 = vector.broadcast %cst_97 : f32 to vector<256x256xf32>
    %169 = arith.maximumf %167, %168 : vector<256x256xf32>
    %c2_98 = arith.constant 2 : index
    %c0_99 = arith.constant 0 : index
    %c0_100 = arith.constant 0 : index
    %170 = vector.load %arg4[%c2_98, %c0_99, %c0_100] : memref<7x256x256xbf16, #tpu.memory_space<vmem>>, vector<1x256x256xbf16>
    %171 = vector.shape_cast %170 : vector<1x256x256xbf16> to vector<256x256xbf16>
    %172 = arith.truncf %169 : vector<256x256xf32> to vector<256x256xbf16>
    %cst_101 = arith.constant dense<0.000000e+00> : vector<256x256xf32>
    %173 = tpu.matmul %172, %171, %cst_101 {dimension_numbers = #tpu.dot_dimension_numbers<[1], [0], [0], [1], [0, 0, 1, 1], [], []>} : vector<256x256xbf16>, vector<256x256xbf16>, vector<256x256xf32> -> vector<256x256xf32>
    %c2_102 = arith.constant 2 : index
    %c0_103 = arith.constant 0 : index
    %174 = vector.load %arg5[%c2_102, %c0_103] : memref<7x256xf32, #tpu.memory_space<vmem>>, vector<1x256xf32>
    %175 = vector.broadcast %174 : vector<1x256xf32> to vector<256x256xf32>
    %176 = arith.addf %173, %175 : vector<256x256xf32>
    %cst_104 = arith.constant 0.000000e+00 : f32
    %177 = vector.broadcast %cst_104 : f32 to vector<256x256xf32>
    %178 = arith.maximumf %176, %177 : vector<256x256xf32>
    %c3_105 = arith.constant 3 : index
    %c0_106 = arith.constant 0 : index
    %c0_107 = arith.constant 0 : index
    %179 = vector.load %arg4[%c3_105, %c0_106, %c0_107] : memref<7x256x256xbf16, #tpu.memory_space<vmem>>, vector<1x256x256xbf16>
    %180 = vector.shape_cast %179 : vector<1x256x256xbf16> to vector<256x256xbf16>
    %181 = arith.truncf %178 : vector<256x256xf32> to vector<256x256xbf16>
    %cst_108 = arith.constant dense<0.000000e+00> : vector<256x256xf32>
    %182 = tpu.matmul %181, %180, %cst_108 {dimension_numbers = #tpu.dot_dimension_numbers<[1], [0], [0], [1], [0, 0, 1, 1], [], []>} : vector<256x256xbf16>, vector<256x256xbf16>, vector<256x256xf32> -> vector<256x256xf32>
    %c3_109 = arith.constant 3 : index
    %c0_110 = arith.constant 0 : index
    %183 = vector.load %arg5[%c3_109, %c0_110] : memref<7x256xf32, #tpu.memory_space<vmem>>, vector<1x256xf32>
    %184 = vector.broadcast %183 : vector<1x256xf32> to vector<256x256xf32>
    %185 = arith.addf %182, %184 : vector<256x256xf32>
    %cst_111 = arith.constant 0.000000e+00 : f32
    %186 = vector.broadcast %cst_111 : f32 to vector<256x256xf32>
    %187 = arith.maximumf %185, %186 : vector<256x256xf32>
    %c4_112 = arith.constant 4 : index
    %c0_113 = arith.constant 0 : index
    %c0_114 = arith.constant 0 : index
    %188 = vector.load %arg4[%c4_112, %c0_113, %c0_114] : memref<7x256x256xbf16, #tpu.memory_space<vmem>>, vector<1x256x256xbf16>
    %189 = vector.shape_cast %188 : vector<1x256x256xbf16> to vector<256x256xbf16>
    %190 = arith.truncf %187 : vector<256x256xf32> to vector<256x256xbf16>
    %cst_115 = arith.constant dense<0.000000e+00> : vector<256x256xf32>
    %191 = tpu.matmul %190, %189, %cst_115 {dimension_numbers = #tpu.dot_dimension_numbers<[1], [0], [0], [1], [0, 0, 1, 1], [], []>} : vector<256x256xbf16>, vector<256x256xbf16>, vector<256x256xf32> -> vector<256x256xf32>
    %192 = vector.extract_strided_slice %129 {offsets = [0, 0], sizes = [256, 1], strides = [1, 1]} : vector<256x3xf32> to vector<256x1xf32>
    %c0_116 = arith.constant 0 : index
    %c0_117 = arith.constant 0 : index
    %193 = vector.load %arg6[%c0_116, %c0_117] : memref<3x256xf32, #tpu.memory_space<vmem>>, vector<1x256xf32>
    %194 = vector.broadcast %192 : vector<256x1xf32> to vector<256x256xf32>
    %195 = vector.broadcast %193 : vector<1x256xf32> to vector<256x256xf32>
    %196 = arith.mulf %194, %195 : vector<256x256xf32>
    %197 = vector.extract_strided_slice %129 {offsets = [0, 1], sizes = [256, 1], strides = [1, 1]} : vector<256x3xf32> to vector<256x1xf32>
    %c1_118 = arith.constant 1 : index
    %c0_119 = arith.constant 0 : index
    %198 = vector.load %arg6[%c1_118, %c0_119] : memref<3x256xf32, #tpu.memory_space<vmem>>, vector<1x256xf32>
    %199 = vector.broadcast %197 : vector<256x1xf32> to vector<256x256xf32>
    %200 = vector.broadcast %198 : vector<1x256xf32> to vector<256x256xf32>
    %201 = arith.mulf %199, %200 : vector<256x256xf32>
    %202 = arith.addf %196, %201 : vector<256x256xf32>
    %203 = vector.extract_strided_slice %129 {offsets = [0, 2], sizes = [256, 1], strides = [1, 1]} : vector<256x3xf32> to vector<256x1xf32>
    %c2_120 = arith.constant 2 : index
    %c0_121 = arith.constant 0 : index
    %204 = vector.load %arg6[%c2_120, %c0_121] : memref<3x256xf32, #tpu.memory_space<vmem>>, vector<1x256xf32>
    %205 = vector.broadcast %203 : vector<256x1xf32> to vector<256x256xf32>
    %206 = vector.broadcast %204 : vector<1x256xf32> to vector<256x256xf32>
    %207 = arith.mulf %205, %206 : vector<256x256xf32>
    %208 = arith.addf %202, %207 : vector<256x256xf32>
    %209 = arith.addf %191, %208 : vector<256x256xf32>
    %c4_122 = arith.constant 4 : index
    %c0_123 = arith.constant 0 : index
    %210 = vector.load %arg5[%c4_122, %c0_123] : memref<7x256xf32, #tpu.memory_space<vmem>>, vector<1x256xf32>
    %211 = vector.broadcast %210 : vector<1x256xf32> to vector<256x256xf32>
    %212 = arith.addf %209, %211 : vector<256x256xf32>
    %cst_124 = arith.constant 0.000000e+00 : f32
    %213 = vector.broadcast %cst_124 : f32 to vector<256x256xf32>
    %214 = arith.maximumf %212, %213 : vector<256x256xf32>
    %c5_125 = arith.constant 5 : index
    %c0_126 = arith.constant 0 : index
    %c0_127 = arith.constant 0 : index
    %215 = vector.load %arg4[%c5_125, %c0_126, %c0_127] : memref<7x256x256xbf16, #tpu.memory_space<vmem>>, vector<1x256x256xbf16>
    %216 = vector.shape_cast %215 : vector<1x256x256xbf16> to vector<256x256xbf16>
    %217 = arith.truncf %214 : vector<256x256xf32> to vector<256x256xbf16>
    %cst_128 = arith.constant dense<0.000000e+00> : vector<256x256xf32>
    %218 = tpu.matmul %217, %216, %cst_128 {dimension_numbers = #tpu.dot_dimension_numbers<[1], [0], [0], [1], [0, 0, 1, 1], [], []>} : vector<256x256xbf16>, vector<256x256xbf16>, vector<256x256xf32> -> vector<256x256xf32>
    %c5_129 = arith.constant 5 : index
    %c0_130 = arith.constant 0 : index
    %219 = vector.load %arg5[%c5_129, %c0_130] : memref<7x256xf32, #tpu.memory_space<vmem>>, vector<1x256xf32>
    %220 = vector.broadcast %219 : vector<1x256xf32> to vector<256x256xf32>
    %221 = arith.addf %218, %220 : vector<256x256xf32>
    %cst_131 = arith.constant 0.000000e+00 : f32
    %222 = vector.broadcast %cst_131 : f32 to vector<256x256xf32>
    %223 = arith.maximumf %221, %222 : vector<256x256xf32>
    %c6_132 = arith.constant 6 : index
    %c0_133 = arith.constant 0 : index
    %c0_134 = arith.constant 0 : index
    %224 = vector.load %arg4[%c6_132, %c0_133, %c0_134] : memref<7x256x256xbf16, #tpu.memory_space<vmem>>, vector<1x256x256xbf16>
    %225 = vector.shape_cast %224 : vector<1x256x256xbf16> to vector<256x256xbf16>
    %226 = arith.truncf %223 : vector<256x256xf32> to vector<256x256xbf16>
    %cst_135 = arith.constant dense<0.000000e+00> : vector<256x256xf32>
    %227 = tpu.matmul %226, %225, %cst_135 {dimension_numbers = #tpu.dot_dimension_numbers<[1], [0], [0], [1], [0, 0, 1, 1], [], []>} : vector<256x256xbf16>, vector<256x256xbf16>, vector<256x256xf32> -> vector<256x256xf32>
    %c6_136 = arith.constant 6 : index
    %c0_137 = arith.constant 0 : index
    %228 = vector.load %arg5[%c6_136, %c0_137] : memref<7x256xf32, #tpu.memory_space<vmem>>, vector<1x256xf32>
    %229 = vector.broadcast %228 : vector<1x256xf32> to vector<256x256xf32>
    %230 = arith.addf %227, %229 : vector<256x256xf32>
    %cst_138 = arith.constant 0.000000e+00 : f32
    %231 = vector.broadcast %cst_138 : f32 to vector<256x256xf32>
    %232 = arith.maximumf %230, %231 : vector<256x256xf32>
    %c0_139 = arith.constant 0 : index
    %c0_140 = arith.constant 0 : index
    %233 = vector.load %arg7[%c0_139, %c0_140] : memref<4x256xf32, #tpu.memory_space<vmem>>, vector<1x256xf32>
    %234 = vector.broadcast %233 : vector<1x256xf32> to vector<256x256xf32>
    %235 = arith.mulf %232, %234 : vector<256x256xf32>
    %cst_141 = arith.constant dense<0.000000e+00> : vector<256xf32>
    %236 = vector.multi_reduction <add>, %235, %cst_141 [1] : vector<256x256xf32> to vector<256xf32>
    %237 = vector.shape_cast %236 : vector<256xf32> to vector<256x1xf32>
    %c1_142 = arith.constant 1 : index
    %c0_143 = arith.constant 0 : index
    %238 = vector.load %arg7[%c1_142, %c0_143] : memref<4x256xf32, #tpu.memory_space<vmem>>, vector<1x256xf32>
    %239 = vector.broadcast %238 : vector<1x256xf32> to vector<256x256xf32>
    %240 = arith.mulf %232, %239 : vector<256x256xf32>
    %cst_144 = arith.constant dense<0.000000e+00> : vector<256xf32>
    %241 = vector.multi_reduction <add>, %240, %cst_144 [1] : vector<256x256xf32> to vector<256xf32>
    %242 = vector.shape_cast %241 : vector<256xf32> to vector<256x1xf32>
    %c2_145 = arith.constant 2 : index
    %c0_146 = arith.constant 0 : index
    %243 = vector.load %arg7[%c2_145, %c0_146] : memref<4x256xf32, #tpu.memory_space<vmem>>, vector<1x256xf32>
    %244 = vector.broadcast %243 : vector<1x256xf32> to vector<256x256xf32>
    %245 = arith.mulf %232, %244 : vector<256x256xf32>
    %cst_147 = arith.constant dense<0.000000e+00> : vector<256xf32>
    %246 = vector.multi_reduction <add>, %245, %cst_147 [1] : vector<256x256xf32> to vector<256xf32>
    %247 = vector.shape_cast %246 : vector<256xf32> to vector<256x1xf32>
    %c3_148 = arith.constant 3 : index
    %c0_149 = arith.constant 0 : index
    %248 = vector.load %arg7[%c3_148, %c0_149] : memref<4x256xf32, #tpu.memory_space<vmem>>, vector<1x256xf32>
    %249 = vector.broadcast %248 : vector<1x256xf32> to vector<256x256xf32>
    %250 = arith.mulf %232, %249 : vector<256x256xf32>
    %cst_150 = arith.constant dense<0.000000e+00> : vector<256xf32>
    %251 = vector.multi_reduction <add>, %250, %cst_150 [1] : vector<256x256xf32> to vector<256xf32>
    %252 = vector.shape_cast %251 : vector<256xf32> to vector<256x1xf32>
    %253 = tpu.concatenate %237, %242, %247, %252 in 1 : vector<256x1xf32>, vector<256x1xf32>, vector<256x1xf32>, vector<256x1xf32> -> vector<256x4xf32>
    %c0_151 = arith.constant 0 : index
    %c0_152 = arith.constant 0 : index
    %254 = vector.load %arg8[%c0_151, %c0_152] : memref<1x4xf32, #tpu.memory_space<vmem>>, vector<1x4xf32>
    %255 = vector.broadcast %254 : vector<1x4xf32> to vector<256x4xf32>
    %256 = arith.addf %253, %255 : vector<256x4xf32>
    %c256_153 = arith.constant 256 : index
    %c0_154 = arith.constant 0 : index
    %257 = vector.load %arg9[%c256_153, %c0_154] : memref<512x4xf32, #tpu.memory_space<vmem>>, vector<256x4xf32>
    tpu.vector_store %arg9[%c256_153, %c0_154], %256 {strides = array<i32>} : memref<512x4xf32, #tpu.memory_space<vmem>>, vector<256x4xf32>,
    return
  }
  func.func @transform_0(%arg0: i32) -> (i32, i32) {
    %c0_i32 = arith.constant 0 : i32
    %c0_i32_0 = arith.constant 0 : i32
    return %arg0, %c0_i32 : i32, i32
  }
  func.func @transform_1(%arg0: i32) -> (i32, i32) {
    %c0_i32 = arith.constant 0 : i32
    %c0_i32_0 = arith.constant 0 : i32
    %c0_i32_1 = arith.constant 0 : i32
    return %c0_i32, %c0_i32_0 : i32, i32
  }
  func.func @transform_2(%arg0: i32) -> (i32, i32) {
    %c0_i32 = arith.constant 0 : i32
    %c0_i32_0 = arith.constant 0 : i32
    %c0_i32_1 = arith.constant 0 : i32
    return %c0_i32, %c0_i32_0 : i32, i32
  }
  func.func @transform_3(%arg0: i32) -> (i32, i32, i32) {
    %c0_i32 = arith.constant 0 : i32
    %c0_i32_0 = arith.constant 0 : i32
    %c0_i32_1 = arith.constant 0 : i32
    %c0_i32_2 = arith.constant 0 : i32
    return %c0_i32, %c0_i32_0, %c0_i32_1 : i32, i32, i32
  }
  func.func @transform_4(%arg0: i32) -> (i32, i32) {
    %c0_i32 = arith.constant 0 : i32
    %c0_i32_0 = arith.constant 0 : i32
    %c0_i32_1 = arith.constant 0 : i32
    return %c0_i32, %c0_i32_0 : i32, i32
  }
  func.func @transform_5(%arg0: i32) -> (i32, i32) {
    %c0_i32 = arith.constant 0 : i32
    %c0_i32_0 = arith.constant 0 : i32
    %c0_i32_1 = arith.constant 0 : i32
    return %c0_i32, %c0_i32_0 : i32, i32
  }
  func.func @transform_6(%arg0: i32) -> (i32, i32) {
    %c0_i32 = arith.constant 0 : i32
    %c0_i32_0 = arith.constant 0 : i32
    %c0_i32_1 = arith.constant 0 : i32
    return %c0_i32, %c0_i32_0 : i32, i32
  }
  func.func @transform_7(%arg0: i32) -> (i32, i32) {
    %c0_i32 = arith.constant 0 : i32
    %c0_i32_0 = arith.constant 0 : i32
    %c0_i32_1 = arith.constant 0 : i32
    return %c0_i32, %c0_i32_0 : i32, i32
  }
  func.func @transform_8(%arg0: i32) -> (i32, i32) {
    %c0_i32 = arith.constant 0 : i32
    %c0_i32_0 = arith.constant 0 : i32
    return %arg0, %c0_i32 : i32, i32
  }
}

</mosaic_0001>

<llo_original>
// kernel: _nerf_pallas_impl.1
$region0: #{_nerf_pallas_impl.1}
  #allocation0 [shape = 'u32[]', space=smem, size = 0x4, offset = 0x4, fixed_abs, tag = 'smem constant byte address 0x4 - core index']
  #allocation1 [shape = 'u32[144,128]{1,0:T(1,128)}', space=vmem, size = 0x12000, scoped, tag = 'internal scratch']
  %s0 = inlined_call_operand.vmem [shape: f32[1024,6], index: 0, kind: input, shape index: {}]
  %s1 = inlined_call_operand.vmem [shape: f32[3,256], index: 1, kind: input, shape index: {}]
  %s2 = inlined_call_operand.vmem [shape: f32[1,256], index: 2, kind: input, shape index: {}]
  %s3 = inlined_call_operand.vmem [shape: bf16[7,256,256], index: 3, kind: input, shape index: {}]
  %s4 = inlined_call_operand.vmem [shape: f32[7,256], index: 4, kind: input, shape index: {}]
  %s5 = inlined_call_operand.vmem [shape: f32[3,256], index: 5, kind: input, shape index: {}]
  %s6 = inlined_call_operand.vmem [shape: f32[4,256], index: 6, kind: input, shape index: {}]
  %s7 = inlined_call_operand.vmem [shape: f32[1,4], index: 7, kind: input, shape index: {}]
  %s8 = inlined_call_operand.vmem [shape: f32[1024,4], index: 8, kind: output, shape index: {}]
  %s9 = sld [smem:[#allocation0]]
  $region65: #{_nerf_pallas_impl.1} parent=0
    _
  %s11 = ssub.s32 1, %s9
  %s12 = scalar_select 0, %s11, %s9
  loop: start=0, step=1, limit=4
  $region2: #{_nerf_pallas_impl.1} parent=0 // loop_pre_header
    _
  $region3: #{_nerf_pallas_impl.1} parent=0 // loop_header
    %s14 = sphi 0, %s18
    %p15 = scmp.ge.s32.totalorder %s14, 4
    %s24 = sphi 0, %s26
    %s27 = sphi 0, %s24
    %s28 = sphi 0, %s27
    %s44 = sphi 0, %s28
    %s48 = sphi 0, %s48
    %s50 = sphi 0, %s48
    %s51 = sphi 0, %s50
    %s65 = sphi 0, %s51
    %s69 = sphi 0, %s69
    %s71 = sphi 0, %s69
    %s72 = sphi 0, %s71
    %s86 = sphi 0, %s72
    %s90 = sphi 0, %s90
    %s92 = sphi 0, %s90
    %s93 = sphi 0, %s92
    %s107 = sphi 0, %s93
    %s111 = sphi 0, %s111
    %s113 = sphi 0, %s111
    %s114 = sphi 0, %s113
    %s128 = sphi 0, %s114
    %s132 = sphi 0, %s132
    %s134 = sphi 0, %s132
    %s135 = sphi 0, %s134
    %s149 = sphi 0, %s135
    %s153 = sphi 0, %s153
    %s155 = sphi 0, %s153
    %s156 = sphi 0, %s155
    %s170 = sphi 0, %s156
    %s174 = sphi 0, %s174
    %s176 = sphi 0, %s174
    %s177 = sphi 0, %s176
    %s191 = sphi 0, %s177
    %s197 = sphi 0, %s199
    %s200 = sphi 0, %s197
    %s201 = sphi 0, %s200
    %s217 = sphi 0, %s201
  $region4: #{_nerf_pallas_impl.1} parent=0 // loop_header_branch
    %17 = sbr.rel (%p15) target = $region8
  $region5: #{_nerf_pallas_impl.1} parent=0 // loop_body
    %s19 = ssub.s32 %s14, 1
    %s20 = ssub.s32 %s14, 2
    %s21 = sadd.s32 %s14, 1
    %s22 = ssub.s32 %s14, %s21
    %p23 = scmp.eq.s32.totalorder %s22, 0
    %s25 = sadd.s32 %s24, 1
    %s26 = scalar_select %p23, %s24, %s25
    %p29 = pneg %p23
    %p30 = scmp.eq.s32.totalorder %s14, 1
    %p31 = por %p29, %p30
    %p32 = scmp.ne.s32.totalorder %s24, %s27
    %p33 = scmp.eq.s32.totalorder %s14, 0
    %p34 = por %p32, %p33
    %p35 = scmp.ne.s32.totalorder %s24, %s27
    %p36 = scmp.eq.s32.totalorder %s19, 1
    %p37 = por %p35, %p36
    %p38 = scmp.ne.s32.totalorder %s27, %s28
    %p39 = scmp.eq.s32.totalorder %s19, 0
    %p40 = por %p38, %p39
    %p41 = scmp.ne.s32.totalorder %s27, %s28
    %p42 = scmp.eq.s32.totalorder %s20, 1
    %p43 = por %p41, %p42
    %p45 = scmp.ne.s32.totalorder %s28, %s44
    %p46 = scmp.eq.s32.totalorder %s20, 0
    %p47 = por %p45, %p46
    %s49 = sadd.s32 %s48, 1
    %p52 = scmp.eq.s32.totalorder %s14, 1
    %p53 = scmp.ne.s32.totalorder %s48, %s50
    %p54 = scmp.eq.s32.totalorder %s14, 0
    %p55 = por %p53, %p54
    %p56 = scmp.ne.s32.totalorder %s48, %s50
    %p57 = scmp.eq.s32.totalorder %s19, 1
    %p58 = por %p56, %p57
    %p59 = scmp.ne.s32.totalorder %s50, %s51
    %p60 = scmp.eq.s32.totalorder %s19, 0
    %p61 = por %p59, %p60
    %p62 = scmp.ne.s32.totalorder %s50, %s51
    %p63 = scmp.eq.s32.totalorder %s20, 1
    %p64 = por %p62, %p63
    %p66 = scmp.ne.s32.totalorder %s51, %s65
    %p67 = scmp.eq.s32.totalorder %s20, 0
    %p68 = por %p66, %p67
    %s70 = sadd.s32 %s69, 1
    %p73 = scmp.eq.s32.totalorder %s14, 1
    %p74 = scmp.ne.s32.totalorder %s69, %s71
    %p75 = scmp.eq.s32.totalorder %s14, 0
    %p76 = por %p74, %p75
    %p77 = scmp.ne.s32.totalorder %s69, %s71
    %p78 = scmp.eq.s32.totalorder %s19, 1
    %p79 = por %p77, %p78
    %p80 = scmp.ne.s32.totalorder %s71, %s72
    %p81 = scmp.eq.s32.totalorder %s19, 0
    %p82 = por %p80, %p81
    %p83 = scmp.ne.s32.totalorder %s71, %s72
    %p84 = scmp.eq.s32.totalorder %s20, 1
    %p85 = por %p83, %p84
    %p87 = scmp.ne.s32.totalorder %s72, %s86
    %p88 = scmp.eq.s32.totalorder %s20, 0
    %p89 = por %p87, %p88
    %s91 = sadd.s32 %s90, 1
    %p94 = scmp.eq.s32.totalorder %s14, 1
    %p95 = scmp.ne.s32.totalorder %s90, %s92
    %p96 = scmp.eq.s32.totalorder %s14, 0
    %p97 = por %p95, %p96
    %p98 = scmp.ne.s32.totalorder %s90, %s92
    %p99 = scmp.eq.s32.totalorder %s19, 1
    %p100 = por %p98, %p99
    %p101 = scmp.ne.s32.totalorder %s92, %s93
    %p102 = scmp.eq.s32.totalorder %s19, 0
    %p103 = por %p101, %p102
    %p104 = scmp.ne.s32.totalorder %s92, %s93
    %p105 = scmp.eq.s32.totalorder %s20, 1
    %p106 = por %p104, %p105
    %p108 = scmp.ne.s32.totalorder %s93, %s107
    %p109 = scmp.eq.s32.totalorder %s20, 0
    %p110 = por %p108, %p109
    %s112 = sadd.s32 %s111, 1
    %p115 = scmp.eq.s32.totalorder %s14, 1
    %p116 = scmp.ne.s32.totalorder %s111, %s113
    %p117 = scmp.eq.s32.totalorder %s14, 0
    %p118 = por %p116, %p117
    %p119 = scmp.ne.s32.totalorder %s111, %s113
    %p120 = scmp.eq.s32.totalorder %s19, 1
    %p121 = por %p119, %p120
    %p122 = scmp.ne.s32.totalorder %s113, %s114
    %p123 = scmp.eq.s32.totalorder %s19, 0
    %p124 = por %p122, %p123
    %p125 = scmp.ne.s32.totalorder %s113, %s114
    %p126 = scmp.eq.s32.totalorder %s20, 1
    %p127 = por %p125, %p126
    %p129 = scmp.ne.s32.totalorder %s114, %s128
    %p130 = scmp.eq.s32.totalorder %s20, 0
    %p131 = por %p129, %p130
    %s133 = sadd.s32 %s132, 1
    %p136 = scmp.eq.s32.totalorder %s14, 1
    %p137 = scmp.ne.s32.totalorder %s132, %s134
    %p138 = scmp.eq.s32.totalorder %s14, 0
    %p139 = por %p137, %p138
    %p140 = scmp.ne.s32.totalorder %s132, %s134
    %p141 = scmp.eq.s32.totalorder %s19, 1
    %p142 = por %p140, %p141
    %p143 = scmp.ne.s32.totalorder %s134, %s135
    %p144 = scmp.eq.s32.totalorder %s19, 0
    %p145 = por %p143, %p144
    %p146 = scmp.ne.s32.totalorder %s134, %s135
    %p147 = scmp.eq.s32.totalorder %s20, 1
    %p148 = por %p146, %p147
    %p150 = scmp.ne.s32.totalorder %s135, %s149
    %p151 = scmp.eq.s32.totalorder %s20, 0
    %p152 = por %p150, %p151
    %s154 = sadd.s32 %s153, 1
    %p157 = scmp.eq.s32.totalorder %s14, 1
    %p158 = scmp.ne.s32.totalorder %s153, %s155
    %p159 = scmp.eq.s32.totalorder %s14, 0
    %p160 = por %p158, %p159
    %p161 = scmp.ne.s32.totalorder %s153, %s155
    %p162 = scmp.eq.s32.totalorder %s19, 1
    %p163 = por %p161, %p162
    %p164 = scmp.ne.s32.totalorder %s155, %s156
    %p165 = scmp.eq.s32.totalorder %s19, 0
    %p166 = por %p164, %p165
    %p167 = scmp.ne.s32.totalorder %s155, %s156
    %p168 = scmp.eq.s32.totalorder %s20, 1
    %p169 = por %p167, %p168
    %p171 = scmp.ne.s32.totalorder %s156, %s170
    %p172 = scmp.eq.s32.totalorder %s20, 0
    %p173 = por %p171, %p172
    %s175 = sadd.s32 %s174, 1
    %p178 = scmp.eq.s32.totalorder %s14, 1
    %p179 = scmp.ne.s32.totalorder %s174, %s176
    %p180 = scmp.eq.s32.totalorder %s14, 0
    %p181 = por %p179, %p180
    %p182 = scmp.ne.s32.totalorder %s174, %s176
    %p183 = scmp.eq.s32.totalorder %s19, 1
    %p184 = por %p182, %p183
    %p185 = scmp.ne.s32.totalorder %s176, %s177
    %p186 = scmp.eq.s32.totalorder %s19, 0
    %p187 = por %p185, %p186
    %p188 = scmp.ne.s32.totalorder %s176, %s177
    %p189 = scmp.eq.s32.totalorder %s20, 1
    %p190 = por %p188, %p189
    %p192 = scmp.ne.s32.totalorder %s177, %s191
    %p193 = scmp.eq.s32.totalorder %s20, 0
    %p194 = por %p192, %p193
    %s195 = ssub.s32 %s14, %s21
    %p196 = scmp.eq.s32.totalorder %s195, 0
    %s198 = sadd.s32 %s197, 1
    %s199 = scalar_select %p196, %s197, %s198
    %p202 = pneg %p196
    %p203 = scmp.eq.s32.totalorder %s14, 1
    %p204 = por %p202, %p203
    %p205 = scmp.ne.s32.totalorder %s197, %s200
    %p206 = scmp.eq.s32.totalorder %s14, 0
    %p207 = por %p205, %p206
    %p208 = scmp.ne.s32.totalorder %s197, %s200
    %p209 = scmp.eq.s32.totalorder %s19, 1
    %p210 = por %p208, %p209
    %p211 = scmp.ne.s32.totalorder %s200, %s201
    %p212 = scmp.eq.s32.totalorder %s19, 0
    %p213 = por %p211, %p212
    %p214 = scmp.ne.s32.totalorder %s200, %s201
    %p215 = scmp.eq.s32.totalorder %s20, 1
    %p216 = por %p214, %p215
    %p218 = scmp.ne.s32.totalorder %s201, %s217
    %p219 = scmp.eq.s32.totalorder %s20, 0
    %p220 = por %p218, %p219
    %p221 = scmp.le.s32.totalorder 1, %s14
    %p222 = scmp.lt.s32.totalorder %s14, 3
    %p223 = pnand %p221, %p222
    %p224 = pneg %p223
    // Predicated region
    $region9: #{_nerf_pallas_impl.1} parent=5 // pred_check
      _
    $region10: #{_nerf_pallas_impl.1} parent=5 // pred_check_branch
      %226 = sbr.rel (%p223) target = $region12
    $region11: #{_nerf_pallas_impl.1} parent=5 // pred_region
      %s227 = ssub.s32 %s14, 1
      // Predicated region
      $region13: #{_nerf_pallas_impl.1} parent=11 // pred_check
        %p228 = pneg %p61
      $region14: #{_nerf_pallas_impl.1} parent=11 // pred_check_branch
        %230 = sbr.rel (%p228) target = $region16
      $region15: #{_nerf_pallas_impl.1} parent=11 // pred_region
        _
      $region16: #{_nerf_pallas_impl.1} parent=11 // pred_fallthru
        _
      // Predicated region
      $region17: #{_nerf_pallas_impl.1} parent=11 // pred_check
        %p231 = pneg %p82
      $region18: #{_nerf_pallas_impl.1} parent=11 // pred_check_branch
        %233 = sbr.rel (%p231) target = $region20
      $region19: #{_nerf_pallas_impl.1} parent=11 // pred_region
        _
      $region20: #{_nerf_pallas_impl.1} parent=11 // pred_fallthru
        _
      // Predicated region
      $region21: #{_nerf_pallas_impl.1} parent=11 // pred_check
        %p234 = pneg %p103
      $region22: #{_nerf_pallas_impl.1} parent=11 // pred_check_branch
        %236 = sbr.rel (%p234) target = $region24
      $region23: #{_nerf_pallas_impl.1} parent=11 // pred_region
        _
      $region24: #{_nerf_pallas_impl.1} parent=11 // pred_fallthru
        _
      // Predicated region
      $region25: #{_nerf_pallas_impl.1} parent=11 // pred_check
        %p237 = pneg %p124
      $region26: #{_nerf_pallas_impl.1} parent=11 // pred_check_branch
        %239 = sbr.rel (%p237) target = $region28
      $region27: #{_nerf_pallas_impl.1} parent=11 // pred_region
        _
      $region28: #{_nerf_pallas_impl.1} parent=11 // pred_fallthru
        _
      // Predicated region
      $region29: #{_nerf_pallas_impl.1} parent=11 // pred_check
        %p240 = pneg %p145
      $region30: #{_nerf_pallas_impl.1} parent=11 // pred_check_branch
        %242 = sbr.rel (%p240) target = $region32
      $region31: #{_nerf_pallas_impl.1} parent=11 // pred_region
        _
      $region32: #{_nerf_pallas_impl.1} parent=11 // pred_fallthru
        _
      // Predicated region
      $region33: #{_nerf_pallas_impl.1} parent=11 // pred_check
        %p243 = pneg %p166
      $region34: #{_nerf_pallas_impl.1} parent=11 // pred_check_branch
        %245 = sbr.rel (%p243) target = $region36
      $region35: #{_nerf_pallas_impl.1} parent=11 // pred_region
        _
      $region36: #{_nerf_pallas_impl.1} parent=11 // pred_fallthru
        _
      // Predicated region
      $region37: #{_nerf_pallas_impl.1} parent=11 // pred_check
        %p246 = pneg %p187
      $region38: #{_nerf_pallas_impl.1} parent=11 // pred_check_branch
        %248 = sbr.rel (%p246) target = $region40
      $region39: #{_nerf_pallas_impl.1} parent=11 // pred_region
        _
      $region40: #{_nerf_pallas_impl.1} parent=11 // pred_fallthru
        _
    $region12: #{_nerf_pallas_impl.1} parent=5 // pred_fallthru
      _
    %p249 = scmp.lt.s32.totalorder %s14, 2
    // Predicated region
    $region41: #{_nerf_pallas_impl.1} parent=5 // pred_check
      %p250 = pneg %p249
    $region42: #{_nerf_pallas_impl.1} parent=5 // pred_check_branch
      %252 = sbr.rel (%p250) target = $region44
    $region43: #{_nerf_pallas_impl.1} parent=5 // pred_region
      // Predicated region
      $region45: #{_nerf_pallas_impl.1} parent=43 // pred_check
        %p253 = pneg %p34
      $region46: #{_nerf_pallas_impl.1} parent=43 // pred_check_branch
        %255 = sbr.rel (%p253) target = $region48
      $region47: #{_nerf_pallas_impl.1} parent=43 // pred_region
        %s256 = smul.u32 64, %s14
        %p257 = scmp.lt.s32.totalorder %s256, 127
        %s258 = scalar_select %p257, %s256, 127
        %s259 = smul.addr %s258, 8
        %s260 = scalar_lea.vmem %s0, %s259
        %s261 = smul.u32 64, %s14
      $region48: #{_nerf_pallas_impl.1} parent=43 // pred_fallthru
        _
    $region44: #{_nerf_pallas_impl.1} parent=5 // pred_fallthru
      _
    %p262 = scmp.le.s32.totalorder 1, %s14
    %p263 = scmp.lt.s32.totalorder %s14, 3
    %p264 = pnand %p262, %p263
    %p265 = pneg %p264
    // Predicated region
    $region49: #{_nerf_pallas_impl.1} parent=5 // pred_check
      _
    $region50: #{_nerf_pallas_impl.1} parent=5 // pred_check_branch
      %267 = sbr.rel (%p264) target = $region52
    $region51: #{_nerf_pallas_impl.1} parent=5 // pred_region
      %s268 = ssub.s32 %s14, 1
      %s269 = smul.u32 64, %s19
      %p270 = scmp.lt.s32.totalorder %s269, 127
      %s271 = scalar_select %p270, %s269, 127
      %s272 = smul.addr %s271, 8
      %s273 = scalar_lea.vmem %s0, %s272
      %p274 = pneg %p40
      %p275 = pneg %p37
      %p276 = pneg %p61
      %p277 = pneg %p58
      %p278 = pneg %p82
      %p279 = pneg %p79
      %p280 = pneg %p103
      %p281 = pneg %p100
      %p282 = pneg %p124
      %p283 = pneg %p121
      %p284 = pneg %p145
      %p285 = pneg %p142
      %p286 = pneg %p166
      %p287 = pneg %p163
      %p288 = pneg %p187
      %p289 = pneg %p184
      %p290 = pneg %p213
      %p291 = pneg %p210
      %s292 = smul.u32 64, %s19
      %p293 = scmp.lt.s32.totalorder %s292, 127
      %s294 = scalar_select %p293, %s292, 127
      %s295 = smul.addr %s294, 8
      %s296 = scalar_lea.vmem %s8, %s295
      %s297 = smul.u32 64, %s19
      %p298 = scmp.lt.s32.totalorder %s297, 127
      %s299 = scalar_select %p298, %s297, 127
      %s300 = smul.addr %s299, 8
      %s301 = scalar_lea.vmem %s0, %s300
      %s302 = smul.u32 64, %s19
      %s303 = smul.u32 64, %s19
      %p304 = scmp.lt.s32.totalorder %s303, 127
      %s305 = scalar_select %p304, %s303, 127
      %s306 = smul.addr %s305, 8
      %s307 = scalar_lea.vmem %s8, %s306
      %s308 = smul.u32 64, %s19
      %v309 = vld [vmem:[%s301] sm:$0xff]
      %v310 = vld [vmem:[%s301 + $0x8] sm:$0xff]
      %v311 = vld [vmem:[%s301 + $0x10] sm:$0xff]
      %v312 = vld [vmem:[%s301 + $0x18] sm:$0xff]
      %v313 = vld [vmem:[%s301 + $0x20] sm:$0xff]
      %v314 = vld [vmem:[%s301 + $0x28] sm:$0xff]
      %v315 = vld [vmem:[%s301 + $0x30] sm:$0xff]
      %v316 = vld [vmem:[%s301 + $0x38] sm:$0xff]
      %v317 = vld [vmem:[%s301 + $0x40] sm:$0xff]
      %v318 = vld [vmem:[%s301 + $0x48] sm:$0xff]
      %v319 = vld [vmem:[%s301 + $0x50] sm:$0xff]
      %v320 = vld [vmem:[%s301 + $0x58] sm:$0xff]
      %v321 = vld [vmem:[%s301 + $0x60] sm:$0xff]
      %v322 = vld [vmem:[%s301 + $0x68] sm:$0xff]
      %v323 = vld [vmem:[%s301 + $0x70] sm:$0xff]
      %v324 = vld [vmem:[%s301 + $0x78] sm:$0xff]
      %v325 = vld [vmem:[%s301 + $0x80] sm:$0xff]
      %v326 = vld [vmem:[%s301 + $0x88] sm:$0xff]
      %v327 = vld [vmem:[%s301 + $0x90] sm:$0xff]
      %v328 = vld [vmem:[%s301 + $0x98] sm:$0xff]
      %v329 = vld [vmem:[%s301 + $0xa0] sm:$0xff]
      %v330 = vld [vmem:[%s301 + $0xa8] sm:$0xff]
      %v331 = vld [vmem:[%s301 + $0xb0] sm:$0xff]
      %v332 = vld [vmem:[%s301 + $0xb8] sm:$0xff]
      %v333 = vld [vmem:[%s301 + $0xc0] sm:$0xff]
      %v334 = vld [vmem:[%s301 + $0xc8] sm:$0xff]
      %v335 = vld [vmem:[%s301 + $0xd0] sm:$0xff]
      %v336 = vld [vmem:[%s301 + $0xd8] sm:$0xff]
      %v337 = vld [vmem:[%s301 + $0xe0] sm:$0xff]
      %v338 = vld [vmem:[%s301 + $0xe8] sm:$0xff]
      %v339 = vld [vmem:[%s301 + $0xf0] sm:$0xff]
      %v340 = vld [vmem:[%s301 + $0xf8] sm:$0xff]
      %v341 = vld [vmem:[%s1] ss:$4 sm:$0x3]
      %343 = vset.pattern.permute.xlu0 0
      %344 = vperm.xlu0 %343, %v309
      %v345 = vpop.permute.xlu0 %344
      %348 = vset.pattern.permute.xlu0 0
      %349 = vperm.xlu0 %348, %v310
      %v350 = vpop.permute.xlu0 %349
      %353 = vset.pattern.permute.xlu0 0
      %354 = vperm.xlu0 %353, %v311
      %v355 = vpop.permute.xlu0 %354
      %358 = vset.pattern.permute.xlu0 0
      %359 = vperm.xlu0 %358, %v312
      %v360 = vpop.permute.xlu0 %359
      %363 = vset.pattern.permute.xlu0 0
      %364 = vperm.xlu0 %363, %v313
      %v365 = vpop.permute.xlu0 %364
      %368 = vset.pattern.permute.xlu0 0
      %369 = vperm.xlu0 %368, %v314
      %v370 = vpop.permute.xlu0 %369
      %373 = vset.pattern.permute.xlu0 0
      %374 = vperm.xlu0 %373, %v315
      %v375 = vpop.permute.xlu0 %374
      %378 = vset.pattern.permute.xlu0 0
      %379 = vperm.xlu0 %378, %v316
      %v380 = vpop.permute.xlu0 %379
      %383 = vset.pattern.permute.xlu0 0
      %384 = vperm.xlu0 %383, %v317
      %v385 = vpop.permute.xlu0 %384
      %388 = vset.pattern.permute.xlu0 0
      %389 = vperm.xlu0 %388, %v318
      %v390 = vpop.permute.xlu0 %389
      %393 = vset.pattern.permute.xlu0 0
      %394 = vperm.xlu0 %393, %v319
      %v395 = vpop.permute.xlu0 %394
      %398 = vset.pattern.permute.xlu0 0
      %399 = vperm.xlu0 %398, %v320
      %v400 = vpop.permute.xlu0 %399
      %403 = vset.pattern.permute.xlu0 0
      %404 = vperm.xlu0 %403, %v321
      %v405 = vpop.permute.xlu0 %404
      %408 = vset.pattern.permute.xlu0 0
      %409 = vperm.xlu0 %408, %v322
      %v410 = vpop.permute.xlu0 %409
      %413 = vset.pattern.permute.xlu0 0
      %414 = vperm.xlu0 %413, %v323
      %v415 = vpop.permute.xlu0 %414
      %418 = vset.pattern.permute.xlu0 0
      %419 = vperm.xlu0 %418, %v324
      %v420 = vpop.permute.xlu0 %419
      %423 = vset.pattern.permute.xlu0 0
      %424 = vperm.xlu0 %423, %v325
      %v425 = vpop.permute.xlu0 %424
      %428 = vset.pattern.permute.xlu0 0
      %429 = vperm.xlu0 %428, %v326
      %v430 = vpop.permute.xlu0 %429
      %433 = vset.pattern.permute.xlu0 0
      %434 = vperm.xlu0 %433, %v327
      %v435 = vpop.permute.xlu0 %434
      %438 = vset.pattern.permute.xlu0 0
      %439 = vperm.xlu0 %438, %v328
      %v440 = vpop.permute.xlu0 %439
      %443 = vset.pattern.permute.xlu0 0
      %444 = vperm.xlu0 %443, %v329
      %v445 = vpop.permute.xlu0 %444
      %448 = vset.pattern.permute.xlu0 0
      %449 = vperm.xlu0 %448, %v330
      %v450 = vpop.permute.xlu0 %449
      %453 = vset.pattern.permute.xlu0 0
      %454 = vperm.xlu0 %453, %v331
      %v455 = vpop.permute.xlu0 %454
      %458 = vset.pattern.permute.xlu0 0
      %459 = vperm.xlu0 %458, %v332
      %v460 = vpop.permute.xlu0 %459
      %463 = vset.pattern.permute.xlu0 0
      %464 = vperm.xlu0 %463, %v333
      %v465 = vpop.permute.xlu0 %464
      %468 = vset.pattern.permute.xlu0 0
      %469 = vperm.xlu0 %468, %v334
      %v470 = vpop.permute.xlu0 %469
      %473 = vset.pattern.permute.xlu0 0
      %474 = vperm.xlu0 %473, %v335
      %v475 = vpop.permute.xlu0 %474
      %478 = vset.pattern.permute.xlu0 0
      %479 = vperm.xlu0 %478, %v336
      %v480 = vpop.permute.xlu0 %479
      %483 = vset.pattern.permute.xlu0 0
      %484 = vperm.xlu0 %483, %v337
      %v485 = vpop.permute.xlu0 %484
      %488 = vset.pattern.permute.xlu0 0
      %489 = vperm.xlu0 %488, %v338
      %v490 = vpop.permute.xlu0 %489
      %493 = vset.pattern.permute.xlu0 0
      %494 = vperm.xlu0 %493, %v339
      %v495 = vpop.permute.xlu0 %494
      %498 = vset.pattern.permute.xlu0 0
      %499 = vperm.xlu0 %498, %v340
      %v500 = vpop.permute.xlu0 %499
      %v503 = vlaneseq
      %v504 = vshrl.u32 %v503, 7
      %v505 = vsub.s32 0, %v504
      %v506 = vrot.slane %v341, %v505
      %v507 = vlaneseq
      %v508 = vshrl.u32 %v507, 7
      %v509 = vsub.s32 1, %v508
      %v510 = vrot.slane %v341, %v509
      %v513 = vmul.f32 %v345, %v506
      %v514 = vmul.f32 %v345, %v510
      %v515 = vmul.f32 %v350, %v506
      %v516 = vmul.f32 %v350, %v510
      %v517 = vmul.f32 %v355, %v506
      %v518 = vmul.f32 %v355, %v510
      %v519 = vmul.f32 %v360, %v506
      %v520 = vmul.f32 %v360, %v510
      %v521 = vmul.f32 %v365, %v506
      %v522 = vmul.f32 %v365, %v510
      %v523 = vmul.f32 %v370, %v506
      %v524 = vmul.f32 %v370, %v510
      %v525 = vmul.f32 %v375, %v506
      %v526 = vmul.f32 %v375, %v510
      %v527 = vmul.f32 %v380, %v506
      %v528 = vmul.f32 %v380, %v510
      %v529 = vmul.f32 %v385, %v506
      %v530 = vmul.f32 %v385, %v510
      %v531 = vmul.f32 %v390, %v506
      %v532 = vmul.f32 %v390, %v510
      %v533 = vmul.f32 %v395, %v506
      %v534 = vmul.f32 %v395, %v510
      %v535 = vmul.f32 %v400, %v506
      %v536 = vmul.f32 %v400, %v510
      %v537 = vmul.f32 %v405, %v506
      %v538 = vmul.f32 %v405, %v510
      %v539 = vmul.f32 %v410, %v506
      %v540 = vmul.f32 %v410, %v510
      %v541 = vmul.f32 %v415, %v506
      %v542 = vmul.f32 %v415, %v510
      %v543 = vmul.f32 %v420, %v506
      %v544 = vmul.f32 %v420, %v510
      %v545 = vmul.f32 %v425, %v506
      %v546 = vmul.f32 %v425, %v510
      %v547 = vmul.f32 %v430, %v506
      %v548 = vmul.f32 %v430, %v510
      %v549 = vmul.f32 %v435, %v506
      %v550 = vmul.f32 %v435, %v510
      %v551 = vmul.f32 %v440, %v506
      %v552 = vmul.f32 %v440, %v510
      %v553 = vmul.f32 %v445, %v506
      %v554 = vmul.f32 %v445, %v510
      %v555 = vmul.f32 %v450, %v506
      %v556 = vmul.f32 %v450, %v510
      %v557 = vmul.f32 %v455, %v506
      %v558 = vmul.f32 %v455, %v510
      %v559 = vmul.f32 %v460, %v506
      %v560 = vmul.f32 %v460, %v510
      %v561 = vmul.f32 %v465, %v506
      %v562 = vmul.f32 %v465, %v510
      %v563 = vmul.f32 %v470, %v506
      %v564 = vmul.f32 %v470, %v510
      %v565 = vmul.f32 %v475, %v506
      %v566 = vmul.f32 %v475, %v510
      %v567 = vmul.f32 %v480, %v506
      %v568 = vmul.f32 %v480, %v510
      %v569 = vmul.f32 %v485, %v506
      %v570 = vmul.f32 %v485, %v510
      %v571 = vmul.f32 %v490, %v506
      %v572 = vmul.f32 %v490, %v510
      %v573 = vmul.f32 %v495, %v506
      %v574 = vmul.f32 %v495, %v510
      %v575 = vmul.f32 %v500, %v506
      %v576 = vmul.f32 %v500, %v510
      %s577 = scalar_lea.vmem %s1, 1
      %v578 = vld [vmem:[%s577] ss:$4 sm:$0x3]
      %579 = vset.pattern.permute.xlu0 1
      %580 = vperm.xlu0 %579, %v309
      %v581 = vpop.permute.xlu0 %580
      %583 = vset.pattern.permute.xlu0 1
      %584 = vperm.xlu0 %583, %v310
      %v585 = vpop.permute.xlu0 %584
      %587 = vset.pattern.permute.xlu0 1
      %588 = vperm.xlu0 %587, %v311
      %v589 = vpop.permute.xlu0 %588
      %591 = vset.pattern.permute.xlu0 1
      %592 = vperm.xlu0 %591, %v312
      %v593 = vpop.permute.xlu0 %592
      %595 = vset.pattern.permute.xlu0 1
      %596 = vperm.xlu0 %595, %v313
      %v597 = vpop.permute.xlu0 %596
      %599 = vset.pattern.permute.xlu0 1
      %600 = vperm.xlu0 %599, %v314
      %v601 = vpop.permute.xlu0 %600
      %603 = vset.pattern.permute.xlu0 1
      %604 = vperm.xlu0 %603, %v315
      %v605 = vpop.permute.xlu0 %604
      %607 = vset.pattern.permute.xlu0 1
      %608 = vperm.xlu0 %607, %v316
      %v609 = vpop.permute.xlu0 %608
      %611 = vset.pattern.permute.xlu0 1
      %612 = vperm.xlu0 %611, %v317
      %v613 = vpop.permute.xlu0 %612
      %615 = vset.pattern.permute.xlu0 1
      %616 = vperm.xlu0 %615, %v318
      %v617 = vpop.permute.xlu0 %616
      %619 = vset.pattern.permute.xlu0 1
      %620 = vperm.xlu0 %619, %v319
      %v621 = vpop.permute.xlu0 %620
      %623 = vset.pattern.permute.xlu0 1
      %624 = vperm.xlu0 %623, %v320
      %v625 = vpop.permute.xlu0 %624
      %627 = vset.pattern.permute.xlu0 1
      %628 = vperm.xlu0 %627, %v321
      %v629 = vpop.permute.xlu0 %628
      %631 = vset.pattern.permute.xlu0 1
      %632 = vperm.xlu0 %631, %v322
      %v633 = vpop.permute.xlu0 %632
      %635 = vset.pattern.permute.xlu0 1
      %636 = vperm.xlu0 %635, %v323
      %v637 = vpop.permute.xlu0 %636
      %639 = vset.pattern.permute.xlu0 1
      %640 = vperm.xlu0 %639, %v324
      %v641 = vpop.permute.xlu0 %640
      %643 = vset.pattern.permute.xlu0 1
      %644 = vperm.xlu0 %643, %v325
      %v645 = vpop.permute.xlu0 %644
      %647 = vset.pattern.permute.xlu0 1
      %648 = vperm.xlu0 %647, %v326
      %v649 = vpop.permute.xlu0 %648
      %651 = vset.pattern.permute.xlu0 1
      %652 = vperm.xlu0 %651, %v327
      %v653 = vpop.permute.xlu0 %652
      %655 = vset.pattern.permute.xlu0 1
      %656 = vperm.xlu0 %655, %v328
      %v657 = vpop.permute.xlu0 %656
      %659 = vset.pattern.permute.xlu0 1
      %660 = vperm.xlu0 %659, %v329
      %v661 = vpop.permute.xlu0 %660
      %663 = vset.pattern.permute.xlu0 1
      %664 = vperm.xlu0 %663, %v330
      %v665 = vpop.permute.xlu0 %664
      %667 = vset.pattern.permute.xlu0 1
      %668 = vperm.xlu0 %667, %v331
      %v669 = vpop.permute.xlu0 %668
      %671 = vset.pattern.permute.xlu0 1
      %672 = vperm.xlu0 %671, %v332
      %v673 = vpop.permute.xlu0 %672
      %675 = vset.pattern.permute.xlu0 1
      %676 = vperm.xlu0 %675, %v333
      %v677 = vpop.permute.xlu0 %676
      %679 = vset.pattern.permute.xlu0 1
      %680 = vperm.xlu0 %679, %v334
      %v681 = vpop.permute.xlu0 %680
      %683 = vset.pattern.permute.xlu0 1
      %684 = vperm.xlu0 %683, %v335
      %v685 = vpop.permute.xlu0 %684
      %687 = vset.pattern.permute.xlu0 1
      %688 = vperm.xlu0 %687, %v336
      %v689 = vpop.permute.xlu0 %688
      %691 = vset.pattern.permute.xlu0 1
      %692 = vperm.xlu0 %691, %v337
      %v693 = vpop.permute.xlu0 %692
      %695 = vset.pattern.permute.xlu0 1
      %696 = vperm.xlu0 %695, %v338
      %v697 = vpop.permute.xlu0 %696
      %699 = vset.pattern.permute.xlu0 1
      %700 = vperm.xlu0 %699, %v339
      %v701 = vpop.permute.xlu0 %700
      %703 = vset.pattern.permute.xlu0 1
      %704 = vperm.xlu0 %703, %v340
      %v705 = vpop.permute.xlu0 %704
      %v708 = vlaneseq
      %v709 = vshrl.u32 %v708, 7
      %v710 = vsub.s32 0, %v709
      %v711 = vrot.slane %v578, %v710
      %v712 = vlaneseq
      %v713 = vshrl.u32 %v712, 7
      %v714 = vsub.s32 1, %v713
      %v715 = vrot.slane %v578, %v714
      %v718 = vmul.f32 %v581, %v711
      %v719 = vmul.f32 %v581, %v715
      %v720 = vmul.f32 %v585, %v711
      %v721 = vmul.f32 %v585, %v715
      %v722 = vmul.f32 %v589, %v711
      %v723 = vmul.f32 %v589, %v715
      %v724 = vmul.f32 %v593, %v711
      %v725 = vmul.f32 %v593, %v715
      %v726 = vmul.f32 %v597, %v711
      %v727 = vmul.f32 %v597, %v715
      %v728 = vmul.f32 %v601, %v711
      %v729 = vmul.f32 %v601, %v715
      %v730 = vmul.f32 %v605, %v711
      %v731 = vmul.f32 %v605, %v715
      %v732 = vmul.f32 %v609, %v711
      %v733 = vmul.f32 %v609, %v715
      %v734 = vmul.f32 %v613, %v711
      %v735 = vmul.f32 %v613, %v715
      %v736 = vmul.f32 %v617, %v711
      %v737 = vmul.f32 %v617, %v715
      %v738 = vmul.f32 %v621, %v711
      %v739 = vmul.f32 %v621, %v715
      %v740 = vmul.f32 %v625, %v711
      %v741 = vmul.f32 %v625, %v715
      %v742 = vmul.f32 %v629, %v711
      %v743 = vmul.f32 %v629, %v715
      %v744 = vmul.f32 %v633, %v711
      %v745 = vmul.f32 %v633, %v715
      %v746 = vmul.f32 %v637, %v711
      %v747 = vmul.f32 %v637, %v715
      %v748 = vmul.f32 %v641, %v711
      %v749 = vmul.f32 %v641, %v715
      %v750 = vmul.f32 %v645, %v711
      %v751 = vmul.f32 %v645, %v715
      %v752 = vmul.f32 %v649, %v711
      %v753 = vmul.f32 %v649, %v715
      %v754 = vmul.f32 %v653, %v711
      %v755 = vmul.f32 %v653, %v715
      %v756 = vmul.f32 %v657, %v711
      %v757 = vmul.f32 %v657, %v715
      %v758 = vmul.f32 %v661, %v711
      %v759 = vmul.f32 %v661, %v715
      %v760 = vmul.f32 %v665, %v711
      %v761 = vmul.f32 %v665, %v715
      %v762 = vmul.f32 %v669, %v711
      %v763 = vmul.f32 %v669, %v715
      %v764 = vmul.f32 %v673, %v711
      %v765 = vmul.f32 %v673, %v715
      %v766 = vmul.f32 %v677, %v711
      %v767 = vmul.f32 %v677, %v715
      %v768 = vmul.f32 %v681, %v711
      %v769 = vmul.f32 %v681, %v715
      %v770 = vmul.f32 %v685, %v711
      %v771 = vmul.f32 %v685, %v715
      %v772 = vmul.f32 %v689, %v711
      %v773 = vmul.f32 %v689, %v715
      %v774 = vmul.f32 %v693, %v711
      %v775 = vmul.f32 %v693, %v715
      %v776 = vmul.f32 %v697, %v711
      %v777 = vmul.f32 %v697, %v715
      %v778 = vmul.f32 %v701, %v711
      %v779 = vmul.f32 %v701, %v715
      %v780 = vmul.f32 %v705, %v711
      %v781 = vmul.f32 %v705, %v715
      %v782 = vadd.f32 %v513, %v718
      %v783 = vadd.f32 %v514, %v719
      %v784 = vadd.f32 %v515, %v720
      %v785 = vadd.f32 %v516, %v721
      %v786 = vadd.f32 %v517, %v722
      %v787 = vadd.f32 %v518, %v723
      %v788 = vadd.f32 %v519, %v724
      %v789 = vadd.f32 %v520, %v725
      %v790 = vadd.f32 %v521, %v726
      %v791 = vadd.f32 %v522, %v727
      %v792 = vadd.f32 %v523, %v728
      %v793 = vadd.f32 %v524, %v729
      %v794 = vadd.f32 %v525, %v730
      %v795 = vadd.f32 %v526, %v731
      %v796 = vadd.f32 %v527, %v732
      %v797 = vadd.f32 %v528, %v733
      %v798 = vadd.f32 %v529, %v734
      %v799 = vadd.f32 %v530, %v735
      %v800 = vadd.f32 %v531, %v736
      %v801 = vadd.f32 %v532, %v737
      %v802 = vadd.f32 %v533, %v738
      %v803 = vadd.f32 %v534, %v739
      %v804 = vadd.f32 %v535, %v740
      %v805 = vadd.f32 %v536, %v741
      %v806 = vadd.f32 %v537, %v742
      %v807 = vadd.f32 %v538, %v743
      %v808 = vadd.f32 %v539, %v744
      %v809 = vadd.f32 %v540, %v745
      %v810 = vadd.f32 %v541, %v746
      %v811 = vadd.f32 %v542, %v747
      %v812 = vadd.f32 %v543, %v748
      %v813 = vadd.f32 %v544, %v749
      %v814 = vadd.f32 %v545, %v750
      %v815 = vadd.f32 %v546, %v751
      %v816 = vadd.f32 %v547, %v752
      %v817 = vadd.f32 %v548, %v753
      %v818 = vadd.f32 %v549, %v754
      %v819 = vadd.f32 %v550, %v755
      %v820 = vadd.f32 %v551, %v756
      %v821 = vadd.f32 %v552, %v757
      %v822 = vadd.f32 %v553, %v758
      %v823 = vadd.f32 %v554, %v759
      %v824 = vadd.f32 %v555, %v760
      %v825 = vadd.f32 %v556, %v761
      %v826 = vadd.f32 %v557, %v762
      %v827 = vadd.f32 %v558, %v763
      %v828 = vadd.f32 %v559, %v764
      %v829 = vadd.f32 %v560, %v765
      %v830 = vadd.f32 %v561, %v766
      %v831 = vadd.f32 %v562, %v767
      %v832 = vadd.f32 %v563, %v768
      %v833 = vadd.f32 %v564, %v769
      %v834 = vadd.f32 %v565, %v770
      %v835 = vadd.f32 %v566, %v771
      %v836 = vadd.f32 %v567, %v772
      %v837 = vadd.f32 %v568, %v773
      %v838 = vadd.f32 %v569, %v774
      %v839 = vadd.f32 %v570, %v775
      %v840 = vadd.f32 %v571, %v776
      %v841 = vadd.f32 %v572, %v777
      %v842 = vadd.f32 %v573, %v778
      %v843 = vadd.f32 %v574, %v779
      %v844 = vadd.f32 %v575, %v780
      %v845 = vadd.f32 %v576, %v781
      %s846 = scalar_lea.vmem %s1, 2
      %v847 = vld [vmem:[%s846] ss:$4 sm:$0x3]
      %848 = vset.pattern.permute.xlu0 2
      %849 = vperm.xlu0 %848, %v309
      %v850 = vpop.permute.xlu0 %849
      %852 = vset.pattern.permute.xlu0 2
      %853 = vperm.xlu0 %852, %v310
      %v854 = vpop.permute.xlu0 %853
      %856 = vset.pattern.permute.xlu0 2
      %857 = vperm.xlu0 %856, %v311
      %v858 = vpop.permute.xlu0 %857
      %860 = vset.pattern.permute.xlu0 2
      %861 = vperm.xlu0 %860, %v312
      %v862 = vpop.permute.xlu0 %861
      %864 = vset.pattern.permute.xlu0 2
      %865 = vperm.xlu0 %864, %v313
      %v866 = vpop.permute.xlu0 %865
      %868 = vset.pattern.permute.xlu0 2
      %869 = vperm.xlu0 %868, %v314
      %v870 = vpop.permute.xlu0 %869
      %872 = vset.pattern.permute.xlu0 2
      %873 = vperm.xlu0 %872, %v315
      %v874 = vpop.permute.xlu0 %873
      %876 = vset.pattern.permute.xlu0 2
      %877 = vperm.xlu0 %876, %v316
      %v878 = vpop.permute.xlu0 %877
      %880 = vset.pattern.permute.xlu0 2
      %881 = vperm.xlu0 %880, %v317
      %v882 = vpop.permute.xlu0 %881
      %884 = vset.pattern.permute.xlu0 2
      %885 = vperm.xlu0 %884, %v318
      %v886 = vpop.permute.xlu0 %885
      %888 = vset.pattern.permute.xlu0 2
      %889 = vperm.xlu0 %888, %v319
      %v890 = vpop.permute.xlu0 %889
      %892 = vset.pattern.permute.xlu0 2
      %893 = vperm.xlu0 %892, %v320
      %v894 = vpop.permute.xlu0 %893
      %896 = vset.pattern.permute.xlu0 2
      %897 = vperm.xlu0 %896, %v321
      %v898 = vpop.permute.xlu0 %897
      %900 = vset.pattern.permute.xlu0 2
      %901 = vperm.xlu0 %900, %v322
      %v902 = vpop.permute.xlu0 %901
      %904 = vset.pattern.permute.xlu0 2
      %905 = vperm.xlu0 %904, %v323
      %v906 = vpop.permute.xlu0 %905
      %908 = vset.pattern.permute.xlu0 2
      %909 = vperm.xlu0 %908, %v324
      %v910 = vpop.permute.xlu0 %909
      %912 = vset.pattern.permute.xlu0 2
      %913 = vperm.xlu0 %912, %v325
      %v914 = vpop.permute.xlu0 %913
      %916 = vset.pattern.permute.xlu0 2
      %917 = vperm.xlu0 %916, %v326
      %v918 = vpop.permute.xlu0 %917
      %920 = vset.pattern.permute.xlu0 2
      %921 = vperm.xlu0 %920, %v327
      %v922 = vpop.permute.xlu0 %921
      %924 = vset.pattern.permute.xlu0 2
      %925 = vperm.xlu0 %924, %v328
      %v926 = vpop.permute.xlu0 %925
      %928 = vset.pattern.permute.xlu0 2
      %929 = vperm.xlu0 %928, %v329
      %v930 = vpop.permute.xlu0 %929
      %932 = vset.pattern.permute.xlu0 2
      %933 = vperm.xlu0 %932, %v330
      %v934 = vpop.permute.xlu0 %933
      %936 = vset.pattern.permute.xlu0 2
      %937 = vperm.xlu0 %936, %v331
      %v938 = vpop.permute.xlu0 %937
      %940 = vset.pattern.permute.xlu0 2
      %941 = vperm.xlu0 %940, %v332
      %v942 = vpop.permute.xlu0 %941
      %944 = vset.pattern.permute.xlu0 2
      %945 = vperm.xlu0 %944, %v333
      %v946 = vpop.permute.xlu0 %945
      %948 = vset.pattern.permute.xlu0 2
      %949 = vperm.xlu0 %948, %v334
      %v950 = vpop.permute.xlu0 %949
      %952 = vset.pattern.permute.xlu0 2
      %953 = vperm.xlu0 %952, %v335
      %v954 = vpop.permute.xlu0 %953
      %956 = vset.pattern.permute.xlu0 2
      %957 = vperm.xlu0 %956, %v336
      %v958 = vpop.permute.xlu0 %957
      %960 = vset.pattern.permute.xlu0 2
      %961 = vperm.xlu0 %960, %v337
      %v962 = vpop.permute.xlu0 %961
      %964 = vset.pattern.permute.xlu0 2
      %965 = vperm.xlu0 %964, %v338
      %v966 = vpop.permute.xlu0 %965
      %968 = vset.pattern.permute.xlu0 2
      %969 = vperm.xlu0 %968, %v339
      %v970 = vpop.permute.xlu0 %969
      %972 = vset.pattern.permute.xlu0 2
      %973 = vperm.xlu0 %972, %v340
      %v974 = vpop.permute.xlu0 %973
      %v977 = vlaneseq
      %v978 = vshrl.u32 %v977, 7
      %v979 = vsub.s32 0, %v978
      %v980 = vrot.slane %v847, %v979
      %v981 = vlaneseq
      %v982 = vshrl.u32 %v981, 7
      %v983 = vsub.s32 1, %v982
      %v984 = vrot.slane %v847, %v983
      %v987 = vmul.f32 %v850, %v980
      %v988 = vmul.f32 %v850, %v984
      %v989 = vmul.f32 %v854, %v980
      %v990 = vmul.f32 %v854, %v984
      %v991 = vmul.f32 %v858, %v980
      %v992 = vmul.f32 %v858, %v984
      %v993 = vmul.f32 %v862, %v980
      %v994 = vmul.f32 %v862, %v984
      %v995 = vmul.f32 %v866, %v980
      %v996 = vmul.f32 %v866, %v984
      %v997 = vmul.f32 %v870, %v980
      %v998 = vmul.f32 %v870, %v984
      %v999 = vmul.f32 %v874, %v980
      %v1000 = vmul.f32 %v874, %v984
      %v1001 = vmul.f32 %v878, %v980
      %v1002 = vmul.f32 %v878, %v984
      %v1003 = vmul.f32 %v882, %v980
      %v1004 = vmul.f32 %v882, %v984
      %v1005 = vmul.f32 %v886, %v980
      %v1006 = vmul.f32 %v886, %v984
      %v1007 = vmul.f32 %v890, %v980
      %v1008 = vmul.f32 %v890, %v984
      %v1009 = vmul.f32 %v894, %v980
      %v1010 = vmul.f32 %v894, %v984
      %v1011 = vmul.f32 %v898, %v980
      %v1012 = vmul.f32 %v898, %v984
      %v1013 = vmul.f32 %v902, %v980
      %v1014 = vmul.f32 %v902, %v984
      %v1015 = vmul.f32 %v906, %v980
      %v1016 = vmul.f32 %v906, %v984
      %v1017 = vmul.f32 %v910, %v980
      %v1018 = vmul.f32 %v910, %v984
      %v1019 = vmul.f32 %v914, %v980
      %v1020 = vmul.f32 %v914, %v984
      %v1021 = vmul.f32 %v918, %v980
      %v1022 = vmul.f32 %v918, %v984
      %v1023 = vmul.f32 %v922, %v980
      %v1024 = vmul.f32 %v922, %v984
      %v1025 = vmul.f32 %v926, %v980
      %v1026 = vmul.f32 %v926, %v984
      %v1027 = vmul.f32 %v930, %v980
      %v1028 = vmul.f32 %v930, %v984
      %v1029 = vmul.f32 %v934, %v980
      %v1030 = vmul.f32 %v934, %v984
      %v1031 = vmul.f32 %v938, %v980
      %v1032 = vmul.f32 %v938, %v984
      %v1033 = vmul.f32 %v942, %v980
      %v1034 = vmul.f32 %v942, %v984
      %v1035 = vmul.f32 %v946, %v980
      %v1036 = vmul.f32 %v946, %v984
      %v1037 = vmul.f32 %v950, %v980
      %v1038 = vmul.f32 %v950, %v984
      %v1039 = vmul.f32 %v954, %v980
      %v1040 = vmul.f32 %v954, %v984
      %v1041 = vmul.f32 %v958, %v980
      %v1042 = vmul.f32 %v958, %v984
      %v1043 = vmul.f32 %v962, %v980
      %v1044 = vmul.f32 %v962, %v984
      %v1045 = vmul.f32 %v966, %v980
      %v1046 = vmul.f32 %v966, %v984
      %v1047 = vmul.f32 %v970, %v980
      %v1048 = vmul.f32 %v970, %v984
      %v1049 = vmul.f32 %v974, %v980
      %v1050 = vmul.f32 %v974, %v984
      %v1051 = vadd.f32 %v782, %v987
      %v1052 = vadd.f32 %v783, %v988
      %v1053 = vadd.f32 %v784, %v989
      %v1054 = vadd.f32 %v785, %v990
      %v1055 = vadd.f32 %v786, %v991
      %v1056 = vadd.f32 %v787, %v992
      %v1057 = vadd.f32 %v788, %v993
      %v1058 = vadd.f32 %v789, %v994
      %v1059 = vadd.f32 %v790, %v995
      %v1060 = vadd.f32 %v791, %v996
      %v1061 = vadd.f32 %v792, %v997
      %v1062 = vadd.f32 %v793, %v998
      %v1063 = vadd.f32 %v794, %v999
      %v1064 = vadd.f32 %v795, %v1000
      %v1065 = vadd.f32 %v796, %v1001
      %v1066 = vadd.f32 %v797, %v1002
      %v1067 = vadd.f32 %v798, %v1003
      %v1068 = vadd.f32 %v799, %v1004
      %v1069 = vadd.f32 %v800, %v1005
      %v1070 = vadd.f32 %v801, %v1006
      %v1071 = vadd.f32 %v802, %v1007
      %v1072 = vadd.f32 %v803, %v1008
      %v1073 = vadd.f32 %v804, %v1009
      %v1074 = vadd.f32 %v805, %v1010
      %v1075 = vadd.f32 %v806, %v1011
      %v1076 = vadd.f32 %v807, %v1012
      %v1077 = vadd.f32 %v808, %v1013
      %v1078 = vadd.f32 %v809, %v1014
      %v1079 = vadd.f32 %v810, %v1015
      %v1080 = vadd.f32 %v811, %v1016
      %v1081 = vadd.f32 %v812, %v1017
      %v1082 = vadd.f32 %v813, %v1018
      %v1083 = vadd.f32 %v814, %v1019
      %v1084 = vadd.f32 %v815, %v1020
      %v1085 = vadd.f32 %v816, %v1021
      %v1086 = vadd.f32 %v817, %v1022
      %v1087 = vadd.f32 %v818, %v1023
      %v1088 = vadd.f32 %v819, %v1024
      %v1089 = vadd.f32 %v820, %v1025
      %v1090 = vadd.f32 %v821, %v1026
      %v1091 = vadd.f32 %v822, %v1027
      %v1092 = vadd.f32 %v823, %v1028
      %v1093 = vadd.f32 %v824, %v1029
      %v1094 = vadd.f32 %v825, %v1030
      %v1095 = vadd.f32 %v826, %v1031
      %v1096 = vadd.f32 %v827, %v1032
      %v1097 = vadd.f32 %v828, %v1033
      %v1098 = vadd.f32 %v829, %v1034
      %v1099 = vadd.f32 %v830, %v1035
      %v1100 = vadd.f32 %v831, %v1036
      %v1101 = vadd.f32 %v832, %v1037
      %v1102 = vadd.f32 %v833, %v1038
      %v1103 = vadd.f32 %v834, %v1039
      %v1104 = vadd.f32 %v835, %v1040
      %v1105 = vadd.f32 %v836, %v1041
      %v1106 = vadd.f32 %v837, %v1042
      %v1107 = vadd.f32 %v838, %v1043
      %v1108 = vadd.f32 %v839, %v1044
      %v1109 = vadd.f32 %v840, %v1045
      %v1110 = vadd.f32 %v841, %v1046
      %v1111 = vadd.f32 %v842, %v1047
      %v1112 = vadd.f32 %v843, %v1048
      %v1113 = vadd.f32 %v844, %v1049
      %v1114 = vadd.f32 %v845, %v1050
      %v1115 = vld [vmem:[%s2] sm:$0x3]
      %v1117 = vlaneseq
      %v1118 = vshrl.u32 %v1117, 7
      %v1119 = vsub.s32 0, %v1118
      %v1120 = vrot.slane %v1115, %v1119
      %v1121 = vlaneseq
      %v1122 = vshrl.u32 %v1121, 7
      %v1123 = vsub.s32 1, %v1122
      %v1124 = vrot.slane %v1115, %v1123
      %v1127 = vadd.f32 %v1051, %v1120
      %v1128 = vadd.f32 %v1052, %v1124
      %v1129 = vadd.f32 %v1053, %v1120
      %v1130 = vadd.f32 %v1054, %v1124
      %v1131 = vadd.f32 %v1055, %v1120
      %v1132 = vadd.f32 %v1056, %v1124
      %v1133 = vadd.f32 %v1057, %v1120
      %v1134 = vadd.f32 %v1058, %v1124
      %v1135 = vadd.f32 %v1059, %v1120
      %v1136 = vadd.f32 %v1060, %v1124
      %v1137 = vadd.f32 %v1061, %v1120
      %v1138 = vadd.f32 %v1062, %v1124
      %v1139 = vadd.f32 %v1063, %v1120
      %v1140 = vadd.f32 %v1064, %v1124
      %v1141 = vadd.f32 %v1065, %v1120
      %v1142 = vadd.f32 %v1066, %v1124
      %v1143 = vadd.f32 %v1067, %v1120
      %v1144 = vadd.f32 %v1068, %v1124
      %v1145 = vadd.f32 %v1069, %v1120
      %v1146 = vadd.f32 %v1070, %v1124
      %v1147 = vadd.f32 %v1071, %v1120
      %v1148 = vadd.f32 %v1072, %v1124
      %v1149 = vadd.f32 %v1073, %v1120
      %v1150 = vadd.f32 %v1074, %v1124
      %v1151 = vadd.f32 %v1075, %v1120
      %v1152 = vadd.f32 %v1076, %v1124
      %v1153 = vadd.f32 %v1077, %v1120
      %v1154 = vadd.f32 %v1078, %v1124
      %v1155 = vadd.f32 %v1079, %v1120
      %v1156 = vadd.f32 %v1080, %v1124
      %v1157 = vadd.f32 %v1081, %v1120
      %v1158 = vadd.f32 %v1082, %v1124
      %v1159 = vadd.f32 %v1083, %v1120
      %v1160 = vadd.f32 %v1084, %v1124
      %v1161 = vadd.f32 %v1085, %v1120
      %v1162 = vadd.f32 %v1086, %v1124
      %v1163 = vadd.f32 %v1087, %v1120
      %v1164 = vadd.f32 %v1088, %v1124
      %v1165 = vadd.f32 %v1089, %v1120
      %v1166 = vadd.f32 %v1090, %v1124
      %v1167 = vadd.f32 %v1091, %v1120
      %v1168 = vadd.f32 %v1092, %v1124
      %v1169 = vadd.f32 %v1093, %v1120
      %v1170 = vadd.f32 %v1094, %v1124
      %v1171 = vadd.f32 %v1095, %v1120
      %v1172 = vadd.f32 %v1096, %v1124
      %v1173 = vadd.f32 %v1097, %v1120
      %v1174 = vadd.f32 %v1098, %v1124
      %v1175 = vadd.f32 %v1099, %v1120
      %v1176 = vadd.f32 %v1100, %v1124
      %v1177 = vadd.f32 %v1101, %v1120
      %v1178 = vadd.f32 %v1102, %v1124
      %v1179 = vadd.f32 %v1103, %v1120
      %v1180 = vadd.f32 %v1104, %v1124
      %v1181 = vadd.f32 %v1105, %v1120
      %v1182 = vadd.f32 %v1106, %v1124
      %v1183 = vadd.f32 %v1107, %v1120
      %v1184 = vadd.f32 %v1108, %v1124
      %v1185 = vadd.f32 %v1109, %v1120
      %v1186 = vadd.f32 %v1110, %v1124
      %v1187 = vadd.f32 %v1111, %v1120
      %v1188 = vadd.f32 %v1112, %v1124
      %v1189 = vadd.f32 %v1113, %v1120
      %v1190 = vadd.f32 %v1114, %v1124
      %v1191 = vmax.f32 %v1127, 0.0
      %v1192 = vmax.f32 %v1128, 0.0
      %v1193 = vmax.f32 %v1129, 0.0
      %v1194 = vmax.f32 %v1130, 0.0
      %v1195 = vmax.f32 %v1131, 0.0
      %v1196 = vmax.f32 %v1132, 0.0
      %v1197 = vmax.f32 %v1133, 0.0
      %v1198 = vmax.f32 %v1134, 0.0
      %v1199 = vmax.f32 %v1135, 0.0
      %v1200 = vmax.f32 %v1136, 0.0
      %v1201 = vmax.f32 %v1137, 0.0
      %v1202 = vmax.f32 %v1138, 0.0
      %v1203 = vmax.f32 %v1139, 0.0
      %v1204 = vmax.f32 %v1140, 0.0
      %v1205 = vmax.f32 %v1141, 0.0
      %v1206 = vmax.f32 %v1142, 0.0
      %v1207 = vmax.f32 %v1143, 0.0
      %v1208 = vmax.f32 %v1144, 0.0
      %v1209 = vmax.f32 %v1145, 0.0
      %v1210 = vmax.f32 %v1146, 0.0
      %v1211 = vmax.f32 %v1147, 0.0
      %v1212 = vmax.f32 %v1148, 0.0
      %v1213 = vmax.f32 %v1149, 0.0
      %v1214 = vmax.f32 %v1150, 0.0
      %v1215 = vmax.f32 %v1151, 0.0
      %v1216 = vmax.f32 %v1152, 0.0
      %v1217 = vmax.f32 %v1153, 0.0
      %v1218 = vmax.f32 %v1154, 0.0
      %v1219 = vmax.f32 %v1155, 0.0
      %v1220 = vmax.f32 %v1156, 0.0
      %v1221 = vmax.f32 %v1157, 0.0
      %v1222 = vmax.f32 %v1158, 0.0
      %v1223 = vmax.f32 %v1159, 0.0
      %v1224 = vmax.f32 %v1160, 0.0
      %v1225 = vmax.f32 %v1161, 0.0
      %v1226 = vmax.f32 %v1162, 0.0
      %v1227 = vmax.f32 %v1163, 0.0
      %v1228 = vmax.f32 %v1164, 0.0
      %v1229 = vmax.f32 %v1165, 0.0
      %v1230 = vmax.f32 %v1166, 0.0
      %v1231 = vmax.f32 %v1167, 0.0
      %v1232 = vmax.f32 %v1168, 0.0
      %v1233 = vmax.f32 %v1169, 0.0
      %v1234 = vmax.f32 %v1170, 0.0
      %v1235 = vmax.f32 %v1171, 0.0
      %v1236 = vmax.f32 %v1172, 0.0
      %v1237 = vmax.f32 %v1173, 0.0
      %v1238 = vmax.f32 %v1174, 0.0
      %v1239 = vmax.f32 %v1175, 0.0
      %v1240 = vmax.f32 %v1176, 0.0
      %v1241 = vmax.f32 %v1177, 0.0
      %v1242 = vmax.f32 %v1178, 0.0
      %v1243 = vmax.f32 %v1179, 0.0
      %v1244 = vmax.f32 %v1180, 0.0
      %v1245 = vmax.f32 %v1181, 0.0
      %v1246 = vmax.f32 %v1182, 0.0
      %v1247 = vmax.f32 %v1183, 0.0
      %v1248 = vmax.f32 %v1184, 0.0
      %v1249 = vmax.f32 %v1185, 0.0
      %v1250 = vmax.f32 %v1186, 0.0
      %v1251 = vmax.f32 %v1187, 0.0
      %v1252 = vmax.f32 %v1188, 0.0
      %v1253 = vmax.f32 %v1189, 0.0
      %v1254 = vmax.f32 %v1190, 0.0
      %v1255 = vld [vmem:[%s3] sm:$0xff]
      %v1256 = vld [vmem:[%s3 + $0x8] sm:$0xff]
      %v1257 = vld [vmem:[%s3 + $0x10] sm:$0xff]
      %v1258 = vld [vmem:[%s3 + $0x18] sm:$0xff]
      %v1259 = vld [vmem:[%s3 + $0x20] sm:$0xff]
      %v1260 = vld [vmem:[%s3 + $0x28] sm:$0xff]
      %v1261 = vld [vmem:[%s3 + $0x30] sm:$0xff]
      %v1262 = vld [vmem:[%s3 + $0x38] sm:$0xff]
      %v1263 = vld [vmem:[%s3 + $0x40] sm:$0xff]
      %v1264 = vld [vmem:[%s3 + $0x48] sm:$0xff]
      %v1265 = vld [vmem:[%s3 + $0x50] sm:$0xff]
      %v1266 = vld [vmem:[%s3 + $0x58] sm:$0xff]
      %v1267 = vld [vmem:[%s3 + $0x60] sm:$0xff]
      %v1268 = vld [vmem:[%s3 + $0x68] sm:$0xff]
      %v1269 = vld [vmem:[%s3 + $0x70] sm:$0xff]
      %v1270 = vld [vmem:[%s3 + $0x78] sm:$0xff]
      %v1271 = vld [vmem:[%s3 + $0x80] sm:$0xff]
      %v1272 = vld [vmem:[%s3 + $0x88] sm:$0xff]
      %v1273 = vld [vmem:[%s3 + $0x90] sm:$0xff]
      %v1274 = vld [vmem:[%s3 + $0x98] sm:$0xff]
      %v1275 = vld [vmem:[%s3 + $0xa0] sm:$0xff]
      %v1276 = vld [vmem:[%s3 + $0xa8] sm:$0xff]
      %v1277 = vld [vmem:[%s3 + $0xb0] sm:$0xff]
      %v1278 = vld [vmem:[%s3 + $0xb8] sm:$0xff]
      %v1279 = vld [vmem:[%s3 + $0xc0] sm:$0xff]
      %v1280 = vld [vmem:[%s3 + $0xc8] sm:$0xff]
      %v1281 = vld [vmem:[%s3 + $0xd0] sm:$0xff]
      %v1282 = vld [vmem:[%s3 + $0xd8] sm:$0xff]
      %v1283 = vld [vmem:[%s3 + $0xe0] sm:$0xff]
      %v1284 = vld [vmem:[%s3 + $0xe8] sm:$0xff]
      %v1285 = vld [vmem:[%s3 + $0xf0] sm:$0xff]
      %v1286 = vld [vmem:[%s3 + $0xf8] sm:$0xff]
      %v1287 = vpack.c.bf16 %v1193, %v1191
      %v1288 = vpack.c.bf16 %v1194, %v1192
      %v1289 = vpack.c.bf16 %v1197, %v1195
      %v1290 = vpack.c.bf16 %v1198, %v1196
      %v1291 = vpack.c.bf16 %v1201, %v1199
      %v1292 = vpack.c.bf16 %v1202, %v1200
      %v1293 = vpack.c.bf16 %v1205, %v1203
      %v1294 = vpack.c.bf16 %v1206, %v1204
      %v1295 = vpack.c.bf16 %v1209, %v1207
      %v1296 = vpack.c.bf16 %v1210, %v1208
      %v1297 = vpack.c.bf16 %v1213, %v1211
      %v1298 = vpack.c.bf16 %v1214, %v1212
      %v1299 = vpack.c.bf16 %v1217, %v1215
      %v1300 = vpack.c.bf16 %v1218, %v1216
      %v1301 = vpack.c.bf16 %v1221, %v1219
      %v1302 = vpack.c.bf16 %v1222, %v1220
      %v1303 = vpack.c.bf16 %v1225, %v1223
      %v1304 = vpack.c.bf16 %v1226, %v1224
      %v1305 = vpack.c.bf16 %v1229, %v1227
      %v1306 = vpack.c.bf16 %v1230, %v1228
      %v1307 = vpack.c.bf16 %v1233, %v1231
      %v1308 = vpack.c.bf16 %v1234, %v1232
      %v1309 = vpack.c.bf16 %v1237, %v1235
      %v1310 = vpack.c.bf16 %v1238, %v1236
      %v1311 = vpack.c.bf16 %v1241, %v1239
      %v1312 = vpack.c.bf16 %v1242, %v1240
      %v1313 = vpack.c.bf16 %v1245, %v1243
      %v1314 = vpack.c.bf16 %v1246, %v1244
      %v1315 = vpack.c.bf16 %v1249, %v1247
      %v1316 = vpack.c.bf16 %v1250, %v1248
      %v1317 = vpack.c.bf16 %v1253, %v1251
      %v1318 = vpack.c.bf16 %v1254, %v1252
      %v1319 = vld [vmem:[%s4] ss:$8 sm:$0x3]
      %v1321 = vlaneseq
      %v1322 = vshrl.u32 %v1321, 7
      %v1323 = vsub.s32 0, %v1322
      %v1324 = vrot.slane %v1319, %v1323
      %v1325 = vlaneseq
      %v1326 = vshrl.u32 %v1325, 7
      %v1327 = vsub.s32 1, %v1326
      %v1328 = vrot.slane %v1319, %v1327
      %v1363 = vunpack.c.l.b16 %v1255
      %v1364 = vunpack.c.h.b16 %v1255
      %v1365 = vunpack.c.l.b16 %v1256
      %v1366 = vunpack.c.h.b16 %v1256
      %v1367 = vunpack.c.l.b16 %v1257
      %v1368 = vunpack.c.h.b16 %v1257
      %v1369 = vunpack.c.l.b16 %v1258
      %v1370 = vunpack.c.h.b16 %v1258
      %v1371 = vunpack.c.l.b16 %v1259
      %v1372 = vunpack.c.h.b16 %v1259
      %v1373 = vunpack.c.l.b16 %v1260
      %v1374 = vunpack.c.h.b16 %v1260
      %v1375 = vunpack.c.l.b16 %v1261
      %v1376 = vunpack.c.h.b16 %v1261
      %v1377 = vunpack.c.l.b16 %v1262
      %v1378 = vunpack.c.h.b16 %v1262
      %v1379 = vunpack.c.l.b16 %v1263
      %v1380 = vunpack.c.h.b16 %v1263
      %v1381 = vunpack.c.l.b16 %v1264
      %v1382 = vunpack.c.h.b16 %v1264
      %v1383 = vunpack.c.l.b16 %v1265
      %v1384 = vunpack.c.h.b16 %v1265
      %v1385 = vunpack.c.l.b16 %v1266
      %v1386 = vunpack.c.h.b16 %v1266
      %v1387 = vunpack.c.l.b16 %v1267
      %v1388 = vunpack.c.h.b16 %v1267
      %v1389 = vunpack.c.l.b16 %v1268
      %v1390 = vunpack.c.h.b16 %v1268
      %v1391 = vunpack.c.l.b16 %v1269
      %v1392 = vunpack.c.h.b16 %v1269
      %v1393 = vunpack.c.l.b16 %v1270
      %v1394 = vunpack.c.h.b16 %v1270
      %v1395 = vunpack.c.l.b16 %v1271
      %v1396 = vunpack.c.h.b16 %v1271
      %v1397 = vunpack.c.l.b16 %v1272
      %v1398 = vunpack.c.h.b16 %v1272
      %v1399 = vunpack.c.l.b16 %v1273
      %v1400 = vunpack.c.h.b16 %v1273
      %v1401 = vunpack.c.l.b16 %v1274
      %v1402 = vunpack.c.h.b16 %v1274
      %v1403 = vunpack.c.l.b16 %v1275
      %v1404 = vunpack.c.h.b16 %v1275
      %v1405 = vunpack.c.l.b16 %v1276
      %v1406 = vunpack.c.h.b16 %v1276
      %v1407 = vunpack.c.l.b16 %v1277
      %v1408 = vunpack.c.h.b16 %v1277
      %v1409 = vunpack.c.l.b16 %v1278
      %v1410 = vunpack.c.h.b16 %v1278
      %v1411 = vunpack.c.l.b16 %v1279
      %v1412 = vunpack.c.h.b16 %v1279
      %v1413 = vunpack.c.l.b16 %v1280
      %v1414 = vunpack.c.h.b16 %v1280
      %v1415 = vunpack.c.l.b16 %v1281
      %v1416 = vunpack.c.h.b16 %v1281
      %v1417 = vunpack.c.l.b16 %v1282
      %v1418 = vunpack.c.h.b16 %v1282
      %v1419 = vunpack.c.l.b16 %v1283
      %v1420 = vunpack.c.h.b16 %v1283
      %v1421 = vunpack.c.l.b16 %v1284
      %v1422 = vunpack.c.h.b16 %v1284
      %v1423 = vunpack.c.l.b16 %v1285
      %v1424 = vunpack.c.h.b16 %v1285
      %v1425 = vunpack.c.l.b16 %v1286
      %v1426 = vunpack.c.h.b16 %v1286
      %v1427 = vpack.c.b16 %v1365, %v1363
      %v1428 = vpack.c.b16 %v1366, %v1364
      %v1429 = vpack.c.b16 %v1369, %v1367
      %v1430 = vpack.c.b16 %v1370, %v1368
      %v1431 = vpack.c.b16 %v1373, %v1371
      %v1432 = vpack.c.b16 %v1374, %v1372
      %v1433 = vpack.c.b16 %v1377, %v1375
      %v1434 = vpack.c.b16 %v1378, %v1376
      %v1435 = vpack.c.b16 %v1381, %v1379
      %v1436 = vpack.c.b16 %v1382, %v1380
      %v1437 = vpack.c.b16 %v1385, %v1383
      %v1438 = vpack.c.b16 %v1386, %v1384
      %v1439 = vpack.c.b16 %v1389, %v1387
      %v1440 = vpack.c.b16 %v1390, %v1388
      %v1441 = vpack.c.b16 %v1393, %v1391
      %v1442 = vpack.c.b16 %v1394, %v1392
      %v1443 = vpack.c.b16 %v1397, %v1395
      %v1444 = vpack.c.b16 %v1398, %v1396
      %v1445 = vpack.c.b16 %v1401, %v1399
      %v1446 = vpack.c.b16 %v1402, %v1400
      %v1447 = vpack.c.b16 %v1405, %v1403
      %v1448 = vpack.c.b16 %v1406, %v1404
      %v1449 = vpack.c.b16 %v1409, %v1407
      %v1450 = vpack.c.b16 %v1410, %v1408
      %v1451 = vpack.c.b16 %v1413, %v1411
      %v1452 = vpack.c.b16 %v1414, %v1412
      %v1453 = vpack.c.b16 %v1417, %v1415
      %v1454 = vpack.c.b16 %v1418, %v1416
      %v1455 = vpack.c.b16 %v1421, %v1419
      %v1456 = vpack.c.b16 %v1422, %v1420
      %v1457 = vpack.c.b16 %v1425, %v1423
      %v1458 = vpack.c.b16 %v1426, %v1424
      %1491 = vmatprep.subr.bf16.mxu0 %v1442
      %1492 = vmatpush1.bf16.msra.mxu0 %v1441
      %1493 = vmatprep.subr.bf16.mxu0 %v1440
      %1494 = vmatpush1.bf16.msra.mxu0 %v1439
      %1495 = vmatprep.subr.bf16.mxu0 %v1438
      %1496 = vmatpush1.bf16.msra.mxu0 %v1437
      %1497 = vmatprep.subr.bf16.mxu0 %v1436
      %1498 = vmatpush1.bf16.msra.mxu0 %v1435
      %1499 = vmatprep.subr.bf16.mxu0 %v1434
      %1500 = vmatpush1.bf16.msra.mxu0 %v1433
      %1501 = vmatprep.subr.bf16.mxu0 %v1432
      %1502 = vmatpush1.bf16.msra.mxu0 %v1431
      %1503 = vmatprep.subr.bf16.mxu0 %v1430
      %1504 = vmatpush1.bf16.msra.mxu0 %v1429
      %1505 = vmatprep.subr.bf16.mxu0 %v1428
      %1506 = vmatpush1.bf16.msra.mxu0 %v1427
      %1507 = vmatprep.subr.bf16.mxu0 %v1458
      %1508 = vmatpush2.bf16.msra.mxu0 %v1457
      %1509 = vmatprep.subr.bf16.mxu0 %v1456
      %1510 = vmatpush2.bf16.msra.mxu0 %v1455
      %1511 = vmatprep.subr.bf16.mxu0 %v1454
      %1512 = vmatpush2.bf16.msra.mxu0 %v1453
      %1513 = vmatprep.subr.bf16.mxu0 %v1452
      %1514 = vmatpush2.bf16.msra.mxu0 %v1451
      %1515 = vmatprep.subr.bf16.mxu0 %v1450
      %1516 = vmatpush2.bf16.msra.mxu0 %v1449
      %1517 = vmatprep.subr.bf16.mxu0 %v1448
      %1518 = vmatpush2.bf16.msra.mxu0 %v1447
      %1519 = vmatprep.subr.bf16.mxu0 %v1446
      %1520 = vmatpush2.bf16.msra.mxu0 %v1445
      %1521 = vmatprep.subr.bf16.mxu0 %v1444
      %1522 = vmatpush2.bf16.msra.mxu0 %v1443
      %1523 = vmatprep.mubr.bf16.mxu0 %v1288
      %1524 = vmatmul.mubr.bf16.gmra.mxu0 %v1287
      %v1525 = vpop.f32.mrf.mxu0
      %v1526 = vadd.f32 %v1324, %v1525
      %v1527 = vpop.f32.mrf.mxu0
      %v1528 = vadd.f32 %v1328, %v1527
      %v1529 = vpop.f32.mrf.mxu0
      %v1530 = vadd.f32 %v1324, %v1529
      %v1531 = vpop.f32.mrf.mxu0
      %v1532 = vadd.f32 %v1328, %v1531
      %1533 = vmatprep.mubr.bf16.mxu0 %v1290
      %1534 = vmatmul.mubr.bf16.gmra.mxu0 %v1289
      %v1535 = vpop.f32.mrf.mxu0
      %v1536 = vadd.f32 %v1324, %v1535
      %v1537 = vpop.f32.mrf.mxu0
      %v1538 = vadd.f32 %v1328, %v1537
      %v1539 = vpop.f32.mrf.mxu0
      %v1540 = vadd.f32 %v1324, %v1539
      %v1541 = vpop.f32.mrf.mxu0
      %v1542 = vadd.f32 %v1328, %v1541
      %1543 = vmatprep.mubr.bf16.mxu0 %v1292
      %1544 = vmatmul.mubr.bf16.gmra.mxu0 %v1291
      %v1545 = vpop.f32.mrf.mxu0
      %v1546 = vadd.f32 %v1324, %v1545
      %v1547 = vpop.f32.mrf.mxu0
      %v1548 = vadd.f32 %v1328, %v1547
      %v1549 = vpop.f32.mrf.mxu0
      %v1550 = vadd.f32 %v1324, %v1549
      %v1551 = vpop.f32.mrf.mxu0
      %v1552 = vadd.f32 %v1328, %v1551
      %1553 = vmatprep.mubr.bf16.mxu0 %v1294
      %1554 = vmatmul.mubr.bf16.gmra.mxu0 %v1293
      %v1555 = vpop.f32.mrf.mxu0
      %v1556 = vadd.f32 %v1324, %v1555
      %v1557 = vpop.f32.mrf.mxu0
      %v1558 = vadd.f32 %v1328, %v1557
      %v1559 = vpop.f32.mrf.mxu0
      %v1560 = vadd.f32 %v1324, %v1559
      %v1561 = vpop.f32.mrf.mxu0
      %v1562 = vadd.f32 %v1328, %v1561
      %1563 = vmatprep.mubr.bf16.mxu0 %v1296
      %1564 = vmatmul.mubr.bf16.gmra.mxu0 %v1295
      %v1565 = vpop.f32.mrf.mxu0
      %v1566 = vadd.f32 %v1324, %v1565
      %v1567 = vpop.f32.mrf.mxu0
      %v1568 = vadd.f32 %v1328, %v1567
      %v1569 = vpop.f32.mrf.mxu0
      %v1570 = vadd.f32 %v1324, %v1569
      %v1571 = vpop.f32.mrf.mxu0
      %v1572 = vadd.f32 %v1328, %v1571
      %1573 = vmatprep.mubr.bf16.mxu0 %v1298
      %1574 = vmatmul.mubr.bf16.gmra.mxu0 %v1297
      %v1575 = vpop.f32.mrf.mxu0
      %v1576 = vadd.f32 %v1324, %v1575
      %v1577 = vpop.f32.mrf.mxu0
      %v1578 = vadd.f32 %v1328, %v1577
      %v1579 = vpop.f32.mrf.mxu0
      %v1580 = vadd.f32 %v1324, %v1579
      %v1581 = vpop.f32.mrf.mxu0
      %v1582 = vadd.f32 %v1328, %v1581
      %1583 = vmatprep.mubr.bf16.mxu0 %v1300
      %1584 = vmatmul.mubr.bf16.gmra.mxu0 %v1299
      %v1585 = vpop.f32.mrf.mxu0
      %v1586 = vadd.f32 %v1324, %v1585
      %v1587 = vpop.f32.mrf.mxu0
      %v1588 = vadd.f32 %v1328, %v1587
      %v1589 = vpop.f32.mrf.mxu0
      %v1590 = vadd.f32 %v1324, %v1589
      %v1591 = vpop.f32.mrf.mxu0
      %v1592 = vadd.f32 %v1328, %v1591
      %1593 = vmatprep.mubr.bf16.mxu0 %v1302
      %1594 = vmatmul.mubr.bf16.gmra.mxu0 %v1301
      %v1595 = vpop.f32.mrf.mxu0
      %v1596 = vadd.f32 %v1324, %v1595
      %v1597 = vpop.f32.mrf.mxu0
      %v1598 = vadd.f32 %v1328, %v1597
      %v1599 = vpop.f32.mrf.mxu0
      %v1600 = vadd.f32 %v1324, %v1599
      %v1601 = vpop.f32.mrf.mxu0
      %v1602 = vadd.f32 %v1328, %v1601
      %1603 = vmatprep.mubr.bf16.mxu0 %v1304
      %1604 = vmatmul.mubr.bf16.gmra.mxu0 %v1303
      %v1605 = vpop.f32.mrf.mxu0
      %v1606 = vadd.f32 %v1324, %v1605
      %v1607 = vpop.f32.mrf.mxu0
      %v1608 = vadd.f32 %v1328, %v1607
      %v1609 = vpop.f32.mrf.mxu0
      %v1610 = vadd.f32 %v1324, %v1609
      %v1611 = vpop.f32.mrf.mxu0
      %v1612 = vadd.f32 %v1328, %v1611
      %1613 = vmatprep.mubr.bf16.mxu0 %v1306
      %1614 = vmatmul.mubr.bf16.gmra.mxu0 %v1305
      %v1615 = vpop.f32.mrf.mxu0
      %v1616 = vadd.f32 %v1324, %v1615
      %v1617 = vpop.f32.mrf.mxu0
      %v1618 = vadd.f32 %v1328, %v1617
      %v1619 = vpop.f32.mrf.mxu0
      %v1620 = vadd.f32 %v1324, %v1619
      %v1621 = vpop.f32.mrf.mxu0
      %v1622 = vadd.f32 %v1328, %v1621
      %1623 = vmatprep.mubr.bf16.mxu0 %v1308
      %1624 = vmatmul.mubr.bf16.gmra.mxu0 %v1307
      %v1625 = vpop.f32.mrf.mxu0
      %v1626 = vadd.f32 %v1324, %v1625
      %v1627 = vpop.f32.mrf.mxu0
      %v1628 = vadd.f32 %v1328, %v1627
      %v1629 = vpop.f32.mrf.mxu0
      %v1630 = vadd.f32 %v1324, %v1629
      %v1631 = vpop.f32.mrf.mxu0
      %v1632 = vadd.f32 %v1328, %v1631
      %1633 = vmatprep.mubr.bf16.mxu0 %v1310
      %1634 = vmatmul.mubr.bf16.gmra.mxu0 %v1309
      %v1635 = vpop.f32.mrf.mxu0
      %v1636 = vadd.f32 %v1324, %v1635
      %v1637 = vpop.f32.mrf.mxu0
      %v1638 = vadd.f32 %v1328, %v1637
      %v1639 = vpop.f32.mrf.mxu0
      %v1640 = vadd.f32 %v1324, %v1639
      %v1641 = vpop.f32.mrf.mxu0
      %v1642 = vadd.f32 %v1328, %v1641
      %1643 = vmatprep.mubr.bf16.mxu0 %v1312
      %1644 = vmatmul.mubr.bf16.gmra.mxu0 %v1311
      %v1645 = vpop.f32.mrf.mxu0
      %v1646 = vadd.f32 %v1324, %v1645
      %v1647 = vpop.f32.mrf.mxu0
      %v1648 = vadd.f32 %v1328, %v1647
      %v1649 = vpop.f32.mrf.mxu0
      %v1650 = vadd.f32 %v1324, %v1649
      %v1651 = vpop.f32.mrf.mxu0
      %v1652 = vadd.f32 %v1328, %v1651
      %1653 = vmatprep.mubr.bf16.mxu0 %v1314
      %1654 = vmatmul.mubr.bf16.gmra.mxu0 %v1313
      %v1655 = vpop.f32.mrf.mxu0
      %v1656 = vadd.f32 %v1324, %v1655
      %v1657 = vpop.f32.mrf.mxu0
      %v1658 = vadd.f32 %v1328, %v1657
      %v1659 = vpop.f32.mrf.mxu0
      %v1660 = vadd.f32 %v1324, %v1659
      %v1661 = vpop.f32.mrf.mxu0
      %v1662 = vadd.f32 %v1328, %v1661
      %1663 = vmatprep.mubr.bf16.mxu0 %v1316
      %1664 = vmatmul.mubr.bf16.gmra.mxu0 %v1315
      %v1665 = vpop.f32.mrf.mxu0
      %v1666 = vadd.f32 %v1324, %v1665
      %v1667 = vpop.f32.mrf.mxu0
      %v1668 = vadd.f32 %v1328, %v1667
      %v1669 = vpop.f32.mrf.mxu0
      %v1670 = vadd.f32 %v1324, %v1669
      %v1671 = vpop.f32.mrf.mxu0
      %v1672 = vadd.f32 %v1328, %v1671
      %1673 = vmatprep.mubr.bf16.mxu0 %v1318
      %1674 = vmatmul.mubr.bf16.gmra.mxu0 %v1317
      %v1675 = vpop.f32.mrf.mxu0
      %v1676 = vadd.f32 %v1324, %v1675
      %v1677 = vpop.f32.mrf.mxu0
      %v1678 = vadd.f32 %v1328, %v1677
      %v1679 = vpop.f32.mrf.mxu0
      %v1680 = vadd.f32 %v1324, %v1679
      %v1681 = vpop.f32.mrf.mxu0
      %v1682 = vadd.f32 %v1328, %v1681
      %1683 = vdwg.mxu0
      %v1684 = vmax.f32 %v1526, 0.0
      %v1685 = vmax.f32 %v1528, 0.0
      %v1686 = vmax.f32 %v1530, 0.0
      %v1687 = vmax.f32 %v1532, 0.0
      %v1688 = vmax.f32 %v1536, 0.0
      %v1689 = vmax.f32 %v1538, 0.0
      %v1690 = vmax.f32 %v1540, 0.0
      %v1691 = vmax.f32 %v1542, 0.0
      %v1692 = vmax.f32 %v1546, 0.0
      %v1693 = vmax.f32 %v1548, 0.0
      %v1694 = vmax.f32 %v1550, 0.0
      %v1695 = vmax.f32 %v1552, 0.0
      %v1696 = vmax.f32 %v1556, 0.0
      %v1697 = vmax.f32 %v1558, 0.0
      %v1698 = vmax.f32 %v1560, 0.0
      %v1699 = vmax.f32 %v1562, 0.0
      %v1700 = vmax.f32 %v1566, 0.0
      %v1701 = vmax.f32 %v1568, 0.0
      %v1702 = vmax.f32 %v1570, 0.0
      %v1703 = vmax.f32 %v1572, 0.0
      %v1704 = vmax.f32 %v1576, 0.0
      %v1705 = vmax.f32 %v1578, 0.0
      %v1706 = vmax.f32 %v1580, 0.0
      %v1707 = vmax.f32 %v1582, 0.0
      %v1708 = vmax.f32 %v1586, 0.0
      %v1709 = vmax.f32 %v1588, 0.0
      %v1710 = vmax.f32 %v1590, 0.0
      %v1711 = vmax.f32 %v1592, 0.0
      %v1712 = vmax.f32 %v1596, 0.0
      %v1713 = vmax.f32 %v1598, 0.0
      %v1714 = vmax.f32 %v1600, 0.0
      %v1715 = vmax.f32 %v1602, 0.0
      %v1716 = vmax.f32 %v1606, 0.0
      %v1717 = vmax.f32 %v1608, 0.0
      %v1718 = vmax.f32 %v1610, 0.0
      %v1719 = vmax.f32 %v1612, 0.0
      %v1720 = vmax.f32 %v1616, 0.0
      %v1721 = vmax.f32 %v1618, 0.0
      %v1722 = vmax.f32 %v1620, 0.0
      %v1723 = vmax.f32 %v1622, 0.0
      %v1724 = vmax.f32 %v1626, 0.0
      %v1725 = vmax.f32 %v1628, 0.0
      %v1726 = vmax.f32 %v1630, 0.0
      %v1727 = vmax.f32 %v1632, 0.0
      %v1728 = vmax.f32 %v1636, 0.0
      %v1729 = vmax.f32 %v1638, 0.0
      %v1730 = vmax.f32 %v1640, 0.0
      %v1731 = vmax.f32 %v1642, 0.0
      %v1732 = vmax.f32 %v1646, 0.0
      %v1733 = vmax.f32 %v1648, 0.0
      %v1734 = vmax.f32 %v1650, 0.0
      %v1735 = vmax.f32 %v1652, 0.0
      %v1736 = vmax.f32 %v1656, 0.0
      %v1737 = vmax.f32 %v1658, 0.0
      %v1738 = vmax.f32 %v1660, 0.0
      %v1739 = vmax.f32 %v1662, 0.0
      %v1740 = vmax.f32 %v1666, 0.0
      %v1741 = vmax.f32 %v1668, 0.0
      %v1742 = vmax.f32 %v1670, 0.0
      %v1743 = vmax.f32 %v1672, 0.0
      %v1744 = vmax.f32 %v1676, 0.0
      %v1745 = vmax.f32 %v1678, 0.0
      %v1746 = vmax.f32 %v1680, 0.0
      %v1747 = vmax.f32 %v1682, 0.0
      %s1748 = scalar_lea.vmem %s3, 256
      %v1749 = vld [vmem:[%s1748] sm:$0xff]
      %v1750 = vld [vmem:[%s1748 + $0x8] sm:$0xff]
      %v1751 = vld [vmem:[%s1748 + $0x10] sm:$0xff]
      %v1752 = vld [vmem:[%s1748 + $0x18] sm:$0xff]
      %v1753 = vld [vmem:[%s1748 + $0x20] sm:$0xff]
      %v1754 = vld [vmem:[%s1748 + $0x28] sm:$0xff]
      %v1755 = vld [vmem:[%s1748 + $0x30] sm:$0xff]
      %v1756 = vld [vmem:[%s1748 + $0x38] sm:$0xff]
      %v1757 = vld [vmem:[%s1748 + $0x40] sm:$0xff]
      %v1758 = vld [vmem:[%s1748 + $0x48] sm:$0xff]
      %v1759 = vld [vmem:[%s1748 + $0x50] sm:$0xff]
      %v1760 = vld [vmem:[%s1748 + $0x58] sm:$0xff]
      %v1761 = vld [vmem:[%s1748 + $0x60] sm:$0xff]
      %v1762 = vld [vmem:[%s1748 + $0x68] sm:$0xff]
      %v1763 = vld [vmem:[%s1748 + $0x70] sm:$0xff]
      %v1764 = vld [vmem:[%s1748 + $0x78] sm:$0xff]
      %v1765 = vld [vmem:[%s1748 + $0x80] sm:$0xff]
      %v1766 = vld [vmem:[%s1748 + $0x88] sm:$0xff]
      %v1767 = vld [vmem:[%s1748 + $0x90] sm:$0xff]
      %v1768 = vld [vmem:[%s1748 + $0x98] sm:$0xff]
      %v1769 = vld [vmem:[%s1748 + $0xa0] sm:$0xff]
      %v1770 = vld [vmem:[%s1748 + $0xa8] sm:$0xff]
      %v1771 = vld [vmem:[%s1748 + $0xb0] sm:$0xff]
      %v1772 = vld [vmem:[%s1748 + $0xb8] sm:$0xff]
      %v1773 = vld [vmem:[%s1748 + $0xc0] sm:$0xff]
      %v1774 = vld [vmem:[%s1748 + $0xc8] sm:$0xff]
      %v1775 = vld [vmem:[%s1748 + $0xd0] sm:$0xff]
      %v1776 = vld [vmem:[%s1748 + $0xd8] sm:$0xff]
      %v1777 = vld [vmem:[%s1748 + $0xe0] sm:$0xff]
      %v1778 = vld [vmem:[%s1748 + $0xe8] sm:$0xff]
      %v1779 = vld [vmem:[%s1748 + $0xf0] sm:$0xff]
      %v1780 = vld [vmem:[%s1748 + $0xf8] sm:$0xff]
      %v1781 = vpack.c.bf16 %v1686, %v1684
      %v1782 = vpack.c.bf16 %v1687, %v1685
      %v1783 = vpack.c.bf16 %v1690, %v1688
      %v1784 = vpack.c.bf16 %v1691, %v1689
      %v1785 = vpack.c.bf16 %v1694, %v1692
      %v1786 = vpack.c.bf16 %v1695, %v1693
      %v1787 = vpack.c.bf16 %v1698, %v1696
      %v1788 = vpack.c.bf16 %v1699, %v1697
      %v1789 = vpack.c.bf16 %v1702, %v1700
      %v1790 = vpack.c.bf16 %v1703, %v1701
      %v1791 = vpack.c.bf16 %v1706, %v1704
      %v1792 = vpack.c.bf16 %v1707, %v1705
      %v1793 = vpack.c.bf16 %v1710, %v1708
      %v1794 = vpack.c.bf16 %v1711, %v1709
      %v1795 = vpack.c.bf16 %v1714, %v1712
      %v1796 = vpack.c.bf16 %v1715, %v1713
      %v1797 = vpack.c.bf16 %v1718, %v1716
      %v1798 = vpack.c.bf16 %v1719, %v1717
      %v1799 = vpack.c.bf16 %v1722, %v1720
      %v1800 = vpack.c.bf16 %v1723, %v1721
      %v1801 = vpack.c.bf16 %v1726, %v1724
      %v1802 = vpack.c.bf16 %v1727, %v1725
      %v1803 = vpack.c.bf16 %v1730, %v1728
      %v1804 = vpack.c.bf16 %v1731, %v1729
      %v1805 = vpack.c.bf16 %v1734, %v1732
      %v1806 = vpack.c.bf16 %v1735, %v1733
      %v1807 = vpack.c.bf16 %v1738, %v1736
      %v1808 = vpack.c.bf16 %v1739, %v1737
      %v1809 = vpack.c.bf16 %v1742, %v1740
      %v1810 = vpack.c.bf16 %v1743, %v1741
      %v1811 = vpack.c.bf16 %v1746, %v1744
      %v1812 = vpack.c.bf16 %v1747, %v1745
      %s1813 = scalar_lea.vmem %s4, 1
      %v1814 = vld [vmem:[%s1813] ss:$8 sm:$0x3]
      %v1816 = vlaneseq
      %v1817 = vshrl.u32 %v1816, 7
      %v1818 = vsub.s32 0, %v1817
      %v1819 = vrot.slane %v1814, %v1818
      %v1820 = vlaneseq
      %v1821 = vshrl.u32 %v1820, 7
      %v1822 = vsub.s32 1, %v1821
      %v1823 = vrot.slane %v1814, %v1822
      %v1858 = vunpack.c.l.b16 %v1749
      %v1859 = vunpack.c.h.b16 %v1749
      %v1860 = vunpack.c.l.b16 %v1750
      %v1861 = vunpack.c.h.b16 %v1750
      %v1862 = vunpack.c.l.b16 %v1751
      %v1863 = vunpack.c.h.b16 %v1751
      %v1864 = vunpack.c.l.b16 %v1752
      %v1865 = vunpack.c.h.b16 %v1752
      %v1866 = vunpack.c.l.b16 %v1753
      %v1867 = vunpack.c.h.b16 %v1753
      %v1868 = vunpack.c.l.b16 %v1754
      %v1869 = vunpack.c.h.b16 %v1754
      %v1870 = vunpack.c.l.b16 %v1755
      %v1871 = vunpack.c.h.b16 %v1755
      %v1872 = vunpack.c.l.b16 %v1756
      %v1873 = vunpack.c.h.b16 %v1756
      %v1874 = vunpack.c.l.b16 %v1757
      %v1875 = vunpack.c.h.b16 %v1757
      %v1876 = vunpack.c.l.b16 %v1758
      %v1877 = vunpack.c.h.b16 %v1758
      %v1878 = vunpack.c.l.b16 %v1759
      %v1879 = vunpack.c.h.b16 %v1759
      %v1880 = vunpack.c.l.b16 %v1760
      %v1881 = vunpack.c.h.b16 %v1760
      %v1882 = vunpack.c.l.b16 %v1761
      %v1883 = vunpack.c.h.b16 %v1761
      %v1884 = vunpack.c.l.b16 %v1762
      %v1885 = vunpack.c.h.b16 %v1762
      %v1886 = vunpack.c.l.b16 %v1763
      %v1887 = vunpack.c.h.b16 %v1763
      %v1888 = vunpack.c.l.b16 %v1764
      %v1889 = vunpack.c.h.b16 %v1764
      %v1890 = vunpack.c.l.b16 %v1765
      %v1891 = vunpack.c.h.b16 %v1765
      %v1892 = vunpack.c.l.b16 %v1766
      %v1893 = vunpack.c.h.b16 %v1766
      %v1894 = vunpack.c.l.b16 %v1767
      %v1895 = vunpack.c.h.b16 %v1767
      %v1896 = vunpack.c.l.b16 %v1768
      %v1897 = vunpack.c.h.b16 %v1768
      %v1898 = vunpack.c.l.b16 %v1769
      %v1899 = vunpack.c.h.b16 %v1769
      %v1900 = vunpack.c.l.b16 %v1770
      %v1901 = vunpack.c.h.b16 %v1770
      %v1902 = vunpack.c.l.b16 %v1771
      %v1903 = vunpack.c.h.b16 %v1771
      %v1904 = vunpack.c.l.b16 %v1772
      %v1905 = vunpack.c.h.b16 %v1772
      %v1906 = vunpack.c.l.b16 %v1773
      %v1907 = vunpack.c.h.b16 %v1773
      %v1908 = vunpack.c.l.b16 %v1774
      %v1909 = vunpack.c.h.b16 %v1774
      %v1910 = vunpack.c.l.b16 %v1775
      %v1911 = vunpack.c.h.b16 %v1775
      %v1912 = vunpack.c.l.b16 %v1776
      %v1913 = vunpack.c.h.b16 %v1776
      %v1914 = vunpack.c.l.b16 %v1777
      %v1915 = vunpack.c.h.b16 %v1777
      %v1916 = vunpack.c.l.b16 %v1778
      %v1917 = vunpack.c.h.b16 %v1778
      %v1918 = vunpack.c.l.b16 %v1779
      %v1919 = vunpack.c.h.b16 %v1779
      %v1920 = vunpack.c.l.b16 %v1780
      %v1921 = vunpack.c.h.b16 %v1780
      %v1922 = vpack.c.b16 %v1860, %v1858
      %v1923 = vpack.c.b16 %v1861, %v1859
      %v1924 = vpack.c.b16 %v1864, %v1862
      %v1925 = vpack.c.b16 %v1865, %v1863
      %v1926 = vpack.c.b16 %v1868, %v1866
      %v1927 = vpack.c.b16 %v1869, %v1867
      %v1928 = vpack.c.b16 %v1872, %v1870
      %v1929 = vpack.c.b16 %v1873, %v1871
      %v1930 = vpack.c.b16 %v1876, %v1874
      %v1931 = vpack.c.b16 %v1877, %v1875
      %v1932 = vpack.c.b16 %v1880, %v1878
      %v1933 = vpack.c.b16 %v1881, %v1879
      %v1934 = vpack.c.b16 %v1884, %v1882
      %v1935 = vpack.c.b16 %v1885, %v1883
      %v1936 = vpack.c.b16 %v1888, %v1886
      %v1937 = vpack.c.b16 %v1889, %v1887
      %v1938 = vpack.c.b16 %v1892, %v1890
      %v1939 = vpack.c.b16 %v1893, %v1891
      %v1940 = vpack.c.b16 %v1896, %v1894
      %v1941 = vpack.c.b16 %v1897, %v1895
      %v1942 = vpack.c.b16 %v1900, %v1898
      %v1943 = vpack.c.b16 %v1901, %v1899
      %v1944 = vpack.c.b16 %v1904, %v1902
      %v1945 = vpack.c.b16 %v1905, %v1903
      %v1946 = vpack.c.b16 %v1908, %v1906
      %v1947 = vpack.c.b16 %v1909, %v1907
      %v1948 = vpack.c.b16 %v1912, %v1910
      %v1949 = vpack.c.b16 %v1913, %v1911
      %v1950 = vpack.c.b16 %v1916, %v1914
      %v1951 = vpack.c.b16 %v1917, %v1915
      %v1952 = vpack.c.b16 %v1920, %v1918
      %v1953 = vpack.c.b16 %v1921, %v1919
      %1986 = vmatprep.subr.bf16.mxu0 %v1937
      %1987 = vmatpush1.bf16.msra.mxu0 %v1936
      %1988 = vmatprep.subr.bf16.mxu0 %v1935
      %1989 = vmatpush1.bf16.msra.mxu0 %v1934
      %1990 = vmatprep.subr.bf16.mxu0 %v1933
      %1991 = vmatpush1.bf16.msra.mxu0 %v1932
      %1992 = vmatprep.subr.bf16.mxu0 %v1931
      %1993 = vmatpush1.bf16.msra.mxu0 %v1930
      %1994 = vmatprep.subr.bf16.mxu0 %v1929
      %1995 = vmatpush1.bf16.msra.mxu0 %v1928
      %1996 = vmatprep.subr.bf16.mxu0 %v1927
      %1997 = vmatpush1.bf16.msra.mxu0 %v1926
      %1998 = vmatprep.subr.bf16.mxu0 %v1925
      %1999 = vmatpush1.bf16.msra.mxu0 %v1924
      %2000 = vmatprep.subr.bf16.mxu0 %v1923
      %2001 = vmatpush1.bf16.msra.mxu0 %v1922
      %2002 = vmatprep.subr.bf16.mxu0 %v1953
      %2003 = vmatpush2.bf16.msra.mxu0 %v1952
      %2004 = vmatprep.subr.bf16.mxu0 %v1951
      %2005 = vmatpush2.bf16.msra.mxu0 %v1950
      %2006 = vmatprep.subr.bf16.mxu0 %v1949
      %2007 = vmatpush2.bf16.msra.mxu0 %v1948
      %2008 = vmatprep.subr.bf16.mxu0 %v1947
      %2009 = vmatpush2.bf16.msra.mxu0 %v1946
      %2010 = vmatprep.subr.bf16.mxu0 %v1945
      %2011 = vmatpush2.bf16.msra.mxu0 %v1944
      %2012 = vmatprep.subr.bf16.mxu0 %v1943
      %2013 = vmatpush2.bf16.msra.mxu0 %v1942
      %2014 = vmatprep.subr.bf16.mxu0 %v1941
      %2015 = vmatpush2.bf16.msra.mxu0 %v1940
      %2016 = vmatprep.subr.bf16.mxu0 %v1939
      %2017 = vmatpush2.bf16.msra.mxu0 %v1938
      %2018 = vmatprep.mubr.bf16.mxu0 %v1782
      %2019 = vmatmul.mubr.bf16.gmra.mxu0 %v1781
      %v2020 = vpop.f32.mrf.mxu0
      %v2021 = vadd.f32 %v1819, %v2020
      %v2022 = vpop.f32.mrf.mxu0
      %v2023 = vadd.f32 %v1823, %v2022
      %v2024 = vpop.f32.mrf.mxu0
      %v2025 = vadd.f32 %v1819, %v2024
      %v2026 = vpop.f32.mrf.mxu0
      %v2027 = vadd.f32 %v1823, %v2026
      %2028 = vmatprep.mubr.bf16.mxu0 %v1784
      %2029 = vmatmul.mubr.bf16.gmra.mxu0 %v1783
      %v2030 = vpop.f32.mrf.mxu0
      %v2031 = vadd.f32 %v1819, %v2030
      %v2032 = vpop.f32.mrf.mxu0
      %v2033 = vadd.f32 %v1823, %v2032
      %v2034 = vpop.f32.mrf.mxu0
      %v2035 = vadd.f32 %v1819, %v2034
      %v2036 = vpop.f32.mrf.mxu0
      %v2037 = vadd.f32 %v1823, %v2036
      %2038 = vmatprep.mubr.bf16.mxu0 %v1786
      %2039 = vmatmul.mubr.bf16.gmra.mxu0 %v1785
      %v2040 = vpop.f32.mrf.mxu0
      %v2041 = vadd.f32 %v1819, %v2040
      %v2042 = vpop.f32.mrf.mxu0
      %v2043 = vadd.f32 %v1823, %v2042
      %v2044 = vpop.f32.mrf.mxu0
      %v2045 = vadd.f32 %v1819, %v2044
      %v2046 = vpop.f32.mrf.mxu0
      %v2047 = vadd.f32 %v1823, %v2046
      %2048 = vmatprep.mubr.bf16.mxu0 %v1788
      %2049 = vmatmul.mubr.bf16.gmra.mxu0 %v1787
      %v2050 = vpop.f32.mrf.mxu0
      %v2051 = vadd.f32 %v1819, %v2050
      %v2052 = vpop.f32.mrf.mxu0
      %v2053 = vadd.f32 %v1823, %v2052
      %v2054 = vpop.f32.mrf.mxu0
      %v2055 = vadd.f32 %v1819, %v2054
      %v2056 = vpop.f32.mrf.mxu0
      %v2057 = vadd.f32 %v1823, %v2056
      %2058 = vmatprep.mubr.bf16.mxu0 %v1790
      %2059 = vmatmul.mubr.bf16.gmra.mxu0 %v1789
      %v2060 = vpop.f32.mrf.mxu0
      %v2061 = vadd.f32 %v1819, %v2060
      %v2062 = vpop.f32.mrf.mxu0
      %v2063 = vadd.f32 %v1823, %v2062
      %v2064 = vpop.f32.mrf.mxu0
      %v2065 = vadd.f32 %v1819, %v2064
      %v2066 = vpop.f32.mrf.mxu0
      %v2067 = vadd.f32 %v1823, %v2066
      %2068 = vmatprep.mubr.bf16.mxu0 %v1792
      %2069 = vmatmul.mubr.bf16.gmra.mxu0 %v1791
      %v2070 = vpop.f32.mrf.mxu0
      %v2071 = vadd.f32 %v1819, %v2070
      %v2072 = vpop.f32.mrf.mxu0
      %v2073 = vadd.f32 %v1823, %v2072
      %v2074 = vpop.f32.mrf.mxu0
      %v2075 = vadd.f32 %v1819, %v2074
      %v2076 = vpop.f32.mrf.mxu0
      %v2077 = vadd.f32 %v1823, %v2076
      %2078 = vmatprep.mubr.bf16.mxu0 %v1794
      %2079 = vmatmul.mubr.bf16.gmra.mxu0 %v1793
      %v2080 = vpop.f32.mrf.mxu0
      %v2081 = vadd.f32 %v1819, %v2080
      %v2082 = vpop.f32.mrf.mxu0
      %v2083 = vadd.f32 %v1823, %v2082
      %v2084 = vpop.f32.mrf.mxu0
      %v2085 = vadd.f32 %v1819, %v2084
      %v2086 = vpop.f32.mrf.mxu0
      %v2087 = vadd.f32 %v1823, %v2086
      %2088 = vmatprep.mubr.bf16.mxu0 %v1796
      %2089 = vmatmul.mubr.bf16.gmra.mxu0 %v1795
      %v2090 = vpop.f32.mrf.mxu0
      %v2091 = vadd.f32 %v1819, %v2090
      %v2092 = vpop.f32.mrf.mxu0
      %v2093 = vadd.f32 %v1823, %v2092
      %v2094 = vpop.f32.mrf.mxu0
      %v2095 = vadd.f32 %v1819, %v2094
      %v2096 = vpop.f32.mrf.mxu0
      %v2097 = vadd.f32 %v1823, %v2096
      %2098 = vmatprep.mubr.bf16.mxu0 %v1798
      %2099 = vmatmul.mubr.bf16.gmra.mxu0 %v1797
      %v2100 = vpop.f32.mrf.mxu0
      %v2101 = vadd.f32 %v1819, %v2100
      %v2102 = vpop.f32.mrf.mxu0
      %v2103 = vadd.f32 %v1823, %v2102
      %v2104 = vpop.f32.mrf.mxu0
      %v2105 = vadd.f32 %v1819, %v2104
      %v2106 = vpop.f32.mrf.mxu0
      %v2107 = vadd.f32 %v1823, %v2106
      %2108 = vmatprep.mubr.bf16.mxu0 %v1800
      %2109 = vmatmul.mubr.bf16.gmra.mxu0 %v1799
      %v2110 = vpop.f32.mrf.mxu0
      %v2111 = vadd.f32 %v1819, %v2110
      %v2112 = vpop.f32.mrf.mxu0
      %v2113 = vadd.f32 %v1823, %v2112
      %v2114 = vpop.f32.mrf.mxu0
      %v2115 = vadd.f32 %v1819, %v2114
      %v2116 = vpop.f32.mrf.mxu0
      %v2117 = vadd.f32 %v1823, %v2116
      %2118 = vmatprep.mubr.bf16.mxu0 %v1802
      %2119 = vmatmul.mubr.bf16.gmra.mxu0 %v1801
      %v2120 = vpop.f32.mrf.mxu0
      %v2121 = vadd.f32 %v1819, %v2120
      %v2122 = vpop.f32.mrf.mxu0
      %v2123 = vadd.f32 %v1823, %v2122
      %v2124 = vpop.f32.mrf.mxu0
      %v2125 = vadd.f32 %v1819, %v2124
      %v2126 = vpop.f32.mrf.mxu0
      %v2127 = vadd.f32 %v1823, %v2126
      %2128 = vmatprep.mubr.bf16.mxu0 %v1804
      %2129 = vmatmul.mubr.bf16.gmra.mxu0 %v1803
      %v2130 = vpop.f32.mrf.mxu0
      %v2131 = vadd.f32 %v1819, %v2130
      %v2132 = vpop.f32.mrf.mxu0
      %v2133 = vadd.f32 %v1823, %v2132
      %v2134 = vpop.f32.mrf.mxu0
      %v2135 = vadd.f32 %v1819, %v2134
      %v2136 = vpop.f32.mrf.mxu0
      %v2137 = vadd.f32 %v1823, %v2136
      %2138 = vmatprep.mubr.bf16.mxu0 %v1806
      %2139 = vmatmul.mubr.bf16.gmra.mxu0 %v1805
      %v2140 = vpop.f32.mrf.mxu0
      %v2141 = vadd.f32 %v1819, %v2140
      %v2142 = vpop.f32.mrf.mxu0
      %v2143 = vadd.f32 %v1823, %v2142
      %v2144 = vpop.f32.mrf.mxu0
      %v2145 = vadd.f32 %v1819, %v2144
      %v2146 = vpop.f32.mrf.mxu0
      %v2147 = vadd.f32 %v1823, %v2146
      %2148 = vmatprep.mubr.bf16.mxu0 %v1808
      %2149 = vmatmul.mubr.bf16.gmra.mxu0 %v1807
      %v2150 = vpop.f32.mrf.mxu0
      %v2151 = vadd.f32 %v1819, %v2150
      %v2152 = vpop.f32.mrf.mxu0
      %v2153 = vadd.f32 %v1823, %v2152
      %v2154 = vpop.f32.mrf.mxu0
      %v2155 = vadd.f32 %v1819, %v2154
      %v2156 = vpop.f32.mrf.mxu0
      %v2157 = vadd.f32 %v1823, %v2156
      %2158 = vmatprep.mubr.bf16.mxu0 %v1810
      %2159 = vmatmul.mubr.bf16.gmra.mxu0 %v1809
      %v2160 = vpop.f32.mrf.mxu0
      %v2161 = vadd.f32 %v1819, %v2160
      %v2162 = vpop.f32.mrf.mxu0
      %v2163 = vadd.f32 %v1823, %v2162
      %v2164 = vpop.f32.mrf.mxu0
      %v2165 = vadd.f32 %v1819, %v2164
      %v2166 = vpop.f32.mrf.mxu0
      %v2167 = vadd.f32 %v1823, %v2166
      %2168 = vmatprep.mubr.bf16.mxu0 %v1812
      %2169 = vmatmul.mubr.bf16.gmra.mxu0 %v1811
      %v2170 = vpop.f32.mrf.mxu0
      %v2171 = vadd.f32 %v1819, %v2170
      %v2172 = vpop.f32.mrf.mxu0
      %v2173 = vadd.f32 %v1823, %v2172
      %v2174 = vpop.f32.mrf.mxu0
      %v2175 = vadd.f32 %v1819, %v2174
      %v2176 = vpop.f32.mrf.mxu0
      %v2177 = vadd.f32 %v1823, %v2176
      %2178 = vdwg.mxu0
      %v2179 = vmax.f32 %v2021, 0.0
      %v2180 = vmax.f32 %v2023, 0.0
      %v2181 = vmax.f32 %v2025, 0.0
      %v2182 = vmax.f32 %v2027, 0.0
      %v2183 = vmax.f32 %v2031, 0.0
      %v2184 = vmax.f32 %v2033, 0.0
      %v2185 = vmax.f32 %v2035, 0.0
      %v2186 = vmax.f32 %v2037, 0.0
      %v2187 = vmax.f32 %v2041, 0.0
      %v2188 = vmax.f32 %v2043, 0.0
      %v2189 = vmax.f32 %v2045, 0.0
      %v2190 = vmax.f32 %v2047, 0.0
      %v2191 = vmax.f32 %v2051, 0.0
      %v2192 = vmax.f32 %v2053, 0.0
      %v2193 = vmax.f32 %v2055, 0.0
      %v2194 = vmax.f32 %v2057, 0.0
      %v2195 = vmax.f32 %v2061, 0.0
      %v2196 = vmax.f32 %v2063, 0.0
      %v2197 = vmax.f32 %v2065, 0.0
      %v2198 = vmax.f32 %v2067, 0.0
      %v2199 = vmax.f32 %v2071, 0.0
      %v2200 = vmax.f32 %v2073, 0.0
      %v2201 = vmax.f32 %v2075, 0.0
      %v2202 = vmax.f32 %v2077, 0.0
      %v2203 = vmax.f32 %v2081, 0.0
      %v2204 = vmax.f32 %v2083, 0.0
      %v2205 = vmax.f32 %v2085, 0.0
      %v2206 = vmax.f32 %v2087, 0.0
      %v2207 = vmax.f32 %v2091, 0.0
      %v2208 = vmax.f32 %v2093, 0.0
      %v2209 = vmax.f32 %v2095, 0.0
      %v2210 = vmax.f32 %v2097, 0.0
      %v2211 = vmax.f32 %v2101, 0.0
      %v2212 = vmax.f32 %v2103, 0.0
      %v2213 = vmax.f32 %v2105, 0.0
      %v2214 = vmax.f32 %v2107, 0.0
      %v2215 = vmax.f32 %v2111, 0.0
      %v2216 = vmax.f32 %v2113, 0.0
      %v2217 = vmax.f32 %v2115, 0.0
      %v2218 = vmax.f32 %v2117, 0.0
      %v2219 = vmax.f32 %v2121, 0.0
      %v2220 = vmax.f32 %v2123, 0.0
      %v2221 = vmax.f32 %v2125, 0.0
      %v2222 = vmax.f32 %v2127, 0.0
      %v2223 = vmax.f32 %v2131, 0.0
      %v2224 = vmax.f32 %v2133, 0.0
      %v2225 = vmax.f32 %v2135, 0.0
      %v2226 = vmax.f32 %v2137, 0.0
      %v2227 = vmax.f32 %v2141, 0.0
      %v2228 = vmax.f32 %v2143, 0.0
      %v2229 = vmax.f32 %v2145, 0.0
      %v2230 = vmax.f32 %v2147, 0.0
      %v2231 = vmax.f32 %v2151, 0.0
      %v2232 = vmax.f32 %v2153, 0.0
      %v2233 = vmax.f32 %v2155, 0.0
      %v2234 = vmax.f32 %v2157, 0.0
      %v2235 = vmax.f32 %v2161, 0.0
      %v2236 = vmax.f32 %v2163, 0.0
      %v2237 = vmax.f32 %v2165, 0.0
      %v2238 = vmax.f32 %v2167, 0.0
      %v2239 = vmax.f32 %v2171, 0.0
      %v2240 = vmax.f32 %v2173, 0.0
      %v2241 = vmax.f32 %v2175, 0.0
      %v2242 = vmax.f32 %v2177, 0.0
      %s2243 = scalar_lea.vmem %s3, 512
      %v2244 = vld [vmem:[%s2243] sm:$0xff]
      %v2245 = vld [vmem:[%s2243 + $0x8] sm:$0xff]
      %v2246 = vld [vmem:[%s2243 + $0x10] sm:$0xff]
      %v2247 = vld [vmem:[%s2243 + $0x18] sm:$0xff]
      %v2248 = vld [vmem:[%s2243 + $0x20] sm:$0xff]
      %v2249 = vld [vmem:[%s2243 + $0x28] sm:$0xff]
      %v2250 = vld [vmem:[%s2243 + $0x30] sm:$0xff]
      %v2251 = vld [vmem:[%s2243 + $0x38] sm:$0xff]
      %v2252 = vld [vmem:[%s2243 + $0x40] sm:$0xff]
      %v2253 = vld [vmem:[%s2243 + $0x48] sm:$0xff]
      %v2254 = vld [vmem:[%s2243 + $0x50] sm:$0xff]
      %v2255 = vld [vmem:[%s2243 + $0x58] sm:$0xff]
      %v2256 = vld [vmem:[%s2243 + $0x60] sm:$0xff]
      %v2257 = vld [vmem:[%s2243 + $0x68] sm:$0xff]
      %v2258 = vld [vmem:[%s2243 + $0x70] sm:$0xff]
      %v2259 = vld [vmem:[%s2243 + $0x78] sm:$0xff]
      %v2260 = vld [vmem:[%s2243 + $0x80] sm:$0xff]
      %v2261 = vld [vmem:[%s2243 + $0x88] sm:$0xff]
      %v2262 = vld [vmem:[%s2243 + $0x90] sm:$0xff]
      %v2263 = vld [vmem:[%s2243 + $0x98] sm:$0xff]
      %v2264 = vld [vmem:[%s2243 + $0xa0] sm:$0xff]
      %v2265 = vld [vmem:[%s2243 + $0xa8] sm:$0xff]
      %v2266 = vld [vmem:[%s2243 + $0xb0] sm:$0xff]
      %v2267 = vld [vmem:[%s2243 + $0xb8] sm:$0xff]
      %v2268 = vld [vmem:[%s2243 + $0xc0] sm:$0xff]
      %v2269 = vld [vmem:[%s2243 + $0xc8] sm:$0xff]
      %v2270 = vld [vmem:[%s2243 + $0xd0] sm:$0xff]
      %v2271 = vld [vmem:[%s2243 + $0xd8] sm:$0xff]
      %v2272 = vld [vmem:[%s2243 + $0xe0] sm:$0xff]
      %v2273 = vld [vmem:[%s2243 + $0xe8] sm:$0xff]
      %v2274 = vld [vmem:[%s2243 + $0xf0] sm:$0xff]
      %v2275 = vld [vmem:[%s2243 + $0xf8] sm:$0xff]
      %v2276 = vpack.c.bf16 %v2181, %v2179
      %v2277 = vpack.c.bf16 %v2182, %v2180
      %v2278 = vpack.c.bf16 %v2185, %v2183
      %v2279 = vpack.c.bf16 %v2186, %v2184
      %v2280 = vpack.c.bf16 %v2189, %v2187
      %v2281 = vpack.c.bf16 %v2190, %v2188
      %v2282 = vpack.c.bf16 %v2193, %v2191
      %v2283 = vpack.c.bf16 %v2194, %v2192
      %v2284 = vpack.c.bf16 %v2197, %v2195
      %v2285 = vpack.c.bf16 %v2198, %v2196
      %v2286 = vpack.c.bf16 %v2201, %v2199
      %v2287 = vpack.c.bf16 %v2202, %v2200
      %v2288 = vpack.c.bf16 %v2205, %v2203
      %v2289 = vpack.c.bf16 %v2206, %v2204
      %v2290 = vpack.c.bf16 %v2209, %v2207
      %v2291 = vpack.c.bf16 %v2210, %v2208
      %v2292 = vpack.c.bf16 %v2213, %v2211
      %v2293 = vpack.c.bf16 %v2214, %v2212
      %v2294 = vpack.c.bf16 %v2217, %v2215
      %v2295 = vpack.c.bf16 %v2218, %v2216
      %v2296 = vpack.c.bf16 %v2221, %v2219
      %v2297 = vpack.c.bf16 %v2222, %v2220
      %v2298 = vpack.c.bf16 %v2225, %v2223
      %v2299 = vpack.c.bf16 %v2226, %v2224
      %v2300 = vpack.c.bf16 %v2229, %v2227
      %v2301 = vpack.c.bf16 %v2230, %v2228
      %v2302 = vpack.c.bf16 %v2233, %v2231
      %v2303 = vpack.c.bf16 %v2234, %v2232
      %v2304 = vpack.c.bf16 %v2237, %v2235
      %v2305 = vpack.c.bf16 %v2238, %v2236
      %v2306 = vpack.c.bf16 %v2241, %v2239
      %v2307 = vpack.c.bf16 %v2242, %v2240
      %s2308 = scalar_lea.vmem %s4, 2
      %v2309 = vld [vmem:[%s2308] ss:$8 sm:$0x3]
      %v2311 = vlaneseq
      %v2312 = vshrl.u32 %v2311, 7
      %v2313 = vsub.s32 0, %v2312
      %v2314 = vrot.slane %v2309, %v2313
      %v2315 = vlaneseq
      %v2316 = vshrl.u32 %v2315, 7
      %v2317 = vsub.s32 1, %v2316
      %v2318 = vrot.slane %v2309, %v2317
      %v2353 = vunpack.c.l.b16 %v2244
      %v2354 = vunpack.c.h.b16 %v2244
      %v2355 = vunpack.c.l.b16 %v2245
      %v2356 = vunpack.c.h.b16 %v2245
      %v2357 = vunpack.c.l.b16 %v2246
      %v2358 = vunpack.c.h.b16 %v2246
      %v2359 = vunpack.c.l.b16 %v2247
      %v2360 = vunpack.c.h.b16 %v2247
      %v2361 = vunpack.c.l.b16 %v2248
      %v2362 = vunpack.c.h.b16 %v2248
      %v2363 = vunpack.c.l.b16 %v2249
      %v2364 = vunpack.c.h.b16 %v2249
      %v2365 = vunpack.c.l.b16 %v2250
      %v2366 = vunpack.c.h.b16 %v2250
      %v2367 = vunpack.c.l.b16 %v2251
      %v2368 = vunpack.c.h.b16 %v2251
      %v2369 = vunpack.c.l.b16 %v2252
      %v2370 = vunpack.c.h.b16 %v2252
      %v2371 = vunpack.c.l.b16 %v2253
      %v2372 = vunpack.c.h.b16 %v2253
      %v2373 = vunpack.c.l.b16 %v2254
      %v2374 = vunpack.c.h.b16 %v2254
      %v2375 = vunpack.c.l.b16 %v2255
      %v2376 = vunpack.c.h.b16 %v2255
      %v2377 = vunpack.c.l.b16 %v2256
      %v2378 = vunpack.c.h.b16 %v2256
      %v2379 = vunpack.c.l.b16 %v2257
      %v2380 = vunpack.c.h.b16 %v2257
      %v2381 = vunpack.c.l.b16 %v2258
      %v2382 = vunpack.c.h.b16 %v2258
      %v2383 = vunpack.c.l.b16 %v2259
      %v2384 = vunpack.c.h.b16 %v2259
      %v2385 = vunpack.c.l.b16 %v2260
      %v2386 = vunpack.c.h.b16 %v2260
      %v2387 = vunpack.c.l.b16 %v2261
      %v2388 = vunpack.c.h.b16 %v2261
      %v2389 = vunpack.c.l.b16 %v2262
      %v2390 = vunpack.c.h.b16 %v2262
      %v2391 = vunpack.c.l.b16 %v2263
      %v2392 = vunpack.c.h.b16 %v2263
      %v2393 = vunpack.c.l.b16 %v2264
      %v2394 = vunpack.c.h.b16 %v2264
      %v2395 = vunpack.c.l.b16 %v2265
      %v2396 = vunpack.c.h.b16 %v2265
      %v2397 = vunpack.c.l.b16 %v2266
      %v2398 = vunpack.c.h.b16 %v2266
      %v2399 = vunpack.c.l.b16 %v2267
      %v2400 = vunpack.c.h.b16 %v2267
      %v2401 = vunpack.c.l.b16 %v2268
      %v2402 = vunpack.c.h.b16 %v2268
      %v2403 = vunpack.c.l.b16 %v2269
      %v2404 = vunpack.c.h.b16 %v2269
      %v2405 = vunpack.c.l.b16 %v2270
      %v2406 = vunpack.c.h.b16 %v2270
      %v2407 = vunpack.c.l.b16 %v2271
      %v2408 = vunpack.c.h.b16 %v2271
      %v2409 = vunpack.c.l.b16 %v2272
      %v2410 = vunpack.c.h.b16 %v2272
      %v2411 = vunpack.c.l.b16 %v2273
      %v2412 = vunpack.c.h.b16 %v2273
      %v2413 = vunpack.c.l.b16 %v2274
      %v2414 = vunpack.c.h.b16 %v2274
      %v2415 = vunpack.c.l.b16 %v2275
      %v2416 = vunpack.c.h.b16 %v2275
      %v2417 = vpack.c.b16 %v2355, %v2353
      %v2418 = vpack.c.b16 %v2356, %v2354
      %v2419 = vpack.c.b16 %v2359, %v2357
      %v2420 = vpack.c.b16 %v2360, %v2358
      %v2421 = vpack.c.b16 %v2363, %v2361
      %v2422 = vpack.c.b16 %v2364, %v2362
      %v2423 = vpack.c.b16 %v2367, %v2365
      %v2424 = vpack.c.b16 %v2368, %v2366
      %v2425 = vpack.c.b16 %v2371, %v2369
      %v2426 = vpack.c.b16 %v2372, %v2370
      %v2427 = vpack.c.b16 %v2375, %v2373
      %v2428 = vpack.c.b16 %v2376, %v2374
      %v2429 = vpack.c.b16 %v2379, %v2377
      %v2430 = vpack.c.b16 %v2380, %v2378
      %v2431 = vpack.c.b16 %v2383, %v2381
      %v2432 = vpack.c.b16 %v2384, %v2382
      %v2433 = vpack.c.b16 %v2387, %v2385
      %v2434 = vpack.c.b16 %v2388, %v2386
      %v2435 = vpack.c.b16 %v2391, %v2389
      %v2436 = vpack.c.b16 %v2392, %v2390
      %v2437 = vpack.c.b16 %v2395, %v2393
      %v2438 = vpack.c.b16 %v2396, %v2394
      %v2439 = vpack.c.b16 %v2399, %v2397
      %v2440 = vpack.c.b16 %v2400, %v2398
      %v2441 = vpack.c.b16 %v2403, %v2401
      %v2442 = vpack.c.b16 %v2404, %v2402
      %v2443 = vpack.c.b16 %v2407, %v2405
      %v2444 = vpack.c.b16 %v2408, %v2406
      %v2445 = vpack.c.b16 %v2411, %v2409
      %v2446 = vpack.c.b16 %v2412, %v2410
      %v2447 = vpack.c.b16 %v2415, %v2413
      %v2448 = vpack.c.b16 %v2416, %v2414
      %2481 = vmatprep.subr.bf16.mxu0 %v2432
      %2482 = vmatpush1.bf16.msra.mxu0 %v2431
      %2483 = vmatprep.subr.bf16.mxu0 %v2430
      %2484 = vmatpush1.bf16.msra.mxu0 %v2429
      %2485 = vmatprep.subr.bf16.mxu0 %v2428
      %2486 = vmatpush1.bf16.msra.mxu0 %v2427
      %2487 = vmatprep.subr.bf16.mxu0 %v2426
      %2488 = vmatpush1.bf16.msra.mxu0 %v2425
      %2489 = vmatprep.subr.bf16.mxu0 %v2424
      %2490 = vmatpush1.bf16.msra.mxu0 %v2423
      %2491 = vmatprep.subr.bf16.mxu0 %v2422
      %2492 = vmatpush1.bf16.msra.mxu0 %v2421
      %2493 = vmatprep.subr.bf16.mxu0 %v2420
      %2494 = vmatpush1.bf16.msra.mxu0 %v2419
      %2495 = vmatprep.subr.bf16.mxu0 %v2418
      %2496 = vmatpush1.bf16.msra.mxu0 %v2417
      %2497 = vmatprep.subr.bf16.mxu0 %v2448
      %2498 = vmatpush2.bf16.msra.mxu0 %v2447
      %2499 = vmatprep.subr.bf16.mxu0 %v2446
      %2500 = vmatpush2.bf16.msra.mxu0 %v2445
      %2501 = vmatprep.subr.bf16.mxu0 %v2444
      %2502 = vmatpush2.bf16.msra.mxu0 %v2443
      %2503 = vmatprep.subr.bf16.mxu0 %v2442
      %2504 = vmatpush2.bf16.msra.mxu0 %v2441
      %2505 = vmatprep.subr.bf16.mxu0 %v2440
      %2506 = vmatpush2.bf16.msra.mxu0 %v2439
      %2507 = vmatprep.subr.bf16.mxu0 %v2438
      %2508 = vmatpush2.bf16.msra.mxu0 %v2437
      %2509 = vmatprep.subr.bf16.mxu0 %v2436
      %2510 = vmatpush2.bf16.msra.mxu0 %v2435
      %2511 = vmatprep.subr.bf16.mxu0 %v2434
      %2512 = vmatpush2.bf16.msra.mxu0 %v2433
      %2513 = vmatprep.mubr.bf16.mxu0 %v2277
      %2514 = vmatmul.mubr.bf16.gmra.mxu0 %v2276
      %v2515 = vpop.f32.mrf.mxu0
      %v2516 = vadd.f32 %v2314, %v2515
      %v2517 = vpop.f32.mrf.mxu0
      %v2518 = vadd.f32 %v2318, %v2517
      %v2519 = vpop.f32.mrf.mxu0
      %v2520 = vadd.f32 %v2314, %v2519
      %v2521 = vpop.f32.mrf.mxu0
      %v2522 = vadd.f32 %v2318, %v2521
      %2523 = vmatprep.mubr.bf16.mxu0 %v2279
      %2524 = vmatmul.mubr.bf16.gmra.mxu0 %v2278
      %v2525 = vpop.f32.mrf.mxu0
      %v2526 = vadd.f32 %v2314, %v2525
      %v2527 = vpop.f32.mrf.mxu0
      %v2528 = vadd.f32 %v2318, %v2527
      %v2529 = vpop.f32.mrf.mxu0
      %v2530 = vadd.f32 %v2314, %v2529
      %v2531 = vpop.f32.mrf.mxu0
      %v2532 = vadd.f32 %v2318, %v2531
      %2533 = vmatprep.mubr.bf16.mxu0 %v2281
      %2534 = vmatmul.mubr.bf16.gmra.mxu0 %v2280
      %v2535 = vpop.f32.mrf.mxu0
      %v2536 = vadd.f32 %v2314, %v2535
      %v2537 = vpop.f32.mrf.mxu0
      %v2538 = vadd.f32 %v2318, %v2537
      %v2539 = vpop.f32.mrf.mxu0
      %v2540 = vadd.f32 %v2314, %v2539
      %v2541 = vpop.f32.mrf.mxu0
      %v2542 = vadd.f32 %v2318, %v2541
      %2543 = vmatprep.mubr.bf16.mxu0 %v2283
      %2544 = vmatmul.mubr.bf16.gmra.mxu0 %v2282
      %v2545 = vpop.f32.mrf.mxu0
      %v2546 = vadd.f32 %v2314, %v2545
      %v2547 = vpop.f32.mrf.mxu0
      %v2548 = vadd.f32 %v2318, %v2547
      %v2549 = vpop.f32.mrf.mxu0
      %v2550 = vadd.f32 %v2314, %v2549
      %v2551 = vpop.f32.mrf.mxu0
      %v2552 = vadd.f32 %v2318, %v2551
      %2553 = vmatprep.mubr.bf16.mxu0 %v2285
      %2554 = vmatmul.mubr.bf16.gmra.mxu0 %v2284
      %v2555 = vpop.f32.mrf.mxu0
      %v2556 = vadd.f32 %v2314, %v2555
      %v2557 = vpop.f32.mrf.mxu0
      %v2558 = vadd.f32 %v2318, %v2557
      %v2559 = vpop.f32.mrf.mxu0
      %v2560 = vadd.f32 %v2314, %v2559
      %v2561 = vpop.f32.mrf.mxu0
      %v2562 = vadd.f32 %v2318, %v2561
      %2563 = vmatprep.mubr.bf16.mxu0 %v2287
      %2564 = vmatmul.mubr.bf16.gmra.mxu0 %v2286
      %v2565 = vpop.f32.mrf.mxu0
      %v2566 = vadd.f32 %v2314, %v2565
      %v2567 = vpop.f32.mrf.mxu0
      %v2568 = vadd.f32 %v2318, %v2567
      %v2569 = vpop.f32.mrf.mxu0
      %v2570 = vadd.f32 %v2314, %v2569
      %v2571 = vpop.f32.mrf.mxu0
      %v2572 = vadd.f32 %v2318, %v2571
      %2573 = vmatprep.mubr.bf16.mxu0 %v2289
      %2574 = vmatmul.mubr.bf16.gmra.mxu0 %v2288
      %v2575 = vpop.f32.mrf.mxu0
      %v2576 = vadd.f32 %v2314, %v2575
      %v2577 = vpop.f32.mrf.mxu0
      %v2578 = vadd.f32 %v2318, %v2577
      %v2579 = vpop.f32.mrf.mxu0
      %v2580 = vadd.f32 %v2314, %v2579
      %v2581 = vpop.f32.mrf.mxu0
      %v2582 = vadd.f32 %v2318, %v2581
      %2583 = vmatprep.mubr.bf16.mxu0 %v2291
      %2584 = vmatmul.mubr.bf16.gmra.mxu0 %v2290
      %v2585 = vpop.f32.mrf.mxu0
      %v2586 = vadd.f32 %v2314, %v2585
      %v2587 = vpop.f32.mrf.mxu0
      %v2588 = vadd.f32 %v2318, %v2587
      %v2589 = vpop.f32.mrf.mxu0
      %v2590 = vadd.f32 %v2314, %v2589
      %v2591 = vpop.f32.mrf.mxu0
      %v2592 = vadd.f32 %v2318, %v2591
      %2593 = vmatprep.mubr.bf16.mxu0 %v2293
      %2594 = vmatmul.mubr.bf16.gmra.mxu0 %v2292
      %v2595 = vpop.f32.mrf.mxu0
      %v2596 = vadd.f32 %v2314, %v2595
      %v2597 = vpop.f32.mrf.mxu0
      %v2598 = vadd.f32 %v2318, %v2597
      %v2599 = vpop.f32.mrf.mxu0
      %v2600 = vadd.f32 %v2314, %v2599
      %v2601 = vpop.f32.mrf.mxu0
      %v2602 = vadd.f32 %v2318, %v2601
      %2603 = vmatprep.mubr.bf16.mxu0 %v2295
      %2604 = vmatmul.mubr.bf16.gmra.mxu0 %v2294
      %v2605 = vpop.f32.mrf.mxu0
      %v2606 = vadd.f32 %v2314, %v2605
      %v2607 = vpop.f32.mrf.mxu0
      %v2608 = vadd.f32 %v2318, %v2607
      %v2609 = vpop.f32.mrf.mxu0
      %v2610 = vadd.f32 %v2314, %v2609
      %v2611 = vpop.f32.mrf.mxu0
      %v2612 = vadd.f32 %v2318, %v2611
      %2613 = vmatprep.mubr.bf16.mxu0 %v2297
      %2614 = vmatmul.mubr.bf16.gmra.mxu0 %v2296
      %v2615 = vpop.f32.mrf.mxu0
      %v2616 = vadd.f32 %v2314, %v2615
      %v2617 = vpop.f32.mrf.mxu0
      %v2618 = vadd.f32 %v2318, %v2617
      %v2619 = vpop.f32.mrf.mxu0
      %v2620 = vadd.f32 %v2314, %v2619
      %v2621 = vpop.f32.mrf.mxu0
      %v2622 = vadd.f32 %v2318, %v2621
      %2623 = vmatprep.mubr.bf16.mxu0 %v2299
      %2624 = vmatmul.mubr.bf16.gmra.mxu0 %v2298
      %v2625 = vpop.f32.mrf.mxu0
      %v2626 = vadd.f32 %v2314, %v2625
      %v2627 = vpop.f32.mrf.mxu0
      %v2628 = vadd.f32 %v2318, %v2627
      %v2629 = vpop.f32.mrf.mxu0
      %v2630 = vadd.f32 %v2314, %v2629
      %v2631 = vpop.f32.mrf.mxu0
      %v2632 = vadd.f32 %v2318, %v2631
      %2633 = vmatprep.mubr.bf16.mxu0 %v2301
      %2634 = vmatmul.mubr.bf16.gmra.mxu0 %v2300
      %v2635 = vpop.f32.mrf.mxu0
      %v2636 = vadd.f32 %v2314, %v2635
      %v2637 = vpop.f32.mrf.mxu0
      %v2638 = vadd.f32 %v2318, %v2637
      %v2639 = vpop.f32.mrf.mxu0
      %v2640 = vadd.f32 %v2314, %v2639
      %v2641 = vpop.f32.mrf.mxu0
      %v2642 = vadd.f32 %v2318, %v2641
      %2643 = vmatprep.mubr.bf16.mxu0 %v2303
      %2644 = vmatmul.mubr.bf16.gmra.mxu0 %v2302
      %v2645 = vpop.f32.mrf.mxu0
      %v2646 = vadd.f32 %v2314, %v2645
      %v2647 = vpop.f32.mrf.mxu0
      %v2648 = vadd.f32 %v2318, %v2647
      %v2649 = vpop.f32.mrf.mxu0
      %v2650 = vadd.f32 %v2314, %v2649
      %v2651 = vpop.f32.mrf.mxu0
      %v2652 = vadd.f32 %v2318, %v2651
      %2653 = vmatprep.mubr.bf16.mxu0 %v2305
      %2654 = vmatmul.mubr.bf16.gmra.mxu0 %v2304
      %v2655 = vpop.f32.mrf.mxu0
      %v2656 = vadd.f32 %v2314, %v2655
      %v2657 = vpop.f32.mrf.mxu0
      %v2658 = vadd.f32 %v2318, %v2657
      %v2659 = vpop.f32.mrf.mxu0
      %v2660 = vadd.f32 %v2314, %v2659
      %v2661 = vpop.f32.mrf.mxu0
      %v2662 = vadd.f32 %v2318, %v2661
      %2663 = vmatprep.mubr.bf16.mxu0 %v2307
      %2664 = vmatmul.mubr.bf16.gmra.mxu0 %v2306
      %v2665 = vpop.f32.mrf.mxu0
      %v2666 = vadd.f32 %v2314, %v2665
      %v2667 = vpop.f32.mrf.mxu0
      %v2668 = vadd.f32 %v2318, %v2667
      %v2669 = vpop.f32.mrf.mxu0
      %v2670 = vadd.f32 %v2314, %v2669
      %v2671 = vpop.f32.mrf.mxu0
      %v2672 = vadd.f32 %v2318, %v2671
      %2673 = vdwg.mxu0
      %v2674 = vmax.f32 %v2516, 0.0
      %v2675 = vmax.f32 %v2518, 0.0
      %v2676 = vmax.f32 %v2520, 0.0
      %v2677 = vmax.f32 %v2522, 0.0
      %v2678 = vmax.f32 %v2526, 0.0
      %v2679 = vmax.f32 %v2528, 0.0
      %v2680 = vmax.f32 %v2530, 0.0
      %v2681 = vmax.f32 %v2532, 0.0
      %v2682 = vmax.f32 %v2536, 0.0
      %v2683 = vmax.f32 %v2538, 0.0
      %v2684 = vmax.f32 %v2540, 0.0
      %v2685 = vmax.f32 %v2542, 0.0
      %v2686 = vmax.f32 %v2546, 0.0
      %v2687 = vmax.f32 %v2548, 0.0
      %v2688 = vmax.f32 %v2550, 0.0
      %v2689 = vmax.f32 %v2552, 0.0
      %v2690 = vmax.f32 %v2556, 0.0
      %v2691 = vmax.f32 %v2558, 0.0
      %v2692 = vmax.f32 %v2560, 0.0
      %v2693 = vmax.f32 %v2562, 0.0
      %v2694 = vmax.f32 %v2566, 0.0
      %v2695 = vmax.f32 %v2568, 0.0
      %v2696 = vmax.f32 %v2570, 0.0
      %v2697 = vmax.f32 %v2572, 0.0
      %v2698 = vmax.f32 %v2576, 0.0
      %v2699 = vmax.f32 %v2578, 0.0
      %v2700 = vmax.f32 %v2580, 0.0
      %v2701 = vmax.f32 %v2582, 0.0
      %v2702 = vmax.f32 %v2586, 0.0
      %v2703 = vmax.f32 %v2588, 0.0
      %v2704 = vmax.f32 %v2590, 0.0
      %v2705 = vmax.f32 %v2592, 0.0
      %v2706 = vmax.f32 %v2596, 0.0
      %v2707 = vmax.f32 %v2598, 0.0
      %v2708 = vmax.f32 %v2600, 0.0
      %v2709 = vmax.f32 %v2602, 0.0
      %v2710 = vmax.f32 %v2606, 0.0
      %v2711 = vmax.f32 %v2608, 0.0
      %v2712 = vmax.f32 %v2610, 0.0
      %v2713 = vmax.f32 %v2612, 0.0
      %v2714 = vmax.f32 %v2616, 0.0
      %v2715 = vmax.f32 %v2618, 0.0
      %v2716 = vmax.f32 %v2620, 0.0
      %v2717 = vmax.f32 %v2622, 0.0
      %v2718 = vmax.f32 %v2626, 0.0
      %v2719 = vmax.f32 %v2628, 0.0
      %v2720 = vmax.f32 %v2630, 0.0
      %v2721 = vmax.f32 %v2632, 0.0
      %v2722 = vmax.f32 %v2636, 0.0
      %v2723 = vmax.f32 %v2638, 0.0
      %v2724 = vmax.f32 %v2640, 0.0
      %v2725 = vmax.f32 %v2642, 0.0
      %v2726 = vmax.f32 %v2646, 0.0
      %v2727 = vmax.f32 %v2648, 0.0
      %v2728 = vmax.f32 %v2650, 0.0
      %v2729 = vmax.f32 %v2652, 0.0
      %v2730 = vmax.f32 %v2656, 0.0
      %v2731 = vmax.f32 %v2658, 0.0
      %v2732 = vmax.f32 %v2660, 0.0
      %v2733 = vmax.f32 %v2662, 0.0
      %v2734 = vmax.f32 %v2666, 0.0
      %v2735 = vmax.f32 %v2668, 0.0
      %v2736 = vmax.f32 %v2670, 0.0
      %v2737 = vmax.f32 %v2672, 0.0
      %s2738 = scalar_lea.vmem %s3, 768
      %v2739 = vld [vmem:[%s2738] sm:$0xff]
      %v2740 = vld [vmem:[%s2738 + $0x8] sm:$0xff]
      %v2741 = vld [vmem:[%s2738 + $0x10] sm:$0xff]
      %v2742 = vld [vmem:[%s2738 + $0x18] sm:$0xff]
      %v2743 = vld [vmem:[%s2738 + $0x20] sm:$0xff]
      %v2744 = vld [vmem:[%s2738 + $0x28] sm:$0xff]
      %v2745 = vld [vmem:[%s2738 + $0x30] sm:$0xff]
      %v2746 = vld [vmem:[%s2738 + $0x38] sm:$0xff]
      %v2747 = vld [vmem:[%s2738 + $0x40] sm:$0xff]
      %v2748 = vld [vmem:[%s2738 + $0x48] sm:$0xff]
      %v2749 = vld [vmem:[%s2738 + $0x50] sm:$0xff]
      %v2750 = vld [vmem:[%s2738 + $0x58] sm:$0xff]
      %v2751 = vld [vmem:[%s2738 + $0x60] sm:$0xff]
      %v2752 = vld [vmem:[%s2738 + $0x68] sm:$0xff]
      %v2753 = vld [vmem:[%s2738 + $0x70] sm:$0xff]
      %v2754 = vld [vmem:[%s2738 + $0x78] sm:$0xff]
      %v2755 = vld [vmem:[%s2738 + $0x80] sm:$0xff]
      %v2756 = vld [vmem:[%s2738 + $0x88] sm:$0xff]
      %v2757 = vld [vmem:[%s2738 + $0x90] sm:$0xff]
      %v2758 = vld [vmem:[%s2738 + $0x98] sm:$0xff]
      %v2759 = vld [vmem:[%s2738 + $0xa0] sm:$0xff]
      %v2760 = vld [vmem:[%s2738 + $0xa8] sm:$0xff]
      %v2761 = vld [vmem:[%s2738 + $0xb0] sm:$0xff]
      %v2762 = vld [vmem:[%s2738 + $0xb8] sm:$0xff]
      %v2763 = vld [vmem:[%s2738 + $0xc0] sm:$0xff]
      %v2764 = vld [vmem:[%s2738 + $0xc8] sm:$0xff]
      %v2765 = vld [vmem:[%s2738 + $0xd0] sm:$0xff]
      %v2766 = vld [vmem:[%s2738 + $0xd8] sm:$0xff]
      %v2767 = vld [vmem:[%s2738 + $0xe0] sm:$0xff]
      %v2768 = vld [vmem:[%s2738 + $0xe8] sm:$0xff]
      %v2769 = vld [vmem:[%s2738 + $0xf0] sm:$0xff]
      %v2770 = vld [vmem:[%s2738 + $0xf8] sm:$0xff]
      %v2771 = vpack.c.bf16 %v2676, %v2674
      %v2772 = vpack.c.bf16 %v2677, %v2675
      %v2773 = vpack.c.bf16 %v2680, %v2678
      %v2774 = vpack.c.bf16 %v2681, %v2679
      %v2775 = vpack.c.bf16 %v2684, %v2682
      %v2776 = vpack.c.bf16 %v2685, %v2683
      %v2777 = vpack.c.bf16 %v2688, %v2686
      %v2778 = vpack.c.bf16 %v2689, %v2687
      %v2779 = vpack.c.bf16 %v2692, %v2690
      %v2780 = vpack.c.bf16 %v2693, %v2691
      %v2781 = vpack.c.bf16 %v2696, %v2694
      %v2782 = vpack.c.bf16 %v2697, %v2695
      %v2783 = vpack.c.bf16 %v2700, %v2698
      %v2784 = vpack.c.bf16 %v2701, %v2699
      %v2785 = vpack.c.bf16 %v2704, %v2702
      %v2786 = vpack.c.bf16 %v2705, %v2703
      %v2787 = vpack.c.bf16 %v2708, %v2706
      %v2788 = vpack.c.bf16 %v2709, %v2707
      %v2789 = vpack.c.bf16 %v2712, %v2710
      %v2790 = vpack.c.bf16 %v2713, %v2711
      %v2791 = vpack.c.bf16 %v2716, %v2714
      %v2792 = vpack.c.bf16 %v2717, %v2715
      %v2793 = vpack.c.bf16 %v2720, %v2718
      %v2794 = vpack.c.bf16 %v2721, %v2719
      %v2795 = vpack.c.bf16 %v2724, %v2722
      %v2796 = vpack.c.bf16 %v2725, %v2723
      %v2797 = vpack.c.bf16 %v2728, %v2726
      %v2798 = vpack.c.bf16 %v2729, %v2727
      %v2799 = vpack.c.bf16 %v2732, %v2730
      %v2800 = vpack.c.bf16 %v2733, %v2731
      %v2801 = vpack.c.bf16 %v2736, %v2734
      %v2802 = vpack.c.bf16 %v2737, %v2735
      %s2803 = scalar_lea.vmem %s4, 3
      %v2804 = vld [vmem:[%s2803] ss:$8 sm:$0x3]
      %v2806 = vlaneseq
      %v2807 = vshrl.u32 %v2806, 7
      %v2808 = vsub.s32 0, %v2807
      %v2809 = vrot.slane %v2804, %v2808
      %v2810 = vlaneseq
      %v2811 = vshrl.u32 %v2810, 7
      %v2812 = vsub.s32 1, %v2811
      %v2813 = vrot.slane %v2804, %v2812
      %v2848 = vunpack.c.l.b16 %v2739
      %v2849 = vunpack.c.h.b16 %v2739
      %v2850 = vunpack.c.l.b16 %v2740
      %v2851 = vunpack.c.h.b16 %v2740
      %v2852 = vunpack.c.l.b16 %v2741
      %v2853 = vunpack.c.h.b16 %v2741
      %v2854 = vunpack.c.l.b16 %v2742
      %v2855 = vunpack.c.h.b16 %v2742
      %v2856 = vunpack.c.l.b16 %v2743
      %v2857 = vunpack.c.h.b16 %v2743
      %v2858 = vunpack.c.l.b16 %v2744
      %v2859 = vunpack.c.h.b16 %v2744
      %v2860 = vunpack.c.l.b16 %v2745
      %v2861 = vunpack.c.h.b16 %v2745
      %v2862 = vunpack.c.l.b16 %v2746
      %v2863 = vunpack.c.h.b16 %v2746
      %v2864 = vunpack.c.l.b16 %v2747
      %v2865 = vunpack.c.h.b16 %v2747
      %v2866 = vunpack.c.l.b16 %v2748
      %v2867 = vunpack.c.h.b16 %v2748
      %v2868 = vunpack.c.l.b16 %v2749
      %v2869 = vunpack.c.h.b16 %v2749
      %v2870 = vunpack.c.l.b16 %v2750
      %v2871 = vunpack.c.h.b16 %v2750
      %v2872 = vunpack.c.l.b16 %v2751
      %v2873 = vunpack.c.h.b16 %v2751
      %v2874 = vunpack.c.l.b16 %v2752
      %v2875 = vunpack.c.h.b16 %v2752
      %v2876 = vunpack.c.l.b16 %v2753
      %v2877 = vunpack.c.h.b16 %v2753
      %v2878 = vunpack.c.l.b16 %v2754
      %v2879 = vunpack.c.h.b16 %v2754
      %v2880 = vunpack.c.l.b16 %v2755
      %v2881 = vunpack.c.h.b16 %v2755
      %v2882 = vunpack.c.l.b16 %v2756
      %v2883 = vunpack.c.h.b16 %v2756
      %v2884 = vunpack.c.l.b16 %v2757
      %v2885 = vunpack.c.h.b16 %v2757
      %v2886 = vunpack.c.l.b16 %v2758
      %v2887 = vunpack.c.h.b16 %v2758
      %v2888 = vunpack.c.l.b16 %v2759
      %v2889 = vunpack.c.h.b16 %v2759
      %v2890 = vunpack.c.l.b16 %v2760
      %v2891 = vunpack.c.h.b16 %v2760
      %v2892 = vunpack.c.l.b16 %v2761
      %v2893 = vunpack.c.h.b16 %v2761
      %v2894 = vunpack.c.l.b16 %v2762
      %v2895 = vunpack.c.h.b16 %v2762
      %v2896 = vunpack.c.l.b16 %v2763
      %v2897 = vunpack.c.h.b16 %v2763
      %v2898 = vunpack.c.l.b16 %v2764
      %v2899 = vunpack.c.h.b16 %v2764
      %v2900 = vunpack.c.l.b16 %v2765
      %v2901 = vunpack.c.h.b16 %v2765
      %v2902 = vunpack.c.l.b16 %v2766
      %v2903 = vunpack.c.h.b16 %v2766
      %v2904 = vunpack.c.l.b16 %v2767
      %v2905 = vunpack.c.h.b16 %v2767
      %v2906 = vunpack.c.l.b16 %v2768
      %v2907 = vunpack.c.h.b16 %v2768
      %v2908 = vunpack.c.l.b16 %v2769
      %v2909 = vunpack.c.h.b16 %v2769
      %v2910 = vunpack.c.l.b16 %v2770
      %v2911 = vunpack.c.h.b16 %v2770
      %v2912 = vpack.c.b16 %v2850, %v2848
      %v2913 = vpack.c.b16 %v2851, %v2849
      %v2914 = vpack.c.b16 %v2854, %v2852
      %v2915 = vpack.c.b16 %v2855, %v2853
      %v2916 = vpack.c.b16 %v2858, %v2856
      %v2917 = vpack.c.b16 %v2859, %v2857
      %v2918 = vpack.c.b16 %v2862, %v2860
      %v2919 = vpack.c.b16 %v2863, %v2861
      %v2920 = vpack.c.b16 %v2866, %v2864
      %v2921 = vpack.c.b16 %v2867, %v2865
      %v2922 = vpack.c.b16 %v2870, %v2868
      %v2923 = vpack.c.b16 %v2871, %v2869
      %v2924 = vpack.c.b16 %v2874, %v2872
      %v2925 = vpack.c.b16 %v2875, %v2873
      %v2926 = vpack.c.b16 %v2878, %v2876
      %v2927 = vpack.c.b16 %v2879, %v2877
      %v2928 = vpack.c.b16 %v2882, %v2880
      %v2929 = vpack.c.b16 %v2883, %v2881
      %v2930 = vpack.c.b16 %v2886, %v2884
      %v2931 = vpack.c.b16 %v2887, %v2885
      %v2932 = vpack.c.b16 %v2890, %v2888
      %v2933 = vpack.c.b16 %v2891, %v2889
      %v2934 = vpack.c.b16 %v2894, %v2892
      %v2935 = vpack.c.b16 %v2895, %v2893
      %v2936 = vpack.c.b16 %v2898, %v2896
      %v2937 = vpack.c.b16 %v2899, %v2897
      %v2938 = vpack.c.b16 %v2902, %v2900
      %v2939 = vpack.c.b16 %v2903, %v2901
      %v2940 = vpack.c.b16 %v2906, %v2904
      %v2941 = vpack.c.b16 %v2907, %v2905
      %v2942 = vpack.c.b16 %v2910, %v2908
      %v2943 = vpack.c.b16 %v2911, %v2909
      %2976 = vmatprep.subr.bf16.mxu0 %v2927
      %2977 = vmatpush1.bf16.msra.mxu0 %v2926
      %2978 = vmatprep.subr.bf16.mxu0 %v2925
      %2979 = vmatpush1.bf16.msra.mxu0 %v2924
      %2980 = vmatprep.subr.bf16.mxu0 %v2923
      %2981 = vmatpush1.bf16.msra.mxu0 %v2922
      %2982 = vmatprep.subr.bf16.mxu0 %v2921
      %2983 = vmatpush1.bf16.msra.mxu0 %v2920
      %2984 = vmatprep.subr.bf16.mxu0 %v2919
      %2985 = vmatpush1.bf16.msra.mxu0 %v2918
      %2986 = vmatprep.subr.bf16.mxu0 %v2917
      %2987 = vmatpush1.bf16.msra.mxu0 %v2916
      %2988 = vmatprep.subr.bf16.mxu0 %v2915
      %2989 = vmatpush1.bf16.msra.mxu0 %v2914
      %2990 = vmatprep.subr.bf16.mxu0 %v2913
      %2991 = vmatpush1.bf16.msra.mxu0 %v2912
      %2992 = vmatprep.subr.bf16.mxu0 %v2943
      %2993 = vmatpush2.bf16.msra.mxu0 %v2942
      %2994 = vmatprep.subr.bf16.mxu0 %v2941
      %2995 = vmatpush2.bf16.msra.mxu0 %v2940
      %2996 = vmatprep.subr.bf16.mxu0 %v2939
      %2997 = vmatpush2.bf16.msra.mxu0 %v2938
      %2998 = vmatprep.subr.bf16.mxu0 %v2937
      %2999 = vmatpush2.bf16.msra.mxu0 %v2936
      %3000 = vmatprep.subr.bf16.mxu0 %v2935
      %3001 = vmatpush2.bf16.msra.mxu0 %v2934
      %3002 = vmatprep.subr.bf16.mxu0 %v2933
      %3003 = vmatpush2.bf16.msra.mxu0 %v2932
      %3004 = vmatprep.subr.bf16.mxu0 %v2931
      %3005 = vmatpush2.bf16.msra.mxu0 %v2930
      %3006 = vmatprep.subr.bf16.mxu0 %v2929
      %3007 = vmatpush2.bf16.msra.mxu0 %v2928
      %3008 = vmatprep.mubr.bf16.mxu0 %v2772
      %3009 = vmatmul.mubr.bf16.gmra.mxu0 %v2771
      %v3010 = vpop.f32.mrf.mxu0
      %v3011 = vadd.f32 %v2809, %v3010
      %v3012 = vpop.f32.mrf.mxu0
      %v3013 = vadd.f32 %v2813, %v3012
      %v3014 = vpop.f32.mrf.mxu0
      %v3015 = vadd.f32 %v2809, %v3014
      %v3016 = vpop.f32.mrf.mxu0
      %v3017 = vadd.f32 %v2813, %v3016
      %3018 = vmatprep.mubr.bf16.mxu0 %v2774
      %3019 = vmatmul.mubr.bf16.gmra.mxu0 %v2773
      %v3020 = vpop.f32.mrf.mxu0
      %v3021 = vadd.f32 %v2809, %v3020
      %v3022 = vpop.f32.mrf.mxu0
      %v3023 = vadd.f32 %v2813, %v3022
      %v3024 = vpop.f32.mrf.mxu0
      %v3025 = vadd.f32 %v2809, %v3024
      %v3026 = vpop.f32.mrf.mxu0
      %v3027 = vadd.f32 %v2813, %v3026
      %3028 = vmatprep.mubr.bf16.mxu0 %v2776
      %3029 = vmatmul.mubr.bf16.gmra.mxu0 %v2775
      %v3030 = vpop.f32.mrf.mxu0
      %v3031 = vadd.f32 %v2809, %v3030
      %v3032 = vpop.f32.mrf.mxu0
      %v3033 = vadd.f32 %v2813, %v3032
      %v3034 = vpop.f32.mrf.mxu0
      %v3035 = vadd.f32 %v2809, %v3034
      %v3036 = vpop.f32.mrf.mxu0
      %v3037 = vadd.f32 %v2813, %v3036
      %3038 = vmatprep.mubr.bf16.mxu0 %v2778
      %3039 = vmatmul.mubr.bf16.gmra.mxu0 %v2777
      %v3040 = vpop.f32.mrf.mxu0
      %v3041 = vadd.f32 %v2809, %v3040
      %v3042 = vpop.f32.mrf.mxu0
      %v3043 = vadd.f32 %v2813, %v3042
      %v3044 = vpop.f32.mrf.mxu0
      %v3045 = vadd.f32 %v2809, %v3044
      %v3046 = vpop.f32.mrf.mxu0
      %v3047 = vadd.f32 %v2813, %v3046
      %3048 = vmatprep.mubr.bf16.mxu0 %v2780
      %3049 = vmatmul.mubr.bf16.gmra.mxu0 %v2779
      %v3050 = vpop.f32.mrf.mxu0
      %v3051 = vadd.f32 %v2809, %v3050
      %v3052 = vpop.f32.mrf.mxu0
      %v3053 = vadd.f32 %v2813, %v3052
      %v3054 = vpop.f32.mrf.mxu0
      %v3055 = vadd.f32 %v2809, %v3054
      %v3056 = vpop.f32.mrf.mxu0
      %v3057 = vadd.f32 %v2813, %v3056
      %3058 = vmatprep.mubr.bf16.mxu0 %v2782
      %3059 = vmatmul.mubr.bf16.gmra.mxu0 %v2781
      %v3060 = vpop.f32.mrf.mxu0
      %v3061 = vadd.f32 %v2809, %v3060
      %v3062 = vpop.f32.mrf.mxu0
      %v3063 = vadd.f32 %v2813, %v3062
      %v3064 = vpop.f32.mrf.mxu0
      %v3065 = vadd.f32 %v2809, %v3064
      %v3066 = vpop.f32.mrf.mxu0
      %v3067 = vadd.f32 %v2813, %v3066
      %3068 = vmatprep.mubr.bf16.mxu0 %v2784
      %3069 = vmatmul.mubr.bf16.gmra.mxu0 %v2783
      %v3070 = vpop.f32.mrf.mxu0
      %v3071 = vadd.f32 %v2809, %v3070
      %v3072 = vpop.f32.mrf.mxu0
      %v3073 = vadd.f32 %v2813, %v3072
      %v3074 = vpop.f32.mrf.mxu0
      %v3075 = vadd.f32 %v2809, %v3074
      %v3076 = vpop.f32.mrf.mxu0
      %v3077 = vadd.f32 %v2813, %v3076
      %3078 = vmatprep.mubr.bf16.mxu0 %v2786
      %3079 = vmatmul.mubr.bf16.gmra.mxu0 %v2785
      %v3080 = vpop.f32.mrf.mxu0
      %v3081 = vadd.f32 %v2809, %v3080
      %v3082 = vpop.f32.mrf.mxu0
      %v3083 = vadd.f32 %v2813, %v3082
      %v3084 = vpop.f32.mrf.mxu0
      %v3085 = vadd.f32 %v2809, %v3084
      %v3086 = vpop.f32.mrf.mxu0
      %v3087 = vadd.f32 %v2813, %v3086
      %3088 = vmatprep.mubr.bf16.mxu0 %v2788
      %3089 = vmatmul.mubr.bf16.gmra.mxu0 %v2787
      %v3090 = vpop.f32.mrf.mxu0
      %v3091 = vadd.f32 %v2809, %v3090
      %v3092 = vpop.f32.mrf.mxu0
      %v3093 = vadd.f32 %v2813, %v3092
      %v3094 = vpop.f32.mrf.mxu0
      %v3095 = vadd.f32 %v2809, %v3094
      %v3096 = vpop.f32.mrf.mxu0
      %v3097 = vadd.f32 %v2813, %v3096
      %3098 = vmatprep.mubr.bf16.mxu0 %v2790
      %3099 = vmatmul.mubr.bf16.gmra.mxu0 %v2789
      %v3100 = vpop.f32.mrf.mxu0
      %v3101 = vadd.f32 %v2809, %v3100
      %v3102 = vpop.f32.mrf.mxu0
      %v3103 = vadd.f32 %v2813, %v3102
      %v3104 = vpop.f32.mrf.mxu0
      %v3105 = vadd.f32 %v2809, %v3104
      %v3106 = vpop.f32.mrf.mxu0
      %v3107 = vadd.f32 %v2813, %v3106
      %3108 = vmatprep.mubr.bf16.mxu0 %v2792
      %3109 = vmatmul.mubr.bf16.gmra.mxu0 %v2791
      %v3110 = vpop.f32.mrf.mxu0
      %v3111 = vadd.f32 %v2809, %v3110
      %v3112 = vpop.f32.mrf.mxu0
      %v3113 = vadd.f32 %v2813, %v3112
      %v3114 = vpop.f32.mrf.mxu0
      %v3115 = vadd.f32 %v2809, %v3114
      %v3116 = vpop.f32.mrf.mxu0
      %v3117 = vadd.f32 %v2813, %v3116
      %3118 = vmatprep.mubr.bf16.mxu0 %v2794
      %3119 = vmatmul.mubr.bf16.gmra.mxu0 %v2793
      %v3120 = vpop.f32.mrf.mxu0
      %v3121 = vadd.f32 %v2809, %v3120
      %v3122 = vpop.f32.mrf.mxu0
      %v3123 = vadd.f32 %v2813, %v3122
      %v3124 = vpop.f32.mrf.mxu0
      %v3125 = vadd.f32 %v2809, %v3124
      %v3126 = vpop.f32.mrf.mxu0
      %v3127 = vadd.f32 %v2813, %v3126
      %3128 = vmatprep.mubr.bf16.mxu0 %v2796
      %3129 = vmatmul.mubr.bf16.gmra.mxu0 %v2795
      %v3130 = vpop.f32.mrf.mxu0
      %v3131 = vadd.f32 %v2809, %v3130
      %v3132 = vpop.f32.mrf.mxu0
      %v3133 = vadd.f32 %v2813, %v3132
      %v3134 = vpop.f32.mrf.mxu0
      %v3135 = vadd.f32 %v2809, %v3134
      %v3136 = vpop.f32.mrf.mxu0
      %v3137 = vadd.f32 %v2813, %v3136
      %3138 = vmatprep.mubr.bf16.mxu0 %v2798
      %3139 = vmatmul.mubr.bf16.gmra.mxu0 %v2797
      %v3140 = vpop.f32.mrf.mxu0
      %v3141 = vadd.f32 %v2809, %v3140
      %v3142 = vpop.f32.mrf.mxu0
      %v3143 = vadd.f32 %v2813, %v3142
      %v3144 = vpop.f32.mrf.mxu0
      %v3145 = vadd.f32 %v2809, %v3144
      %v3146 = vpop.f32.mrf.mxu0
      %v3147 = vadd.f32 %v2813, %v3146
      %3148 = vmatprep.mubr.bf16.mxu0 %v2800
      %3149 = vmatmul.mubr.bf16.gmra.mxu0 %v2799
      %v3150 = vpop.f32.mrf.mxu0
      %v3151 = vadd.f32 %v2809, %v3150
      %v3152 = vpop.f32.mrf.mxu0
      %v3153 = vadd.f32 %v2813, %v3152
      %v3154 = vpop.f32.mrf.mxu0
      %v3155 = vadd.f32 %v2809, %v3154
      %v3156 = vpop.f32.mrf.mxu0
      %v3157 = vadd.f32 %v2813, %v3156
      %3158 = vmatprep.mubr.bf16.mxu0 %v2802
      %3159 = vmatmul.mubr.bf16.gmra.mxu0 %v2801
      %v3160 = vpop.f32.mrf.mxu0
      %v3161 = vadd.f32 %v2809, %v3160
      %v3162 = vpop.f32.mrf.mxu0
      %v3163 = vadd.f32 %v2813, %v3162
      %v3164 = vpop.f32.mrf.mxu0
      %v3165 = vadd.f32 %v2809, %v3164
      %v3166 = vpop.f32.mrf.mxu0
      %v3167 = vadd.f32 %v2813, %v3166
      %3168 = vdwg.mxu0
      %v3169 = vmax.f32 %v3011, 0.0
      %v3170 = vmax.f32 %v3013, 0.0
      %v3171 = vmax.f32 %v3015, 0.0
      %v3172 = vmax.f32 %v3017, 0.0
      %v3173 = vmax.f32 %v3021, 0.0
      %v3174 = vmax.f32 %v3023, 0.0
      %v3175 = vmax.f32 %v3025, 0.0
      %v3176 = vmax.f32 %v3027, 0.0
      %v3177 = vmax.f32 %v3031, 0.0
      %v3178 = vmax.f32 %v3033, 0.0
      %v3179 = vmax.f32 %v3035, 0.0
      %v3180 = vmax.f32 %v3037, 0.0
      %v3181 = vmax.f32 %v3041, 0.0
      %v3182 = vmax.f32 %v3043, 0.0
      %v3183 = vmax.f32 %v3045, 0.0
      %v3184 = vmax.f32 %v3047, 0.0
      %v3185 = vmax.f32 %v3051, 0.0
      %v3186 = vmax.f32 %v3053, 0.0
      %v3187 = vmax.f32 %v3055, 0.0
      %v3188 = vmax.f32 %v3057, 0.0
      %v3189 = vmax.f32 %v3061, 0.0
      %v3190 = vmax.f32 %v3063, 0.0
      %v3191 = vmax.f32 %v3065, 0.0
      %v3192 = vmax.f32 %v3067, 0.0
      %v3193 = vmax.f32 %v3071, 0.0
      %v3194 = vmax.f32 %v3073, 0.0
      %v3195 = vmax.f32 %v3075, 0.0
      %v3196 = vmax.f32 %v3077, 0.0
      %v3197 = vmax.f32 %v3081, 0.0
      %v3198 = vmax.f32 %v3083, 0.0
      %v3199 = vmax.f32 %v3085, 0.0
      %v3200 = vmax.f32 %v3087, 0.0
      %v3201 = vmax.f32 %v3091, 0.0
      %v3202 = vmax.f32 %v3093, 0.0
      %v3203 = vmax.f32 %v3095, 0.0
      %v3204 = vmax.f32 %v3097, 0.0
      %v3205 = vmax.f32 %v3101, 0.0
      %v3206 = vmax.f32 %v3103, 0.0
      %v3207 = vmax.f32 %v3105, 0.0
      %v3208 = vmax.f32 %v3107, 0.0
      %v3209 = vmax.f32 %v3111, 0.0
      %v3210 = vmax.f32 %v3113, 0.0
      %v3211 = vmax.f32 %v3115, 0.0
      %v3212 = vmax.f32 %v3117, 0.0
      %v3213 = vmax.f32 %v3121, 0.0
      %v3214 = vmax.f32 %v3123, 0.0
      %v3215 = vmax.f32 %v3125, 0.0
      %v3216 = vmax.f32 %v3127, 0.0
      %v3217 = vmax.f32 %v3131, 0.0
      %v3218 = vmax.f32 %v3133, 0.0
      %v3219 = vmax.f32 %v3135, 0.0
      %v3220 = vmax.f32 %v3137, 0.0
      %v3221 = vmax.f32 %v3141, 0.0
      %v3222 = vmax.f32 %v3143, 0.0
      %v3223 = vmax.f32 %v3145, 0.0
      %v3224 = vmax.f32 %v3147, 0.0
      %v3225 = vmax.f32 %v3151, 0.0
      %v3226 = vmax.f32 %v3153, 0.0
      %v3227 = vmax.f32 %v3155, 0.0
      %v3228 = vmax.f32 %v3157, 0.0
      %v3229 = vmax.f32 %v3161, 0.0
      %v3230 = vmax.f32 %v3163, 0.0
      %v3231 = vmax.f32 %v3165, 0.0
      %v3232 = vmax.f32 %v3167, 0.0
      %s3233 = scalar_lea.vmem %s3, 1024
      %v3234 = vld [vmem:[%s3233] sm:$0xff]
      %v3235 = vld [vmem:[%s3233 + $0x8] sm:$0xff]
      %v3236 = vld [vmem:[%s3233 + $0x10] sm:$0xff]
      %v3237 = vld [vmem:[%s3233 + $0x18] sm:$0xff]
      %v3238 = vld [vmem:[%s3233 + $0x20] sm:$0xff]
      %v3239 = vld [vmem:[%s3233 + $0x28] sm:$0xff]
      %v3240 = vld [vmem:[%s3233 + $0x30] sm:$0xff]
      %v3241 = vld [vmem:[%s3233 + $0x38] sm:$0xff]
      %v3242 = vld [vmem:[%s3233 + $0x40] sm:$0xff]
      %v3243 = vld [vmem:[%s3233 + $0x48] sm:$0xff]
      %v3244 = vld [vmem:[%s3233 + $0x50] sm:$0xff]
      %v3245 = vld [vmem:[%s3233 + $0x58] sm:$0xff]
      %v3246 = vld [vmem:[%s3233 + $0x60] sm:$0xff]
      %v3247 = vld [vmem:[%s3233 + $0x68] sm:$0xff]
      %v3248 = vld [vmem:[%s3233 + $0x70] sm:$0xff]
      %v3249 = vld [vmem:[%s3233 + $0x78] sm:$0xff]
      %v3250 = vld [vmem:[%s3233 + $0x80] sm:$0xff]
      %v3251 = vld [vmem:[%s3233 + $0x88] sm:$0xff]
      %v3252 = vld [vmem:[%s3233 + $0x90] sm:$0xff]
      %v3253 = vld [vmem:[%s3233 + $0x98] sm:$0xff]
      %v3254 = vld [vmem:[%s3233 + $0xa0] sm:$0xff]
      %v3255 = vld [vmem:[%s3233 + $0xa8] sm:$0xff]
      %v3256 = vld [vmem:[%s3233 + $0xb0] sm:$0xff]
      %v3257 = vld [vmem:[%s3233 + $0xb8] sm:$0xff]
      %v3258 = vld [vmem:[%s3233 + $0xc0] sm:$0xff]
      %v3259 = vld [vmem:[%s3233 + $0xc8] sm:$0xff]
      %v3260 = vld [vmem:[%s3233 + $0xd0] sm:$0xff]
      %v3261 = vld [vmem:[%s3233 + $0xd8] sm:$0xff]
      %v3262 = vld [vmem:[%s3233 + $0xe0] sm:$0xff]
      %v3263 = vld [vmem:[%s3233 + $0xe8] sm:$0xff]
      %v3264 = vld [vmem:[%s3233 + $0xf0] sm:$0xff]
      %v3265 = vld [vmem:[%s3233 + $0xf8] sm:$0xff]
      %v3266 = vpack.c.bf16 %v3171, %v3169
      %v3267 = vpack.c.bf16 %v3172, %v3170
      %v3268 = vpack.c.bf16 %v3175, %v3173
      %v3269 = vpack.c.bf16 %v3176, %v3174
      %v3270 = vpack.c.bf16 %v3179, %v3177
      %v3271 = vpack.c.bf16 %v3180, %v3178
      %v3272 = vpack.c.bf16 %v3183, %v3181
      %v3273 = vpack.c.bf16 %v3184, %v3182
      %v3274 = vpack.c.bf16 %v3187, %v3185
      %v3275 = vpack.c.bf16 %v3188, %v3186
      %v3276 = vpack.c.bf16 %v3191, %v3189
      %v3277 = vpack.c.bf16 %v3192, %v3190
      %v3278 = vpack.c.bf16 %v3195, %v3193
      %v3279 = vpack.c.bf16 %v3196, %v3194
      %v3280 = vpack.c.bf16 %v3199, %v3197
      %v3281 = vpack.c.bf16 %v3200, %v3198
      %v3282 = vpack.c.bf16 %v3203, %v3201
      %v3283 = vpack.c.bf16 %v3204, %v3202
      %v3284 = vpack.c.bf16 %v3207, %v3205
      %v3285 = vpack.c.bf16 %v3208, %v3206
      %v3286 = vpack.c.bf16 %v3211, %v3209
      %v3287 = vpack.c.bf16 %v3212, %v3210
      %v3288 = vpack.c.bf16 %v3215, %v3213
      %v3289 = vpack.c.bf16 %v3216, %v3214
      %v3290 = vpack.c.bf16 %v3219, %v3217
      %v3291 = vpack.c.bf16 %v3220, %v3218
      %v3292 = vpack.c.bf16 %v3223, %v3221
      %v3293 = vpack.c.bf16 %v3224, %v3222
      %v3294 = vpack.c.bf16 %v3227, %v3225
      %v3295 = vpack.c.bf16 %v3228, %v3226
      %v3296 = vpack.c.bf16 %v3231, %v3229
      %v3297 = vpack.c.bf16 %v3232, %v3230
      %v3298 = vld [vmem:[%s5] ss:$4 sm:$0x3]
      %v3300 = vlaneseq
      %v3301 = vshrl.u32 %v3300, 7
      %v3302 = vsub.s32 0, %v3301
      %v3303 = vrot.slane %v3298, %v3302
      %v3304 = vlaneseq
      %v3305 = vshrl.u32 %v3304, 7
      %v3306 = vsub.s32 1, %v3305
      %v3307 = vrot.slane %v3298, %v3306
      %v3310 = vmul.f32 %v345, %v3303
      %v3311 = vmul.f32 %v345, %v3307
      %v3312 = vmul.f32 %v350, %v3303
      %v3313 = vmul.f32 %v350, %v3307
      %v3314 = vmul.f32 %v355, %v3303
      %v3315 = vmul.f32 %v355, %v3307
      %v3316 = vmul.f32 %v360, %v3303
      %v3317 = vmul.f32 %v360, %v3307
      %v3318 = vmul.f32 %v365, %v3303
      %v3319 = vmul.f32 %v365, %v3307
      %v3320 = vmul.f32 %v370, %v3303
      %v3321 = vmul.f32 %v370, %v3307
      %v3322 = vmul.f32 %v375, %v3303
      %v3323 = vmul.f32 %v375, %v3307
      %v3324 = vmul.f32 %v380, %v3303
      %v3325 = vmul.f32 %v380, %v3307
      %v3326 = vmul.f32 %v385, %v3303
      %v3327 = vmul.f32 %v385, %v3307
      %v3328 = vmul.f32 %v390, %v3303
      %v3329 = vmul.f32 %v390, %v3307
      %v3330 = vmul.f32 %v395, %v3303
      %v3331 = vmul.f32 %v395, %v3307
      %v3332 = vmul.f32 %v400, %v3303
      %v3333 = vmul.f32 %v400, %v3307
      %v3334 = vmul.f32 %v405, %v3303
      %v3335 = vmul.f32 %v405, %v3307
      %v3336 = vmul.f32 %v410, %v3303
      %v3337 = vmul.f32 %v410, %v3307
      %v3338 = vmul.f32 %v415, %v3303
      %v3339 = vmul.f32 %v415, %v3307
      %v3340 = vmul.f32 %v420, %v3303
      %v3341 = vmul.f32 %v420, %v3307
      %v3342 = vmul.f32 %v425, %v3303
      %v3343 = vmul.f32 %v425, %v3307
      %v3344 = vmul.f32 %v430, %v3303
      %v3345 = vmul.f32 %v430, %v3307
      %v3346 = vmul.f32 %v435, %v3303
      %v3347 = vmul.f32 %v435, %v3307
      %v3348 = vmul.f32 %v440, %v3303
      %v3349 = vmul.f32 %v440, %v3307
      %v3350 = vmul.f32 %v445, %v3303
      %v3351 = vmul.f32 %v445, %v3307
      %v3352 = vmul.f32 %v450, %v3303
      %v3353 = vmul.f32 %v450, %v3307
      %v3354 = vmul.f32 %v455, %v3303
      %v3355 = vmul.f32 %v455, %v3307
      %v3356 = vmul.f32 %v460, %v3303
      %v3357 = vmul.f32 %v460, %v3307
      %v3358 = vmul.f32 %v465, %v3303
      %v3359 = vmul.f32 %v465, %v3307
      %v3360 = vmul.f32 %v470, %v3303
      %v3361 = vmul.f32 %v470, %v3307
      %v3362 = vmul.f32 %v475, %v3303
      %v3363 = vmul.f32 %v475, %v3307
      %v3364 = vmul.f32 %v480, %v3303
      %v3365 = vmul.f32 %v480, %v3307
      %v3366 = vmul.f32 %v485, %v3303
      %v3367 = vmul.f32 %v485, %v3307
      %v3368 = vmul.f32 %v490, %v3303
      %v3369 = vmul.f32 %v490, %v3307
      %v3370 = vmul.f32 %v495, %v3303
      %v3371 = vmul.f32 %v495, %v3307
      %v3372 = vmul.f32 %v500, %v3303
      %v3373 = vmul.f32 %v500, %v3307
      %s3374 = scalar_lea.vmem %s5, 1
      %v3375 = vld [vmem:[%s3374] ss:$4 sm:$0x3]
      %v3377 = vlaneseq
      %v3378 = vshrl.u32 %v3377, 7
      %v3379 = vsub.s32 0, %v3378
      %v3380 = vrot.slane %v3375, %v3379
      %v3381 = vlaneseq
      %v3382 = vshrl.u32 %v3381, 7
      %v3383 = vsub.s32 1, %v3382
      %v3384 = vrot.slane %v3375, %v3383
      %v3387 = vmul.f32 %v581, %v3380
      %v3388 = vmul.f32 %v581, %v3384
      %v3389 = vmul.f32 %v585, %v3380
      %v3390 = vmul.f32 %v585, %v3384
      %v3391 = vmul.f32 %v589, %v3380
      %v3392 = vmul.f32 %v589, %v3384
      %v3393 = vmul.f32 %v593, %v3380
      %v3394 = vmul.f32 %v593, %v3384
      %v3395 = vmul.f32 %v597, %v3380
      %v3396 = vmul.f32 %v597, %v3384
      %v3397 = vmul.f32 %v601, %v3380
      %v3398 = vmul.f32 %v601, %v3384
      %v3399 = vmul.f32 %v605, %v3380
      %v3400 = vmul.f32 %v605, %v3384
      %v3401 = vmul.f32 %v609, %v3380
      %v3402 = vmul.f32 %v609, %v3384
      %v3403 = vmul.f32 %v613, %v3380
      %v3404 = vmul.f32 %v613, %v3384
      %v3405 = vmul.f32 %v617, %v3380
      %v3406 = vmul.f32 %v617, %v3384
      %v3407 = vmul.f32 %v621, %v3380
      %v3408 = vmul.f32 %v621, %v3384
      %v3409 = vmul.f32 %v625, %v3380
      %v3410 = vmul.f32 %v625, %v3384
      %v3411 = vmul.f32 %v629, %v3380
      %v3412 = vmul.f32 %v629, %v3384
      %v3413 = vmul.f32 %v633, %v3380
      %v3414 = vmul.f32 %v633, %v3384
      %v3415 = vmul.f32 %v637, %v3380
      %v3416 = vmul.f32 %v637, %v3384
      %v3417 = vmul.f32 %v641, %v3380
      %v3418 = vmul.f32 %v641, %v3384
      %v3419 = vmul.f32 %v645, %v3380
      %v3420 = vmul.f32 %v645, %v3384
      %v3421 = vmul.f32 %v649, %v3380
      %v3422 = vmul.f32 %v649, %v3384
      %v3423 = vmul.f32 %v653, %v3380
      %v3424 = vmul.f32 %v653, %v3384
      %v3425 = vmul.f32 %v657, %v3380
      %v3426 = vmul.f32 %v657, %v3384
      %v3427 = vmul.f32 %v661, %v3380
      %v3428 = vmul.f32 %v661, %v3384
      %v3429 = vmul.f32 %v665, %v3380
      %v3430 = vmul.f32 %v665, %v3384
      %v3431 = vmul.f32 %v669, %v3380
      %v3432 = vmul.f32 %v669, %v3384
      %v3433 = vmul.f32 %v673, %v3380
      %v3434 = vmul.f32 %v673, %v3384
      %v3435 = vmul.f32 %v677, %v3380
      %v3436 = vmul.f32 %v677, %v3384
      %v3437 = vmul.f32 %v681, %v3380
      %v3438 = vmul.f32 %v681, %v3384
      %v3439 = vmul.f32 %v685, %v3380
      %v3440 = vmul.f32 %v685, %v3384
      %v3441 = vmul.f32 %v689, %v3380
      %v3442 = vmul.f32 %v689, %v3384
      %v3443 = vmul.f32 %v693, %v3380
      %v3444 = vmul.f32 %v693, %v3384
      %v3445 = vmul.f32 %v697, %v3380
      %v3446 = vmul.f32 %v697, %v3384
      %v3447 = vmul.f32 %v701, %v3380
      %v3448 = vmul.f32 %v701, %v3384
      %v3449 = vmul.f32 %v705, %v3380
      %v3450 = vmul.f32 %v705, %v3384
      %v3451 = vadd.f32 %v3310, %v3387
      %v3452 = vadd.f32 %v3311, %v3388
      %v3453 = vadd.f32 %v3312, %v3389
      %v3454 = vadd.f32 %v3313, %v3390
      %v3455 = vadd.f32 %v3314, %v3391
      %v3456 = vadd.f32 %v3315, %v3392
      %v3457 = vadd.f32 %v3316, %v3393
      %v3458 = vadd.f32 %v3317, %v3394
      %v3459 = vadd.f32 %v3318, %v3395
      %v3460 = vadd.f32 %v3319, %v3396
      %v3461 = vadd.f32 %v3320, %v3397
      %v3462 = vadd.f32 %v3321, %v3398
      %v3463 = vadd.f32 %v3322, %v3399
      %v3464 = vadd.f32 %v3323, %v3400
      %v3465 = vadd.f32 %v3324, %v3401
      %v3466 = vadd.f32 %v3325, %v3402
      %v3467 = vadd.f32 %v3326, %v3403
      %v3468 = vadd.f32 %v3327, %v3404
      %v3469 = vadd.f32 %v3328, %v3405
      %v3470 = vadd.f32 %v3329, %v3406
      %v3471 = vadd.f32 %v3330, %v3407
      %v3472 = vadd.f32 %v3331, %v3408
      %v3473 = vadd.f32 %v3332, %v3409
      %v3474 = vadd.f32 %v3333, %v3410
      %v3475 = vadd.f32 %v3334, %v3411
      %v3476 = vadd.f32 %v3335, %v3412
      %v3477 = vadd.f32 %v3336, %v3413
      %v3478 = vadd.f32 %v3337, %v3414
      %v3479 = vadd.f32 %v3338, %v3415
      %v3480 = vadd.f32 %v3339, %v3416
      %v3481 = vadd.f32 %v3340, %v3417
      %v3482 = vadd.f32 %v3341, %v3418
      %v3483 = vadd.f32 %v3342, %v3419
      %v3484 = vadd.f32 %v3343, %v3420
      %v3485 = vadd.f32 %v3344, %v3421
      %v3486 = vadd.f32 %v3345, %v3422
      %v3487 = vadd.f32 %v3346, %v3423
      %v3488 = vadd.f32 %v3347, %v3424
      %v3489 = vadd.f32 %v3348, %v3425
      %v3490 = vadd.f32 %v3349, %v3426
      %v3491 = vadd.f32 %v3350, %v3427
      %v3492 = vadd.f32 %v3351, %v3428
      %v3493 = vadd.f32 %v3352, %v3429
      %v3494 = vadd.f32 %v3353, %v3430
      %v3495 = vadd.f32 %v3354, %v3431
      %v3496 = vadd.f32 %v3355, %v3432
      %v3497 = vadd.f32 %v3356, %v3433
      %v3498 = vadd.f32 %v3357, %v3434
      %v3499 = vadd.f32 %v3358, %v3435
      %v3500 = vadd.f32 %v3359, %v3436
      %v3501 = vadd.f32 %v3360, %v3437
      %v3502 = vadd.f32 %v3361, %v3438
      %v3503 = vadd.f32 %v3362, %v3439
      %v3504 = vadd.f32 %v3363, %v3440
      %v3505 = vadd.f32 %v3364, %v3441
      %v3506 = vadd.f32 %v3365, %v3442
      %v3507 = vadd.f32 %v3366, %v3443
      %v3508 = vadd.f32 %v3367, %v3444
      %v3509 = vadd.f32 %v3368, %v3445
      %v3510 = vadd.f32 %v3369, %v3446
      %v3511 = vadd.f32 %v3370, %v3447
      %v3512 = vadd.f32 %v3371, %v3448
      %v3513 = vadd.f32 %v3372, %v3449
      %v3514 = vadd.f32 %v3373, %v3450
      %s3515 = scalar_lea.vmem %s5, 2
      %v3516 = vld [vmem:[%s3515] ss:$4 sm:$0x3]
      %v3518 = vlaneseq
      %v3519 = vshrl.u32 %v3518, 7
      %v3520 = vsub.s32 0, %v3519
      %v3521 = vrot.slane %v3516, %v3520
      %v3522 = vlaneseq
      %v3523 = vshrl.u32 %v3522, 7
      %v3524 = vsub.s32 1, %v3523
      %v3525 = vrot.slane %v3516, %v3524
      %v3528 = vmul.f32 %v850, %v3521
      %v3529 = vmul.f32 %v850, %v3525
      %v3530 = vmul.f32 %v854, %v3521
      %v3531 = vmul.f32 %v854, %v3525
      %v3532 = vmul.f32 %v858, %v3521
      %v3533 = vmul.f32 %v858, %v3525
      %v3534 = vmul.f32 %v862, %v3521
      %v3535 = vmul.f32 %v862, %v3525
      %v3536 = vmul.f32 %v866, %v3521
      %v3537 = vmul.f32 %v866, %v3525
      %v3538 = vmul.f32 %v870, %v3521
      %v3539 = vmul.f32 %v870, %v3525
      %v3540 = vmul.f32 %v874, %v3521
      %v3541 = vmul.f32 %v874, %v3525
      %v3542 = vmul.f32 %v878, %v3521
      %v3543 = vmul.f32 %v878, %v3525
      %v3544 = vmul.f32 %v882, %v3521
      %v3545 = vmul.f32 %v882, %v3525
      %v3546 = vmul.f32 %v886, %v3521
      %v3547 = vmul.f32 %v886, %v3525
      %v3548 = vmul.f32 %v890, %v3521
      %v3549 = vmul.f32 %v890, %v3525
      %v3550 = vmul.f32 %v894, %v3521
      %v3551 = vmul.f32 %v894, %v3525
      %v3552 = vmul.f32 %v898, %v3521
      %v3553 = vmul.f32 %v898, %v3525
      %v3554 = vmul.f32 %v902, %v3521
      %v3555 = vmul.f32 %v902, %v3525
      %v3556 = vmul.f32 %v906, %v3521
      %v3557 = vmul.f32 %v906, %v3525
      %v3558 = vmul.f32 %v910, %v3521
      %v3559 = vmul.f32 %v910, %v3525
      %v3560 = vmul.f32 %v914, %v3521
      %v3561 = vmul.f32 %v914, %v3525
      %v3562 = vmul.f32 %v918, %v3521
      %v3563 = vmul.f32 %v918, %v3525
      %v3564 = vmul.f32 %v922, %v3521
      %v3565 = vmul.f32 %v922, %v3525
      %v3566 = vmul.f32 %v926, %v3521
      %v3567 = vmul.f32 %v926, %v3525
      %v3568 = vmul.f32 %v930, %v3521
      %v3569 = vmul.f32 %v930, %v3525
      %v3570 = vmul.f32 %v934, %v3521
      %v3571 = vmul.f32 %v934, %v3525
      %v3572 = vmul.f32 %v938, %v3521
      %v3573 = vmul.f32 %v938, %v3525
      %v3574 = vmul.f32 %v942, %v3521
      %v3575 = vmul.f32 %v942, %v3525
      %v3576 = vmul.f32 %v946, %v3521
      %v3577 = vmul.f32 %v946, %v3525
      %v3578 = vmul.f32 %v950, %v3521
      %v3579 = vmul.f32 %v950, %v3525
      %v3580 = vmul.f32 %v954, %v3521
      %v3581 = vmul.f32 %v954, %v3525
      %v3582 = vmul.f32 %v958, %v3521
      %v3583 = vmul.f32 %v958, %v3525
      %v3584 = vmul.f32 %v962, %v3521
      %v3585 = vmul.f32 %v962, %v3525
      %v3586 = vmul.f32 %v966, %v3521
      %v3587 = vmul.f32 %v966, %v3525
      %v3588 = vmul.f32 %v970, %v3521
      %v3589 = vmul.f32 %v970, %v3525
      %v3590 = vmul.f32 %v974, %v3521
      %v3591 = vmul.f32 %v974, %v3525
      %v3592 = vadd.f32 %v3451, %v3528
      %v3593 = vadd.f32 %v3452, %v3529
      %v3594 = vadd.f32 %v3453, %v3530
      %v3595 = vadd.f32 %v3454, %v3531
      %v3596 = vadd.f32 %v3455, %v3532
      %v3597 = vadd.f32 %v3456, %v3533
      %v3598 = vadd.f32 %v3457, %v3534
      %v3599 = vadd.f32 %v3458, %v3535
      %v3600 = vadd.f32 %v3459, %v3536
      %v3601 = vadd.f32 %v3460, %v3537
      %v3602 = vadd.f32 %v3461, %v3538
      %v3603 = vadd.f32 %v3462, %v3539
      %v3604 = vadd.f32 %v3463, %v3540
      %v3605 = vadd.f32 %v3464, %v3541
      %v3606 = vadd.f32 %v3465, %v3542
      %v3607 = vadd.f32 %v3466, %v3543
      %v3608 = vadd.f32 %v3467, %v3544
      %v3609 = vadd.f32 %v3468, %v3545
      %v3610 = vadd.f32 %v3469, %v3546
      %v3611 = vadd.f32 %v3470, %v3547
      %v3612 = vadd.f32 %v3471, %v3548
      %v3613 = vadd.f32 %v3472, %v3549
      %v3614 = vadd.f32 %v3473, %v3550
      %v3615 = vadd.f32 %v3474, %v3551
      %v3616 = vadd.f32 %v3475, %v3552
      %v3617 = vadd.f32 %v3476, %v3553
      %v3618 = vadd.f32 %v3477, %v3554
      %v3619 = vadd.f32 %v3478, %v3555
      %v3620 = vadd.f32 %v3479, %v3556
      %v3621 = vadd.f32 %v3480, %v3557
      %v3622 = vadd.f32 %v3481, %v3558
      %v3623 = vadd.f32 %v3482, %v3559
      %v3624 = vadd.f32 %v3483, %v3560
      %v3625 = vadd.f32 %v3484, %v3561
      %v3626 = vadd.f32 %v3485, %v3562
      %v3627 = vadd.f32 %v3486, %v3563
      %v3628 = vadd.f32 %v3487, %v3564
      %v3629 = vadd.f32 %v3488, %v3565
      %v3630 = vadd.f32 %v3489, %v3566
      %v3631 = vadd.f32 %v3490, %v3567
      %v3632 = vadd.f32 %v3491, %v3568
      %v3633 = vadd.f32 %v3492, %v3569
      %v3634 = vadd.f32 %v3493, %v3570
      %v3635 = vadd.f32 %v3494, %v3571
      %v3636 = vadd.f32 %v3495, %v3572
      %v3637 = vadd.f32 %v3496, %v3573
      %v3638 = vadd.f32 %v3497, %v3574
      %v3639 = vadd.f32 %v3498, %v3575
      %v3640 = vadd.f32 %v3499, %v3576
      %v3641 = vadd.f32 %v3500, %v3577
      %v3642 = vadd.f32 %v3501, %v3578
      %v3643 = vadd.f32 %v3502, %v3579
      %v3644 = vadd.f32 %v3503, %v3580
      %v3645 = vadd.f32 %v3504, %v3581
      %v3646 = vadd.f32 %v3505, %v3582
      %v3647 = vadd.f32 %v3506, %v3583
      %v3648 = vadd.f32 %v3507, %v3584
      %v3649 = vadd.f32 %v3508, %v3585
      %v3650 = vadd.f32 %v3509, %v3586
      %v3651 = vadd.f32 %v3510, %v3587
      %v3652 = vadd.f32 %v3511, %v3588
      %v3653 = vadd.f32 %v3512, %v3589
      %v3654 = vadd.f32 %v3513, %v3590
      %v3655 = vadd.f32 %v3514, %v3591
      %v3688 = vunpack.c.l.b16 %v3234
      %v3689 = vunpack.c.h.b16 %v3234
      %v3690 = vunpack.c.l.b16 %v3235
      %v3691 = vunpack.c.h.b16 %v3235
      %v3692 = vunpack.c.l.b16 %v3236
      %v3693 = vunpack.c.h.b16 %v3236
      %v3694 = vunpack.c.l.b16 %v3237
      %v3695 = vunpack.c.h.b16 %v3237
      %v3696 = vunpack.c.l.b16 %v3238
      %v3697 = vunpack.c.h.b16 %v3238
      %v3698 = vunpack.c.l.b16 %v3239
      %v3699 = vunpack.c.h.b16 %v3239
      %v3700 = vunpack.c.l.b16 %v3240
      %v3701 = vunpack.c.h.b16 %v3240
      %v3702 = vunpack.c.l.b16 %v3241
      %v3703 = vunpack.c.h.b16 %v3241
      %v3704 = vunpack.c.l.b16 %v3242
      %v3705 = vunpack.c.h.b16 %v3242
      %v3706 = vunpack.c.l.b16 %v3243
      %v3707 = vunpack.c.h.b16 %v3243
      %v3708 = vunpack.c.l.b16 %v3244
      %v3709 = vunpack.c.h.b16 %v3244
      %v3710 = vunpack.c.l.b16 %v3245
      %v3711 = vunpack.c.h.b16 %v3245
      %v3712 = vunpack.c.l.b16 %v3246
      %v3713 = vunpack.c.h.b16 %v3246
      %v3714 = vunpack.c.l.b16 %v3247
      %v3715 = vunpack.c.h.b16 %v3247
      %v3716 = vunpack.c.l.b16 %v3248
      %v3717 = vunpack.c.h.b16 %v3248
      %v3718 = vunpack.c.l.b16 %v3249
      %v3719 = vunpack.c.h.b16 %v3249
      %v3720 = vunpack.c.l.b16 %v3250
      %v3721 = vunpack.c.h.b16 %v3250
      %v3722 = vunpack.c.l.b16 %v3251
      %v3723 = vunpack.c.h.b16 %v3251
      %v3724 = vunpack.c.l.b16 %v3252
      %v3725 = vunpack.c.h.b16 %v3252
      %v3726 = vunpack.c.l.b16 %v3253
      %v3727 = vunpack.c.h.b16 %v3253
      %v3728 = vunpack.c.l.b16 %v3254
      %v3729 = vunpack.c.h.b16 %v3254
      %v3730 = vunpack.c.l.b16 %v3255
      %v3731 = vunpack.c.h.b16 %v3255
      %v3732 = vunpack.c.l.b16 %v3256
      %v3733 = vunpack.c.h.b16 %v3256
      %v3734 = vunpack.c.l.b16 %v3257
      %v3735 = vunpack.c.h.b16 %v3257
      %v3736 = vunpack.c.l.b16 %v3258
      %v3737 = vunpack.c.h.b16 %v3258
      %v3738 = vunpack.c.l.b16 %v3259
      %v3739 = vunpack.c.h.b16 %v3259
      %v3740 = vunpack.c.l.b16 %v3260
      %v3741 = vunpack.c.h.b16 %v3260
      %v3742 = vunpack.c.l.b16 %v3261
      %v3743 = vunpack.c.h.b16 %v3261
      %v3744 = vunpack.c.l.b16 %v3262
      %v3745 = vunpack.c.h.b16 %v3262
      %v3746 = vunpack.c.l.b16 %v3263
      %v3747 = vunpack.c.h.b16 %v3263
      %v3748 = vunpack.c.l.b16 %v3264
      %v3749 = vunpack.c.h.b16 %v3264
      %v3750 = vunpack.c.l.b16 %v3265
      %v3751 = vunpack.c.h.b16 %v3265
      %v3752 = vpack.c.b16 %v3690, %v3688
      %v3753 = vpack.c.b16 %v3691, %v3689
      %v3754 = vpack.c.b16 %v3694, %v3692
      %v3755 = vpack.c.b16 %v3695, %v3693
      %v3756 = vpack.c.b16 %v3698, %v3696
      %v3757 = vpack.c.b16 %v3699, %v3697
      %v3758 = vpack.c.b16 %v3702, %v3700
      %v3759 = vpack.c.b16 %v3703, %v3701
      %v3760 = vpack.c.b16 %v3706, %v3704
      %v3761 = vpack.c.b16 %v3707, %v3705
      %v3762 = vpack.c.b16 %v3710, %v3708
      %v3763 = vpack.c.b16 %v3711, %v3709
      %v3764 = vpack.c.b16 %v3714, %v3712
      %v3765 = vpack.c.b16 %v3715, %v3713
      %v3766 = vpack.c.b16 %v3718, %v3716
      %v3767 = vpack.c.b16 %v3719, %v3717
      %v3768 = vpack.c.b16 %v3722, %v3720
      %v3769 = vpack.c.b16 %v3723, %v3721
      %v3770 = vpack.c.b16 %v3726, %v3724
      %v3771 = vpack.c.b16 %v3727, %v3725
      %v3772 = vpack.c.b16 %v3730, %v3728
      %v3773 = vpack.c.b16 %v3731, %v3729
      %v3774 = vpack.c.b16 %v3734, %v3732
      %v3775 = vpack.c.b16 %v3735, %v3733
      %v3776 = vpack.c.b16 %v3738, %v3736
      %v3777 = vpack.c.b16 %v3739, %v3737
      %v3778 = vpack.c.b16 %v3742, %v3740
      %v3779 = vpack.c.b16 %v3743, %v3741
      %v3780 = vpack.c.b16 %v3746, %v3744
      %v3781 = vpack.c.b16 %v3747, %v3745
      %v3782 = vpack.c.b16 %v3750, %v3748
      %v3783 = vpack.c.b16 %v3751, %v3749
      %3816 = vmatprep.subr.bf16.mxu0 %v3767
      %3817 = vmatpush1.bf16.msra.mxu0 %v3766
      %3818 = vmatprep.subr.bf16.mxu0 %v3765
      %3819 = vmatpush1.bf16.msra.mxu0 %v3764
      %3820 = vmatprep.subr.bf16.mxu0 %v3763
      %3821 = vmatpush1.bf16.msra.mxu0 %v3762
      %3822 = vmatprep.subr.bf16.mxu0 %v3761
      %3823 = vmatpush1.bf16.msra.mxu0 %v3760
      %3824 = vmatprep.subr.bf16.mxu0 %v3759
      %3825 = vmatpush1.bf16.msra.mxu0 %v3758
      %3826 = vmatprep.subr.bf16.mxu0 %v3757
      %3827 = vmatpush1.bf16.msra.mxu0 %v3756
      %3828 = vmatprep.subr.bf16.mxu0 %v3755
      %3829 = vmatpush1.bf16.msra.mxu0 %v3754
      %3830 = vmatprep.subr.bf16.mxu0 %v3753
      %3831 = vmatpush1.bf16.msra.mxu0 %v3752
      %3832 = vmatprep.subr.bf16.mxu0 %v3783
      %3833 = vmatpush2.bf16.msra.mxu0 %v3782
      %3834 = vmatprep.subr.bf16.mxu0 %v3781
      %3835 = vmatpush2.bf16.msra.mxu0 %v3780
      %3836 = vmatprep.subr.bf16.mxu0 %v3779
      %3837 = vmatpush2.bf16.msra.mxu0 %v3778
      %3838 = vmatprep.subr.bf16.mxu0 %v3777
      %3839 = vmatpush2.bf16.msra.mxu0 %v3776
      %3840 = vmatprep.subr.bf16.mxu0 %v3775
      %3841 = vmatpush2.bf16.msra.mxu0 %v3774
      %3842 = vmatprep.subr.bf16.mxu0 %v3773
      %3843 = vmatpush2.bf16.msra.mxu0 %v3772
      %3844 = vmatprep.subr.bf16.mxu0 %v3771
      %3845 = vmatpush2.bf16.msra.mxu0 %v3770
      %3846 = vmatprep.subr.bf16.mxu0 %v3769
      %3847 = vmatpush2.bf16.msra.mxu0 %v3768
      %3848 = vmatprep.mubr.bf16.mxu0 %v3267
      %3849 = vmatmul.mubr.bf16.gmra.mxu0 %v3266
      %v3850 = vpop.f32.mrf.mxu0
      %v3851 = vadd.f32 %v3592, %v3850
      %v3852 = vpop.f32.mrf.mxu0
      %v3853 = vadd.f32 %v3593, %v3852
      %v3854 = vpop.f32.mrf.mxu0
      %v3855 = vadd.f32 %v3594, %v3854
      %v3856 = vpop.f32.mrf.mxu0
      %v3857 = vadd.f32 %v3595, %v3856
      %3858 = vmatprep.mubr.bf16.mxu0 %v3269
      %3859 = vmatmul.mubr.bf16.gmra.mxu0 %v3268
      %v3860 = vpop.f32.mrf.mxu0
      %v3861 = vadd.f32 %v3596, %v3860
      %v3862 = vpop.f32.mrf.mxu0
      %v3863 = vadd.f32 %v3597, %v3862
      %v3864 = vpop.f32.mrf.mxu0
      %v3865 = vadd.f32 %v3598, %v3864
      %v3866 = vpop.f32.mrf.mxu0
      %v3867 = vadd.f32 %v3599, %v3866
      %3868 = vmatprep.mubr.bf16.mxu0 %v3271
      %3869 = vmatmul.mubr.bf16.gmra.mxu0 %v3270
      %v3870 = vpop.f32.mrf.mxu0
      %v3871 = vadd.f32 %v3600, %v3870
      %v3872 = vpop.f32.mrf.mxu0
      %v3873 = vadd.f32 %v3601, %v3872
      %v3874 = vpop.f32.mrf.mxu0
      %v3875 = vadd.f32 %v3602, %v3874
      %v3876 = vpop.f32.mrf.mxu0
      %v3877 = vadd.f32 %v3603, %v3876
      %3878 = vmatprep.mubr.bf16.mxu0 %v3273
      %3879 = vmatmul.mubr.bf16.gmra.mxu0 %v3272
      %v3880 = vpop.f32.mrf.mxu0
      %v3881 = vadd.f32 %v3604, %v3880
      %v3882 = vpop.f32.mrf.mxu0
      %v3883 = vadd.f32 %v3605, %v3882
      %v3884 = vpop.f32.mrf.mxu0
      %v3885 = vadd.f32 %v3606, %v3884
      %v3886 = vpop.f32.mrf.mxu0
      %v3887 = vadd.f32 %v3607, %v3886
      %3888 = vmatprep.mubr.bf16.mxu0 %v3275
      %3889 = vmatmul.mubr.bf16.gmra.mxu0 %v3274
      %v3890 = vpop.f32.mrf.mxu0
      %v3891 = vadd.f32 %v3608, %v3890
      %v3892 = vpop.f32.mrf.mxu0
      %v3893 = vadd.f32 %v3609, %v3892
      %v3894 = vpop.f32.mrf.mxu0
      %v3895 = vadd.f32 %v3610, %v3894
      %v3896 = vpop.f32.mrf.mxu0
      %v3897 = vadd.f32 %v3611, %v3896
      %3898 = vmatprep.mubr.bf16.mxu0 %v3277
      %3899 = vmatmul.mubr.bf16.gmra.mxu0 %v3276
      %v3900 = vpop.f32.mrf.mxu0
      %v3901 = vadd.f32 %v3612, %v3900
      %v3902 = vpop.f32.mrf.mxu0
      %v3903 = vadd.f32 %v3613, %v3902
      %v3904 = vpop.f32.mrf.mxu0
      %v3905 = vadd.f32 %v3614, %v3904
      %v3906 = vpop.f32.mrf.mxu0
      %v3907 = vadd.f32 %v3615, %v3906
      %3908 = vmatprep.mubr.bf16.mxu0 %v3279
      %3909 = vmatmul.mubr.bf16.gmra.mxu0 %v3278
      %v3910 = vpop.f32.mrf.mxu0
      %v3911 = vadd.f32 %v3616, %v3910
      %v3912 = vpop.f32.mrf.mxu0
      %v3913 = vadd.f32 %v3617, %v3912
      %v3914 = vpop.f32.mrf.mxu0
      %v3915 = vadd.f32 %v3618, %v3914
      %v3916 = vpop.f32.mrf.mxu0
      %v3917 = vadd.f32 %v3619, %v3916
      %3918 = vmatprep.mubr.bf16.mxu0 %v3281
      %3919 = vmatmul.mubr.bf16.gmra.mxu0 %v3280
      %v3920 = vpop.f32.mrf.mxu0
      %v3921 = vadd.f32 %v3620, %v3920
      %v3922 = vpop.f32.mrf.mxu0
      %v3923 = vadd.f32 %v3621, %v3922
      %v3924 = vpop.f32.mrf.mxu0
      %v3925 = vadd.f32 %v3622, %v3924
      %v3926 = vpop.f32.mrf.mxu0
      %v3927 = vadd.f32 %v3623, %v3926
      %3928 = vmatprep.mubr.bf16.mxu0 %v3283
      %3929 = vmatmul.mubr.bf16.gmra.mxu0 %v3282
      %v3930 = vpop.f32.mrf.mxu0
      %v3931 = vadd.f32 %v3624, %v3930
      %v3932 = vpop.f32.mrf.mxu0
      %v3933 = vadd.f32 %v3625, %v3932
      %v3934 = vpop.f32.mrf.mxu0
      %v3935 = vadd.f32 %v3626, %v3934
      %v3936 = vpop.f32.mrf.mxu0
      %v3937 = vadd.f32 %v3627, %v3936
      %3938 = vmatprep.mubr.bf16.mxu0 %v3285
      %3939 = vmatmul.mubr.bf16.gmra.mxu0 %v3284
      %v3940 = vpop.f32.mrf.mxu0
      %v3941 = vadd.f32 %v3628, %v3940
      %v3942 = vpop.f32.mrf.mxu0
      %v3943 = vadd.f32 %v3629, %v3942
      %v3944 = vpop.f32.mrf.mxu0
      %v3945 = vadd.f32 %v3630, %v3944
      %v3946 = vpop.f32.mrf.mxu0
      %v3947 = vadd.f32 %v3631, %v3946
      %3948 = vmatprep.mubr.bf16.mxu0 %v3287
      %3949 = vmatmul.mubr.bf16.gmra.mxu0 %v3286
      %v3950 = vpop.f32.mrf.mxu0
      %v3951 = vadd.f32 %v3632, %v3950
      %v3952 = vpop.f32.mrf.mxu0
      %v3953 = vadd.f32 %v3633, %v3952
      %v3954 = vpop.f32.mrf.mxu0
      %v3955 = vadd.f32 %v3634, %v3954
      %v3956 = vpop.f32.mrf.mxu0
      %v3957 = vadd.f32 %v3635, %v3956
      %3958 = vmatprep.mubr.bf16.mxu0 %v3289
      %3959 = vmatmul.mubr.bf16.gmra.mxu0 %v3288
      %v3960 = vpop.f32.mrf.mxu0
      %v3961 = vadd.f32 %v3636, %v3960
      %v3962 = vpop.f32.mrf.mxu0
      %v3963 = vadd.f32 %v3637, %v3962
      %v3964 = vpop.f32.mrf.mxu0
      %v3965 = vadd.f32 %v3638, %v3964
      %v3966 = vpop.f32.mrf.mxu0
      %v3967 = vadd.f32 %v3639, %v3966
      %3968 = vmatprep.mubr.bf16.mxu0 %v3291
      %3969 = vmatmul.mubr.bf16.gmra.mxu0 %v3290
      %v3970 = vpop.f32.mrf.mxu0
      %v3971 = vadd.f32 %v3640, %v3970
      %v3972 = vpop.f32.mrf.mxu0
      %v3973 = vadd.f32 %v3641, %v3972
      %v3974 = vpop.f32.mrf.mxu0
      %v3975 = vadd.f32 %v3642, %v3974
      %v3976 = vpop.f32.mrf.mxu0
      %v3977 = vadd.f32 %v3643, %v3976
      %3978 = vmatprep.mubr.bf16.mxu0 %v3293
      %3979 = vmatmul.mubr.bf16.gmra.mxu0 %v3292
      %v3980 = vpop.f32.mrf.mxu0
      %v3981 = vadd.f32 %v3644, %v3980
      %v3982 = vpop.f32.mrf.mxu0
      %v3983 = vadd.f32 %v3645, %v3982
      %v3984 = vpop.f32.mrf.mxu0
      %v3985 = vadd.f32 %v3646, %v3984
      %v3986 = vpop.f32.mrf.mxu0
      %v3987 = vadd.f32 %v3647, %v3986
      %3988 = vmatprep.mubr.bf16.mxu0 %v3295
      %3989 = vmatmul.mubr.bf16.gmra.mxu0 %v3294
      %v3990 = vpop.f32.mrf.mxu0
      %v3991 = vadd.f32 %v3648, %v3990
      %v3992 = vpop.f32.mrf.mxu0
      %v3993 = vadd.f32 %v3649, %v3992
      %v3994 = vpop.f32.mrf.mxu0
      %v3995 = vadd.f32 %v3650, %v3994
      %v3996 = vpop.f32.mrf.mxu0
      %v3997 = vadd.f32 %v3651, %v3996
      %3998 = vmatprep.mubr.bf16.mxu0 %v3297
      %3999 = vmatmul.mubr.bf16.gmra.mxu0 %v3296
      %v4000 = vpop.f32.mrf.mxu0
      %v4001 = vadd.f32 %v3652, %v4000
      %v4002 = vpop.f32.mrf.mxu0
      %v4003 = vadd.f32 %v3653, %v4002
      %v4004 = vpop.f32.mrf.mxu0
      %v4005 = vadd.f32 %v3654, %v4004
      %v4006 = vpop.f32.mrf.mxu0
      %v4007 = vadd.f32 %v3655, %v4006
      %4008 = vdwg.mxu0
      %s4009 = scalar_lea.vmem %s4, 4
      %v4010 = vld [vmem:[%s4009] ss:$8 sm:$0x3]
      %v4012 = vlaneseq
      %v4013 = vshrl.u32 %v4012, 7
      %v4014 = vsub.s32 0, %v4013
      %v4015 = vrot.slane %v4010, %v4014
      %v4016 = vlaneseq
      %v4017 = vshrl.u32 %v4016, 7
      %v4018 = vsub.s32 1, %v4017
      %v4019 = vrot.slane %v4010, %v4018
      %v4022 = vadd.f32 %v3851, %v4015
      %v4023 = vadd.f32 %v3853, %v4019
      %v4024 = vadd.f32 %v3855, %v4015
      %v4025 = vadd.f32 %v3857, %v4019
      %v4026 = vadd.f32 %v3861, %v4015
      %v4027 = vadd.f32 %v3863, %v4019
      %v4028 = vadd.f32 %v3865, %v4015
      %v4029 = vadd.f32 %v3867, %v4019
      %v4030 = vadd.f32 %v3871, %v4015
      %v4031 = vadd.f32 %v3873, %v4019
      %v4032 = vadd.f32 %v3875, %v4015
      %v4033 = vadd.f32 %v3877, %v4019
      %v4034 = vadd.f32 %v3881, %v4015
      %v4035 = vadd.f32 %v3883, %v4019
      %v4036 = vadd.f32 %v3885, %v4015
      %v4037 = vadd.f32 %v3887, %v4019
      %v4038 = vadd.f32 %v3891, %v4015
      %v4039 = vadd.f32 %v3893, %v4019
      %v4040 = vadd.f32 %v3895, %v4015
      %v4041 = vadd.f32 %v3897, %v4019
      %v4042 = vadd.f32 %v3901, %v4015
      %v4043 = vadd.f32 %v3903, %v4019
      %v4044 = vadd.f32 %v3905, %v4015
      %v4045 = vadd.f32 %v3907, %v4019
      %v4046 = vadd.f32 %v3911, %v4015
      %v4047 = vadd.f32 %v3913, %v4019
      %v4048 = vadd.f32 %v3915, %v4015
      %v4049 = vadd.f32 %v3917, %v4019
      %v4050 = vadd.f32 %v3921, %v4015
      %v4051 = vadd.f32 %v3923, %v4019
      %v4052 = vadd.f32 %v3925, %v4015
      %v4053 = vadd.f32 %v3927, %v4019
      %v4054 = vadd.f32 %v3931, %v4015
      %v4055 = vadd.f32 %v3933, %v4019
      %v4056 = vadd.f32 %v3935, %v4015
      %v4057 = vadd.f32 %v3937, %v4019
      %v4058 = vadd.f32 %v3941, %v4015
      %v4059 = vadd.f32 %v3943, %v4019
      %v4060 = vadd.f32 %v3945, %v4015
      %v4061 = vadd.f32 %v3947, %v4019
      %v4062 = vadd.f32 %v3951, %v4015
      %v4063 = vadd.f32 %v3953, %v4019
      %v4064 = vadd.f32 %v3955, %v4015
      %v4065 = vadd.f32 %v3957, %v4019
      %v4066 = vadd.f32 %v3961, %v4015
      %v4067 = vadd.f32 %v3963, %v4019
      %v4068 = vadd.f32 %v3965, %v4015
      %v4069 = vadd.f32 %v3967, %v4019
      %v4070 = vadd.f32 %v3971, %v4015
      %v4071 = vadd.f32 %v3973, %v4019
      %v4072 = vadd.f32 %v3975, %v4015
      %v4073 = vadd.f32 %v3977, %v4019
      %v4074 = vadd.f32 %v3981, %v4015
      %v4075 = vadd.f32 %v3983, %v4019
      %v4076 = vadd.f32 %v3985, %v4015
      %v4077 = vadd.f32 %v3987, %v4019
      %v4078 = vadd.f32 %v3991, %v4015
      %v4079 = vadd.f32 %v3993, %v4019
      %v4080 = vadd.f32 %v3995, %v4015
      %v4081 = vadd.f32 %v3997, %v4019
      %v4082 = vadd.f32 %v4001, %v4015
      %v4083 = vadd.f32 %v4003, %v4019
      %v4084 = vadd.f32 %v4005, %v4015
      %v4085 = vadd.f32 %v4007, %v4019
      %v4086 = vmax.f32 %v4022, 0.0
      %v4087 = vmax.f32 %v4023, 0.0
      %v4088 = vmax.f32 %v4024, 0.0
      %v4089 = vmax.f32 %v4025, 0.0
      %v4090 = vmax.f32 %v4026, 0.0
      %v4091 = vmax.f32 %v4027, 0.0
      %v4092 = vmax.f32 %v4028, 0.0
      %v4093 = vmax.f32 %v4029, 0.0
      %v4094 = vmax.f32 %v4030, 0.0
      %v4095 = vmax.f32 %v4031, 0.0
      %v4096 = vmax.f32 %v4032, 0.0
      %v4097 = vmax.f32 %v4033, 0.0
      %v4098 = vmax.f32 %v4034, 0.0
      %v4099 = vmax.f32 %v4035, 0.0
      %v4100 = vmax.f32 %v4036, 0.0
      %v4101 = vmax.f32 %v4037, 0.0
      %v4102 = vmax.f32 %v4038, 0.0
      %v4103 = vmax.f32 %v4039, 0.0
      %v4104 = vmax.f32 %v4040, 0.0
      %v4105 = vmax.f32 %v4041, 0.0
      %v4106 = vmax.f32 %v4042, 0.0
      %v4107 = vmax.f32 %v4043, 0.0
      %v4108 = vmax.f32 %v4044, 0.0
      %v4109 = vmax.f32 %v4045, 0.0
      %v4110 = vmax.f32 %v4046, 0.0
      %v4111 = vmax.f32 %v4047, 0.0
      %v4112 = vmax.f32 %v4048, 0.0
      %v4113 = vmax.f32 %v4049, 0.0
      %v4114 = vmax.f32 %v4050, 0.0
      %v4115 = vmax.f32 %v4051, 0.0
      %v4116 = vmax.f32 %v4052, 0.0
      %v4117 = vmax.f32 %v4053, 0.0
      %v4118 = vmax.f32 %v4054, 0.0
      %v4119 = vmax.f32 %v4055, 0.0
      %v4120 = vmax.f32 %v4056, 0.0
      %v4121 = vmax.f32 %v4057, 0.0
      %v4122 = vmax.f32 %v4058, 0.0
      %v4123 = vmax.f32 %v4059, 0.0
      %v4124 = vmax.f32 %v4060, 0.0
      %v4125 = vmax.f32 %v4061, 0.0
      %v4126 = vmax.f32 %v4062, 0.0
      %v4127 = vmax.f32 %v4063, 0.0
      %v4128 = vmax.f32 %v4064, 0.0
      %v4129 = vmax.f32 %v4065, 0.0
      %v4130 = vmax.f32 %v4066, 0.0
      %v4131 = vmax.f32 %v4067, 0.0
      %v4132 = vmax.f32 %v4068, 0.0
      %v4133 = vmax.f32 %v4069, 0.0
      %v4134 = vmax.f32 %v4070, 0.0
      %v4135 = vmax.f32 %v4071, 0.0
      %v4136 = vmax.f32 %v4072, 0.0
      %v4137 = vmax.f32 %v4073, 0.0
      %v4138 = vmax.f32 %v4074, 0.0
      %v4139 = vmax.f32 %v4075, 0.0
      %v4140 = vmax.f32 %v4076, 0.0
      %v4141 = vmax.f32 %v4077, 0.0
      %v4142 = vmax.f32 %v4078, 0.0
      %v4143 = vmax.f32 %v4079, 0.0
      %v4144 = vmax.f32 %v4080, 0.0
      %v4145 = vmax.f32 %v4081, 0.0
      %v4146 = vmax.f32 %v4082, 0.0
      %v4147 = vmax.f32 %v4083, 0.0
      %v4148 = vmax.f32 %v4084, 0.0
      %v4149 = vmax.f32 %v4085, 0.0
      %s4150 = scalar_lea.vmem %s3, 1280
      %v4151 = vld [vmem:[%s4150] sm:$0xff]
      %v4152 = vld [vmem:[%s4150 + $0x8] sm:$0xff]
      %v4153 = vld [vmem:[%s4150 + $0x10] sm:$0xff]
      %v4154 = vld [vmem:[%s4150 + $0x18] sm:$0xff]
      %v4155 = vld [vmem:[%s4150 + $0x20] sm:$0xff]
      %v4156 = vld [vmem:[%s4150 + $0x28] sm:$0xff]
      %v4157 = vld [vmem:[%s4150 + $0x30] sm:$0xff]
      %v4158 = vld [vmem:[%s4150 + $0x38] sm:$0xff]
      %v4159 = vld [vmem:[%s4150 + $0x40] sm:$0xff]
      %v4160 = vld [vmem:[%s4150 + $0x48] sm:$0xff]
      %v4161 = vld [vmem:[%s4150 + $0x50] sm:$0xff]
      %v4162 = vld [vmem:[%s4150 + $0x58] sm:$0xff]
      %v4163 = vld [vmem:[%s4150 + $0x60] sm:$0xff]
      %v4164 = vld [vmem:[%s4150 + $0x68] sm:$0xff]
      %v4165 = vld [vmem:[%s4150 + $0x70] sm:$0xff]
      %v4166 = vld [vmem:[%s4150 + $0x78] sm:$0xff]
      %v4167 = vld [vmem:[%s4150 + $0x80] sm:$0xff]
      %v4168 = vld [vmem:[%s4150 + $0x88] sm:$0xff]
      %v4169 = vld [vmem:[%s4150 + $0x90] sm:$0xff]
      %v4170 = vld [vmem:[%s4150 + $0x98] sm:$0xff]
      %v4171 = vld [vmem:[%s4150 + $0xa0] sm:$0xff]
      %v4172 = vld [vmem:[%s4150 + $0xa8] sm:$0xff]
      %v4173 = vld [vmem:[%s4150 + $0xb0] sm:$0xff]
      %v4174 = vld [vmem:[%s4150 + $0xb8] sm:$0xff]
      %v4175 = vld [vmem:[%s4150 + $0xc0] sm:$0xff]
      %v4176 = vld [vmem:[%s4150 + $0xc8] sm:$0xff]
      %v4177 = vld [vmem:[%s4150 + $0xd0] sm:$0xff]
      %v4178 = vld [vmem:[%s4150 + $0xd8] sm:$0xff]
      %v4179 = vld [vmem:[%s4150 + $0xe0] sm:$0xff]
      %v4180 = vld [vmem:[%s4150 + $0xe8] sm:$0xff]
      %v4181 = vld [vmem:[%s4150 + $0xf0] sm:$0xff]
      %v4182 = vld [vmem:[%s4150 + $0xf8] sm:$0xff]
      %v4183 = vpack.c.bf16 %v4088, %v4086
      %v4184 = vpack.c.bf16 %v4089, %v4087
      %v4185 = vpack.c.bf16 %v4092, %v4090
      %v4186 = vpack.c.bf16 %v4093, %v4091
      %v4187 = vpack.c.bf16 %v4096, %v4094
      %v4188 = vpack.c.bf16 %v4097, %v4095
      %v4189 = vpack.c.bf16 %v4100, %v4098
      %v4190 = vpack.c.bf16 %v4101, %v4099
      %v4191 = vpack.c.bf16 %v4104, %v4102
      %v4192 = vpack.c.bf16 %v4105, %v4103
      %v4193 = vpack.c.bf16 %v4108, %v4106
      %v4194 = vpack.c.bf16 %v4109, %v4107
      %v4195 = vpack.c.bf16 %v4112, %v4110
      %v4196 = vpack.c.bf16 %v4113, %v4111
      %v4197 = vpack.c.bf16 %v4116, %v4114
      %v4198 = vpack.c.bf16 %v4117, %v4115
      %v4199 = vpack.c.bf16 %v4120, %v4118
      %v4200 = vpack.c.bf16 %v4121, %v4119
      %v4201 = vpack.c.bf16 %v4124, %v4122
      %v4202 = vpack.c.bf16 %v4125, %v4123
      %v4203 = vpack.c.bf16 %v4128, %v4126
      %v4204 = vpack.c.bf16 %v4129, %v4127
      %v4205 = vpack.c.bf16 %v4132, %v4130
      %v4206 = vpack.c.bf16 %v4133, %v4131
      %v4207 = vpack.c.bf16 %v4136, %v4134
      %v4208 = vpack.c.bf16 %v4137, %v4135
      %v4209 = vpack.c.bf16 %v4140, %v4138
      %v4210 = vpack.c.bf16 %v4141, %v4139
      %v4211 = vpack.c.bf16 %v4144, %v4142
      %v4212 = vpack.c.bf16 %v4145, %v4143
      %v4213 = vpack.c.bf16 %v4148, %v4146
      %v4214 = vpack.c.bf16 %v4149, %v4147
      %s4215 = scalar_lea.vmem %s4, 5
      %v4216 = vld [vmem:[%s4215] ss:$8 sm:$0x3]
      %v4218 = vlaneseq
      %v4219 = vshrl.u32 %v4218, 7
      %v4220 = vsub.s32 0, %v4219
      %v4221 = vrot.slane %v4216, %v4220
      %v4222 = vlaneseq
      %v4223 = vshrl.u32 %v4222, 7
      %v4224 = vsub.s32 1, %v4223
      %v4225 = vrot.slane %v4216, %v4224
      %v4260 = vunpack.c.l.b16 %v4151
      %v4261 = vunpack.c.h.b16 %v4151
      %v4262 = vunpack.c.l.b16 %v4152
      %v4263 = vunpack.c.h.b16 %v4152
      %v4264 = vunpack.c.l.b16 %v4153
      %v4265 = vunpack.c.h.b16 %v4153
      %v4266 = vunpack.c.l.b16 %v4154
      %v4267 = vunpack.c.h.b16 %v4154
      %v4268 = vunpack.c.l.b16 %v4155
      %v4269 = vunpack.c.h.b16 %v4155
      %v4270 = vunpack.c.l.b16 %v4156
      %v4271 = vunpack.c.h.b16 %v4156
      %v4272 = vunpack.c.l.b16 %v4157
      %v4273 = vunpack.c.h.b16 %v4157
      %v4274 = vunpack.c.l.b16 %v4158
      %v4275 = vunpack.c.h.b16 %v4158
      %v4276 = vunpack.c.l.b16 %v4159
      %v4277 = vunpack.c.h.b16 %v4159
      %v4278 = vunpack.c.l.b16 %v4160
      %v4279 = vunpack.c.h.b16 %v4160
      %v4280 = vunpack.c.l.b16 %v4161
      %v4281 = vunpack.c.h.b16 %v4161
      %v4282 = vunpack.c.l.b16 %v4162
      %v4283 = vunpack.c.h.b16 %v4162
      %v4284 = vunpack.c.l.b16 %v4163
      %v4285 = vunpack.c.h.b16 %v4163
      %v4286 = vunpack.c.l.b16 %v4164
      %v4287 = vunpack.c.h.b16 %v4164
      %v4288 = vunpack.c.l.b16 %v4165
      %v4289 = vunpack.c.h.b16 %v4165
      %v4290 = vunpack.c.l.b16 %v4166
      %v4291 = vunpack.c.h.b16 %v4166
      %v4292 = vunpack.c.l.b16 %v4167
      %v4293 = vunpack.c.h.b16 %v4167
      %v4294 = vunpack.c.l.b16 %v4168
      %v4295 = vunpack.c.h.b16 %v4168
      %v4296 = vunpack.c.l.b16 %v4169
      %v4297 = vunpack.c.h.b16 %v4169
      %v4298 = vunpack.c.l.b16 %v4170
      %v4299 = vunpack.c.h.b16 %v4170
      %v4300 = vunpack.c.l.b16 %v4171
      %v4301 = vunpack.c.h.b16 %v4171
      %v4302 = vunpack.c.l.b16 %v4172
      %v4303 = vunpack.c.h.b16 %v4172
      %v4304 = vunpack.c.l.b16 %v4173
      %v4305 = vunpack.c.h.b16 %v4173
      %v4306 = vunpack.c.l.b16 %v4174
      %v4307 = vunpack.c.h.b16 %v4174
      %v4308 = vunpack.c.l.b16 %v4175
      %v4309 = vunpack.c.h.b16 %v4175
      %v4310 = vunpack.c.l.b16 %v4176
      %v4311 = vunpack.c.h.b16 %v4176
      %v4312 = vunpack.c.l.b16 %v4177
      %v4313 = vunpack.c.h.b16 %v4177
      %v4314 = vunpack.c.l.b16 %v4178
      %v4315 = vunpack.c.h.b16 %v4178
      %v4316 = vunpack.c.l.b16 %v4179
      %v4317 = vunpack.c.h.b16 %v4179
      %v4318 = vunpack.c.l.b16 %v4180
      %v4319 = vunpack.c.h.b16 %v4180
      %v4320 = vunpack.c.l.b16 %v4181
      %v4321 = vunpack.c.h.b16 %v4181
      %v4322 = vunpack.c.l.b16 %v4182
      %v4323 = vunpack.c.h.b16 %v4182
      %v4324 = vpack.c.b16 %v4262, %v4260
      %v4325 = vpack.c.b16 %v4263, %v4261
      %v4326 = vpack.c.b16 %v4266, %v4264
      %v4327 = vpack.c.b16 %v4267, %v4265
      %v4328 = vpack.c.b16 %v4270, %v4268
      %v4329 = vpack.c.b16 %v4271, %v4269
      %v4330 = vpack.c.b16 %v4274, %v4272
      %v4331 = vpack.c.b16 %v4275, %v4273
      %v4332 = vpack.c.b16 %v4278, %v4276
      %v4333 = vpack.c.b16 %v4279, %v4277
      %v4334 = vpack.c.b16 %v4282, %v4280
      %v4335 = vpack.c.b16 %v4283, %v4281
      %v4336 = vpack.c.b16 %v4286, %v4284
      %v4337 = vpack.c.b16 %v4287, %v4285
      %v4338 = vpack.c.b16 %v4290, %v4288
      %v4339 = vpack.c.b16 %v4291, %v4289
      %v4340 = vpack.c.b16 %v4294, %v4292
      %v4341 = vpack.c.b16 %v4295, %v4293
      %v4342 = vpack.c.b16 %v4298, %v4296
      %v4343 = vpack.c.b16 %v4299, %v4297
      %v4344 = vpack.c.b16 %v4302, %v4300
      %v4345 = vpack.c.b16 %v4303, %v4301
      %v4346 = vpack.c.b16 %v4306, %v4304
      %v4347 = vpack.c.b16 %v4307, %v4305
      %v4348 = vpack.c.b16 %v4310, %v4308
      %v4349 = vpack.c.b16 %v4311, %v4309
      %v4350 = vpack.c.b16 %v4314, %v4312
      %v4351 = vpack.c.b16 %v4315, %v4313
      %v4352 = vpack.c.b16 %v4318, %v4316
      %v4353 = vpack.c.b16 %v4319, %v4317
      %v4354 = vpack.c.b16 %v4322, %v4320
      %v4355 = vpack.c.b16 %v4323, %v4321
      %4388 = vmatprep.subr.bf16.mxu0 %v4339
      %4389 = vmatpush1.bf16.msra.mxu0 %v4338
      %4390 = vmatprep.subr.bf16.mxu0 %v4337
      %4391 = vmatpush1.bf16.msra.mxu0 %v4336
      %4392 = vmatprep.subr.bf16.mxu0 %v4335
      %4393 = vmatpush1.bf16.msra.mxu0 %v4334
      %4394 = vmatprep.subr.bf16.mxu0 %v4333
      %4395 = vmatpush1.bf16.msra.mxu0 %v4332
      %4396 = vmatprep.subr.bf16.mxu0 %v4331
      %4397 = vmatpush1.bf16.msra.mxu0 %v4330
      %4398 = vmatprep.subr.bf16.mxu0 %v4329
      %4399 = vmatpush1.bf16.msra.mxu0 %v4328
      %4400 = vmatprep.subr.bf16.mxu0 %v4327
      %4401 = vmatpush1.bf16.msra.mxu0 %v4326
      %4402 = vmatprep.subr.bf16.mxu0 %v4325
      %4403 = vmatpush1.bf16.msra.mxu0 %v4324
      %4404 = vmatprep.subr.bf16.mxu0 %v4355
      %4405 = vmatpush2.bf16.msra.mxu0 %v4354
      %4406 = vmatprep.subr.bf16.mxu0 %v4353
      %4407 = vmatpush2.bf16.msra.mxu0 %v4352
      %4408 = vmatprep.subr.bf16.mxu0 %v4351
      %4409 = vmatpush2.bf16.msra.mxu0 %v4350
      %4410 = vmatprep.subr.bf16.mxu0 %v4349
      %4411 = vmatpush2.bf16.msra.mxu0 %v4348
      %4412 = vmatprep.subr.bf16.mxu0 %v4347
      %4413 = vmatpush2.bf16.msra.mxu0 %v4346
      %4414 = vmatprep.subr.bf16.mxu0 %v4345
      %4415 = vmatpush2.bf16.msra.mxu0 %v4344
      %4416 = vmatprep.subr.bf16.mxu0 %v4343
      %4417 = vmatpush2.bf16.msra.mxu0 %v4342
      %4418 = vmatprep.subr.bf16.mxu0 %v4341
      %4419 = vmatpush2.bf16.msra.mxu0 %v4340
      %4420 = vmatprep.mubr.bf16.mxu0 %v4184
      %4421 = vmatmul.mubr.bf16.gmra.mxu0 %v4183
      %v4422 = vpop.f32.mrf.mxu0
      %v4423 = vadd.f32 %v4221, %v4422
      %v4424 = vpop.f32.mrf.mxu0
      %v4425 = vadd.f32 %v4225, %v4424
      %v4426 = vpop.f32.mrf.mxu0
      %v4427 = vadd.f32 %v4221, %v4426
      %v4428 = vpop.f32.mrf.mxu0
      %v4429 = vadd.f32 %v4225, %v4428
      %4430 = vmatprep.mubr.bf16.mxu0 %v4186
      %4431 = vmatmul.mubr.bf16.gmra.mxu0 %v4185
      %v4432 = vpop.f32.mrf.mxu0
      %v4433 = vadd.f32 %v4221, %v4432
      %v4434 = vpop.f32.mrf.mxu0
      %v4435 = vadd.f32 %v4225, %v4434
      %v4436 = vpop.f32.mrf.mxu0
      %v4437 = vadd.f32 %v4221, %v4436
      %v4438 = vpop.f32.mrf.mxu0
      %v4439 = vadd.f32 %v4225, %v4438
      %4440 = vmatprep.mubr.bf16.mxu0 %v4188
      %4441 = vmatmul.mubr.bf16.gmra.mxu0 %v4187
      %v4442 = vpop.f32.mrf.mxu0
      %v4443 = vadd.f32 %v4221, %v4442
      %v4444 = vpop.f32.mrf.mxu0
      %v4445 = vadd.f32 %v4225, %v4444
      %v4446 = vpop.f32.mrf.mxu0
      %v4447 = vadd.f32 %v4221, %v4446
      %v4448 = vpop.f32.mrf.mxu0
      %v4449 = vadd.f32 %v4225, %v4448
      %4450 = vmatprep.mubr.bf16.mxu0 %v4190
      %4451 = vmatmul.mubr.bf16.gmra.mxu0 %v4189
      %v4452 = vpop.f32.mrf.mxu0
      %v4453 = vadd.f32 %v4221, %v4452
      %v4454 = vpop.f32.mrf.mxu0
      %v4455 = vadd.f32 %v4225, %v4454
      %v4456 = vpop.f32.mrf.mxu0
      %v4457 = vadd.f32 %v4221, %v4456
      %v4458 = vpop.f32.mrf.mxu0
      %v4459 = vadd.f32 %v4225, %v4458
      %4460 = vmatprep.mubr.bf16.mxu0 %v4192
      %4461 = vmatmul.mubr.bf16.gmra.mxu0 %v4191
      %v4462 = vpop.f32.mrf.mxu0
      %v4463 = vadd.f32 %v4221, %v4462
      %v4464 = vpop.f32.mrf.mxu0
      %v4465 = vadd.f32 %v4225, %v4464
      %v4466 = vpop.f32.mrf.mxu0
      %v4467 = vadd.f32 %v4221, %v4466
      %v4468 = vpop.f32.mrf.mxu0
      %v4469 = vadd.f32 %v4225, %v4468
      %4470 = vmatprep.mubr.bf16.mxu0 %v4194
      %4471 = vmatmul.mubr.bf16.gmra.mxu0 %v4193
      %v4472 = vpop.f32.mrf.mxu0
      %v4473 = vadd.f32 %v4221, %v4472
      %v4474 = vpop.f32.mrf.mxu0
      %v4475 = vadd.f32 %v4225, %v4474
      %v4476 = vpop.f32.mrf.mxu0
      %v4477 = vadd.f32 %v4221, %v4476
      %v4478 = vpop.f32.mrf.mxu0
      %v4479 = vadd.f32 %v4225, %v4478
      %4480 = vmatprep.mubr.bf16.mxu0 %v4196
      %4481 = vmatmul.mubr.bf16.gmra.mxu0 %v4195
      %v4482 = vpop.f32.mrf.mxu0
      %v4483 = vadd.f32 %v4221, %v4482
      %v4484 = vpop.f32.mrf.mxu0
      %v4485 = vadd.f32 %v4225, %v4484
      %v4486 = vpop.f32.mrf.mxu0
      %v4487 = vadd.f32 %v4221, %v4486
      %v4488 = vpop.f32.mrf.mxu0
      %v4489 = vadd.f32 %v4225, %v4488
      %4490 = vmatprep.mubr.bf16.mxu0 %v4198
      %4491 = vmatmul.mubr.bf16.gmra.mxu0 %v4197
      %v4492 = vpop.f32.mrf.mxu0
      %v4493 = vadd.f32 %v4221, %v4492
      %v4494 = vpop.f32.mrf.mxu0
      %v4495 = vadd.f32 %v4225, %v4494
      %v4496 = vpop.f32.mrf.mxu0
      %v4497 = vadd.f32 %v4221, %v4496
      %v4498 = vpop.f32.mrf.mxu0
      %v4499 = vadd.f32 %v4225, %v4498
      %4500 = vmatprep.mubr.bf16.mxu0 %v4200
      %4501 = vmatmul.mubr.bf16.gmra.mxu0 %v4199
      %v4502 = vpop.f32.mrf.mxu0
      %v4503 = vadd.f32 %v4221, %v4502
      %v4504 = vpop.f32.mrf.mxu0
      %v4505 = vadd.f32 %v4225, %v4504
      %v4506 = vpop.f32.mrf.mxu0
      %v4507 = vadd.f32 %v4221, %v4506
      %v4508 = vpop.f32.mrf.mxu0
      %v4509 = vadd.f32 %v4225, %v4508
      %4510 = vmatprep.mubr.bf16.mxu0 %v4202
      %4511 = vmatmul.mubr.bf16.gmra.mxu0 %v4201
      %v4512 = vpop.f32.mrf.mxu0
      %v4513 = vadd.f32 %v4221, %v4512
      %v4514 = vpop.f32.mrf.mxu0
      %v4515 = vadd.f32 %v4225, %v4514
      %v4516 = vpop.f32.mrf.mxu0
      %v4517 = vadd.f32 %v4221, %v4516
      %v4518 = vpop.f32.mrf.mxu0
      %v4519 = vadd.f32 %v4225, %v4518
      %4520 = vmatprep.mubr.bf16.mxu0 %v4204
      %4521 = vmatmul.mubr.bf16.gmra.mxu0 %v4203
      %v4522 = vpop.f32.mrf.mxu0
      %v4523 = vadd.f32 %v4221, %v4522
      %v4524 = vpop.f32.mrf.mxu0
      %v4525 = vadd.f32 %v4225, %v4524
      %v4526 = vpop.f32.mrf.mxu0
      %v4527 = vadd.f32 %v4221, %v4526
      %v4528 = vpop.f32.mrf.mxu0
      %v4529 = vadd.f32 %v4225, %v4528
      %4530 = vmatprep.mubr.bf16.mxu0 %v4206
      %4531 = vmatmul.mubr.bf16.gmra.mxu0 %v4205
      %v4532 = vpop.f32.mrf.mxu0
      %v4533 = vadd.f32 %v4221, %v4532
      %v4534 = vpop.f32.mrf.mxu0
      %v4535 = vadd.f32 %v4225, %v4534
      %v4536 = vpop.f32.mrf.mxu0
      %v4537 = vadd.f32 %v4221, %v4536
      %v4538 = vpop.f32.mrf.mxu0
      %v4539 = vadd.f32 %v4225, %v4538
      %4540 = vmatprep.mubr.bf16.mxu0 %v4208
      %4541 = vmatmul.mubr.bf16.gmra.mxu0 %v4207
      %v4542 = vpop.f32.mrf.mxu0
      %v4543 = vadd.f32 %v4221, %v4542
      %v4544 = vpop.f32.mrf.mxu0
      %v4545 = vadd.f32 %v4225, %v4544
      %v4546 = vpop.f32.mrf.mxu0
      %v4547 = vadd.f32 %v4221, %v4546
      %v4548 = vpop.f32.mrf.mxu0
      %v4549 = vadd.f32 %v4225, %v4548
      %4550 = vmatprep.mubr.bf16.mxu0 %v4210
      %4551 = vmatmul.mubr.bf16.gmra.mxu0 %v4209
      %v4552 = vpop.f32.mrf.mxu0
      %v4553 = vadd.f32 %v4221, %v4552
      %v4554 = vpop.f32.mrf.mxu0
      %v4555 = vadd.f32 %v4225, %v4554
      %v4556 = vpop.f32.mrf.mxu0
      %v4557 = vadd.f32 %v4221, %v4556
      %v4558 = vpop.f32.mrf.mxu0
      %v4559 = vadd.f32 %v4225, %v4558
      %4560 = vmatprep.mubr.bf16.mxu0 %v4212
      %4561 = vmatmul.mubr.bf16.gmra.mxu0 %v4211
      %v4562 = vpop.f32.mrf.mxu0
      %v4563 = vadd.f32 %v4221, %v4562
      %v4564 = vpop.f32.mrf.mxu0
      %v4565 = vadd.f32 %v4225, %v4564
      %v4566 = vpop.f32.mrf.mxu0
      %v4567 = vadd.f32 %v4221, %v4566
      %v4568 = vpop.f32.mrf.mxu0
      %v4569 = vadd.f32 %v4225, %v4568
      %4570 = vmatprep.mubr.bf16.mxu0 %v4214
      %4571 = vmatmul.mubr.bf16.gmra.mxu0 %v4213
      %v4572 = vpop.f32.mrf.mxu0
      %v4573 = vadd.f32 %v4221, %v4572
      %v4574 = vpop.f32.mrf.mxu0
      %v4575 = vadd.f32 %v4225, %v4574
      %v4576 = vpop.f32.mrf.mxu0
      %v4577 = vadd.f32 %v4221, %v4576
      %v4578 = vpop.f32.mrf.mxu0
      %v4579 = vadd.f32 %v4225, %v4578
      %4580 = vdwg.mxu0
      %v4581 = vmax.f32 %v4423, 0.0
      %v4582 = vmax.f32 %v4425, 0.0
      %v4583 = vmax.f32 %v4427, 0.0
      %v4584 = vmax.f32 %v4429, 0.0
      %v4585 = vmax.f32 %v4433, 0.0
      %v4586 = vmax.f32 %v4435, 0.0
      %v4587 = vmax.f32 %v4437, 0.0
      %v4588 = vmax.f32 %v4439, 0.0
      %v4589 = vmax.f32 %v4443, 0.0
      %v4590 = vmax.f32 %v4445, 0.0
      %v4591 = vmax.f32 %v4447, 0.0
      %v4592 = vmax.f32 %v4449, 0.0
      %v4593 = vmax.f32 %v4453, 0.0
      %v4594 = vmax.f32 %v4455, 0.0
      %v4595 = vmax.f32 %v4457, 0.0
      %v4596 = vmax.f32 %v4459, 0.0
      %v4597 = vmax.f32 %v4463, 0.0
      %v4598 = vmax.f32 %v4465, 0.0
      %v4599 = vmax.f32 %v4467, 0.0
      %v4600 = vmax.f32 %v4469, 0.0
      %v4601 = vmax.f32 %v4473, 0.0
      %v4602 = vmax.f32 %v4475, 0.0
      %v4603 = vmax.f32 %v4477, 0.0
      %v4604 = vmax.f32 %v4479, 0.0
      %v4605 = vmax.f32 %v4483, 0.0
      %v4606 = vmax.f32 %v4485, 0.0
      %v4607 = vmax.f32 %v4487, 0.0
      %v4608 = vmax.f32 %v4489, 0.0
      %v4609 = vmax.f32 %v4493, 0.0
      %v4610 = vmax.f32 %v4495, 0.0
      %v4611 = vmax.f32 %v4497, 0.0
      %v4612 = vmax.f32 %v4499, 0.0
      %v4613 = vmax.f32 %v4503, 0.0
      %v4614 = vmax.f32 %v4505, 0.0
      %v4615 = vmax.f32 %v4507, 0.0
      %v4616 = vmax.f32 %v4509, 0.0
      %v4617 = vmax.f32 %v4513, 0.0
      %v4618 = vmax.f32 %v4515, 0.0
      %v4619 = vmax.f32 %v4517, 0.0
      %v4620 = vmax.f32 %v4519, 0.0
      %v4621 = vmax.f32 %v4523, 0.0
      %v4622 = vmax.f32 %v4525, 0.0
      %v4623 = vmax.f32 %v4527, 0.0
      %v4624 = vmax.f32 %v4529, 0.0
      %v4625 = vmax.f32 %v4533, 0.0
      %v4626 = vmax.f32 %v4535, 0.0
      %v4627 = vmax.f32 %v4537, 0.0
      %v4628 = vmax.f32 %v4539, 0.0
      %v4629 = vmax.f32 %v4543, 0.0
      %v4630 = vmax.f32 %v4545, 0.0
      %v4631 = vmax.f32 %v4547, 0.0
      %v4632 = vmax.f32 %v4549, 0.0
      %v4633 = vmax.f32 %v4553, 0.0
      %v4634 = vmax.f32 %v4555, 0.0
      %v4635 = vmax.f32 %v4557, 0.0
      %v4636 = vmax.f32 %v4559, 0.0
      %v4637 = vmax.f32 %v4563, 0.0
      %v4638 = vmax.f32 %v4565, 0.0
      %v4639 = vmax.f32 %v4567, 0.0
      %v4640 = vmax.f32 %v4569, 0.0
      %v4641 = vmax.f32 %v4573, 0.0
      %v4642 = vmax.f32 %v4575, 0.0
      %v4643 = vmax.f32 %v4577, 0.0
      %v4644 = vmax.f32 %v4579, 0.0
      %s4645 = scalar_lea.vmem %s3, 1536
      %v4646 = vld [vmem:[%s4645] sm:$0xff]
      %v4647 = vld [vmem:[%s4645 + $0x8] sm:$0xff]
      %v4648 = vld [vmem:[%s4645 + $0x10] sm:$0xff]
      %v4649 = vld [vmem:[%s4645 + $0x18] sm:$0xff]
      %v4650 = vld [vmem:[%s4645 + $0x20] sm:$0xff]
      %v4651 = vld [vmem:[%s4645 + $0x28] sm:$0xff]
      %v4652 = vld [vmem:[%s4645 + $0x30] sm:$0xff]
      %v4653 = vld [vmem:[%s4645 + $0x38] sm:$0xff]
      %v4654 = vld [vmem:[%s4645 + $0x40] sm:$0xff]
      %v4655 = vld [vmem:[%s4645 + $0x48] sm:$0xff]
      %v4656 = vld [vmem:[%s4645 + $0x50] sm:$0xff]
      %v4657 = vld [vmem:[%s4645 + $0x58] sm:$0xff]
      %v4658 = vld [vmem:[%s4645 + $0x60] sm:$0xff]
      %v4659 = vld [vmem:[%s4645 + $0x68] sm:$0xff]
      %v4660 = vld [vmem:[%s4645 + $0x70] sm:$0xff]
      %v4661 = vld [vmem:[%s4645 + $0x78] sm:$0xff]
      %v4662 = vld [vmem:[%s4645 + $0x80] sm:$0xff]
      %v4663 = vld [vmem:[%s4645 + $0x88] sm:$0xff]
      %v4664 = vld [vmem:[%s4645 + $0x90] sm:$0xff]
      %v4665 = vld [vmem:[%s4645 + $0x98] sm:$0xff]
      %v4666 = vld [vmem:[%s4645 + $0xa0] sm:$0xff]
      %v4667 = vld [vmem:[%s4645 + $0xa8] sm:$0xff]
      %v4668 = vld [vmem:[%s4645 + $0xb0] sm:$0xff]
      %v4669 = vld [vmem:[%s4645 + $0xb8] sm:$0xff]
      %v4670 = vld [vmem:[%s4645 + $0xc0] sm:$0xff]
      %v4671 = vld [vmem:[%s4645 + $0xc8] sm:$0xff]
      %v4672 = vld [vmem:[%s4645 + $0xd0] sm:$0xff]
      %v4673 = vld [vmem:[%s4645 + $0xd8] sm:$0xff]
      %v4674 = vld [vmem:[%s4645 + $0xe0] sm:$0xff]
      %v4675 = vld [vmem:[%s4645 + $0xe8] sm:$0xff]
      %v4676 = vld [vmem:[%s4645 + $0xf0] sm:$0xff]
      %v4677 = vld [vmem:[%s4645 + $0xf8] sm:$0xff]
      %v4678 = vpack.c.bf16 %v4583, %v4581
      %v4679 = vpack.c.bf16 %v4584, %v4582
      %v4680 = vpack.c.bf16 %v4587, %v4585
      %v4681 = vpack.c.bf16 %v4588, %v4586
      %v4682 = vpack.c.bf16 %v4591, %v4589
      %v4683 = vpack.c.bf16 %v4592, %v4590
      %v4684 = vpack.c.bf16 %v4595, %v4593
      %v4685 = vpack.c.bf16 %v4596, %v4594
      %v4686 = vpack.c.bf16 %v4599, %v4597
      %v4687 = vpack.c.bf16 %v4600, %v4598
      %v4688 = vpack.c.bf16 %v4603, %v4601
      %v4689 = vpack.c.bf16 %v4604, %v4602
      %v4690 = vpack.c.bf16 %v4607, %v4605
      %v4691 = vpack.c.bf16 %v4608, %v4606
      %v4692 = vpack.c.bf16 %v4611, %v4609
      %v4693 = vpack.c.bf16 %v4612, %v4610
      %v4694 = vpack.c.bf16 %v4615, %v4613
      %v4695 = vpack.c.bf16 %v4616, %v4614
      %v4696 = vpack.c.bf16 %v4619, %v4617
      %v4697 = vpack.c.bf16 %v4620, %v4618
      %v4698 = vpack.c.bf16 %v4623, %v4621
      %v4699 = vpack.c.bf16 %v4624, %v4622
      %v4700 = vpack.c.bf16 %v4627, %v4625
      %v4701 = vpack.c.bf16 %v4628, %v4626
      %v4702 = vpack.c.bf16 %v4631, %v4629
      %v4703 = vpack.c.bf16 %v4632, %v4630
      %v4704 = vpack.c.bf16 %v4635, %v4633
      %v4705 = vpack.c.bf16 %v4636, %v4634
      %v4706 = vpack.c.bf16 %v4639, %v4637
      %v4707 = vpack.c.bf16 %v4640, %v4638
      %v4708 = vpack.c.bf16 %v4643, %v4641
      %v4709 = vpack.c.bf16 %v4644, %v4642
      %s4710 = scalar_lea.vmem %s4, 6
      %v4711 = vld [vmem:[%s4710] ss:$8 sm:$0x3]
      %v4713 = vlaneseq
      %v4714 = vshrl.u32 %v4713, 7
      %v4715 = vsub.s32 0, %v4714
      %v4716 = vrot.slane %v4711, %v4715
      %v4717 = vlaneseq
      %v4718 = vshrl.u32 %v4717, 7
      %v4719 = vsub.s32 1, %v4718
      %v4720 = vrot.slane %v4711, %v4719
      %v4755 = vunpack.c.l.b16 %v4646
      %v4756 = vunpack.c.h.b16 %v4646
      %v4757 = vunpack.c.l.b16 %v4647
      %v4758 = vunpack.c.h.b16 %v4647
      %v4759 = vunpack.c.l.b16 %v4648
      %v4760 = vunpack.c.h.b16 %v4648
      %v4761 = vunpack.c.l.b16 %v4649
      %v4762 = vunpack.c.h.b16 %v4649
      %v4763 = vunpack.c.l.b16 %v4650
      %v4764 = vunpack.c.h.b16 %v4650
      %v4765 = vunpack.c.l.b16 %v4651
      %v4766 = vunpack.c.h.b16 %v4651
      %v4767 = vunpack.c.l.b16 %v4652
      %v4768 = vunpack.c.h.b16 %v4652
      %v4769 = vunpack.c.l.b16 %v4653
      %v4770 = vunpack.c.h.b16 %v4653
      %v4771 = vunpack.c.l.b16 %v4654
      %v4772 = vunpack.c.h.b16 %v4654
      %v4773 = vunpack.c.l.b16 %v4655
      %v4774 = vunpack.c.h.b16 %v4655
      %v4775 = vunpack.c.l.b16 %v4656
      %v4776 = vunpack.c.h.b16 %v4656
      %v4777 = vunpack.c.l.b16 %v4657
      %v4778 = vunpack.c.h.b16 %v4657
      %v4779 = vunpack.c.l.b16 %v4658
      %v4780 = vunpack.c.h.b16 %v4658
      %v4781 = vunpack.c.l.b16 %v4659
      %v4782 = vunpack.c.h.b16 %v4659
      %v4783 = vunpack.c.l.b16 %v4660
      %v4784 = vunpack.c.h.b16 %v4660
      %v4785 = vunpack.c.l.b16 %v4661
      %v4786 = vunpack.c.h.b16 %v4661
      %v4787 = vunpack.c.l.b16 %v4662
      %v4788 = vunpack.c.h.b16 %v4662
      %v4789 = vunpack.c.l.b16 %v4663
      %v4790 = vunpack.c.h.b16 %v4663
      %v4791 = vunpack.c.l.b16 %v4664
      %v4792 = vunpack.c.h.b16 %v4664
      %v4793 = vunpack.c.l.b16 %v4665
      %v4794 = vunpack.c.h.b16 %v4665
      %v4795 = vunpack.c.l.b16 %v4666
      %v4796 = vunpack.c.h.b16 %v4666
      %v4797 = vunpack.c.l.b16 %v4667
      %v4798 = vunpack.c.h.b16 %v4667
      %v4799 = vunpack.c.l.b16 %v4668
      %v4800 = vunpack.c.h.b16 %v4668
      %v4801 = vunpack.c.l.b16 %v4669
      %v4802 = vunpack.c.h.b16 %v4669
      %v4803 = vunpack.c.l.b16 %v4670
      %v4804 = vunpack.c.h.b16 %v4670
      %v4805 = vunpack.c.l.b16 %v4671
      %v4806 = vunpack.c.h.b16 %v4671
      %v4807 = vunpack.c.l.b16 %v4672
      %v4808 = vunpack.c.h.b16 %v4672
      %v4809 = vunpack.c.l.b16 %v4673
      %v4810 = vunpack.c.h.b16 %v4673
      %v4811 = vunpack.c.l.b16 %v4674
      %v4812 = vunpack.c.h.b16 %v4674
      %v4813 = vunpack.c.l.b16 %v4675
      %v4814 = vunpack.c.h.b16 %v4675
      %v4815 = vunpack.c.l.b16 %v4676
      %v4816 = vunpack.c.h.b16 %v4676
      %v4817 = vunpack.c.l.b16 %v4677
      %v4818 = vunpack.c.h.b16 %v4677
      %v4819 = vpack.c.b16 %v4757, %v4755
      %v4820 = vpack.c.b16 %v4758, %v4756
      %v4821 = vpack.c.b16 %v4761, %v4759
      %v4822 = vpack.c.b16 %v4762, %v4760
      %v4823 = vpack.c.b16 %v4765, %v4763
      %v4824 = vpack.c.b16 %v4766, %v4764
      %v4825 = vpack.c.b16 %v4769, %v4767
      %v4826 = vpack.c.b16 %v4770, %v4768
      %v4827 = vpack.c.b16 %v4773, %v4771
      %v4828 = vpack.c.b16 %v4774, %v4772
      %v4829 = vpack.c.b16 %v4777, %v4775
      %v4830 = vpack.c.b16 %v4778, %v4776
      %v4831 = vpack.c.b16 %v4781, %v4779
      %v4832 = vpack.c.b16 %v4782, %v4780
      %v4833 = vpack.c.b16 %v4785, %v4783
      %v4834 = vpack.c.b16 %v4786, %v4784
      %v4835 = vpack.c.b16 %v4789, %v4787
      %v4836 = vpack.c.b16 %v4790, %v4788
      %v4837 = vpack.c.b16 %v4793, %v4791
      %v4838 = vpack.c.b16 %v4794, %v4792
      %v4839 = vpack.c.b16 %v4797, %v4795
      %v4840 = vpack.c.b16 %v4798, %v4796
      %v4841 = vpack.c.b16 %v4801, %v4799
      %v4842 = vpack.c.b16 %v4802, %v4800
      %v4843 = vpack.c.b16 %v4805, %v4803
      %v4844 = vpack.c.b16 %v4806, %v4804
      %v4845 = vpack.c.b16 %v4809, %v4807
      %v4846 = vpack.c.b16 %v4810, %v4808
      %v4847 = vpack.c.b16 %v4813, %v4811
      %v4848 = vpack.c.b16 %v4814, %v4812
      %v4849 = vpack.c.b16 %v4817, %v4815
      %v4850 = vpack.c.b16 %v4818, %v4816
      %4883 = vmatprep.subr.bf16.mxu0 %v4834
      %4884 = vmatpush1.bf16.msra.mxu0 %v4833
      %4885 = vmatprep.subr.bf16.mxu0 %v4832
      %4886 = vmatpush1.bf16.msra.mxu0 %v4831
      %4887 = vmatprep.subr.bf16.mxu0 %v4830
      %4888 = vmatpush1.bf16.msra.mxu0 %v4829
      %4889 = vmatprep.subr.bf16.mxu0 %v4828
      %4890 = vmatpush1.bf16.msra.mxu0 %v4827
      %4891 = vmatprep.subr.bf16.mxu0 %v4826
      %4892 = vmatpush1.bf16.msra.mxu0 %v4825
      %4893 = vmatprep.subr.bf16.mxu0 %v4824
      %4894 = vmatpush1.bf16.msra.mxu0 %v4823
      %4895 = vmatprep.subr.bf16.mxu0 %v4822
      %4896 = vmatpush1.bf16.msra.mxu0 %v4821
      %4897 = vmatprep.subr.bf16.mxu0 %v4820
      %4898 = vmatpush1.bf16.msra.mxu0 %v4819
      %4899 = vmatprep.subr.bf16.mxu0 %v4850
      %4900 = vmatpush2.bf16.msra.mxu0 %v4849
      %4901 = vmatprep.subr.bf16.mxu0 %v4848
      %4902 = vmatpush2.bf16.msra.mxu0 %v4847
      %4903 = vmatprep.subr.bf16.mxu0 %v4846
      %4904 = vmatpush2.bf16.msra.mxu0 %v4845
      %4905 = vmatprep.subr.bf16.mxu0 %v4844
      %4906 = vmatpush2.bf16.msra.mxu0 %v4843
      %4907 = vmatprep.subr.bf16.mxu0 %v4842
      %4908 = vmatpush2.bf16.msra.mxu0 %v4841
      %4909 = vmatprep.subr.bf16.mxu0 %v4840
      %4910 = vmatpush2.bf16.msra.mxu0 %v4839
      %4911 = vmatprep.subr.bf16.mxu0 %v4838
      %4912 = vmatpush2.bf16.msra.mxu0 %v4837
      %4913 = vmatprep.subr.bf16.mxu0 %v4836
      %4914 = vmatpush2.bf16.msra.mxu0 %v4835
      %4915 = vmatprep.mubr.bf16.mxu0 %v4679
      %4916 = vmatmul.mubr.bf16.gmra.mxu0 %v4678
      %v4917 = vpop.f32.mrf.mxu0
      %v4918 = vadd.f32 %v4716, %v4917
      %v4919 = vpop.f32.mrf.mxu0
      %v4920 = vadd.f32 %v4720, %v4919
      %v4921 = vpop.f32.mrf.mxu0
      %v4922 = vadd.f32 %v4716, %v4921
      %v4923 = vpop.f32.mrf.mxu0
      %v4924 = vadd.f32 %v4720, %v4923
      %4925 = vmatprep.mubr.bf16.mxu0 %v4681
      %4926 = vmatmul.mubr.bf16.gmra.mxu0 %v4680
      %v4927 = vpop.f32.mrf.mxu0
      %v4928 = vadd.f32 %v4716, %v4927
      %v4929 = vpop.f32.mrf.mxu0
      %v4930 = vadd.f32 %v4720, %v4929
      %v4931 = vpop.f32.mrf.mxu0
      %v4932 = vadd.f32 %v4716, %v4931
      %v4933 = vpop.f32.mrf.mxu0
      %v4934 = vadd.f32 %v4720, %v4933
      %4935 = vmatprep.mubr.bf16.mxu0 %v4683
      %4936 = vmatmul.mubr.bf16.gmra.mxu0 %v4682
      %v4937 = vpop.f32.mrf.mxu0
      %v4938 = vadd.f32 %v4716, %v4937
      %v4939 = vpop.f32.mrf.mxu0
      %v4940 = vadd.f32 %v4720, %v4939
      %v4941 = vpop.f32.mrf.mxu0
      %v4942 = vadd.f32 %v4716, %v4941
      %v4943 = vpop.f32.mrf.mxu0
      %v4944 = vadd.f32 %v4720, %v4943
      %4945 = vmatprep.mubr.bf16.mxu0 %v4685
      %4946 = vmatmul.mubr.bf16.gmra.mxu0 %v4684
      %v4947 = vpop.f32.mrf.mxu0
      %v4948 = vadd.f32 %v4716, %v4947
      %v4949 = vpop.f32.mrf.mxu0
      %v4950 = vadd.f32 %v4720, %v4949
      %v4951 = vpop.f32.mrf.mxu0
      %v4952 = vadd.f32 %v4716, %v4951
      %v4953 = vpop.f32.mrf.mxu0
      %v4954 = vadd.f32 %v4720, %v4953
      %4955 = vmatprep.mubr.bf16.mxu0 %v4687
      %4956 = vmatmul.mubr.bf16.gmra.mxu0 %v4686
      %v4957 = vpop.f32.mrf.mxu0
      %v4958 = vadd.f32 %v4716, %v4957
      %v4959 = vpop.f32.mrf.mxu0
      %v4960 = vadd.f32 %v4720, %v4959
      %v4961 = vpop.f32.mrf.mxu0
      %v4962 = vadd.f32 %v4716, %v4961
      %v4963 = vpop.f32.mrf.mxu0
      %v4964 = vadd.f32 %v4720, %v4963
      %4965 = vmatprep.mubr.bf16.mxu0 %v4689
      %4966 = vmatmul.mubr.bf16.gmra.mxu0 %v4688
      %v4967 = vpop.f32.mrf.mxu0
      %v4968 = vadd.f32 %v4716, %v4967
      %v4969 = vpop.f32.mrf.mxu0
      %v4970 = vadd.f32 %v4720, %v4969
      %v4971 = vpop.f32.mrf.mxu0
      %v4972 = vadd.f32 %v4716, %v4971
      %v4973 = vpop.f32.mrf.mxu0
      %v4974 = vadd.f32 %v4720, %v4973
      %4975 = vmatprep.mubr.bf16.mxu0 %v4691
      %4976 = vmatmul.mubr.bf16.gmra.mxu0 %v4690
      %v4977 = vpop.f32.mrf.mxu0
      %v4978 = vadd.f32 %v4716, %v4977
      %v4979 = vpop.f32.mrf.mxu0
      %v4980 = vadd.f32 %v4720, %v4979
      %v4981 = vpop.f32.mrf.mxu0
      %v4982 = vadd.f32 %v4716, %v4981
      %v4983 = vpop.f32.mrf.mxu0
      %v4984 = vadd.f32 %v4720, %v4983
      %4985 = vmatprep.mubr.bf16.mxu0 %v4693
      %4986 = vmatmul.mubr.bf16.gmra.mxu0 %v4692
      %v4987 = vpop.f32.mrf.mxu0
      %v4988 = vadd.f32 %v4716, %v4987
      %v4989 = vpop.f32.mrf.mxu0
      %v4990 = vadd.f32 %v4720, %v4989
      %v4991 = vpop.f32.mrf.mxu0
      %v4992 = vadd.f32 %v4716, %v4991
      %v4993 = vpop.f32.mrf.mxu0
      %v4994 = vadd.f32 %v4720, %v4993
      %4995 = vmatprep.mubr.bf16.mxu0 %v4695
      %4996 = vmatmul.mubr.bf16.gmra.mxu0 %v4694
      %v4997 = vpop.f32.mrf.mxu0
      %v4998 = vadd.f32 %v4716, %v4997
      %v4999 = vpop.f32.mrf.mxu0
      %v5000 = vadd.f32 %v4720, %v4999
      %v5001 = vpop.f32.mrf.mxu0
      %v5002 = vadd.f32 %v4716, %v5001
      %v5003 = vpop.f32.mrf.mxu0
      %v5004 = vadd.f32 %v4720, %v5003
      %5005 = vmatprep.mubr.bf16.mxu0 %v4697
      %5006 = vmatmul.mubr.bf16.gmra.mxu0 %v4696
      %v5007 = vpop.f32.mrf.mxu0
      %v5008 = vadd.f32 %v4716, %v5007
      %v5009 = vpop.f32.mrf.mxu0
      %v5010 = vadd.f32 %v4720, %v5009
      %v5011 = vpop.f32.mrf.mxu0
      %v5012 = vadd.f32 %v4716, %v5011
      %v5013 = vpop.f32.mrf.mxu0
      %v5014 = vadd.f32 %v4720, %v5013
      %5015 = vmatprep.mubr.bf16.mxu0 %v4699
      %5016 = vmatmul.mubr.bf16.gmra.mxu0 %v4698
      %v5017 = vpop.f32.mrf.mxu0
      %v5018 = vadd.f32 %v4716, %v5017
      %v5019 = vpop.f32.mrf.mxu0
      %v5020 = vadd.f32 %v4720, %v5019
      %v5021 = vpop.f32.mrf.mxu0
      %v5022 = vadd.f32 %v4716, %v5021
      %v5023 = vpop.f32.mrf.mxu0
      %v5024 = vadd.f32 %v4720, %v5023
      %5025 = vmatprep.mubr.bf16.mxu0 %v4701
      %5026 = vmatmul.mubr.bf16.gmra.mxu0 %v4700
      %v5027 = vpop.f32.mrf.mxu0
      %v5028 = vadd.f32 %v4716, %v5027
      %v5029 = vpop.f32.mrf.mxu0
      %v5030 = vadd.f32 %v4720, %v5029
      %v5031 = vpop.f32.mrf.mxu0
      %v5032 = vadd.f32 %v4716, %v5031
      %v5033 = vpop.f32.mrf.mxu0
      %v5034 = vadd.f32 %v4720, %v5033
      %5035 = vmatprep.mubr.bf16.mxu0 %v4703
      %5036 = vmatmul.mubr.bf16.gmra.mxu0 %v4702
      %v5037 = vpop.f32.mrf.mxu0
      %v5038 = vadd.f32 %v4716, %v5037
      %v5039 = vpop.f32.mrf.mxu0
      %v5040 = vadd.f32 %v4720, %v5039
      %v5041 = vpop.f32.mrf.mxu0
      %v5042 = vadd.f32 %v4716, %v5041
      %v5043 = vpop.f32.mrf.mxu0
      %v5044 = vadd.f32 %v4720, %v5043
      %5045 = vmatprep.mubr.bf16.mxu0 %v4705
      %5046 = vmatmul.mubr.bf16.gmra.mxu0 %v4704
      %v5047 = vpop.f32.mrf.mxu0
      %v5048 = vadd.f32 %v4716, %v5047
      %v5049 = vpop.f32.mrf.mxu0
      %v5050 = vadd.f32 %v4720, %v5049
      %v5051 = vpop.f32.mrf.mxu0
      %v5052 = vadd.f32 %v4716, %v5051
      %v5053 = vpop.f32.mrf.mxu0
      %v5054 = vadd.f32 %v4720, %v5053
      %5055 = vmatprep.mubr.bf16.mxu0 %v4707
      %5056 = vmatmul.mubr.bf16.gmra.mxu0 %v4706
      %v5057 = vpop.f32.mrf.mxu0
      %v5058 = vadd.f32 %v4716, %v5057
      %v5059 = vpop.f32.mrf.mxu0
      %v5060 = vadd.f32 %v4720, %v5059
      %v5061 = vpop.f32.mrf.mxu0
      %v5062 = vadd.f32 %v4716, %v5061
      %v5063 = vpop.f32.mrf.mxu0
      %v5064 = vadd.f32 %v4720, %v5063
      %5065 = vmatprep.mubr.bf16.mxu0 %v4709
      %5066 = vmatmul.mubr.bf16.gmra.mxu0 %v4708
      %v5067 = vpop.f32.mrf.mxu0
      %v5068 = vadd.f32 %v4716, %v5067
      %v5069 = vpop.f32.mrf.mxu0
      %v5070 = vadd.f32 %v4720, %v5069
      %v5071 = vpop.f32.mrf.mxu0
      %v5072 = vadd.f32 %v4716, %v5071
      %v5073 = vpop.f32.mrf.mxu0
      %v5074 = vadd.f32 %v4720, %v5073
      %5075 = vdwg.mxu0
      %v5076 = vmax.f32 %v4918, 0.0
      %v5077 = vmax.f32 %v4920, 0.0
      %v5078 = vmax.f32 %v4922, 0.0
      %v5079 = vmax.f32 %v4924, 0.0
      %v5080 = vmax.f32 %v4928, 0.0
      %v5081 = vmax.f32 %v4930, 0.0
      %v5082 = vmax.f32 %v4932, 0.0
      %v5083 = vmax.f32 %v4934, 0.0
      %v5084 = vmax.f32 %v4938, 0.0
      %v5085 = vmax.f32 %v4940, 0.0
      %v5086 = vmax.f32 %v4942, 0.0
      %v5087 = vmax.f32 %v4944, 0.0
      %v5088 = vmax.f32 %v4948, 0.0
      %v5089 = vmax.f32 %v4950, 0.0
      %v5090 = vmax.f32 %v4952, 0.0
      %v5091 = vmax.f32 %v4954, 0.0
      %v5092 = vmax.f32 %v4958, 0.0
      %v5093 = vmax.f32 %v4960, 0.0
      %v5094 = vmax.f32 %v4962, 0.0
      %v5095 = vmax.f32 %v4964, 0.0
      %v5096 = vmax.f32 %v4968, 0.0
      %v5097 = vmax.f32 %v4970, 0.0
      %v5098 = vmax.f32 %v4972, 0.0
      %v5099 = vmax.f32 %v4974, 0.0
      %v5100 = vmax.f32 %v4978, 0.0
      %v5101 = vmax.f32 %v4980, 0.0
      %v5102 = vmax.f32 %v4982, 0.0
      %v5103 = vmax.f32 %v4984, 0.0
      %v5104 = vmax.f32 %v4988, 0.0
      %v5105 = vmax.f32 %v4990, 0.0
      %v5106 = vmax.f32 %v4992, 0.0
      %v5107 = vmax.f32 %v4994, 0.0
      %v5108 = vmax.f32 %v4998, 0.0
      %v5109 = vmax.f32 %v5000, 0.0
      %v5110 = vmax.f32 %v5002, 0.0
      %v5111 = vmax.f32 %v5004, 0.0
      %v5112 = vmax.f32 %v5008, 0.0
      %v5113 = vmax.f32 %v5010, 0.0
      %v5114 = vmax.f32 %v5012, 0.0
      %v5115 = vmax.f32 %v5014, 0.0
      %v5116 = vmax.f32 %v5018, 0.0
      %v5117 = vmax.f32 %v5020, 0.0
      %v5118 = vmax.f32 %v5022, 0.0
      %v5119 = vmax.f32 %v5024, 0.0
      %v5120 = vmax.f32 %v5028, 0.0
      %v5121 = vmax.f32 %v5030, 0.0
      %v5122 = vmax.f32 %v5032, 0.0
      %v5123 = vmax.f32 %v5034, 0.0
      %v5124 = vmax.f32 %v5038, 0.0
      %v5125 = vmax.f32 %v5040, 0.0
      %v5126 = vmax.f32 %v5042, 0.0
      %v5127 = vmax.f32 %v5044, 0.0
      %v5128 = vmax.f32 %v5048, 0.0
      %v5129 = vmax.f32 %v5050, 0.0
      %v5130 = vmax.f32 %v5052, 0.0
      %v5131 = vmax.f32 %v5054, 0.0
      %v5132 = vmax.f32 %v5058, 0.0
      %v5133 = vmax.f32 %v5060, 0.0
      %v5134 = vmax.f32 %v5062, 0.0
      %v5135 = vmax.f32 %v5064, 0.0
      %v5136 = vmax.f32 %v5068, 0.0
      %v5137 = vmax.f32 %v5070, 0.0
      %v5138 = vmax.f32 %v5072, 0.0
      %v5139 = vmax.f32 %v5074, 0.0
      %v5140 = vld [vmem:[%s6] ss:$4 sm:$0x3]
      %v5142 = vlaneseq
      %v5143 = vshrl.u32 %v5142, 7
      %v5144 = vsub.s32 0, %v5143
      %v5145 = vrot.slane %v5140, %v5144
      %v5146 = vlaneseq
      %v5147 = vshrl.u32 %v5146, 7
      %v5148 = vsub.s32 1, %v5147
      %v5149 = vrot.slane %v5140, %v5148
      %v5152 = vmul.f32 %v5076, %v5145
      %v5153 = vmul.f32 %v5077, %v5149
      %v5154 = vmul.f32 %v5078, %v5145
      %v5155 = vmul.f32 %v5079, %v5149
      %v5156 = vmul.f32 %v5080, %v5145
      %v5157 = vmul.f32 %v5081, %v5149
      %v5158 = vmul.f32 %v5082, %v5145
      %v5159 = vmul.f32 %v5083, %v5149
      %v5160 = vmul.f32 %v5084, %v5145
      %v5161 = vmul.f32 %v5085, %v5149
      %v5162 = vmul.f32 %v5086, %v5145
      %v5163 = vmul.f32 %v5087, %v5149
      %v5164 = vmul.f32 %v5088, %v5145
      %v5165 = vmul.f32 %v5089, %v5149
      %v5166 = vmul.f32 %v5090, %v5145
      %v5167 = vmul.f32 %v5091, %v5149
      %v5168 = vmul.f32 %v5092, %v5145
      %v5169 = vmul.f32 %v5093, %v5149
      %v5170 = vmul.f32 %v5094, %v5145
      %v5171 = vmul.f32 %v5095, %v5149
      %v5172 = vmul.f32 %v5096, %v5145
      %v5173 = vmul.f32 %v5097, %v5149
      %v5174 = vmul.f32 %v5098, %v5145
      %v5175 = vmul.f32 %v5099, %v5149
      %v5176 = vmul.f32 %v5100, %v5145
      %v5177 = vmul.f32 %v5101, %v5149
      %v5178 = vmul.f32 %v5102, %v5145
      %v5179 = vmul.f32 %v5103, %v5149
      %v5180 = vmul.f32 %v5104, %v5145
      %v5181 = vmul.f32 %v5105, %v5149
      %v5182 = vmul.f32 %v5106, %v5145
      %v5183 = vmul.f32 %v5107, %v5149
      %v5184 = vmul.f32 %v5108, %v5145
      %v5185 = vmul.f32 %v5109, %v5149
      %v5186 = vmul.f32 %v5110, %v5145
      %v5187 = vmul.f32 %v5111, %v5149
      %v5188 = vmul.f32 %v5112, %v5145
      %v5189 = vmul.f32 %v5113, %v5149
      %v5190 = vmul.f32 %v5114, %v5145
      %v5191 = vmul.f32 %v5115, %v5149
      %v5192 = vmul.f32 %v5116, %v5145
      %v5193 = vmul.f32 %v5117, %v5149
      %v5194 = vmul.f32 %v5118, %v5145
      %v5195 = vmul.f32 %v5119, %v5149
      %v5196 = vmul.f32 %v5120, %v5145
      %v5197 = vmul.f32 %v5121, %v5149
      %v5198 = vmul.f32 %v5122, %v5145
      %v5199 = vmul.f32 %v5123, %v5149
      %v5200 = vmul.f32 %v5124, %v5145
      %v5201 = vmul.f32 %v5125, %v5149
      %v5202 = vmul.f32 %v5126, %v5145
      %v5203 = vmul.f32 %v5127, %v5149
      %v5204 = vmul.f32 %v5128, %v5145
      %v5205 = vmul.f32 %v5129, %v5149
      %v5206 = vmul.f32 %v5130, %v5145
      %v5207 = vmul.f32 %v5131, %v5149
      %v5208 = vmul.f32 %v5132, %v5145
      %v5209 = vmul.f32 %v5133, %v5149
      %v5210 = vmul.f32 %v5134, %v5145
      %v5211 = vmul.f32 %v5135, %v5149
      %v5212 = vmul.f32 %v5136, %v5145
      %v5213 = vmul.f32 %v5137, %v5149
      %v5214 = vmul.f32 %v5138, %v5145
      %v5215 = vmul.f32 %v5139, %v5149
      %v5216 = vadd.f32 %v5152, %v5153
      %5217 = vadd.xlane.f32.xlu0 %v5216
      %v5218 = vpop.xlane.xlu0 %5217
      %v5219 = vadd.f32 %v5154, %v5155
      %5220 = vadd.xlane.f32.xlu0 %v5219
      %v5221 = vpop.xlane.xlu0 %5220
      %v5222 = vadd.f32 %v5156, %v5157
      %5223 = vadd.xlane.f32.xlu0 %v5222
      %v5224 = vpop.xlane.xlu0 %5223
      %v5225 = vadd.f32 %v5158, %v5159
      %5226 = vadd.xlane.f32.xlu0 %v5225
      %v5227 = vpop.xlane.xlu0 %5226
      %v5228 = vadd.f32 %v5160, %v5161
      %5229 = vadd.xlane.f32.xlu0 %v5228
      %v5230 = vpop.xlane.xlu0 %5229
      %v5231 = vadd.f32 %v5162, %v5163
      %5232 = vadd.xlane.f32.xlu0 %v5231
      %v5233 = vpop.xlane.xlu0 %5232
      %v5234 = vadd.f32 %v5164, %v5165
      %5235 = vadd.xlane.f32.xlu0 %v5234
      %v5236 = vpop.xlane.xlu0 %5235
      %v5237 = vadd.f32 %v5166, %v5167
      %5238 = vadd.xlane.f32.xlu0 %v5237
      %v5239 = vpop.xlane.xlu0 %5238
      %v5240 = vadd.f32 %v5168, %v5169
      %5241 = vadd.xlane.f32.xlu0 %v5240
      %v5242 = vpop.xlane.xlu0 %5241
      %v5243 = vadd.f32 %v5170, %v5171
      %5244 = vadd.xlane.f32.xlu0 %v5243
      %v5245 = vpop.xlane.xlu0 %5244
      %v5246 = vadd.f32 %v5172, %v5173
      %5247 = vadd.xlane.f32.xlu0 %v5246
      %v5248 = vpop.xlane.xlu0 %5247
      %v5249 = vadd.f32 %v5174, %v5175
      %5250 = vadd.xlane.f32.xlu0 %v5249
      %v5251 = vpop.xlane.xlu0 %5250
      %v5252 = vadd.f32 %v5176, %v5177
      %5253 = vadd.xlane.f32.xlu0 %v5252
      %v5254 = vpop.xlane.xlu0 %5253
      %v5255 = vadd.f32 %v5178, %v5179
      %5256 = vadd.xlane.f32.xlu0 %v5255
      %v5257 = vpop.xlane.xlu0 %5256
      %v5258 = vadd.f32 %v5180, %v5181
      %5259 = vadd.xlane.f32.xlu0 %v5258
      %v5260 = vpop.xlane.xlu0 %5259
      %v5261 = vadd.f32 %v5182, %v5183
      %5262 = vadd.xlane.f32.xlu0 %v5261
      %v5263 = vpop.xlane.xlu0 %5262
      %v5264 = vadd.f32 %v5184, %v5185
      %5265 = vadd.xlane.f32.xlu0 %v5264
      %v5266 = vpop.xlane.xlu0 %5265
      %v5267 = vadd.f32 %v5186, %v5187
      %5268 = vadd.xlane.f32.xlu0 %v5267
      %v5269 = vpop.xlane.xlu0 %5268
      %v5270 = vadd.f32 %v5188, %v5189
      %5271 = vadd.xlane.f32.xlu0 %v5270
      %v5272 = vpop.xlane.xlu0 %5271
      %v5273 = vadd.f32 %v5190, %v5191
      %5274 = vadd.xlane.f32.xlu0 %v5273
      %v5275 = vpop.xlane.xlu0 %5274
      %v5276 = vadd.f32 %v5192, %v5193
      %5277 = vadd.xlane.f32.xlu0 %v5276
      %v5278 = vpop.xlane.xlu0 %5277
      %v5279 = vadd.f32 %v5194, %v5195
      %5280 = vadd.xlane.f32.xlu0 %v5279
      %v5281 = vpop.xlane.xlu0 %5280
      %v5282 = vadd.f32 %v5196, %v5197
      %5283 = vadd.xlane.f32.xlu0 %v5282
      %v5284 = vpop.xlane.xlu0 %5283
      %v5285 = vadd.f32 %v5198, %v5199
      %5286 = vadd.xlane.f32.xlu0 %v5285
      %v5287 = vpop.xlane.xlu0 %5286
      %v5288 = vadd.f32 %v5200, %v5201
      %5289 = vadd.xlane.f32.xlu0 %v5288
      %v5290 = vpop.xlane.xlu0 %5289
      %v5291 = vadd.f32 %v5202, %v5203
      %5292 = vadd.xlane.f32.xlu0 %v5291
      %v5293 = vpop.xlane.xlu0 %5292
      %v5294 = vadd.f32 %v5204, %v5205
      %5295 = vadd.xlane.f32.xlu0 %v5294
      %v5296 = vpop.xlane.xlu0 %5295
      %v5297 = vadd.f32 %v5206, %v5207
      %5298 = vadd.xlane.f32.xlu0 %v5297
      %v5299 = vpop.xlane.xlu0 %5298
      %v5300 = vadd.f32 %v5208, %v5209
      %5301 = vadd.xlane.f32.xlu0 %v5300
      %v5302 = vpop.xlane.xlu0 %5301
      %v5303 = vadd.f32 %v5210, %v5211
      %5304 = vadd.xlane.f32.xlu0 %v5303
      %v5305 = vpop.xlane.xlu0 %5304
      %v5306 = vadd.f32 %v5212, %v5213
      %5307 = vadd.xlane.f32.xlu0 %v5306
      %v5308 = vpop.xlane.xlu0 %5307
      %v5309 = vadd.f32 %v5214, %v5215
      %5310 = vadd.xlane.f32.xlu0 %v5309
      %v5311 = vpop.xlane.xlu0 %5310
      %s5312 = scalar_lea.vmem %s6, 1
      %v5313 = vld [vmem:[%s5312] ss:$4 sm:$0x3]
      %v5315 = vlaneseq
      %v5316 = vshrl.u32 %v5315, 7
      %v5317 = vsub.s32 0, %v5316
      %v5318 = vrot.slane %v5313, %v5317
      %v5319 = vlaneseq
      %v5320 = vshrl.u32 %v5319, 7
      %v5321 = vsub.s32 1, %v5320
      %v5322 = vrot.slane %v5313, %v5321
      %v5325 = vmul.f32 %v5076, %v5318
      %v5326 = vmul.f32 %v5077, %v5322
      %v5327 = vmul.f32 %v5078, %v5318
      %v5328 = vmul.f32 %v5079, %v5322
      %v5329 = vmul.f32 %v5080, %v5318
      %v5330 = vmul.f32 %v5081, %v5322
      %v5331 = vmul.f32 %v5082, %v5318
      %v5332 = vmul.f32 %v5083, %v5322
      %v5333 = vmul.f32 %v5084, %v5318
      %v5334 = vmul.f32 %v5085, %v5322
      %v5335 = vmul.f32 %v5086, %v5318
      %v5336 = vmul.f32 %v5087, %v5322
      %v5337 = vmul.f32 %v5088, %v5318
      %v5338 = vmul.f32 %v5089, %v5322
      %v5339 = vmul.f32 %v5090, %v5318
      %v5340 = vmul.f32 %v5091, %v5322
      %v5341 = vmul.f32 %v5092, %v5318
      %v5342 = vmul.f32 %v5093, %v5322
      %v5343 = vmul.f32 %v5094, %v5318
      %v5344 = vmul.f32 %v5095, %v5322
      %v5345 = vmul.f32 %v5096, %v5318
      %v5346 = vmul.f32 %v5097, %v5322
      %v5347 = vmul.f32 %v5098, %v5318
      %v5348 = vmul.f32 %v5099, %v5322
      %v5349 = vmul.f32 %v5100, %v5318
      %v5350 = vmul.f32 %v5101, %v5322
      %v5351 = vmul.f32 %v5102, %v5318
      %v5352 = vmul.f32 %v5103, %v5322
      %v5353 = vmul.f32 %v5104, %v5318
      %v5354 = vmul.f32 %v5105, %v5322
      %v5355 = vmul.f32 %v5106, %v5318
      %v5356 = vmul.f32 %v5107, %v5322
      %v5357 = vmul.f32 %v5108, %v5318
      %v5358 = vmul.f32 %v5109, %v5322
      %v5359 = vmul.f32 %v5110, %v5318
      %v5360 = vmul.f32 %v5111, %v5322
      %v5361 = vmul.f32 %v5112, %v5318
      %v5362 = vmul.f32 %v5113, %v5322
      %v5363 = vmul.f32 %v5114, %v5318
      %v5364 = vmul.f32 %v5115, %v5322
      %v5365 = vmul.f32 %v5116, %v5318
      %v5366 = vmul.f32 %v5117, %v5322
      %v5367 = vmul.f32 %v5118, %v5318
      %v5368 = vmul.f32 %v5119, %v5322
      %v5369 = vmul.f32 %v5120, %v5318
      %v5370 = vmul.f32 %v5121, %v5322
      %v5371 = vmul.f32 %v5122, %v5318
      %v5372 = vmul.f32 %v5123, %v5322
      %v5373 = vmul.f32 %v5124, %v5318
      %v5374 = vmul.f32 %v5125, %v5322
      %v5375 = vmul.f32 %v5126, %v5318
      %v5376 = vmul.f32 %v5127, %v5322
      %v5377 = vmul.f32 %v5128, %v5318
      %v5378 = vmul.f32 %v5129, %v5322
      %v5379 = vmul.f32 %v5130, %v5318
      %v5380 = vmul.f32 %v5131, %v5322
      %v5381 = vmul.f32 %v5132, %v5318
      %v5382 = vmul.f32 %v5133, %v5322
      %v5383 = vmul.f32 %v5134, %v5318
      %v5384 = vmul.f32 %v5135, %v5322
      %v5385 = vmul.f32 %v5136, %v5318
      %v5386 = vmul.f32 %v5137, %v5322
      %v5387 = vmul.f32 %v5138, %v5318
      %v5388 = vmul.f32 %v5139, %v5322
      %v5389 = vadd.f32 %v5325, %v5326
      %5390 = vadd.xlane.f32.xlu0 %v5389
      %v5391 = vpop.xlane.xlu0 %5390
      %v5392 = vadd.f32 %v5327, %v5328
      %5393 = vadd.xlane.f32.xlu0 %v5392
      %v5394 = vpop.xlane.xlu0 %5393
      %v5395 = vadd.f32 %v5329, %v5330
      %5396 = vadd.xlane.f32.xlu0 %v5395
      %v5397 = vpop.xlane.xlu0 %5396
      %v5398 = vadd.f32 %v5331, %v5332
      %5399 = vadd.xlane.f32.xlu0 %v5398
      %v5400 = vpop.xlane.xlu0 %5399
      %v5401 = vadd.f32 %v5333, %v5334
      %5402 = vadd.xlane.f32.xlu0 %v5401
      %v5403 = vpop.xlane.xlu0 %5402
      %v5404 = vadd.f32 %v5335, %v5336
      %5405 = vadd.xlane.f32.xlu0 %v5404
      %v5406 = vpop.xlane.xlu0 %5405
      %v5407 = vadd.f32 %v5337, %v5338
      %5408 = vadd.xlane.f32.xlu0 %v5407
      %v5409 = vpop.xlane.xlu0 %5408
      %v5410 = vadd.f32 %v5339, %v5340
      %5411 = vadd.xlane.f32.xlu0 %v5410
      %v5412 = vpop.xlane.xlu0 %5411
      %v5413 = vadd.f32 %v5341, %v5342
      %5414 = vadd.xlane.f32.xlu0 %v5413
      %v5415 = vpop.xlane.xlu0 %5414
      %v5416 = vadd.f32 %v5343, %v5344
      %5417 = vadd.xlane.f32.xlu0 %v5416
      %v5418 = vpop.xlane.xlu0 %5417
      %v5419 = vadd.f32 %v5345, %v5346
      %5420 = vadd.xlane.f32.xlu0 %v5419
      %v5421 = vpop.xlane.xlu0 %5420
      %v5422 = vadd.f32 %v5347, %v5348
      %5423 = vadd.xlane.f32.xlu0 %v5422
      %v5424 = vpop.xlane.xlu0 %5423
      %v5425 = vadd.f32 %v5349, %v5350
      %5426 = vadd.xlane.f32.xlu0 %v5425
      %v5427 = vpop.xlane.xlu0 %5426
      %v5428 = vadd.f32 %v5351, %v5352
      %5429 = vadd.xlane.f32.xlu0 %v5428
      %v5430 = vpop.xlane.xlu0 %5429
      %v5431 = vadd.f32 %v5353, %v5354
      %5432 = vadd.xlane.f32.xlu0 %v5431
      %v5433 = vpop.xlane.xlu0 %5432
      %v5434 = vadd.f32 %v5355, %v5356
      %5435 = vadd.xlane.f32.xlu0 %v5434
      %v5436 = vpop.xlane.xlu0 %5435
      %v5437 = vadd.f32 %v5357, %v5358
      %5438 = vadd.xlane.f32.xlu0 %v5437
      %v5439 = vpop.xlane.xlu0 %5438
      %v5440 = vadd.f32 %v5359, %v5360
      %5441 = vadd.xlane.f32.xlu0 %v5440
      %v5442 = vpop.xlane.xlu0 %5441
      %v5443 = vadd.f32 %v5361, %v5362
      %5444 = vadd.xlane.f32.xlu0 %v5443
      %v5445 = vpop.xlane.xlu0 %5444
      %v5446 = vadd.f32 %v5363, %v5364
      %5447 = vadd.xlane.f32.xlu0 %v5446
      %v5448 = vpop.xlane.xlu0 %5447
      %v5449 = vadd.f32 %v5365, %v5366
      %5450 = vadd.xlane.f32.xlu0 %v5449
      %v5451 = vpop.xlane.xlu0 %5450
      %v5452 = vadd.f32 %v5367, %v5368
      %5453 = vadd.xlane.f32.xlu0 %v5452
      %v5454 = vpop.xlane.xlu0 %5453
      %v5455 = vadd.f32 %v5369, %v5370
      %5456 = vadd.xlane.f32.xlu0 %v5455
      %v5457 = vpop.xlane.xlu0 %5456
      %v5458 = vadd.f32 %v5371, %v5372
      %5459 = vadd.xlane.f32.xlu0 %v5458
      %v5460 = vpop.xlane.xlu0 %5459
      %v5461 = vadd.f32 %v5373, %v5374
      %5462 = vadd.xlane.f32.xlu0 %v5461
      %v5463 = vpop.xlane.xlu0 %5462
      %v5464 = vadd.f32 %v5375, %v5376
      %5465 = vadd.xlane.f32.xlu0 %v5464
      %v5466 = vpop.xlane.xlu0 %5465
      %v5467 = vadd.f32 %v5377, %v5378
      %5468 = vadd.xlane.f32.xlu0 %v5467
      %v5469 = vpop.xlane.xlu0 %5468
      %v5470 = vadd.f32 %v5379, %v5380
      %5471 = vadd.xlane.f32.xlu0 %v5470
      %v5472 = vpop.xlane.xlu0 %5471
      %v5473 = vadd.f32 %v5381, %v5382
      %5474 = vadd.xlane.f32.xlu0 %v5473
      %v5475 = vpop.xlane.xlu0 %5474
      %v5476 = vadd.f32 %v5383, %v5384
      %5477 = vadd.xlane.f32.xlu0 %v5476
      %v5478 = vpop.xlane.xlu0 %5477
      %v5479 = vadd.f32 %v5385, %v5386
      %5480 = vadd.xlane.f32.xlu0 %v5479
      %v5481 = vpop.xlane.xlu0 %5480
      %v5482 = vadd.f32 %v5387, %v5388
      %5483 = vadd.xlane.f32.xlu0 %v5482
      %v5484 = vpop.xlane.xlu0 %5483
      %s5485 = scalar_lea.vmem %s6, 2
      %v5486 = vld [vmem:[%s5485] ss:$4 sm:$0x3]
      %v5488 = vlaneseq
      %v5489 = vshrl.u32 %v5488, 7
      %v5490 = vsub.s32 0, %v5489
      %v5491 = vrot.slane %v5486, %v5490
      %v5492 = vlaneseq
      %v5493 = vshrl.u32 %v5492, 7
      %v5494 = vsub.s32 1, %v5493
      %v5495 = vrot.slane %v5486, %v5494
      %v5498 = vmul.f32 %v5076, %v5491
      %v5499 = vmul.f32 %v5077, %v5495
      %v5500 = vmul.f32 %v5078, %v5491
      %v5501 = vmul.f32 %v5079, %v5495
      %v5502 = vmul.f32 %v5080, %v5491
      %v5503 = vmul.f32 %v5081, %v5495
      %v5504 = vmul.f32 %v5082, %v5491
      %v5505 = vmul.f32 %v5083, %v5495
      %v5506 = vmul.f32 %v5084, %v5491
      %v5507 = vmul.f32 %v5085, %v5495
      %v5508 = vmul.f32 %v5086, %v5491
      %v5509 = vmul.f32 %v5087, %v5495
      %v5510 = vmul.f32 %v5088, %v5491
      %v5511 = vmul.f32 %v5089, %v5495
      %v5512 = vmul.f32 %v5090, %v5491
      %v5513 = vmul.f32 %v5091, %v5495
      %v5514 = vmul.f32 %v5092, %v5491
      %v5515 = vmul.f32 %v5093, %v5495
      %v5516 = vmul.f32 %v5094, %v5491
      %v5517 = vmul.f32 %v5095, %v5495
      %v5518 = vmul.f32 %v5096, %v5491
      %v5519 = vmul.f32 %v5097, %v5495
      %v5520 = vmul.f32 %v5098, %v5491
      %v5521 = vmul.f32 %v5099, %v5495
      %v5522 = vmul.f32 %v5100, %v5491
      %v5523 = vmul.f32 %v5101, %v5495
      %v5524 = vmul.f32 %v5102, %v5491
      %v5525 = vmul.f32 %v5103, %v5495
      %v5526 = vmul.f32 %v5104, %v5491
      %v5527 = vmul.f32 %v5105, %v5495
      %v5528 = vmul.f32 %v5106, %v5491
      %v5529 = vmul.f32 %v5107, %v5495
      %v5530 = vmul.f32 %v5108, %v5491
      %v5531 = vmul.f32 %v5109, %v5495
      %v5532 = vmul.f32 %v5110, %v5491
      %v5533 = vmul.f32 %v5111, %v5495
      %v5534 = vmul.f32 %v5112, %v5491
      %v5535 = vmul.f32 %v5113, %v5495
      %v5536 = vmul.f32 %v5114, %v5491
      %v5537 = vmul.f32 %v5115, %v5495
      %v5538 = vmul.f32 %v5116, %v5491
      %v5539 = vmul.f32 %v5117, %v5495
      %v5540 = vmul.f32 %v5118, %v5491
      %v5541 = vmul.f32 %v5119, %v5495
      %v5542 = vmul.f32 %v5120, %v5491
      %v5543 = vmul.f32 %v5121, %v5495
      %v5544 = vmul.f32 %v5122, %v5491
      %v5545 = vmul.f32 %v5123, %v5495
      %v5546 = vmul.f32 %v5124, %v5491
      %v5547 = vmul.f32 %v5125, %v5495
      %v5548 = vmul.f32 %v5126, %v5491
      %v5549 = vmul.f32 %v5127, %v5495
      %v5550 = vmul.f32 %v5128, %v5491
      %v5551 = vmul.f32 %v5129, %v5495
      %v5552 = vmul.f32 %v5130, %v5491
      %v5553 = vmul.f32 %v5131, %v5495
      %v5554 = vmul.f32 %v5132, %v5491
      %v5555 = vmul.f32 %v5133, %v5495
      %v5556 = vmul.f32 %v5134, %v5491
      %v5557 = vmul.f32 %v5135, %v5495
      %v5558 = vmul.f32 %v5136, %v5491
      %v5559 = vmul.f32 %v5137, %v5495
      %v5560 = vmul.f32 %v5138, %v5491
      %v5561 = vmul.f32 %v5139, %v5495
      %v5562 = vadd.f32 %v5498, %v5499
      %5563 = vadd.xlane.f32.xlu0 %v5562
      %v5564 = vpop.xlane.xlu0 %5563
      %v5565 = vadd.f32 %v5500, %v5501
      %5566 = vadd.xlane.f32.xlu0 %v5565
      %v5567 = vpop.xlane.xlu0 %5566
      %v5568 = vadd.f32 %v5502, %v5503
      %5569 = vadd.xlane.f32.xlu0 %v5568
      %v5570 = vpop.xlane.xlu0 %5569
      %v5571 = vadd.f32 %v5504, %v5505
      %5572 = vadd.xlane.f32.xlu0 %v5571
      %v5573 = vpop.xlane.xlu0 %5572
      %v5574 = vadd.f32 %v5506, %v5507
      %5575 = vadd.xlane.f32.xlu0 %v5574
      %v5576 = vpop.xlane.xlu0 %5575
      %v5577 = vadd.f32 %v5508, %v5509
      %5578 = vadd.xlane.f32.xlu0 %v5577
      %v5579 = vpop.xlane.xlu0 %5578
      %v5580 = vadd.f32 %v5510, %v5511
      %5581 = vadd.xlane.f32.xlu0 %v5580
      %v5582 = vpop.xlane.xlu0 %5581
      %v5583 = vadd.f32 %v5512, %v5513
      %5584 = vadd.xlane.f32.xlu0 %v5583
      %v5585 = vpop.xlane.xlu0 %5584
      %v5586 = vadd.f32 %v5514, %v5515
      %5587 = vadd.xlane.f32.xlu0 %v5586
      %v5588 = vpop.xlane.xlu0 %5587
      %v5589 = vadd.f32 %v5516, %v5517
      %5590 = vadd.xlane.f32.xlu0 %v5589
      %v5591 = vpop.xlane.xlu0 %5590
      %v5592 = vadd.f32 %v5518, %v5519
      %5593 = vadd.xlane.f32.xlu0 %v5592
      %v5594 = vpop.xlane.xlu0 %5593
      %v5595 = vadd.f32 %v5520, %v5521
      %5596 = vadd.xlane.f32.xlu0 %v5595
      %v5597 = vpop.xlane.xlu0 %5596
      %v5598 = vadd.f32 %v5522, %v5523
      %5599 = vadd.xlane.f32.xlu0 %v5598
      %v5600 = vpop.xlane.xlu0 %5599
      %v5601 = vadd.f32 %v5524, %v5525
      %5602 = vadd.xlane.f32.xlu0 %v5601
      %v5603 = vpop.xlane.xlu0 %5602
      %v5604 = vadd.f32 %v5526, %v5527
      %5605 = vadd.xlane.f32.xlu0 %v5604
      %v5606 = vpop.xlane.xlu0 %5605
      %v5607 = vadd.f32 %v5528, %v5529
      %5608 = vadd.xlane.f32.xlu0 %v5607
      %v5609 = vpop.xlane.xlu0 %5608
      %v5610 = vadd.f32 %v5530, %v5531
      %5611 = vadd.xlane.f32.xlu0 %v5610
      %v5612 = vpop.xlane.xlu0 %5611
      %v5613 = vadd.f32 %v5532, %v5533
      %5614 = vadd.xlane.f32.xlu0 %v5613
      %v5615 = vpop.xlane.xlu0 %5614
      %v5616 = vadd.f32 %v5534, %v5535
      %5617 = vadd.xlane.f32.xlu0 %v5616
      %v5618 = vpop.xlane.xlu0 %5617
      %v5619 = vadd.f32 %v5536, %v5537
      %5620 = vadd.xlane.f32.xlu0 %v5619
      %v5621 = vpop.xlane.xlu0 %5620
      %v5622 = vadd.f32 %v5538, %v5539
      %5623 = vadd.xlane.f32.xlu0 %v5622
      %v5624 = vpop.xlane.xlu0 %5623
      %v5625 = vadd.f32 %v5540, %v5541
      %5626 = vadd.xlane.f32.xlu0 %v5625
      %v5627 = vpop.xlane.xlu0 %5626
      %v5628 = vadd.f32 %v5542, %v5543
      %5629 = vadd.xlane.f32.xlu0 %v5628
      %v5630 = vpop.xlane.xlu0 %5629
      %v5631 = vadd.f32 %v5544, %v5545
      %5632 = vadd.xlane.f32.xlu0 %v5631
      %v5633 = vpop.xlane.xlu0 %5632
      %v5634 = vadd.f32 %v5546, %v5547
      %5635 = vadd.xlane.f32.xlu0 %v5634
      %v5636 = vpop.xlane.xlu0 %5635
      %v5637 = vadd.f32 %v5548, %v5549
      %5638 = vadd.xlane.f32.xlu0 %v5637
      %v5639 = vpop.xlane.xlu0 %5638
      %v5640 = vadd.f32 %v5550, %v5551
      %5641 = vadd.xlane.f32.xlu0 %v5640
      %v5642 = vpop.xlane.xlu0 %5641
      %v5643 = vadd.f32 %v5552, %v5553
      %5644 = vadd.xlane.f32.xlu0 %v5643
      %v5645 = vpop.xlane.xlu0 %5644
      %v5646 = vadd.f32 %v5554, %v5555
      %5647 = vadd.xlane.f32.xlu0 %v5646
      %v5648 = vpop.xlane.xlu0 %5647
      %v5649 = vadd.f32 %v5556, %v5557
      %5650 = vadd.xlane.f32.xlu0 %v5649
      %v5651 = vpop.xlane.xlu0 %5650
      %v5652 = vadd.f32 %v5558, %v5559
      %5653 = vadd.xlane.f32.xlu0 %v5652
      %v5654 = vpop.xlane.xlu0 %5653
      %v5655 = vadd.f32 %v5560, %v5561
      %5656 = vadd.xlane.f32.xlu0 %v5655
      %v5657 = vpop.xlane.xlu0 %5656
      %s5658 = scalar_lea.vmem %s6, 3
      %v5659 = vld [vmem:[%s5658] ss:$4 sm:$0x3]
      %v5661 = vlaneseq
      %v5662 = vshrl.u32 %v5661, 7
      %v5663 = vsub.s32 0, %v5662
      %v5664 = vrot.slane %v5659, %v5663
      %v5665 = vlaneseq
      %v5666 = vshrl.u32 %v5665, 7
      %v5667 = vsub.s32 1, %v5666
      %v5668 = vrot.slane %v5659, %v5667
      %v5671 = vmul.f32 %v5076, %v5664
      %v5672 = vmul.f32 %v5077, %v5668
      %v5673 = vmul.f32 %v5078, %v5664
      %v5674 = vmul.f32 %v5079, %v5668
      %v5675 = vmul.f32 %v5080, %v5664
      %v5676 = vmul.f32 %v5081, %v5668
      %v5677 = vmul.f32 %v5082, %v5664
      %v5678 = vmul.f32 %v5083, %v5668
      %v5679 = vmul.f32 %v5084, %v5664
      %v5680 = vmul.f32 %v5085, %v5668
      %v5681 = vmul.f32 %v5086, %v5664
      %v5682 = vmul.f32 %v5087, %v5668
      %v5683 = vmul.f32 %v5088, %v5664
      %v5684 = vmul.f32 %v5089, %v5668
      %v5685 = vmul.f32 %v5090, %v5664
      %v5686 = vmul.f32 %v5091, %v5668
      %v5687 = vmul.f32 %v5092, %v5664
      %v5688 = vmul.f32 %v5093, %v5668
      %v5689 = vmul.f32 %v5094, %v5664
      %v5690 = vmul.f32 %v5095, %v5668
      %v5691 = vmul.f32 %v5096, %v5664
      %v5692 = vmul.f32 %v5097, %v5668
      %v5693 = vmul.f32 %v5098, %v5664
      %v5694 = vmul.f32 %v5099, %v5668
      %v5695 = vmul.f32 %v5100, %v5664
      %v5696 = vmul.f32 %v5101, %v5668
      %v5697 = vmul.f32 %v5102, %v5664
      %v5698 = vmul.f32 %v5103, %v5668
      %v5699 = vmul.f32 %v5104, %v5664
      %v5700 = vmul.f32 %v5105, %v5668
      %v5701 = vmul.f32 %v5106, %v5664
      %v5702 = vmul.f32 %v5107, %v5668
      %v5703 = vmul.f32 %v5108, %v5664
      %v5704 = vmul.f32 %v5109, %v5668
      %v5705 = vmul.f32 %v5110, %v5664
      %v5706 = vmul.f32 %v5111, %v5668
      %v5707 = vmul.f32 %v5112, %v5664
      %v5708 = vmul.f32 %v5113, %v5668
      %v5709 = vmul.f32 %v5114, %v5664
      %v5710 = vmul.f32 %v5115, %v5668
      %v5711 = vmul.f32 %v5116, %v5664
      %v5712 = vmul.f32 %v5117, %v5668
      %v5713 = vmul.f32 %v5118, %v5664
      %v5714 = vmul.f32 %v5119, %v5668
      %v5715 = vmul.f32 %v5120, %v5664
      %v5716 = vmul.f32 %v5121, %v5668
      %v5717 = vmul.f32 %v5122, %v5664
      %v5718 = vmul.f32 %v5123, %v5668
      %v5719 = vmul.f32 %v5124, %v5664
      %v5720 = vmul.f32 %v5125, %v5668
      %v5721 = vmul.f32 %v5126, %v5664
      %v5722 = vmul.f32 %v5127, %v5668
      %v5723 = vmul.f32 %v5128, %v5664
      %v5724 = vmul.f32 %v5129, %v5668
      %v5725 = vmul.f32 %v5130, %v5664
      %v5726 = vmul.f32 %v5131, %v5668
      %v5727 = vmul.f32 %v5132, %v5664
      %v5728 = vmul.f32 %v5133, %v5668
      %v5729 = vmul.f32 %v5134, %v5664
      %v5730 = vmul.f32 %v5135, %v5668
      %v5731 = vmul.f32 %v5136, %v5664
      %v5732 = vmul.f32 %v5137, %v5668
      %v5733 = vmul.f32 %v5138, %v5664
      %v5734 = vmul.f32 %v5139, %v5668
      %v5735 = vadd.f32 %v5671, %v5672
      %5736 = vadd.xlane.f32.xlu0 %v5735
      %v5737 = vpop.xlane.xlu0 %5736
      %v5738 = vadd.f32 %v5673, %v5674
      %5739 = vadd.xlane.f32.xlu0 %v5738
      %v5740 = vpop.xlane.xlu0 %5739
      %v5741 = vadd.f32 %v5675, %v5676
      %5742 = vadd.xlane.f32.xlu0 %v5741
      %v5743 = vpop.xlane.xlu0 %5742
      %v5744 = vadd.f32 %v5677, %v5678
      %5745 = vadd.xlane.f32.xlu0 %v5744
      %v5746 = vpop.xlane.xlu0 %5745
      %v5747 = vadd.f32 %v5679, %v5680
      %5748 = vadd.xlane.f32.xlu0 %v5747
      %v5749 = vpop.xlane.xlu0 %5748
      %v5750 = vadd.f32 %v5681, %v5682
      %5751 = vadd.xlane.f32.xlu0 %v5750
      %v5752 = vpop.xlane.xlu0 %5751
      %v5753 = vadd.f32 %v5683, %v5684
      %5754 = vadd.xlane.f32.xlu0 %v5753
      %v5755 = vpop.xlane.xlu0 %5754
      %v5756 = vadd.f32 %v5685, %v5686
      %5757 = vadd.xlane.f32.xlu0 %v5756
      %v5758 = vpop.xlane.xlu0 %5757
      %v5759 = vadd.f32 %v5687, %v5688
      %5760 = vadd.xlane.f32.xlu0 %v5759
      %v5761 = vpop.xlane.xlu0 %5760
      %v5762 = vadd.f32 %v5689, %v5690
      %5763 = vadd.xlane.f32.xlu0 %v5762
      %v5764 = vpop.xlane.xlu0 %5763
      %v5765 = vadd.f32 %v5691, %v5692
      %5766 = vadd.xlane.f32.xlu0 %v5765
      %v5767 = vpop.xlane.xlu0 %5766
      %v5768 = vadd.f32 %v5693, %v5694
      %5769 = vadd.xlane.f32.xlu0 %v5768
      %v5770 = vpop.xlane.xlu0 %5769
      %v5771 = vadd.f32 %v5695, %v5696
      %5772 = vadd.xlane.f32.xlu0 %v5771
      %v5773 = vpop.xlane.xlu0 %5772
      %v5774 = vadd.f32 %v5697, %v5698
      %5775 = vadd.xlane.f32.xlu0 %v5774
      %v5776 = vpop.xlane.xlu0 %5775
      %v5777 = vadd.f32 %v5699, %v5700
      %5778 = vadd.xlane.f32.xlu0 %v5777
      %v5779 = vpop.xlane.xlu0 %5778
      %v5780 = vadd.f32 %v5701, %v5702
      %5781 = vadd.xlane.f32.xlu0 %v5780
      %v5782 = vpop.xlane.xlu0 %5781
      %v5783 = vadd.f32 %v5703, %v5704
      %5784 = vadd.xlane.f32.xlu0 %v5783
      %v5785 = vpop.xlane.xlu0 %5784
      %v5786 = vadd.f32 %v5705, %v5706
      %5787 = vadd.xlane.f32.xlu0 %v5786
      %v5788 = vpop.xlane.xlu0 %5787
      %v5789 = vadd.f32 %v5707, %v5708
      %5790 = vadd.xlane.f32.xlu0 %v5789
      %v5791 = vpop.xlane.xlu0 %5790
      %v5792 = vadd.f32 %v5709, %v5710
      %5793 = vadd.xlane.f32.xlu0 %v5792
      %v5794 = vpop.xlane.xlu0 %5793
      %v5795 = vadd.f32 %v5711, %v5712
      %5796 = vadd.xlane.f32.xlu0 %v5795
      %v5797 = vpop.xlane.xlu0 %5796
      %v5798 = vadd.f32 %v5713, %v5714
      %5799 = vadd.xlane.f32.xlu0 %v5798
      %v5800 = vpop.xlane.xlu0 %5799
      %v5801 = vadd.f32 %v5715, %v5716
      %5802 = vadd.xlane.f32.xlu0 %v5801
      %v5803 = vpop.xlane.xlu0 %5802
      %v5804 = vadd.f32 %v5717, %v5718
      %5805 = vadd.xlane.f32.xlu0 %v5804
      %v5806 = vpop.xlane.xlu0 %5805
      %v5807 = vadd.f32 %v5719, %v5720
      %5808 = vadd.xlane.f32.xlu0 %v5807
      %v5809 = vpop.xlane.xlu0 %5808
      %v5810 = vadd.f32 %v5721, %v5722
      %5811 = vadd.xlane.f32.xlu0 %v5810
      %v5812 = vpop.xlane.xlu0 %5811
      %v5813 = vadd.f32 %v5723, %v5724
      %5814 = vadd.xlane.f32.xlu0 %v5813
      %v5815 = vpop.xlane.xlu0 %5814
      %v5816 = vadd.f32 %v5725, %v5726
      %5817 = vadd.xlane.f32.xlu0 %v5816
      %v5818 = vpop.xlane.xlu0 %5817
      %v5819 = vadd.f32 %v5727, %v5728
      %5820 = vadd.xlane.f32.xlu0 %v5819
      %v5821 = vpop.xlane.xlu0 %5820
      %v5822 = vadd.f32 %v5729, %v5730
      %5823 = vadd.xlane.f32.xlu0 %v5822
      %v5824 = vpop.xlane.xlu0 %5823
      %v5825 = vadd.f32 %v5731, %v5732
      %5826 = vadd.xlane.f32.xlu0 %v5825
      %v5827 = vpop.xlane.xlu0 %5826
      %v5828 = vadd.f32 %v5733, %v5734
      %5829 = vadd.xlane.f32.xlu0 %v5828
      %v5830 = vpop.xlane.xlu0 %5829
      %vm5831 = vcmask 7168
      %v5832 = vsel %vm5831, %v5218, %v5391
      %v5833 = vsel %vm5831, %v5221, %v5394
      %v5834 = vsel %vm5831, %v5224, %v5397
      %v5835 = vsel %vm5831, %v5227, %v5400
      %v5836 = vsel %vm5831, %v5230, %v5403
      %v5837 = vsel %vm5831, %v5233, %v5406
      %v5838 = vsel %vm5831, %v5236, %v5409
      %v5839 = vsel %vm5831, %v5239, %v5412
      %v5840 = vsel %vm5831, %v5242, %v5415
      %v5841 = vsel %vm5831, %v5245, %v5418
      %v5842 = vsel %vm5831, %v5248, %v5421
      %v5843 = vsel %vm5831, %v5251, %v5424
      %v5844 = vsel %vm5831, %v5254, %v5427
      %v5845 = vsel %vm5831, %v5257, %v5430
      %v5846 = vsel %vm5831, %v5260, %v5433
      %v5847 = vsel %vm5831, %v5263, %v5436
      %v5848 = vsel %vm5831, %v5266, %v5439
      %v5849 = vsel %vm5831, %v5269, %v5442
      %v5850 = vsel %vm5831, %v5272, %v5445
      %v5851 = vsel %vm5831, %v5275, %v5448
      %v5852 = vsel %vm5831, %v5278, %v5451
      %v5853 = vsel %vm5831, %v5281, %v5454
      %v5854 = vsel %vm5831, %v5284, %v5457
      %v5855 = vsel %vm5831, %v5287, %v5460
      %v5856 = vsel %vm5831, %v5290, %v5463
      %v5857 = vsel %vm5831, %v5293, %v5466
      %v5858 = vsel %vm5831, %v5296, %v5469
      %v5859 = vsel %vm5831, %v5299, %v5472
      %v5860 = vsel %vm5831, %v5302, %v5475
      %v5861 = vsel %vm5831, %v5305, %v5478
      %v5862 = vsel %vm5831, %v5308, %v5481
      %v5863 = vsel %vm5831, %v5311, %v5484
      %vm5864 = vcmask 15360
      %v5865 = vsel %vm5864, %v5832, %v5564
      %v5866 = vsel %vm5864, %v5833, %v5567
      %v5867 = vsel %vm5864, %v5834, %v5570
      %v5868 = vsel %vm5864, %v5835, %v5573
      %v5869 = vsel %vm5864, %v5836, %v5576
      %v5870 = vsel %vm5864, %v5837, %v5579
      %v5871 = vsel %vm5864, %v5838, %v5582
      %v5872 = vsel %vm5864, %v5839, %v5585
      %v5873 = vsel %vm5864, %v5840, %v5588
      %v5874 = vsel %vm5864, %v5841, %v5591
      %v5875 = vsel %vm5864, %v5842, %v5594
      %v5876 = vsel %vm5864, %v5843, %v5597
      %v5877 = vsel %vm5864, %v5844, %v5600
      %v5878 = vsel %vm5864, %v5845, %v5603
      %v5879 = vsel %vm5864, %v5846, %v5606
      %v5880 = vsel %vm5864, %v5847, %v5609
      %v5881 = vsel %vm5864, %v5848, %v5612
      %v5882 = vsel %vm5864, %v5849, %v5615
      %v5883 = vsel %vm5864, %v5850, %v5618
      %v5884 = vsel %vm5864, %v5851, %v5621
      %v5885 = vsel %vm5864, %v5852, %v5624
      %v5886 = vsel %vm5864, %v5853, %v5627
      %v5887 = vsel %vm5864, %v5854, %v5630
      %v5888 = vsel %vm5864, %v5855, %v5633
      %v5889 = vsel %vm5864, %v5856, %v5636
      %v5890 = vsel %vm5864, %v5857, %v5639
      %v5891 = vsel %vm5864, %v5858, %v5642
      %v5892 = vsel %vm5864, %v5859, %v5645
      %v5893 = vsel %vm5864, %v5860, %v5648
      %v5894 = vsel %vm5864, %v5861, %v5651
      %v5895 = vsel %vm5864, %v5862, %v5654
      %v5896 = vsel %vm5864, %v5863, %v5657
      %vm5897 = vcmask 23552
      %v5898 = vsel %vm5897, %v5865, %v5737
      %v5899 = vsel %vm5897, %v5866, %v5740
      %v5900 = vsel %vm5897, %v5867, %v5743
      %v5901 = vsel %vm5897, %v5868, %v5746
      %v5902 = vsel %vm5897, %v5869, %v5749
      %v5903 = vsel %vm5897, %v5870, %v5752
      %v5904 = vsel %vm5897, %v5871, %v5755
      %v5905 = vsel %vm5897, %v5872, %v5758
      %v5906 = vsel %vm5897, %v5873, %v5761
      %v5907 = vsel %vm5897, %v5874, %v5764
      %v5908 = vsel %vm5897, %v5875, %v5767
      %v5909 = vsel %vm5897, %v5876, %v5770
      %v5910 = vsel %vm5897, %v5877, %v5773
      %v5911 = vsel %vm5897, %v5878, %v5776
      %v5912 = vsel %vm5897, %v5879, %v5779
      %v5913 = vsel %vm5897, %v5880, %v5782
      %v5914 = vsel %vm5897, %v5881, %v5785
      %v5915 = vsel %vm5897, %v5882, %v5788
      %v5916 = vsel %vm5897, %v5883, %v5791
      %v5917 = vsel %vm5897, %v5884, %v5794
      %v5918 = vsel %vm5897, %v5885, %v5797
      %v5919 = vsel %vm5897, %v5886, %v5800
      %v5920 = vsel %vm5897, %v5887, %v5803
      %v5921 = vsel %vm5897, %v5888, %v5806
      %v5922 = vsel %vm5897, %v5889, %v5809
      %v5923 = vsel %vm5897, %v5890, %v5812
      %v5924 = vsel %vm5897, %v5891, %v5815
      %v5925 = vsel %vm5897, %v5892, %v5818
      %v5926 = vsel %vm5897, %v5893, %v5821
      %v5927 = vsel %vm5897, %v5894, %v5824
      %v5928 = vsel %vm5897, %v5895, %v5827
      %v5929 = vsel %vm5897, %v5896, %v5830
      %v5930 = vld [vmem:[%s7] sm:$0x1]
      %v5932 = vlaneseq
      %v5933 = vshrl.u32 %v5932, 7
      %v5934 = vsub.s32 0, %v5933
      %v5935 = vrot.slane %v5930, %v5934
      %v5937 = vadd.f32 %v5898, %v5935
      %v5938 = vadd.f32 %v5899, %v5935
      %v5939 = vadd.f32 %v5900, %v5935
      %v5940 = vadd.f32 %v5901, %v5935
      %v5941 = vadd.f32 %v5902, %v5935
      %v5942 = vadd.f32 %v5903, %v5935
      %v5943 = vadd.f32 %v5904, %v5935
      %v5944 = vadd.f32 %v5905, %v5935
      %v5945 = vadd.f32 %v5906, %v5935
      %v5946 = vadd.f32 %v5907, %v5935
      %v5947 = vadd.f32 %v5908, %v5935
      %v5948 = vadd.f32 %v5909, %v5935
      %v5949 = vadd.f32 %v5910, %v5935
      %v5950 = vadd.f32 %v5911, %v5935
      %v5951 = vadd.f32 %v5912, %v5935
      %v5952 = vadd.f32 %v5913, %v5935
      %v5953 = vadd.f32 %v5914, %v5935
      %v5954 = vadd.f32 %v5915, %v5935
      %v5955 = vadd.f32 %v5916, %v5935
      %v5956 = vadd.f32 %v5917, %v5935
      %v5957 = vadd.f32 %v5918, %v5935
      %v5958 = vadd.f32 %v5919, %v5935
      %v5959 = vadd.f32 %v5920, %v5935
      %v5960 = vadd.f32 %v5921, %v5935
      %v5961 = vadd.f32 %v5922, %v5935
      %v5962 = vadd.f32 %v5923, %v5935
      %v5963 = vadd.f32 %v5924, %v5935
      %v5964 = vadd.f32 %v5925, %v5935
      %v5965 = vadd.f32 %v5926, %v5935
      %v5966 = vadd.f32 %v5927, %v5935
      %v5967 = vadd.f32 %v5928, %v5935
      %v5968 = vadd.f32 %v5929, %v5935
      %vm5969 = vcmask 31744
      %5970 = vst.msk [vmem:[%s307] sm:$0xff] %vm5969, %v5937
      %5971 = vst.msk [vmem:[%s307 + $0x8] sm:$0xff] %vm5969, %v5938
      %5972 = vst.msk [vmem:[%s307 + $0x10] sm:$0xff] %vm5969, %v5939
      %5973 = vst.msk [vmem:[%s307 + $0x18] sm:$0xff] %vm5969, %v5940
      %5974 = vst.msk [vmem:[%s307 + $0x20] sm:$0xff] %vm5969, %v5941
      %5975 = vst.msk [vmem:[%s307 + $0x28] sm:$0xff] %vm5969, %v5942
      %5976 = vst.msk [vmem:[%s307 + $0x30] sm:$0xff] %vm5969, %v5943
      %5977 = vst.msk [vmem:[%s307 + $0x38] sm:$0xff] %vm5969, %v5944
      %5978 = vst.msk [vmem:[%s307 + $0x40] sm:$0xff] %vm5969, %v5945
      %5979 = vst.msk [vmem:[%s307 + $0x48] sm:$0xff] %vm5969, %v5946
      %5980 = vst.msk [vmem:[%s307 + $0x50] sm:$0xff] %vm5969, %v5947
      %5981 = vst.msk [vmem:[%s307 + $0x58] sm:$0xff] %vm5969, %v5948
      %5982 = vst.msk [vmem:[%s307 + $0x60] sm:$0xff] %vm5969, %v5949
      %5983 = vst.msk [vmem:[%s307 + $0x68] sm:$0xff] %vm5969, %v5950
      %5984 = vst.msk [vmem:[%s307 + $0x70] sm:$0xff] %vm5969, %v5951
      %5985 = vst.msk [vmem:[%s307 + $0x78] sm:$0xff] %vm5969, %v5952
      %5986 = vst.msk [vmem:[%s307 + $0x80] sm:$0xff] %vm5969, %v5953
      %5987 = vst.msk [vmem:[%s307 + $0x88] sm:$0xff] %vm5969, %v5954
      %5988 = vst.msk [vmem:[%s307 + $0x90] sm:$0xff] %vm5969, %v5955
      %5989 = vst.msk [vmem:[%s307 + $0x98] sm:$0xff] %vm5969, %v5956
      %5990 = vst.msk [vmem:[%s307 + $0xa0] sm:$0xff] %vm5969, %v5957
      %5991 = vst.msk [vmem:[%s307 + $0xa8] sm:$0xff] %vm5969, %v5958
      %5992 = vst.msk [vmem:[%s307 + $0xb0] sm:$0xff] %vm5969, %v5959
      %5993 = vst.msk [vmem:[%s307 + $0xb8] sm:$0xff] %vm5969, %v5960
      %5994 = vst.msk [vmem:[%s307 + $0xc0] sm:$0xff] %vm5969, %v5961
      %5995 = vst.msk [vmem:[%s307 + $0xc8] sm:$0xff] %vm5969, %v5962
      %5996 = vst.msk [vmem:[%s307 + $0xd0] sm:$0xff] %vm5969, %v5963
      %5997 = vst.msk [vmem:[%s307 + $0xd8] sm:$0xff] %vm5969, %v5964
      %5998 = vst.msk [vmem:[%s307 + $0xe0] sm:$0xff] %vm5969, %v5965
      %5999 = vst.msk [vmem:[%s307 + $0xe8] sm:$0xff] %vm5969, %v5966
      %6000 = vst.msk [vmem:[%s307 + $0xf0] sm:$0xff] %vm5969, %v5967
      %6001 = vst.msk [vmem:[%s307 + $0xf8] sm:$0xff] %vm5969, %v5968
      %v6002 = vld [vmem:[%s301 + $0x100] sm:$0xff]
      %v6003 = vld [vmem:[%s301 + $0x108] sm:$0xff]
      %v6004 = vld [vmem:[%s301 + $0x110] sm:$0xff]
      %v6005 = vld [vmem:[%s301 + $0x118] sm:$0xff]
      %v6006 = vld [vmem:[%s301 + $0x120] sm:$0xff]
      %v6007 = vld [vmem:[%s301 + $0x128] sm:$0xff]
      %v6008 = vld [vmem:[%s301 + $0x130] sm:$0xff]
      %v6009 = vld [vmem:[%s301 + $0x138] sm:$0xff]
      %v6010 = vld [vmem:[%s301 + $0x140] sm:$0xff]
      %v6011 = vld [vmem:[%s301 + $0x148] sm:$0xff]
      %v6012 = vld [vmem:[%s301 + $0x150] sm:$0xff]
      %v6013 = vld [vmem:[%s301 + $0x158] sm:$0xff]
      %v6014 = vld [vmem:[%s301 + $0x160] sm:$0xff]
      %v6015 = vld [vmem:[%s301 + $0x168] sm:$0xff]
      %v6016 = vld [vmem:[%s301 + $0x170] sm:$0xff]
      %v6017 = vld [vmem:[%s301 + $0x178] sm:$0xff]
      %v6018 = vld [vmem:[%s301 + $0x180] sm:$0xff]
      %v6019 = vld [vmem:[%s301 + $0x188] sm:$0xff]
      %v6020 = vld [vmem:[%s301 + $0x190] sm:$0xff]
      %v6021 = vld [vmem:[%s301 + $0x198] sm:$0xff]
      %v6022 = vld [vmem:[%s301 + $0x1a0] sm:$0xff]
      %v6023 = vld [vmem:[%s301 + $0x1a8] sm:$0xff]
      %v6024 = vld [vmem:[%s301 + $0x1b0] sm:$0xff]
      %v6025 = vld [vmem:[%s301 + $0x1b8] sm:$0xff]
      %v6026 = vld [vmem:[%s301 + $0x1c0] sm:$0xff]
      %v6027 = vld [vmem:[%s301 + $0x1c8] sm:$0xff]
      %v6028 = vld [vmem:[%s301 + $0x1d0] sm:$0xff]
      %v6029 = vld [vmem:[%s301 + $0x1d8] sm:$0xff]
      %v6030 = vld [vmem:[%s301 + $0x1e0] sm:$0xff]
      %v6031 = vld [vmem:[%s301 + $0x1e8] sm:$0xff]
      %v6032 = vld [vmem:[%s301 + $0x1f0] sm:$0xff]
      %v6033 = vld [vmem:[%s301 + $0x1f8] sm:$0xff]
      %v6034 = vld [vmem:[%s1] ss:$4 sm:$0x3]
      %6036 = vset.pattern.permute.xlu0 0
      %6037 = vperm.xlu0 %6036, %v6002
      %v6038 = vpop.permute.xlu0 %6037
      %6041 = vset.pattern.permute.xlu0 0
      %6042 = vperm.xlu0 %6041, %v6003
      %v6043 = vpop.permute.xlu0 %6042
      %6046 = vset.pattern.permute.xlu0 0
      %6047 = vperm.xlu0 %6046, %v6004
      %v6048 = vpop.permute.xlu0 %6047
      %6051 = vset.pattern.permute.xlu0 0
      %6052 = vperm.xlu0 %6051, %v6005
      %v6053 = vpop.permute.xlu0 %6052
      %6056 = vset.pattern.permute.xlu0 0
      %6057 = vperm.xlu0 %6056, %v6006
      %v6058 = vpop.permute.xlu0 %6057
      %6061 = vset.pattern.permute.xlu0 0
      %6062 = vperm.xlu0 %6061, %v6007
      %v6063 = vpop.permute.xlu0 %6062
      %6066 = vset.pattern.permute.xlu0 0
      %6067 = vperm.xlu0 %6066, %v6008
      %v6068 = vpop.permute.xlu0 %6067
      %6071 = vset.pattern.permute.xlu0 0
      %6072 = vperm.xlu0 %6071, %v6009
      %v6073 = vpop.permute.xlu0 %6072
      %6076 = vset.pattern.permute.xlu0 0
      %6077 = vperm.xlu0 %6076, %v6010
      %v6078 = vpop.permute.xlu0 %6077
      %6081 = vset.pattern.permute.xlu0 0
      %6082 = vperm.xlu0 %6081, %v6011
      %v6083 = vpop.permute.xlu0 %6082
      %6086 = vset.pattern.permute.xlu0 0
      %6087 = vperm.xlu0 %6086, %v6012
      %v6088 = vpop.permute.xlu0 %6087
      %6091 = vset.pattern.permute.xlu0 0
      %6092 = vperm.xlu0 %6091, %v6013
      %v6093 = vpop.permute.xlu0 %6092
      %6096 = vset.pattern.permute.xlu0 0
      %6097 = vperm.xlu0 %6096, %v6014
      %v6098 = vpop.permute.xlu0 %6097
      %6101 = vset.pattern.permute.xlu0 0
      %6102 = vperm.xlu0 %6101, %v6015
      %v6103 = vpop.permute.xlu0 %6102
      %6106 = vset.pattern.permute.xlu0 0
      %6107 = vperm.xlu0 %6106, %v6016
      %v6108 = vpop.permute.xlu0 %6107
      %6111 = vset.pattern.permute.xlu0 0
      %6112 = vperm.xlu0 %6111, %v6017
      %v6113 = vpop.permute.xlu0 %6112
      %6116 = vset.pattern.permute.xlu0 0
      %6117 = vperm.xlu0 %6116, %v6018
      %v6118 = vpop.permute.xlu0 %6117
      %6121 = vset.pattern.permute.xlu0 0
      %6122 = vperm.xlu0 %6121, %v6019
      %v6123 = vpop.permute.xlu0 %6122
      %6126 = vset.pattern.permute.xlu0 0
      %6127 = vperm.xlu0 %6126, %v6020
      %v6128 = vpop.permute.xlu0 %6127
      %6131 = vset.pattern.permute.xlu0 0
      %6132 = vperm.xlu0 %6131, %v6021
      %v6133 = vpop.permute.xlu0 %6132
      %6136 = vset.pattern.permute.xlu0 0
      %6137 = vperm.xlu0 %6136, %v6022
      %v6138 = vpop.permute.xlu0 %6137
      %6141 = vset.pattern.permute.xlu0 0
      %6142 = vperm.xlu0 %6141, %v6023
      %v6143 = vpop.permute.xlu0 %6142
      %6146 = vset.pattern.permute.xlu0 0
      %6147 = vperm.xlu0 %6146, %v6024
      %v6148 = vpop.permute.xlu0 %6147
      %6151 = vset.pattern.permute.xlu0 0
      %6152 = vperm.xlu0 %6151, %v6025
      %v6153 = vpop.permute.xlu0 %6152
      %6156 = vset.pattern.permute.xlu0 0
      %6157 = vperm.xlu0 %6156, %v6026
      %v6158 = vpop.permute.xlu0 %6157
      %6161 = vset.pattern.permute.xlu0 0
      %6162 = vperm.xlu0 %6161, %v6027
      %v6163 = vpop.permute.xlu0 %6162
      %6166 = vset.pattern.permute.xlu0 0
      %6167 = vperm.xlu0 %6166, %v6028
      %v6168 = vpop.permute.xlu0 %6167
      %6171 = vset.pattern.permute.xlu0 0
      %6172 = vperm.xlu0 %6171, %v6029
      %v6173 = vpop.permute.xlu0 %6172
      %6176 = vset.pattern.permute.xlu0 0
      %6177 = vperm.xlu0 %6176, %v6030
      %v6178 = vpop.permute.xlu0 %6177
      %6181 = vset.pattern.permute.xlu0 0
      %6182 = vperm.xlu0 %6181, %v6031
      %v6183 = vpop.permute.xlu0 %6182
      %6186 = vset.pattern.permute.xlu0 0
      %6187 = vperm.xlu0 %6186, %v6032
      %v6188 = vpop.permute.xlu0 %6187
      %6191 = vset.pattern.permute.xlu0 0
      %6192 = vperm.xlu0 %6191, %v6033
      %v6193 = vpop.permute.xlu0 %6192
      %v6196 = vlaneseq
      %v6197 = vshrl.u32 %v6196, 7
      %v6198 = vsub.s32 0, %v6197
      %v6199 = vrot.slane %v6034, %v6198
      %v6200 = vlaneseq
      %v6201 = vshrl.u32 %v6200, 7
      %v6202 = vsub.s32 1, %v6201
      %v6203 = vrot.slane %v6034, %v6202
      %v6206 = vmul.f32 %v6038, %v6199
      %v6207 = vmul.f32 %v6038, %v6203
      %v6208 = vmul.f32 %v6043, %v6199
      %v6209 = vmul.f32 %v6043, %v6203
      %v6210 = vmul.f32 %v6048, %v6199
      %v6211 = vmul.f32 %v6048, %v6203
      %v6212 = vmul.f32 %v6053, %v6199
      %v6213 = vmul.f32 %v6053, %v6203
      %v6214 = vmul.f32 %v6058, %v6199
      %v6215 = vmul.f32 %v6058, %v6203
      %v6216 = vmul.f32 %v6063, %v6199
      %v6217 = vmul.f32 %v6063, %v6203
      %v6218 = vmul.f32 %v6068, %v6199
      %v6219 = vmul.f32 %v6068, %v6203
      %v6220 = vmul.f32 %v6073, %v6199
      %v6221 = vmul.f32 %v6073, %v6203
      %v6222 = vmul.f32 %v6078, %v6199
      %v6223 = vmul.f32 %v6078, %v6203
      %v6224 = vmul.f32 %v6083, %v6199
      %v6225 = vmul.f32 %v6083, %v6203
      %v6226 = vmul.f32 %v6088, %v6199
      %v6227 = vmul.f32 %v6088, %v6203
      %v6228 = vmul.f32 %v6093, %v6199
      %v6229 = vmul.f32 %v6093, %v6203
      %v6230 = vmul.f32 %v6098, %v6199
      %v6231 = vmul.f32 %v6098, %v6203
      %v6232 = vmul.f32 %v6103, %v6199
      %v6233 = vmul.f32 %v6103, %v6203
      %v6234 = vmul.f32 %v6108, %v6199
      %v6235 = vmul.f32 %v6108, %v6203
      %v6236 = vmul.f32 %v6113, %v6199
      %v6237 = vmul.f32 %v6113, %v6203
      %v6238 = vmul.f32 %v6118, %v6199
      %v6239 = vmul.f32 %v6118, %v6203
      %v6240 = vmul.f32 %v6123, %v6199
      %v6241 = vmul.f32 %v6123, %v6203
      %v6242 = vmul.f32 %v6128, %v6199
      %v6243 = vmul.f32 %v6128, %v6203
      %v6244 = vmul.f32 %v6133, %v6199
      %v6245 = vmul.f32 %v6133, %v6203
      %v6246 = vmul.f32 %v6138, %v6199
      %v6247 = vmul.f32 %v6138, %v6203
      %v6248 = vmul.f32 %v6143, %v6199
      %v6249 = vmul.f32 %v6143, %v6203
      %v6250 = vmul.f32 %v6148, %v6199
      %v6251 = vmul.f32 %v6148, %v6203
      %v6252 = vmul.f32 %v6153, %v6199
      %v6253 = vmul.f32 %v6153, %v6203
      %v6254 = vmul.f32 %v6158, %v6199
      %v6255 = vmul.f32 %v6158, %v6203
      %v6256 = vmul.f32 %v6163, %v6199
      %v6257 = vmul.f32 %v6163, %v6203
      %v6258 = vmul.f32 %v6168, %v6199
      %v6259 = vmul.f32 %v6168, %v6203
      %v6260 = vmul.f32 %v6173, %v6199
      %v6261 = vmul.f32 %v6173, %v6203
      %v6262 = vmul.f32 %v6178, %v6199
      %v6263 = vmul.f32 %v6178, %v6203
      %v6264 = vmul.f32 %v6183, %v6199
      %v6265 = vmul.f32 %v6183, %v6203
      %v6266 = vmul.f32 %v6188, %v6199
      %v6267 = vmul.f32 %v6188, %v6203
      %v6268 = vmul.f32 %v6193, %v6199
      %v6269 = vmul.f32 %v6193, %v6203
      %v6270 = vld [vmem:[%s577] ss:$4 sm:$0x3]
      %6271 = vset.pattern.permute.xlu0 1
      %6272 = vperm.xlu0 %6271, %v6002
      %v6273 = vpop.permute.xlu0 %6272
      %6275 = vset.pattern.permute.xlu0 1
      %6276 = vperm.xlu0 %6275, %v6003
      %v6277 = vpop.permute.xlu0 %6276
      %6279 = vset.pattern.permute.xlu0 1
      %6280 = vperm.xlu0 %6279, %v6004
      %v6281 = vpop.permute.xlu0 %6280
      %6283 = vset.pattern.permute.xlu0 1
      %6284 = vperm.xlu0 %6283, %v6005
      %v6285 = vpop.permute.xlu0 %6284
      %6287 = vset.pattern.permute.xlu0 1
      %6288 = vperm.xlu0 %6287, %v6006
      %v6289 = vpop.permute.xlu0 %6288
      %6291 = vset.pattern.permute.xlu0 1
      %6292 = vperm.xlu0 %6291, %v6007
      %v6293 = vpop.permute.xlu0 %6292
      %6295 = vset.pattern.permute.xlu0 1
      %6296 = vperm.xlu0 %6295, %v6008
      %v6297 = vpop.permute.xlu0 %6296
      %6299 = vset.pattern.permute.xlu0 1
      %6300 = vperm.xlu0 %6299, %v6009
      %v6301 = vpop.permute.xlu0 %6300
      %6303 = vset.pattern.permute.xlu0 1
      %6304 = vperm.xlu0 %6303, %v6010
      %v6305 = vpop.permute.xlu0 %6304
      %6307 = vset.pattern.permute.xlu0 1
      %6308 = vperm.xlu0 %6307, %v6011
      %v6309 = vpop.permute.xlu0 %6308
      %6311 = vset.pattern.permute.xlu0 1
      %6312 = vperm.xlu0 %6311, %v6012
      %v6313 = vpop.permute.xlu0 %6312
      %6315 = vset.pattern.permute.xlu0 1
      %6316 = vperm.xlu0 %6315, %v6013
      %v6317 = vpop.permute.xlu0 %6316
      %6319 = vset.pattern.permute.xlu0 1
      %6320 = vperm.xlu0 %6319, %v6014
      %v6321 = vpop.permute.xlu0 %6320
      %6323 = vset.pattern.permute.xlu0 1
      %6324 = vperm.xlu0 %6323, %v6015
      %v6325 = vpop.permute.xlu0 %6324
      %6327 = vset.pattern.permute.xlu0 1
      %6328 = vperm.xlu0 %6327, %v6016
      %v6329 = vpop.permute.xlu0 %6328
      %6331 = vset.pattern.permute.xlu0 1
      %6332 = vperm.xlu0 %6331, %v6017
      %v6333 = vpop.permute.xlu0 %6332
      %6335 = vset.pattern.permute.xlu0 1
      %6336 = vperm.xlu0 %6335, %v6018
      %v6337 = vpop.permute.xlu0 %6336
      %6339 = vset.pattern.permute.xlu0 1
      %6340 = vperm.xlu0 %6339, %v6019
      %v6341 = vpop.permute.xlu0 %6340
      %6343 = vset.pattern.permute.xlu0 1
      %6344 = vperm.xlu0 %6343, %v6020
      %v6345 = vpop.permute.xlu0 %6344
      %6347 = vset.pattern.permute.xlu0 1
      %6348 = vperm.xlu0 %6347, %v6021
      %v6349 = vpop.permute.xlu0 %6348
      %6351 = vset.pattern.permute.xlu0 1
      %6352 = vperm.xlu0 %6351, %v6022
      %v6353 = vpop.permute.xlu0 %6352
      %6355 = vset.pattern.permute.xlu0 1
      %6356 = vperm.xlu0 %6355, %v6023
      %v6357 = vpop.permute.xlu0 %6356
      %6359 = vset.pattern.permute.xlu0 1
      %6360 = vperm.xlu0 %6359, %v6024
      %v6361 = vpop.permute.xlu0 %6360
      %6363 = vset.pattern.permute.xlu0 1
      %6364 = vperm.xlu0 %6363, %v6025
      %v6365 = vpop.permute.xlu0 %6364
      %6367 = vset.pattern.permute.xlu0 1
      %6368 = vperm.xlu0 %6367, %v6026
      %v6369 = vpop.permute.xlu0 %6368
      %6371 = vset.pattern.permute.xlu0 1
      %6372 = vperm.xlu0 %6371, %v6027
      %v6373 = vpop.permute.xlu0 %6372
      %6375 = vset.pattern.permute.xlu0 1
      %6376 = vperm.xlu0 %6375, %v6028
      %v6377 = vpop.permute.xlu0 %6376
      %6379 = vset.pattern.permute.xlu0 1
      %6380 = vperm.xlu0 %6379, %v6029
      %v6381 = vpop.permute.xlu0 %6380
      %6383 = vset.pattern.permute.xlu0 1
      %6384 = vperm.xlu0 %6383, %v6030
      %v6385 = vpop.permute.xlu0 %6384
      %6387 = vset.pattern.permute.xlu0 1
      %6388 = vperm.xlu0 %6387, %v6031
      %v6389 = vpop.permute.xlu0 %6388
      %6391 = vset.pattern.permute.xlu0 1
      %6392 = vperm.xlu0 %6391, %v6032
      %v6393 = vpop.permute.xlu0 %6392
      %6395 = vset.pattern.permute.xlu0 1
      %6396 = vperm.xlu0 %6395, %v6033
      %v6397 = vpop.permute.xlu0 %6396
      %v6400 = vlaneseq
      %v6401 = vshrl.u32 %v6400, 7
      %v6402 = vsub.s32 0, %v6401
      %v6403 = vrot.slane %v6270, %v6402
      %v6404 = vlaneseq
      %v6405 = vshrl.u32 %v6404, 7
      %v6406 = vsub.s32 1, %v6405
      %v6407 = vrot.slane %v6270, %v6406
      %v6410 = vmul.f32 %v6273, %v6403
      %v6411 = vmul.f32 %v6273, %v6407
      %v6412 = vmul.f32 %v6277, %v6403
      %v6413 = vmul.f32 %v6277, %v6407
      %v6414 = vmul.f32 %v6281, %v6403
      %v6415 = vmul.f32 %v6281, %v6407
      %v6416 = vmul.f32 %v6285, %v6403
      %v6417 = vmul.f32 %v6285, %v6407
      %v6418 = vmul.f32 %v6289, %v6403
      %v6419 = vmul.f32 %v6289, %v6407
      %v6420 = vmul.f32 %v6293, %v6403
      %v6421 = vmul.f32 %v6293, %v6407
      %v6422 = vmul.f32 %v6297, %v6403
      %v6423 = vmul.f32 %v6297, %v6407
      %v6424 = vmul.f32 %v6301, %v6403
      %v6425 = vmul.f32 %v6301, %v6407
      %v6426 = vmul.f32 %v6305, %v6403
      %v6427 = vmul.f32 %v6305, %v6407
      %v6428 = vmul.f32 %v6309, %v6403
      %v6429 = vmul.f32 %v6309, %v6407
      %v6430 = vmul.f32 %v6313, %v6403
      %v6431 = vmul.f32 %v6313, %v6407
      %v6432 = vmul.f32 %v6317, %v6403
      %v6433 = vmul.f32 %v6317, %v6407
      %v6434 = vmul.f32 %v6321, %v6403
      %v6435 = vmul.f32 %v6321, %v6407
      %v6436 = vmul.f32 %v6325, %v6403
      %v6437 = vmul.f32 %v6325, %v6407
      %v6438 = vmul.f32 %v6329, %v6403
      %v6439 = vmul.f32 %v6329, %v6407
      %v6440 = vmul.f32 %v6333, %v6403
      %v6441 = vmul.f32 %v6333, %v6407
      %v6442 = vmul.f32 %v6337, %v6403
      %v6443 = vmul.f32 %v6337, %v6407
      %v6444 = vmul.f32 %v6341, %v6403
      %v6445 = vmul.f32 %v6341, %v6407
      %v6446 = vmul.f32 %v6345, %v6403
      %v6447 = vmul.f32 %v6345, %v6407
      %v6448 = vmul.f32 %v6349, %v6403
      %v6449 = vmul.f32 %v6349, %v6407
      %v6450 = vmul.f32 %v6353, %v6403
      %v6451 = vmul.f32 %v6353, %v6407
      %v6452 = vmul.f32 %v6357, %v6403
      %v6453 = vmul.f32 %v6357, %v6407
      %v6454 = vmul.f32 %v6361, %v6403
      %v6455 = vmul.f32 %v6361, %v6407
      %v6456 = vmul.f32 %v6365, %v6403
      %v6457 = vmul.f32 %v6365, %v6407
      %v6458 = vmul.f32 %v6369, %v6403
      %v6459 = vmul.f32 %v6369, %v6407
      %v6460 = vmul.f32 %v6373, %v6403
      %v6461 = vmul.f32 %v6373, %v6407
      %v6462 = vmul.f32 %v6377, %v6403
      %v6463 = vmul.f32 %v6377, %v6407
      %v6464 = vmul.f32 %v6381, %v6403
      %v6465 = vmul.f32 %v6381, %v6407
      %v6466 = vmul.f32 %v6385, %v6403
      %v6467 = vmul.f32 %v6385, %v6407
      %v6468 = vmul.f32 %v6389, %v6403
      %v6469 = vmul.f32 %v6389, %v6407
      %v6470 = vmul.f32 %v6393, %v6403
      %v6471 = vmul.f32 %v6393, %v6407
      %v6472 = vmul.f32 %v6397, %v6403
      %v6473 = vmul.f32 %v6397, %v6407
      %v6474 = vadd.f32 %v6206, %v6410
      %v6475 = vadd.f32 %v6207, %v6411
      %v6476 = vadd.f32 %v6208, %v6412
      %v6477 = vadd.f32 %v6209, %v6413
      %v6478 = vadd.f32 %v6210, %v6414
      %v6479 = vadd.f32 %v6211, %v6415
      %v6480 = vadd.f32 %v6212, %v6416
      %v6481 = vadd.f32 %v6213, %v6417
      %v6482 = vadd.f32 %v6214, %v6418
      %v6483 = vadd.f32 %v6215, %v6419
      %v6484 = vadd.f32 %v6216, %v6420
      %v6485 = vadd.f32 %v6217, %v6421
      %v6486 = vadd.f32 %v6218, %v6422
      %v6487 = vadd.f32 %v6219, %v6423
      %v6488 = vadd.f32 %v6220, %v6424
      %v6489 = vadd.f32 %v6221, %v6425
      %v6490 = vadd.f32 %v6222, %v6426
      %v6491 = vadd.f32 %v6223, %v6427
      %v6492 = vadd.f32 %v6224, %v6428
      %v6493 = vadd.f32 %v6225, %v6429
      %v6494 = vadd.f32 %v6226, %v6430
      %v6495 = vadd.f32 %v6227, %v6431
      %v6496 = vadd.f32 %v6228, %v6432
      %v6497 = vadd.f32 %v6229, %v6433
      %v6498 = vadd.f32 %v6230, %v6434
      %v6499 = vadd.f32 %v6231, %v6435
      %v6500 = vadd.f32 %v6232, %v6436
      %v6501 = vadd.f32 %v6233, %v6437
      %v6502 = vadd.f32 %v6234, %v6438
      %v6503 = vadd.f32 %v6235, %v6439
      %v6504 = vadd.f32 %v6236, %v6440
      %v6505 = vadd.f32 %v6237, %v6441
      %v6506 = vadd.f32 %v6238, %v6442
      %v6507 = vadd.f32 %v6239, %v6443
      %v6508 = vadd.f32 %v6240, %v6444
      %v6509 = vadd.f32 %v6241, %v6445
      %v6510 = vadd.f32 %v6242, %v6446
      %v6511 = vadd.f32 %v6243, %v6447
      %v6512 = vadd.f32 %v6244, %v6448
      %v6513 = vadd.f32 %v6245, %v6449
      %v6514 = vadd.f32 %v6246, %v6450
      %v6515 = vadd.f32 %v6247, %v6451
      %v6516 = vadd.f32 %v6248, %v6452
      %v6517 = vadd.f32 %v6249, %v6453
      %v6518 = vadd.f32 %v6250, %v6454
      %v6519 = vadd.f32 %v6251, %v6455
      %v6520 = vadd.f32 %v6252, %v6456
      %v6521 = vadd.f32 %v6253, %v6457
      %v6522 = vadd.f32 %v6254, %v6458
      %v6523 = vadd.f32 %v6255, %v6459
      %v6524 = vadd.f32 %v6256, %v6460
      %v6525 = vadd.f32 %v6257, %v6461
      %v6526 = vadd.f32 %v6258, %v6462
      %v6527 = vadd.f32 %v6259, %v6463
      %v6528 = vadd.f32 %v6260, %v6464
      %v6529 = vadd.f32 %v6261, %v6465
      %v6530 = vadd.f32 %v6262, %v6466
      %v6531 = vadd.f32 %v6263, %v6467
      %v6532 = vadd.f32 %v6264, %v6468
      %v6533 = vadd.f32 %v6265, %v6469
      %v6534 = vadd.f32 %v6266, %v6470
      %v6535 = vadd.f32 %v6267, %v6471
      %v6536 = vadd.f32 %v6268, %v6472
      %v6537 = vadd.f32 %v6269, %v6473
      %v6538 = vld [vmem:[%s846] ss:$4 sm:$0x3]
      %6539 = vset.pattern.permute.xlu0 2
      %6540 = vperm.xlu0 %6539, %v6002
      %v6541 = vpop.permute.xlu0 %6540
      %6543 = vset.pattern.permute.xlu0 2
      %6544 = vperm.xlu0 %6543, %v6003
      %v6545 = vpop.permute.xlu0 %6544
      %6547 = vset.pattern.permute.xlu0 2
      %6548 = vperm.xlu0 %6547, %v6004
      %v6549 = vpop.permute.xlu0 %6548
      %6551 = vset.pattern.permute.xlu0 2
      %6552 = vperm.xlu0 %6551, %v6005
      %v6553 = vpop.permute.xlu0 %6552
      %6555 = vset.pattern.permute.xlu0 2
      %6556 = vperm.xlu0 %6555, %v6006
      %v6557 = vpop.permute.xlu0 %6556
      %6559 = vset.pattern.permute.xlu0 2
      %6560 = vperm.xlu0 %6559, %v6007
      %v6561 = vpop.permute.xlu0 %6560
      %6563 = vset.pattern.permute.xlu0 2
      %6564 = vperm.xlu0 %6563, %v6008
      %v6565 = vpop.permute.xlu0 %6564
      %6567 = vset.pattern.permute.xlu0 2
      %6568 = vperm.xlu0 %6567, %v6009
      %v6569 = vpop.permute.xlu0 %6568
      %6571 = vset.pattern.permute.xlu0 2
      %6572 = vperm.xlu0 %6571, %v6010
      %v6573 = vpop.permute.xlu0 %6572
      %6575 = vset.pattern.permute.xlu0 2
      %6576 = vperm.xlu0 %6575, %v6011
      %v6577 = vpop.permute.xlu0 %6576
      %6579 = vset.pattern.permute.xlu0 2
      %6580 = vperm.xlu0 %6579, %v6012
      %v6581 = vpop.permute.xlu0 %6580
      %6583 = vset.pattern.permute.xlu0 2
      %6584 = vperm.xlu0 %6583, %v6013
      %v6585 = vpop.permute.xlu0 %6584
      %6587 = vset.pattern.permute.xlu0 2
      %6588 = vperm.xlu0 %6587, %v6014
      %v6589 = vpop.permute.xlu0 %6588
      %6591 = vset.pattern.permute.xlu0 2
      %6592 = vperm.xlu0 %6591, %v6015
      %v6593 = vpop.permute.xlu0 %6592
      %6595 = vset.pattern.permute.xlu0 2
      %6596 = vperm.xlu0 %6595, %v6016
      %v6597 = vpop.permute.xlu0 %6596
      %6599 = vset.pattern.permute.xlu0 2
      %6600 = vperm.xlu0 %6599, %v6017
      %v6601 = vpop.permute.xlu0 %6600
      %6603 = vset.pattern.permute.xlu0 2
      %6604 = vperm.xlu0 %6603, %v6018
      %v6605 = vpop.permute.xlu0 %6604
      %6607 = vset.pattern.permute.xlu0 2
      %6608 = vperm.xlu0 %6607, %v6019
      %v6609 = vpop.permute.xlu0 %6608
      %6611 = vset.pattern.permute.xlu0 2
      %6612 = vperm.xlu0 %6611, %v6020
      %v6613 = vpop.permute.xlu0 %6612
      %6615 = vset.pattern.permute.xlu0 2
      %6616 = vperm.xlu0 %6615, %v6021
      %v6617 = vpop.permute.xlu0 %6616
      %6619 = vset.pattern.permute.xlu0 2
      %6620 = vperm.xlu0 %6619, %v6022
      %v6621 = vpop.permute.xlu0 %6620
      %6623 = vset.pattern.permute.xlu0 2
      %6624 = vperm.xlu0 %6623, %v6023
      %v6625 = vpop.permute.xlu0 %6624
      %6627 = vset.pattern.permute.xlu0 2
      %6628 = vperm.xlu0 %6627, %v6024
      %v6629 = vpop.permute.xlu0 %6628
      %6631 = vset.pattern.permute.xlu0 2
      %6632 = vperm.xlu0 %6631, %v6025
      %v6633 = vpop.permute.xlu0 %6632
      %6635 = vset.pattern.permute.xlu0 2
      %6636 = vperm.xlu0 %6635, %v6026
      %v6637 = vpop.permute.xlu0 %6636
      %6639 = vset.pattern.permute.xlu0 2
      %6640 = vperm.xlu0 %6639, %v6027
      %v6641 = vpop.permute.xlu0 %6640
      %6643 = vset.pattern.permute.xlu0 2
      %6644 = vperm.xlu0 %6643, %v6028
      %v6645 = vpop.permute.xlu0 %6644
      %6647 = vset.pattern.permute.xlu0 2
      %6648 = vperm.xlu0 %6647, %v6029
      %v6649 = vpop.permute.xlu0 %6648
      %6651 = vset.pattern.permute.xlu0 2
      %6652 = vperm.xlu0 %6651, %v6030
      %v6653 = vpop.permute.xlu0 %6652
      %6655 = vset.pattern.permute.xlu0 2
      %6656 = vperm.xlu0 %6655, %v6031
      %v6657 = vpop.permute.xlu0 %6656
      %6659 = vset.pattern.permute.xlu0 2
      %6660 = vperm.xlu0 %6659, %v6032
      %v6661 = vpop.permute.xlu0 %6660
      %6663 = vset.pattern.permute.xlu0 2
      %6664 = vperm.xlu0 %6663, %v6033
      %v6665 = vpop.permute.xlu0 %6664
      %v6668 = vlaneseq
      %v6669 = vshrl.u32 %v6668, 7
      %v6670 = vsub.s32 0, %v6669
      %v6671 = vrot.slane %v6538, %v6670
      %v6672 = vlaneseq
      %v6673 = vshrl.u32 %v6672, 7
      %v6674 = vsub.s32 1, %v6673
      %v6675 = vrot.slane %v6538, %v6674
      %v6678 = vmul.f32 %v6541, %v6671
      %v6679 = vmul.f32 %v6541, %v6675
      %v6680 = vmul.f32 %v6545, %v6671
      %v6681 = vmul.f32 %v6545, %v6675
      %v6682 = vmul.f32 %v6549, %v6671
      %v6683 = vmul.f32 %v6549, %v6675
      %v6684 = vmul.f32 %v6553, %v6671
      %v6685 = vmul.f32 %v6553, %v6675
      %v6686 = vmul.f32 %v6557, %v6671
      %v6687 = vmul.f32 %v6557, %v6675
      %v6688 = vmul.f32 %v6561, %v6671
      %v6689 = vmul.f32 %v6561, %v6675
      %v6690 = vmul.f32 %v6565, %v6671
      %v6691 = vmul.f32 %v6565, %v6675
      %v6692 = vmul.f32 %v6569, %v6671
      %v6693 = vmul.f32 %v6569, %v6675
      %v6694 = vmul.f32 %v6573, %v6671
      %v6695 = vmul.f32 %v6573, %v6675
      %v6696 = vmul.f32 %v6577, %v6671
      %v6697 = vmul.f32 %v6577, %v6675
      %v6698 = vmul.f32 %v6581, %v6671
      %v6699 = vmul.f32 %v6581, %v6675
      %v6700 = vmul.f32 %v6585, %v6671
      %v6701 = vmul.f32 %v6585, %v6675
      %v6702 = vmul.f32 %v6589, %v6671
      %v6703 = vmul.f32 %v6589, %v6675
      %v6704 = vmul.f32 %v6593, %v6671
      %v6705 = vmul.f32 %v6593, %v6675
      %v6706 = vmul.f32 %v6597, %v6671
      %v6707 = vmul.f32 %v6597, %v6675
      %v6708 = vmul.f32 %v6601, %v6671
      %v6709 = vmul.f32 %v6601, %v6675
      %v6710 = vmul.f32 %v6605, %v6671
      %v6711 = vmul.f32 %v6605, %v6675
      %v6712 = vmul.f32 %v6609, %v6671
      %v6713 = vmul.f32 %v6609, %v6675
      %v6714 = vmul.f32 %v6613, %v6671
      %v6715 = vmul.f32 %v6613, %v6675
      %v6716 = vmul.f32 %v6617, %v6671
      %v6717 = vmul.f32 %v6617, %v6675
      %v6718 = vmul.f32 %v6621, %v6671
      %v6719 = vmul.f32 %v6621, %v6675
      %v6720 = vmul.f32 %v6625, %v6671
      %v6721 = vmul.f32 %v6625, %v6675
      %v6722 = vmul.f32 %v6629, %v6671
      %v6723 = vmul.f32 %v6629, %v6675
      %v6724 = vmul.f32 %v6633, %v6671
      %v6725 = vmul.f32 %v6633, %v6675
      %v6726 = vmul.f32 %v6637, %v6671
      %v6727 = vmul.f32 %v6637, %v6675
      %v6728 = vmul.f32 %v6641, %v6671
      %v6729 = vmul.f32 %v6641, %v6675
      %v6730 = vmul.f32 %v6645, %v6671
      %v6731 = vmul.f32 %v6645, %v6675
      %v6732 = vmul.f32 %v6649, %v6671
      %v6733 = vmul.f32 %v6649, %v6675
      %v6734 = vmul.f32 %v6653, %v6671
      %v6735 = vmul.f32 %v6653, %v6675
      %v6736 = vmul.f32 %v6657, %v6671
      %v6737 = vmul.f32 %v6657, %v6675
      %v6738 = vmul.f32 %v6661, %v6671
      %v6739 = vmul.f32 %v6661, %v6675
      %v6740 = vmul.f32 %v6665, %v6671
      %v6741 = vmul.f32 %v6665, %v6675
      %v6742 = vadd.f32 %v6474, %v6678
      %v6743 = vadd.f32 %v6475, %v6679
      %v6744 = vadd.f32 %v6476, %v6680
      %v6745 = vadd.f32 %v6477, %v6681
      %v6746 = vadd.f32 %v6478, %v6682
      %v6747 = vadd.f32 %v6479, %v6683
      %v6748 = vadd.f32 %v6480, %v6684
      %v6749 = vadd.f32 %v6481, %v6685
      %v6750 = vadd.f32 %v6482, %v6686
      %v6751 = vadd.f32 %v6483, %v6687
      %v6752 = vadd.f32 %v6484, %v6688
      %v6753 = vadd.f32 %v6485, %v6689
      %v6754 = vadd.f32 %v6486, %v6690
      %v6755 = vadd.f32 %v6487, %v6691
      %v6756 = vadd.f32 %v6488, %v6692
      %v6757 = vadd.f32 %v6489, %v6693
      %v6758 = vadd.f32 %v6490, %v6694
      %v6759 = vadd.f32 %v6491, %v6695
      %v6760 = vadd.f32 %v6492, %v6696
      %v6761 = vadd.f32 %v6493, %v6697
      %v6762 = vadd.f32 %v6494, %v6698
      %v6763 = vadd.f32 %v6495, %v6699
      %v6764 = vadd.f32 %v6496, %v6700
      %v6765 = vadd.f32 %v6497, %v6701
      %v6766 = vadd.f32 %v6498, %v6702
      %v6767 = vadd.f32 %v6499, %v6703
      %v6768 = vadd.f32 %v6500, %v6704
      %v6769 = vadd.f32 %v6501, %v6705
      %v6770 = vadd.f32 %v6502, %v6706
      %v6771 = vadd.f32 %v6503, %v6707
      %v6772 = vadd.f32 %v6504, %v6708
      %v6773 = vadd.f32 %v6505, %v6709
      %v6774 = vadd.f32 %v6506, %v6710
      %v6775 = vadd.f32 %v6507, %v6711
      %v6776 = vadd.f32 %v6508, %v6712
      %v6777 = vadd.f32 %v6509, %v6713
      %v6778 = vadd.f32 %v6510, %v6714
      %v6779 = vadd.f32 %v6511, %v6715
      %v6780 = vadd.f32 %v6512, %v6716
      %v6781 = vadd.f32 %v6513, %v6717
      %v6782 = vadd.f32 %v6514, %v6718
      %v6783 = vadd.f32 %v6515, %v6719
      %v6784 = vadd.f32 %v6516, %v6720
      %v6785 = vadd.f32 %v6517, %v6721
      %v6786 = vadd.f32 %v6518, %v6722
      %v6787 = vadd.f32 %v6519, %v6723
      %v6788 = vadd.f32 %v6520, %v6724
      %v6789 = vadd.f32 %v6521, %v6725
      %v6790 = vadd.f32 %v6522, %v6726
      %v6791 = vadd.f32 %v6523, %v6727
      %v6792 = vadd.f32 %v6524, %v6728
      %v6793 = vadd.f32 %v6525, %v6729
      %v6794 = vadd.f32 %v6526, %v6730
      %v6795 = vadd.f32 %v6527, %v6731
      %v6796 = vadd.f32 %v6528, %v6732
      %v6797 = vadd.f32 %v6529, %v6733
      %v6798 = vadd.f32 %v6530, %v6734
      %v6799 = vadd.f32 %v6531, %v6735
      %v6800 = vadd.f32 %v6532, %v6736
      %v6801 = vadd.f32 %v6533, %v6737
      %v6802 = vadd.f32 %v6534, %v6738
      %v6803 = vadd.f32 %v6535, %v6739
      %v6804 = vadd.f32 %v6536, %v6740
      %v6805 = vadd.f32 %v6537, %v6741
      %v6806 = vld [vmem:[%s2] sm:$0x3]
      %v6808 = vlaneseq
      %v6809 = vshrl.u32 %v6808, 7
      %v6810 = vsub.s32 0, %v6809
      %v6811 = vrot.slane %v6806, %v6810
      %v6812 = vlaneseq
      %v6813 = vshrl.u32 %v6812, 7
      %v6814 = vsub.s32 1, %v6813
      %v6815 = vrot.slane %v6806, %v6814
      %v6818 = vadd.f32 %v6742, %v6811
      %v6819 = vadd.f32 %v6743, %v6815
      %v6820 = vadd.f32 %v6744, %v6811
      %v6821 = vadd.f32 %v6745, %v6815
      %v6822 = vadd.f32 %v6746, %v6811
      %v6823 = vadd.f32 %v6747, %v6815
      %v6824 = vadd.f32 %v6748, %v6811
      %v6825 = vadd.f32 %v6749, %v6815
      %v6826 = vadd.f32 %v6750, %v6811
      %v6827 = vadd.f32 %v6751, %v6815
      %v6828 = vadd.f32 %v6752, %v6811
      %v6829 = vadd.f32 %v6753, %v6815
      %v6830 = vadd.f32 %v6754, %v6811
      %v6831 = vadd.f32 %v6755, %v6815
      %v6832 = vadd.f32 %v6756, %v6811
      %v6833 = vadd.f32 %v6757, %v6815
      %v6834 = vadd.f32 %v6758, %v6811
      %v6835 = vadd.f32 %v6759, %v6815
      %v6836 = vadd.f32 %v6760, %v6811
      %v6837 = vadd.f32 %v6761, %v6815
      %v6838 = vadd.f32 %v6762, %v6811
      %v6839 = vadd.f32 %v6763, %v6815
      %v6840 = vadd.f32 %v6764, %v6811
      %v6841 = vadd.f32 %v6765, %v6815
      %v6842 = vadd.f32 %v6766, %v6811
      %v6843 = vadd.f32 %v6767, %v6815
      %v6844 = vadd.f32 %v6768, %v6811
      %v6845 = vadd.f32 %v6769, %v6815
      %v6846 = vadd.f32 %v6770, %v6811
      %v6847 = vadd.f32 %v6771, %v6815
      %v6848 = vadd.f32 %v6772, %v6811
      %v6849 = vadd.f32 %v6773, %v6815
      %v6850 = vadd.f32 %v6774, %v6811
      %v6851 = vadd.f32 %v6775, %v6815
      %v6852 = vadd.f32 %v6776, %v6811
      %v6853 = vadd.f32 %v6777, %v6815
      %v6854 = vadd.f32 %v6778, %v6811
      %v6855 = vadd.f32 %v6779, %v6815
      %v6856 = vadd.f32 %v6780, %v6811
      %v6857 = vadd.f32 %v6781, %v6815
      %v6858 = vadd.f32 %v6782, %v6811
      %v6859 = vadd.f32 %v6783, %v6815
      %v6860 = vadd.f32 %v6784, %v6811
      %v6861 = vadd.f32 %v6785, %v6815
      %v6862 = vadd.f32 %v6786, %v6811
      %v6863 = vadd.f32 %v6787, %v6815
      %v6864 = vadd.f32 %v6788, %v6811
      %v6865 = vadd.f32 %v6789, %v6815
      %v6866 = vadd.f32 %v6790, %v6811
      %v6867 = vadd.f32 %v6791, %v6815
      %v6868 = vadd.f32 %v6792, %v6811
      %v6869 = vadd.f32 %v6793, %v6815
      %v6870 = vadd.f32 %v6794, %v6811
      %v6871 = vadd.f32 %v6795, %v6815
      %v6872 = vadd.f32 %v6796, %v6811
      %v6873 = vadd.f32 %v6797, %v6815
      %v6874 = vadd.f32 %v6798, %v6811
      %v6875 = vadd.f32 %v6799, %v6815
      %v6876 = vadd.f32 %v6800, %v6811
      %v6877 = vadd.f32 %v6801, %v6815
      %v6878 = vadd.f32 %v6802, %v6811
      %v6879 = vadd.f32 %v6803, %v6815
      %v6880 = vadd.f32 %v6804, %v6811
      %v6881 = vadd.f32 %v6805, %v6815
      %v6882 = vmax.f32 %v6818, 0.0
      %v6883 = vmax.f32 %v6819, 0.0
      %v6884 = vmax.f32 %v6820, 0.0
      %v6885 = vmax.f32 %v6821, 0.0
      %v6886 = vmax.f32 %v6822, 0.0
      %v6887 = vmax.f32 %v6823, 0.0
      %v6888 = vmax.f32 %v6824, 0.0
      %v6889 = vmax.f32 %v6825, 0.0
      %v6890 = vmax.f32 %v6826, 0.0
      %v6891 = vmax.f32 %v6827, 0.0
      %v6892 = vmax.f32 %v6828, 0.0
      %v6893 = vmax.f32 %v6829, 0.0
      %v6894 = vmax.f32 %v6830, 0.0
      %v6895 = vmax.f32 %v6831, 0.0
      %v6896 = vmax.f32 %v6832, 0.0
      %v6897 = vmax.f32 %v6833, 0.0
      %v6898 = vmax.f32 %v6834, 0.0
      %v6899 = vmax.f32 %v6835, 0.0
      %v6900 = vmax.f32 %v6836, 0.0
      %v6901 = vmax.f32 %v6837, 0.0
      %v6902 = vmax.f32 %v6838, 0.0
      %v6903 = vmax.f32 %v6839, 0.0
      %v6904 = vmax.f32 %v6840, 0.0
      %v6905 = vmax.f32 %v6841, 0.0
      %v6906 = vmax.f32 %v6842, 0.0
      %v6907 = vmax.f32 %v6843, 0.0
      %v6908 = vmax.f32 %v6844, 0.0
      %v6909 = vmax.f32 %v6845, 0.0
      %v6910 = vmax.f32 %v6846, 0.0
      %v6911 = vmax.f32 %v6847, 0.0
      %v6912 = vmax.f32 %v6848, 0.0
      %v6913 = vmax.f32 %v6849, 0.0
      %v6914 = vmax.f32 %v6850, 0.0
      %v6915 = vmax.f32 %v6851, 0.0
      %v6916 = vmax.f32 %v6852, 0.0
      %v6917 = vmax.f32 %v6853, 0.0
      %v6918 = vmax.f32 %v6854, 0.0
      %v6919 = vmax.f32 %v6855, 0.0
      %v6920 = vmax.f32 %v6856, 0.0
      %v6921 = vmax.f32 %v6857, 0.0
      %v6922 = vmax.f32 %v6858, 0.0
      %v6923 = vmax.f32 %v6859, 0.0
      %v6924 = vmax.f32 %v6860, 0.0
      %v6925 = vmax.f32 %v6861, 0.0
      %v6926 = vmax.f32 %v6862, 0.0
      %v6927 = vmax.f32 %v6863, 0.0
      %v6928 = vmax.f32 %v6864, 0.0
      %v6929 = vmax.f32 %v6865, 0.0
      %v6930 = vmax.f32 %v6866, 0.0
      %v6931 = vmax.f32 %v6867, 0.0
      %v6932 = vmax.f32 %v6868, 0.0
      %v6933 = vmax.f32 %v6869, 0.0
      %v6934 = vmax.f32 %v6870, 0.0
      %v6935 = vmax.f32 %v6871, 0.0
      %v6936 = vmax.f32 %v6872, 0.0
      %v6937 = vmax.f32 %v6873, 0.0
      %v6938 = vmax.f32 %v6874, 0.0
      %v6939 = vmax.f32 %v6875, 0.0
      %v6940 = vmax.f32 %v6876, 0.0
      %v6941 = vmax.f32 %v6877, 0.0
      %v6942 = vmax.f32 %v6878, 0.0
      %v6943 = vmax.f32 %v6879, 0.0
      %v6944 = vmax.f32 %v6880, 0.0
      %v6945 = vmax.f32 %v6881, 0.0
      %v6946 = vld [vmem:[%s3] sm:$0xff]
      %v6947 = vld [vmem:[%s3 + $0x8] sm:$0xff]
      %v6948 = vld [vmem:[%s3 + $0x10] sm:$0xff]
      %v6949 = vld [vmem:[%s3 + $0x18] sm:$0xff]
      %v6950 = vld [vmem:[%s3 + $0x20] sm:$0xff]
      %v6951 = vld [vmem:[%s3 + $0x28] sm:$0xff]
      %v6952 = vld [vmem:[%s3 + $0x30] sm:$0xff]
      %v6953 = vld [vmem:[%s3 + $0x38] sm:$0xff]
      %v6954 = vld [vmem:[%s3 + $0x40] sm:$0xff]
      %v6955 = vld [vmem:[%s3 + $0x48] sm:$0xff]
      %v6956 = vld [vmem:[%s3 + $0x50] sm:$0xff]
      %v6957 = vld [vmem:[%s3 + $0x58] sm:$0xff]
      %v6958 = vld [vmem:[%s3 + $0x60] sm:$0xff]
      %v6959 = vld [vmem:[%s3 + $0x68] sm:$0xff]
      %v6960 = vld [vmem:[%s3 + $0x70] sm:$0xff]
      %v6961 = vld [vmem:[%s3 + $0x78] sm:$0xff]
      %v6962 = vld [vmem:[%s3 + $0x80] sm:$0xff]
      %v6963 = vld [vmem:[%s3 + $0x88] sm:$0xff]
      %v6964 = vld [vmem:[%s3 + $0x90] sm:$0xff]
      %v6965 = vld [vmem:[%s3 + $0x98] sm:$0xff]
      %v6966 = vld [vmem:[%s3 + $0xa0] sm:$0xff]
      %v6967 = vld [vmem:[%s3 + $0xa8] sm:$0xff]
      %v6968 = vld [vmem:[%s3 + $0xb0] sm:$0xff]
      %v6969 = vld [vmem:[%s3 + $0xb8] sm:$0xff]
      %v6970 = vld [vmem:[%s3 + $0xc0] sm:$0xff]
      %v6971 = vld [vmem:[%s3 + $0xc8] sm:$0xff]
      %v6972 = vld [vmem:[%s3 + $0xd0] sm:$0xff]
      %v6973 = vld [vmem:[%s3 + $0xd8] sm:$0xff]
      %v6974 = vld [vmem:[%s3 + $0xe0] sm:$0xff]
      %v6975 = vld [vmem:[%s3 + $0xe8] sm:$0xff]
      %v6976 = vld [vmem:[%s3 + $0xf0] sm:$0xff]
      %v6977 = vld [vmem:[%s3 + $0xf8] sm:$0xff]
      %v6978 = vpack.c.bf16 %v6884, %v6882
      %v6979 = vpack.c.bf16 %v6885, %v6883
      %v6980 = vpack.c.bf16 %v6888, %v6886
      %v6981 = vpack.c.bf16 %v6889, %v6887
      %v6982 = vpack.c.bf16 %v6892, %v6890
      %v6983 = vpack.c.bf16 %v6893, %v6891
      %v6984 = vpack.c.bf16 %v6896, %v6894
      %v6985 = vpack.c.bf16 %v6897, %v6895
      %v6986 = vpack.c.bf16 %v6900, %v6898
      %v6987 = vpack.c.bf16 %v6901, %v6899
      %v6988 = vpack.c.bf16 %v6904, %v6902
      %v6989 = vpack.c.bf16 %v6905, %v6903
      %v6990 = vpack.c.bf16 %v6908, %v6906
      %v6991 = vpack.c.bf16 %v6909, %v6907
      %v6992 = vpack.c.bf16 %v6912, %v6910
      %v6993 = vpack.c.bf16 %v6913, %v6911
      %v6994 = vpack.c.bf16 %v6916, %v6914
      %v6995 = vpack.c.bf16 %v6917, %v6915
      %v6996 = vpack.c.bf16 %v6920, %v6918
      %v6997 = vpack.c.bf16 %v6921, %v6919
      %v6998 = vpack.c.bf16 %v6924, %v6922
      %v6999 = vpack.c.bf16 %v6925, %v6923
      %v7000 = vpack.c.bf16 %v6928, %v6926
      %v7001 = vpack.c.bf16 %v6929, %v6927
      %v7002 = vpack.c.bf16 %v6932, %v6930
      %v7003 = vpack.c.bf16 %v6933, %v6931
      %v7004 = vpack.c.bf16 %v6936, %v6934
      %v7005 = vpack.c.bf16 %v6937, %v6935
      %v7006 = vpack.c.bf16 %v6940, %v6938
      %v7007 = vpack.c.bf16 %v6941, %v6939
      %v7008 = vpack.c.bf16 %v6944, %v6942
      %v7009 = vpack.c.bf16 %v6945, %v6943
      %v7010 = vld [vmem:[%s4] ss:$8 sm:$0x3]
      %v7012 = vlaneseq
      %v7013 = vshrl.u32 %v7012, 7
      %v7014 = vsub.s32 0, %v7013
      %v7015 = vrot.slane %v7010, %v7014
      %v7016 = vlaneseq
      %v7017 = vshrl.u32 %v7016, 7
      %v7018 = vsub.s32 1, %v7017
      %v7019 = vrot.slane %v7010, %v7018
      %v7054 = vunpack.c.l.b16 %v6946
      %v7055 = vunpack.c.h.b16 %v6946
      %v7056 = vunpack.c.l.b16 %v6947
      %v7057 = vunpack.c.h.b16 %v6947
      %v7058 = vunpack.c.l.b16 %v6948
      %v7059 = vunpack.c.h.b16 %v6948
      %v7060 = vunpack.c.l.b16 %v6949
      %v7061 = vunpack.c.h.b16 %v6949
      %v7062 = vunpack.c.l.b16 %v6950
      %v7063 = vunpack.c.h.b16 %v6950
      %v7064 = vunpack.c.l.b16 %v6951
      %v7065 = vunpack.c.h.b16 %v6951
      %v7066 = vunpack.c.l.b16 %v6952
      %v7067 = vunpack.c.h.b16 %v6952
      %v7068 = vunpack.c.l.b16 %v6953
      %v7069 = vunpack.c.h.b16 %v6953
      %v7070 = vunpack.c.l.b16 %v6954
      %v7071 = vunpack.c.h.b16 %v6954
      %v7072 = vunpack.c.l.b16 %v6955
      %v7073 = vunpack.c.h.b16 %v6955
      %v7074 = vunpack.c.l.b16 %v6956
      %v7075 = vunpack.c.h.b16 %v6956
      %v7076 = vunpack.c.l.b16 %v6957
      %v7077 = vunpack.c.h.b16 %v6957
      %v7078 = vunpack.c.l.b16 %v6958
      %v7079 = vunpack.c.h.b16 %v6958
      %v7080 = vunpack.c.l.b16 %v6959
      %v7081 = vunpack.c.h.b16 %v6959
      %v7082 = vunpack.c.l.b16 %v6960
      %v7083 = vunpack.c.h.b16 %v6960
      %v7084 = vunpack.c.l.b16 %v6961
      %v7085 = vunpack.c.h.b16 %v6961
      %v7086 = vunpack.c.l.b16 %v6962
      %v7087 = vunpack.c.h.b16 %v6962
      %v7088 = vunpack.c.l.b16 %v6963
      %v7089 = vunpack.c.h.b16 %v6963
      %v7090 = vunpack.c.l.b16 %v6964
      %v7091 = vunpack.c.h.b16 %v6964
      %v7092 = vunpack.c.l.b16 %v6965
      %v7093 = vunpack.c.h.b16 %v6965
      %v7094 = vunpack.c.l.b16 %v6966
      %v7095 = vunpack.c.h.b16 %v6966
      %v7096 = vunpack.c.l.b16 %v6967
      %v7097 = vunpack.c.h.b16 %v6967
      %v7098 = vunpack.c.l.b16 %v6968
      %v7099 = vunpack.c.h.b16 %v6968
      %v7100 = vunpack.c.l.b16 %v6969
      %v7101 = vunpack.c.h.b16 %v6969
      %v7102 = vunpack.c.l.b16 %v6970
      %v7103 = vunpack.c.h.b16 %v6970
      %v7104 = vunpack.c.l.b16 %v6971
      %v7105 = vunpack.c.h.b16 %v6971
      %v7106 = vunpack.c.l.b16 %v6972
      %v7107 = vunpack.c.h.b16 %v6972
      %v7108 = vunpack.c.l.b16 %v6973
      %v7109 = vunpack.c.h.b16 %v6973
      %v7110 = vunpack.c.l.b16 %v6974
      %v7111 = vunpack.c.h.b16 %v6974
      %v7112 = vunpack.c.l.b16 %v6975
      %v7113 = vunpack.c.h.b16 %v6975
      %v7114 = vunpack.c.l.b16 %v6976
      %v7115 = vunpack.c.h.b16 %v6976
      %v7116 = vunpack.c.l.b16 %v6977
      %v7117 = vunpack.c.h.b16 %v6977
      %v7118 = vpack.c.b16 %v7056, %v7054
      %v7119 = vpack.c.b16 %v7057, %v7055
      %v7120 = vpack.c.b16 %v7060, %v7058
      %v7121 = vpack.c.b16 %v7061, %v7059
      %v7122 = vpack.c.b16 %v7064, %v7062
      %v7123 = vpack.c.b16 %v7065, %v7063
      %v7124 = vpack.c.b16 %v7068, %v7066
      %v7125 = vpack.c.b16 %v7069, %v7067
      %v7126 = vpack.c.b16 %v7072, %v7070
      %v7127 = vpack.c.b16 %v7073, %v7071
      %v7128 = vpack.c.b16 %v7076, %v7074
      %v7129 = vpack.c.b16 %v7077, %v7075
      %v7130 = vpack.c.b16 %v7080, %v7078
      %v7131 = vpack.c.b16 %v7081, %v7079
      %v7132 = vpack.c.b16 %v7084, %v7082
      %v7133 = vpack.c.b16 %v7085, %v7083
      %v7134 = vpack.c.b16 %v7088, %v7086
      %v7135 = vpack.c.b16 %v7089, %v7087
      %v7136 = vpack.c.b16 %v7092, %v7090
      %v7137 = vpack.c.b16 %v7093, %v7091
      %v7138 = vpack.c.b16 %v7096, %v7094
      %v7139 = vpack.c.b16 %v7097, %v7095
      %v7140 = vpack.c.b16 %v7100, %v7098
      %v7141 = vpack.c.b16 %v7101, %v7099
      %v7142 = vpack.c.b16 %v7104, %v7102
      %v7143 = vpack.c.b16 %v7105, %v7103
      %v7144 = vpack.c.b16 %v7108, %v7106
      %v7145 = vpack.c.b16 %v7109, %v7107
      %v7146 = vpack.c.b16 %v7112, %v7110
      %v7147 = vpack.c.b16 %v7113, %v7111
      %v7148 = vpack.c.b16 %v7116, %v7114
      %v7149 = vpack.c.b16 %v7117, %v7115
      %7182 = vmatprep.subr.bf16.mxu0 %v7133
      %7183 = vmatpush1.bf16.msra.mxu0 %v7132
      %7184 = vmatprep.subr.bf16.mxu0 %v7131
      %7185 = vmatpush1.bf16.msra.mxu0 %v7130
      %7186 = vmatprep.subr.bf16.mxu0 %v7129
      %7187 = vmatpush1.bf16.msra.mxu0 %v7128
      %7188 = vmatprep.subr.bf16.mxu0 %v7127
      %7189 = vmatpush1.bf16.msra.mxu0 %v7126
      %7190 = vmatprep.subr.bf16.mxu0 %v7125
      %7191 = vmatpush1.bf16.msra.mxu0 %v7124
      %7192 = vmatprep.subr.bf16.mxu0 %v7123
      %7193 = vmatpush1.bf16.msra.mxu0 %v7122
      %7194 = vmatprep.subr.bf16.mxu0 %v7121
      %7195 = vmatpush1.bf16.msra.mxu0 %v7120
      %7196 = vmatprep.subr.bf16.mxu0 %v7119
      %7197 = vmatpush1.bf16.msra.mxu0 %v7118
      %7198 = vmatprep.subr.bf16.mxu0 %v7149
      %7199 = vmatpush2.bf16.msra.mxu0 %v7148
      %7200 = vmatprep.subr.bf16.mxu0 %v7147
      %7201 = vmatpush2.bf16.msra.mxu0 %v7146
      %7202 = vmatprep.subr.bf16.mxu0 %v7145
      %7203 = vmatpush2.bf16.msra.mxu0 %v7144
      %7204 = vmatprep.subr.bf16.mxu0 %v7143
      %7205 = vmatpush2.bf16.msra.mxu0 %v7142
      %7206 = vmatprep.subr.bf16.mxu0 %v7141
      %7207 = vmatpush2.bf16.msra.mxu0 %v7140
      %7208 = vmatprep.subr.bf16.mxu0 %v7139
      %7209 = vmatpush2.bf16.msra.mxu0 %v7138
      %7210 = vmatprep.subr.bf16.mxu0 %v7137
      %7211 = vmatpush2.bf16.msra.mxu0 %v7136
      %7212 = vmatprep.subr.bf16.mxu0 %v7135
      %7213 = vmatpush2.bf16.msra.mxu0 %v7134
      %7214 = vmatprep.mubr.bf16.mxu0 %v6979
      %7215 = vmatmul.mubr.bf16.gmra.mxu0 %v6978
      %v7216 = vpop.f32.mrf.mxu0
      %v7217 = vadd.f32 %v7015, %v7216
      %v7218 = vpop.f32.mrf.mxu0
      %v7219 = vadd.f32 %v7019, %v7218
      %v7220 = vpop.f32.mrf.mxu0
      %v7221 = vadd.f32 %v7015, %v7220
      %v7222 = vpop.f32.mrf.mxu0
      %v7223 = vadd.f32 %v7019, %v7222
      %7224 = vmatprep.mubr.bf16.mxu0 %v6981
      %7225 = vmatmul.mubr.bf16.gmra.mxu0 %v6980
      %v7226 = vpop.f32.mrf.mxu0
      %v7227 = vadd.f32 %v7015, %v7226
      %v7228 = vpop.f32.mrf.mxu0
      %v7229 = vadd.f32 %v7019, %v7228
      %v7230 = vpop.f32.mrf.mxu0
      %v7231 = vadd.f32 %v7015, %v7230
      %v7232 = vpop.f32.mrf.mxu0
      %v7233 = vadd.f32 %v7019, %v7232
      %7234 = vmatprep.mubr.bf16.mxu0 %v6983
      %7235 = vmatmul.mubr.bf16.gmra.mxu0 %v6982
      %v7236 = vpop.f32.mrf.mxu0
      %v7237 = vadd.f32 %v7015, %v7236
      %v7238 = vpop.f32.mrf.mxu0
      %v7239 = vadd.f32 %v7019, %v7238
      %v7240 = vpop.f32.mrf.mxu0
      %v7241 = vadd.f32 %v7015, %v7240
      %v7242 = vpop.f32.mrf.mxu0
      %v7243 = vadd.f32 %v7019, %v7242
      %7244 = vmatprep.mubr.bf16.mxu0 %v6985
      %7245 = vmatmul.mubr.bf16.gmra.mxu0 %v6984
      %v7246 = vpop.f32.mrf.mxu0
      %v7247 = vadd.f32 %v7015, %v7246
      %v7248 = vpop.f32.mrf.mxu0
      %v7249 = vadd.f32 %v7019, %v7248
      %v7250 = vpop.f32.mrf.mxu0
      %v7251 = vadd.f32 %v7015, %v7250
      %v7252 = vpop.f32.mrf.mxu0
      %v7253 = vadd.f32 %v7019, %v7252
      %7254 = vmatprep.mubr.bf16.mxu0 %v6987
      %7255 = vmatmul.mubr.bf16.gmra.mxu0 %v6986
      %v7256 = vpop.f32.mrf.mxu0
      %v7257 = vadd.f32 %v7015, %v7256
      %v7258 = vpop.f32.mrf.mxu0
      %v7259 = vadd.f32 %v7019, %v7258
      %v7260 = vpop.f32.mrf.mxu0
      %v7261 = vadd.f32 %v7015, %v7260
      %v7262 = vpop.f32.mrf.mxu0
      %v7263 = vadd.f32 %v7019, %v7262
      %7264 = vmatprep.mubr.bf16.mxu0 %v6989
      %7265 = vmatmul.mubr.bf16.gmra.mxu0 %v6988
      %v7266 = vpop.f32.mrf.mxu0
      %v7267 = vadd.f32 %v7015, %v7266
      %v7268 = vpop.f32.mrf.mxu0
      %v7269 = vadd.f32 %v7019, %v7268
      %v7270 = vpop.f32.mrf.mxu0
      %v7271 = vadd.f32 %v7015, %v7270
      %v7272 = vpop.f32.mrf.mxu0
      %v7273 = vadd.f32 %v7019, %v7272
      %7274 = vmatprep.mubr.bf16.mxu0 %v6991
      %7275 = vmatmul.mubr.bf16.gmra.mxu0 %v6990
      %v7276 = vpop.f32.mrf.mxu0
      %v7277 = vadd.f32 %v7015, %v7276
      %v7278 = vpop.f32.mrf.mxu0
      %v7279 = vadd.f32 %v7019, %v7278
      %v7280 = vpop.f32.mrf.mxu0
      %v7281 = vadd.f32 %v7015, %v7280
      %v7282 = vpop.f32.mrf.mxu0
      %v7283 = vadd.f32 %v7019, %v7282
      %7284 = vmatprep.mubr.bf16.mxu0 %v6993
      %7285 = vmatmul.mubr.bf16.gmra.mxu0 %v6992
      %v7286 = vpop.f32.mrf.mxu0
      %v7287 = vadd.f32 %v7015, %v7286
      %v7288 = vpop.f32.mrf.mxu0
      %v7289 = vadd.f32 %v7019, %v7288
      %v7290 = vpop.f32.mrf.mxu0
      %v7291 = vadd.f32 %v7015, %v7290
      %v7292 = vpop.f32.mrf.mxu0
      %v7293 = vadd.f32 %v7019, %v7292
      %7294 = vmatprep.mubr.bf16.mxu0 %v6995
      %7295 = vmatmul.mubr.bf16.gmra.mxu0 %v6994
      %v7296 = vpop.f32.mrf.mxu0
      %v7297 = vadd.f32 %v7015, %v7296
      %v7298 = vpop.f32.mrf.mxu0
      %v7299 = vadd.f32 %v7019, %v7298
      %v7300 = vpop.f32.mrf.mxu0
      %v7301 = vadd.f32 %v7015, %v7300
      %v7302 = vpop.f32.mrf.mxu0
      %v7303 = vadd.f32 %v7019, %v7302
      %7304 = vmatprep.mubr.bf16.mxu0 %v6997
      %7305 = vmatmul.mubr.bf16.gmra.mxu0 %v6996
      %v7306 = vpop.f32.mrf.mxu0
      %v7307 = vadd.f32 %v7015, %v7306
      %v7308 = vpop.f32.mrf.mxu0
      %v7309 = vadd.f32 %v7019, %v7308
      %v7310 = vpop.f32.mrf.mxu0
      %v7311 = vadd.f32 %v7015, %v7310
      %v7312 = vpop.f32.mrf.mxu0
      %v7313 = vadd.f32 %v7019, %v7312
      %7314 = vmatprep.mubr.bf16.mxu0 %v6999
      %7315 = vmatmul.mubr.bf16.gmra.mxu0 %v6998
      %v7316 = vpop.f32.mrf.mxu0
      %v7317 = vadd.f32 %v7015, %v7316
      %v7318 = vpop.f32.mrf.mxu0
      %v7319 = vadd.f32 %v7019, %v7318
      %v7320 = vpop.f32.mrf.mxu0
      %v7321 = vadd.f32 %v7015, %v7320
      %v7322 = vpop.f32.mrf.mxu0
      %v7323 = vadd.f32 %v7019, %v7322
      %7324 = vmatprep.mubr.bf16.mxu0 %v7001
      %7325 = vmatmul.mubr.bf16.gmra.mxu0 %v7000
      %v7326 = vpop.f32.mrf.mxu0
      %v7327 = vadd.f32 %v7015, %v7326
      %v7328 = vpop.f32.mrf.mxu0
      %v7329 = vadd.f32 %v7019, %v7328
      %v7330 = vpop.f32.mrf.mxu0
      %v7331 = vadd.f32 %v7015, %v7330
      %v7332 = vpop.f32.mrf.mxu0
      %v7333 = vadd.f32 %v7019, %v7332
      %7334 = vmatprep.mubr.bf16.mxu0 %v7003
      %7335 = vmatmul.mubr.bf16.gmra.mxu0 %v7002
      %v7336 = vpop.f32.mrf.mxu0
      %v7337 = vadd.f32 %v7015, %v7336
      %v7338 = vpop.f32.mrf.mxu0
      %v7339 = vadd.f32 %v7019, %v7338
      %v7340 = vpop.f32.mrf.mxu0
      %v7341 = vadd.f32 %v7015, %v7340
      %v7342 = vpop.f32.mrf.mxu0
      %v7343 = vadd.f32 %v7019, %v7342
      %7344 = vmatprep.mubr.bf16.mxu0 %v7005
      %7345 = vmatmul.mubr.bf16.gmra.mxu0 %v7004
      %v7346 = vpop.f32.mrf.mxu0
      %v7347 = vadd.f32 %v7015, %v7346
      %v7348 = vpop.f32.mrf.mxu0
      %v7349 = vadd.f32 %v7019, %v7348
      %v7350 = vpop.f32.mrf.mxu0
      %v7351 = vadd.f32 %v7015, %v7350
      %v7352 = vpop.f32.mrf.mxu0
      %v7353 = vadd.f32 %v7019, %v7352
      %7354 = vmatprep.mubr.bf16.mxu0 %v7007
      %7355 = vmatmul.mubr.bf16.gmra.mxu0 %v7006
      %v7356 = vpop.f32.mrf.mxu0
      %v7357 = vadd.f32 %v7015, %v7356
      %v7358 = vpop.f32.mrf.mxu0
      %v7359 = vadd.f32 %v7019, %v7358
      %v7360 = vpop.f32.mrf.mxu0
      %v7361 = vadd.f32 %v7015, %v7360
      %v7362 = vpop.f32.mrf.mxu0
      %v7363 = vadd.f32 %v7019, %v7362
      %7364 = vmatprep.mubr.bf16.mxu0 %v7009
      %7365 = vmatmul.mubr.bf16.gmra.mxu0 %v7008
      %v7366 = vpop.f32.mrf.mxu0
      %v7367 = vadd.f32 %v7015, %v7366
      %v7368 = vpop.f32.mrf.mxu0
      %v7369 = vadd.f32 %v7019, %v7368
      %v7370 = vpop.f32.mrf.mxu0
      %v7371 = vadd.f32 %v7015, %v7370
      %v7372 = vpop.f32.mrf.mxu0
      %v7373 = vadd.f32 %v7019, %v7372
      %7374 = vdwg.mxu0
      %v7375 = vmax.f32 %v7217, 0.0
      %v7376 = vmax.f32 %v7219, 0.0
      %v7377 = vmax.f32 %v7221, 0.0
      %v7378 = vmax.f32 %v7223, 0.0
      %v7379 = vmax.f32 %v7227, 0.0
      %v7380 = vmax.f32 %v7229, 0.0
      %v7381 = vmax.f32 %v7231, 0.0
      %v7382 = vmax.f32 %v7233, 0.0
      %v7383 = vmax.f32 %v7237, 0.0
      %v7384 = vmax.f32 %v7239, 0.0
      %v7385 = vmax.f32 %v7241, 0.0
      %v7386 = vmax.f32 %v7243, 0.0
      %v7387 = vmax.f32 %v7247, 0.0
      %v7388 = vmax.f32 %v7249, 0.0
      %v7389 = vmax.f32 %v7251, 0.0
      %v7390 = vmax.f32 %v7253, 0.0
      %v7391 = vmax.f32 %v7257, 0.0
      %v7392 = vmax.f32 %v7259, 0.0
      %v7393 = vmax.f32 %v7261, 0.0
      %v7394 = vmax.f32 %v7263, 0.0
      %v7395 = vmax.f32 %v7267, 0.0
      %v7396 = vmax.f32 %v7269, 0.0
      %v7397 = vmax.f32 %v7271, 0.0
      %v7398 = vmax.f32 %v7273, 0.0
      %v7399 = vmax.f32 %v7277, 0.0
      %v7400 = vmax.f32 %v7279, 0.0
      %v7401 = vmax.f32 %v7281, 0.0
      %v7402 = vmax.f32 %v7283, 0.0
      %v7403 = vmax.f32 %v7287, 0.0
      %v7404 = vmax.f32 %v7289, 0.0
      %v7405 = vmax.f32 %v7291, 0.0
      %v7406 = vmax.f32 %v7293, 0.0
      %v7407 = vmax.f32 %v7297, 0.0
      %v7408 = vmax.f32 %v7299, 0.0
      %v7409 = vmax.f32 %v7301, 0.0
      %v7410 = vmax.f32 %v7303, 0.0
      %v7411 = vmax.f32 %v7307, 0.0
      %v7412 = vmax.f32 %v7309, 0.0
      %v7413 = vmax.f32 %v7311, 0.0
      %v7414 = vmax.f32 %v7313, 0.0
      %v7415 = vmax.f32 %v7317, 0.0
      %v7416 = vmax.f32 %v7319, 0.0
      %v7417 = vmax.f32 %v7321, 0.0
      %v7418 = vmax.f32 %v7323, 0.0
      %v7419 = vmax.f32 %v7327, 0.0
      %v7420 = vmax.f32 %v7329, 0.0
      %v7421 = vmax.f32 %v7331, 0.0
      %v7422 = vmax.f32 %v7333, 0.0
      %v7423 = vmax.f32 %v7337, 0.0
      %v7424 = vmax.f32 %v7339, 0.0
      %v7425 = vmax.f32 %v7341, 0.0
      %v7426 = vmax.f32 %v7343, 0.0
      %v7427 = vmax.f32 %v7347, 0.0
      %v7428 = vmax.f32 %v7349, 0.0
      %v7429 = vmax.f32 %v7351, 0.0
      %v7430 = vmax.f32 %v7353, 0.0
      %v7431 = vmax.f32 %v7357, 0.0
      %v7432 = vmax.f32 %v7359, 0.0
      %v7433 = vmax.f32 %v7361, 0.0
      %v7434 = vmax.f32 %v7363, 0.0
      %v7435 = vmax.f32 %v7367, 0.0
      %v7436 = vmax.f32 %v7369, 0.0
      %v7437 = vmax.f32 %v7371, 0.0
      %v7438 = vmax.f32 %v7373, 0.0
      %v7439 = vld [vmem:[%s1748] sm:$0xff]
      %v7440 = vld [vmem:[%s1748 + $0x8] sm:$0xff]
      %v7441 = vld [vmem:[%s1748 + $0x10] sm:$0xff]
      %v7442 = vld [vmem:[%s1748 + $0x18] sm:$0xff]
      %v7443 = vld [vmem:[%s1748 + $0x20] sm:$0xff]
      %v7444 = vld [vmem:[%s1748 + $0x28] sm:$0xff]
      %v7445 = vld [vmem:[%s1748 + $0x30] sm:$0xff]
      %v7446 = vld [vmem:[%s1748 + $0x38] sm:$0xff]
      %v7447 = vld [vmem:[%s1748 + $0x40] sm:$0xff]
      %v7448 = vld [vmem:[%s1748 + $0x48] sm:$0xff]
      %v7449 = vld [vmem:[%s1748 + $0x50] sm:$0xff]
      %v7450 = vld [vmem:[%s1748 + $0x58] sm:$0xff]
      %v7451 = vld [vmem:[%s1748 + $0x60] sm:$0xff]
      %v7452 = vld [vmem:[%s1748 + $0x68] sm:$0xff]
      %v7453 = vld [vmem:[%s1748 + $0x70] sm:$0xff]
      %v7454 = vld [vmem:[%s1748 + $0x78] sm:$0xff]
      %v7455 = vld [vmem:[%s1748 + $0x80] sm:$0xff]
      %v7456 = vld [vmem:[%s1748 + $0x88] sm:$0xff]
      %v7457 = vld [vmem:[%s1748 + $0x90] sm:$0xff]
      %v7458 = vld [vmem:[%s1748 + $0x98] sm:$0xff]
      %v7459 = vld [vmem:[%s1748 + $0xa0] sm:$0xff]
      %v7460 = vld [vmem:[%s1748 + $0xa8] sm:$0xff]
      %v7461 = vld [vmem:[%s1748 + $0xb0] sm:$0xff]
      %v7462 = vld [vmem:[%s1748 + $0xb8] sm:$0xff]
      %v7463 = vld [vmem:[%s1748 + $0xc0] sm:$0xff]
      %v7464 = vld [vmem:[%s1748 + $0xc8] sm:$0xff]
      %v7465 = vld [vmem:[%s1748 + $0xd0] sm:$0xff]
      %v7466 = vld [vmem:[%s1748 + $0xd8] sm:$0xff]
      %v7467 = vld [vmem:[%s1748 + $0xe0] sm:$0xff]
      %v7468 = vld [vmem:[%s1748 + $0xe8] sm:$0xff]
      %v7469 = vld [vmem:[%s1748 + $0xf0] sm:$0xff]
      %v7470 = vld [vmem:[%s1748 + $0xf8] sm:$0xff]
      %v7471 = vpack.c.bf16 %v7377, %v7375
      %v7472 = vpack.c.bf16 %v7378, %v7376
      %v7473 = vpack.c.bf16 %v7381, %v7379
      %v7474 = vpack.c.bf16 %v7382, %v7380
      %v7475 = vpack.c.bf16 %v7385, %v7383
      %v7476 = vpack.c.bf16 %v7386, %v7384
      %v7477 = vpack.c.bf16 %v7389, %v7387
      %v7478 = vpack.c.bf16 %v7390, %v7388
      %v7479 = vpack.c.bf16 %v7393, %v7391
      %v7480 = vpack.c.bf16 %v7394, %v7392
      %v7481 = vpack.c.bf16 %v7397, %v7395
      %v7482 = vpack.c.bf16 %v7398, %v7396
      %v7483 = vpack.c.bf16 %v7401, %v7399
      %v7484 = vpack.c.bf16 %v7402, %v7400
      %v7485 = vpack.c.bf16 %v7405, %v7403
      %v7486 = vpack.c.bf16 %v7406, %v7404
      %v7487 = vpack.c.bf16 %v7409, %v7407
      %v7488 = vpack.c.bf16 %v7410, %v7408
      %v7489 = vpack.c.bf16 %v7413, %v7411
      %v7490 = vpack.c.bf16 %v7414, %v7412
      %v7491 = vpack.c.bf16 %v7417, %v7415
      %v7492 = vpack.c.bf16 %v7418, %v7416
      %v7493 = vpack.c.bf16 %v7421, %v7419
      %v7494 = vpack.c.bf16 %v7422, %v7420
      %v7495 = vpack.c.bf16 %v7425, %v7423
      %v7496 = vpack.c.bf16 %v7426, %v7424
      %v7497 = vpack.c.bf16 %v7429, %v7427
      %v7498 = vpack.c.bf16 %v7430, %v7428
      %v7499 = vpack.c.bf16 %v7433, %v7431
      %v7500 = vpack.c.bf16 %v7434, %v7432
      %v7501 = vpack.c.bf16 %v7437, %v7435
      %v7502 = vpack.c.bf16 %v7438, %v7436
      %v7503 = vld [vmem:[%s1813] ss:$8 sm:$0x3]
      %v7505 = vlaneseq
      %v7506 = vshrl.u32 %v7505, 7
      %v7507 = vsub.s32 0, %v7506
      %v7508 = vrot.slane %v7503, %v7507
      %v7509 = vlaneseq
      %v7510 = vshrl.u32 %v7509, 7
      %v7511 = vsub.s32 1, %v7510
      %v7512 = vrot.slane %v7503, %v7511
      %v7547 = vunpack.c.l.b16 %v7439
      %v7548 = vunpack.c.h.b16 %v7439
      %v7549 = vunpack.c.l.b16 %v7440
      %v7550 = vunpack.c.h.b16 %v7440
      %v7551 = vunpack.c.l.b16 %v7441
      %v7552 = vunpack.c.h.b16 %v7441
      %v7553 = vunpack.c.l.b16 %v7442
      %v7554 = vunpack.c.h.b16 %v7442
      %v7555 = vunpack.c.l.b16 %v7443
      %v7556 = vunpack.c.h.b16 %v7443
      %v7557 = vunpack.c.l.b16 %v7444
      %v7558 = vunpack.c.h.b16 %v7444
      %v7559 = vunpack.c.l.b16 %v7445
      %v7560 = vunpack.c.h.b16 %v7445
      %v7561 = vunpack.c.l.b16 %v7446
      %v7562 = vunpack.c.h.b16 %v7446
      %v7563 = vunpack.c.l.b16 %v7447
      %v7564 = vunpack.c.h.b16 %v7447
      %v7565 = vunpack.c.l.b16 %v7448
      %v7566 = vunpack.c.h.b16 %v7448
      %v7567 = vunpack.c.l.b16 %v7449
      %v7568 = vunpack.c.h.b16 %v7449
      %v7569 = vunpack.c.l.b16 %v7450
      %v7570 = vunpack.c.h.b16 %v7450
      %v7571 = vunpack.c.l.b16 %v7451
      %v7572 = vunpack.c.h.b16 %v7451
      %v7573 = vunpack.c.l.b16 %v7452
      %v7574 = vunpack.c.h.b16 %v7452
      %v7575 = vunpack.c.l.b16 %v7453
      %v7576 = vunpack.c.h.b16 %v7453
      %v7577 = vunpack.c.l.b16 %v7454
      %v7578 = vunpack.c.h.b16 %v7454
      %v7579 = vunpack.c.l.b16 %v7455
      %v7580 = vunpack.c.h.b16 %v7455
      %v7581 = vunpack.c.l.b16 %v7456
      %v7582 = vunpack.c.h.b16 %v7456
      %v7583 = vunpack.c.l.b16 %v7457
      %v7584 = vunpack.c.h.b16 %v7457
      %v7585 = vunpack.c.l.b16 %v7458
      %v7586 = vunpack.c.h.b16 %v7458
      %v7587 = vunpack.c.l.b16 %v7459
      %v7588 = vunpack.c.h.b16 %v7459
      %v7589 = vunpack.c.l.b16 %v7460
      %v7590 = vunpack.c.h.b16 %v7460
      %v7591 = vunpack.c.l.b16 %v7461
      %v7592 = vunpack.c.h.b16 %v7461
      %v7593 = vunpack.c.l.b16 %v7462
      %v7594 = vunpack.c.h.b16 %v7462
      %v7595 = vunpack.c.l.b16 %v7463
      %v7596 = vunpack.c.h.b16 %v7463
      %v7597 = vunpack.c.l.b16 %v7464
      %v7598 = vunpack.c.h.b16 %v7464
      %v7599 = vunpack.c.l.b16 %v7465
      %v7600 = vunpack.c.h.b16 %v7465
      %v7601 = vunpack.c.l.b16 %v7466
      %v7602 = vunpack.c.h.b16 %v7466
      %v7603 = vunpack.c.l.b16 %v7467
      %v7604 = vunpack.c.h.b16 %v7467
      %v7605 = vunpack.c.l.b16 %v7468
      %v7606 = vunpack.c.h.b16 %v7468
      %v7607 = vunpack.c.l.b16 %v7469
      %v7608 = vunpack.c.h.b16 %v7469
      %v7609 = vunpack.c.l.b16 %v7470
      %v7610 = vunpack.c.h.b16 %v7470
      %v7611 = vpack.c.b16 %v7549, %v7547
      %v7612 = vpack.c.b16 %v7550, %v7548
      %v7613 = vpack.c.b16 %v7553, %v7551
      %v7614 = vpack.c.b16 %v7554, %v7552
      %v7615 = vpack.c.b16 %v7557, %v7555
      %v7616 = vpack.c.b16 %v7558, %v7556
      %v7617 = vpack.c.b16 %v7561, %v7559
      %v7618 = vpack.c.b16 %v7562, %v7560
      %v7619 = vpack.c.b16 %v7565, %v7563
      %v7620 = vpack.c.b16 %v7566, %v7564
      %v7621 = vpack.c.b16 %v7569, %v7567
      %v7622 = vpack.c.b16 %v7570, %v7568
      %v7623 = vpack.c.b16 %v7573, %v7571
      %v7624 = vpack.c.b16 %v7574, %v7572
      %v7625 = vpack.c.b16 %v7577, %v7575
      %v7626 = vpack.c.b16 %v7578, %v7576
      %v7627 = vpack.c.b16 %v7581, %v7579
      %v7628 = vpack.c.b16 %v7582, %v7580
      %v7629 = vpack.c.b16 %v7585, %v7583
      %v7630 = vpack.c.b16 %v7586, %v7584
      %v7631 = vpack.c.b16 %v7589, %v7587
      %v7632 = vpack.c.b16 %v7590, %v7588
      %v7633 = vpack.c.b16 %v7593, %v7591
      %v7634 = vpack.c.b16 %v7594, %v7592
      %v7635 = vpack.c.b16 %v7597, %v7595
      %v7636 = vpack.c.b16 %v7598, %v7596
      %v7637 = vpack.c.b16 %v7601, %v7599
      %v7638 = vpack.c.b16 %v7602, %v7600
      %v7639 = vpack.c.b16 %v7605, %v7603
      %v7640 = vpack.c.b16 %v7606, %v7604
      %v7641 = vpack.c.b16 %v7609, %v7607
      %v7642 = vpack.c.b16 %v7610, %v7608
      %7675 = vmatprep.subr.bf16.mxu0 %v7626
      %7676 = vmatpush1.bf16.msra.mxu0 %v7625
      %7677 = vmatprep.subr.bf16.mxu0 %v7624
      %7678 = vmatpush1.bf16.msra.mxu0 %v7623
      %7679 = vmatprep.subr.bf16.mxu0 %v7622
      %7680 = vmatpush1.bf16.msra.mxu0 %v7621
      %7681 = vmatprep.subr.bf16.mxu0 %v7620
      %7682 = vmatpush1.bf16.msra.mxu0 %v7619
      %7683 = vmatprep.subr.bf16.mxu0 %v7618
      %7684 = vmatpush1.bf16.msra.mxu0 %v7617
      %7685 = vmatprep.subr.bf16.mxu0 %v7616
      %7686 = vmatpush1.bf16.msra.mxu0 %v7615
      %7687 = vmatprep.subr.bf16.mxu0 %v7614
      %7688 = vmatpush1.bf16.msra.mxu0 %v7613
      %7689 = vmatprep.subr.bf16.mxu0 %v7612
      %7690 = vmatpush1.bf16.msra.mxu0 %v7611
      %7691 = vmatprep.subr.bf16.mxu0 %v7642
      %7692 = vmatpush2.bf16.msra.mxu0 %v7641
      %7693 = vmatprep.subr.bf16.mxu0 %v7640
      %7694 = vmatpush2.bf16.msra.mxu0 %v7639
      %7695 = vmatprep.subr.bf16.mxu0 %v7638
      %7696 = vmatpush2.bf16.msra.mxu0 %v7637
      %7697 = vmatprep.subr.bf16.mxu0 %v7636
      %7698 = vmatpush2.bf16.msra.mxu0 %v7635
      %7699 = vmatprep.subr.bf16.mxu0 %v7634
      %7700 = vmatpush2.bf16.msra.mxu0 %v7633
      %7701 = vmatprep.subr.bf16.mxu0 %v7632
      %7702 = vmatpush2.bf16.msra.mxu0 %v7631
      %7703 = vmatprep.subr.bf16.mxu0 %v7630
      %7704 = vmatpush2.bf16.msra.mxu0 %v7629
      %7705 = vmatprep.subr.bf16.mxu0 %v7628
      %7706 = vmatpush2.bf16.msra.mxu0 %v7627
      %7707 = vmatprep.mubr.bf16.mxu0 %v7472
      %7708 = vmatmul.mubr.bf16.gmra.mxu0 %v7471
      %v7709 = vpop.f32.mrf.mxu0
      %v7710 = vadd.f32 %v7508, %v7709
      %v7711 = vpop.f32.mrf.mxu0
      %v7712 = vadd.f32 %v7512, %v7711
      %v7713 = vpop.f32.mrf.mxu0
      %v7714 = vadd.f32 %v7508, %v7713
      %v7715 = vpop.f32.mrf.mxu0
      %v7716 = vadd.f32 %v7512, %v7715
      %7717 = vmatprep.mubr.bf16.mxu0 %v7474
      %7718 = vmatmul.mubr.bf16.gmra.mxu0 %v7473
      %v7719 = vpop.f32.mrf.mxu0
      %v7720 = vadd.f32 %v7508, %v7719
      %v7721 = vpop.f32.mrf.mxu0
      %v7722 = vadd.f32 %v7512, %v7721
      %v7723 = vpop.f32.mrf.mxu0
      %v7724 = vadd.f32 %v7508, %v7723
      %v7725 = vpop.f32.mrf.mxu0
      %v7726 = vadd.f32 %v7512, %v7725
      %7727 = vmatprep.mubr.bf16.mxu0 %v7476
      %7728 = vmatmul.mubr.bf16.gmra.mxu0 %v7475
      %v7729 = vpop.f32.mrf.mxu0
      %v7730 = vadd.f32 %v7508, %v7729
      %v7731 = vpop.f32.mrf.mxu0
      %v7732 = vadd.f32 %v7512, %v7731
      %v7733 = vpop.f32.mrf.mxu0
      %v7734 = vadd.f32 %v7508, %v7733
      %v7735 = vpop.f32.mrf.mxu0
      %v7736 = vadd.f32 %v7512, %v7735
      %7737 = vmatprep.mubr.bf16.mxu0 %v7478
      %7738 = vmatmul.mubr.bf16.gmra.mxu0 %v7477
      %v7739 = vpop.f32.mrf.mxu0
      %v7740 = vadd.f32 %v7508, %v7739
      %v7741 = vpop.f32.mrf.mxu0
      %v7742 = vadd.f32 %v7512, %v7741
      %v7743 = vpop.f32.mrf.mxu0
      %v7744 = vadd.f32 %v7508, %v7743
      %v7745 = vpop.f32.mrf.mxu0
      %v7746 = vadd.f32 %v7512, %v7745
      %7747 = vmatprep.mubr.bf16.mxu0 %v7480
      %7748 = vmatmul.mubr.bf16.gmra.mxu0 %v7479
      %v7749 = vpop.f32.mrf.mxu0
      %v7750 = vadd.f32 %v7508, %v7749
      %v7751 = vpop.f32.mrf.mxu0
      %v7752 = vadd.f32 %v7512, %v7751
      %v7753 = vpop.f32.mrf.mxu0
      %v7754 = vadd.f32 %v7508, %v7753
      %v7755 = vpop.f32.mrf.mxu0
      %v7756 = vadd.f32 %v7512, %v7755
      %7757 = vmatprep.mubr.bf16.mxu0 %v7482
      %7758 = vmatmul.mubr.bf16.gmra.mxu0 %v7481
      %v7759 = vpop.f32.mrf.mxu0
      %v7760 = vadd.f32 %v7508, %v7759
      %v7761 = vpop.f32.mrf.mxu0
      %v7762 = vadd.f32 %v7512, %v7761
      %v7763 = vpop.f32.mrf.mxu0
      %v7764 = vadd.f32 %v7508, %v7763
      %v7765 = vpop.f32.mrf.mxu0
      %v7766 = vadd.f32 %v7512, %v7765
      %7767 = vmatprep.mubr.bf16.mxu0 %v7484
      %7768 = vmatmul.mubr.bf16.gmra.mxu0 %v7483
      %v7769 = vpop.f32.mrf.mxu0
      %v7770 = vadd.f32 %v7508, %v7769
      %v7771 = vpop.f32.mrf.mxu0
      %v7772 = vadd.f32 %v7512, %v7771
      %v7773 = vpop.f32.mrf.mxu0
      %v7774 = vadd.f32 %v7508, %v7773
      %v7775 = vpop.f32.mrf.mxu0
      %v7776 = vadd.f32 %v7512, %v7775
      %7777 = vmatprep.mubr.bf16.mxu0 %v7486
      %7778 = vmatmul.mubr.bf16.gmra.mxu0 %v7485
      %v7779 = vpop.f32.mrf.mxu0
      %v7780 = vadd.f32 %v7508, %v7779
      %v7781 = vpop.f32.mrf.mxu0
      %v7782 = vadd.f32 %v7512, %v7781
      %v7783 = vpop.f32.mrf.mxu0
      %v7784 = vadd.f32 %v7508, %v7783
      %v7785 = vpop.f32.mrf.mxu0
      %v7786 = vadd.f32 %v7512, %v7785
      %7787 = vmatprep.mubr.bf16.mxu0 %v7488
      %7788 = vmatmul.mubr.bf16.gmra.mxu0 %v7487
      %v7789 = vpop.f32.mrf.mxu0
      %v7790 = vadd.f32 %v7508, %v7789
      %v7791 = vpop.f32.mrf.mxu0
      %v7792 = vadd.f32 %v7512, %v7791
      %v7793 = vpop.f32.mrf.mxu0
      %v7794 = vadd.f32 %v7508, %v7793
      %v7795 = vpop.f32.mrf.mxu0
      %v7796 = vadd.f32 %v7512, %v7795
      %7797 = vmatprep.mubr.bf16.mxu0 %v7490
      %7798 = vmatmul.mubr.bf16.gmra.mxu0 %v7489
      %v7799 = vpop.f32.mrf.mxu0
      %v7800 = vadd.f32 %v7508, %v7799
      %v7801 = vpop.f32.mrf.mxu0
      %v7802 = vadd.f32 %v7512, %v7801
      %v7803 = vpop.f32.mrf.mxu0
      %v7804 = vadd.f32 %v7508, %v7803
      %v7805 = vpop.f32.mrf.mxu0
      %v7806 = vadd.f32 %v7512, %v7805
      %7807 = vmatprep.mubr.bf16.mxu0 %v7492
      %7808 = vmatmul.mubr.bf16.gmra.mxu0 %v7491
      %v7809 = vpop.f32.mrf.mxu0
      %v7810 = vadd.f32 %v7508, %v7809
      %v7811 = vpop.f32.mrf.mxu0
      %v7812 = vadd.f32 %v7512, %v7811
      %v7813 = vpop.f32.mrf.mxu0
      %v7814 = vadd.f32 %v7508, %v7813
      %v7815 = vpop.f32.mrf.mxu0
      %v7816 = vadd.f32 %v7512, %v7815
      %7817 = vmatprep.mubr.bf16.mxu0 %v7494
      %7818 = vmatmul.mubr.bf16.gmra.mxu0 %v7493
      %v7819 = vpop.f32.mrf.mxu0
      %v7820 = vadd.f32 %v7508, %v7819
      %v7821 = vpop.f32.mrf.mxu0
      %v7822 = vadd.f32 %v7512, %v7821
      %v7823 = vpop.f32.mrf.mxu0
      %v7824 = vadd.f32 %v7508, %v7823
      %v7825 = vpop.f32.mrf.mxu0
      %v7826 = vadd.f32 %v7512, %v7825
      %7827 = vmatprep.mubr.bf16.mxu0 %v7496
      %7828 = vmatmul.mubr.bf16.gmra.mxu0 %v7495
      %v7829 = vpop.f32.mrf.mxu0
      %v7830 = vadd.f32 %v7508, %v7829
      %v7831 = vpop.f32.mrf.mxu0
      %v7832 = vadd.f32 %v7512, %v7831
      %v7833 = vpop.f32.mrf.mxu0
      %v7834 = vadd.f32 %v7508, %v7833
      %v7835 = vpop.f32.mrf.mxu0
      %v7836 = vadd.f32 %v7512, %v7835
      %7837 = vmatprep.mubr.bf16.mxu0 %v7498
      %7838 = vmatmul.mubr.bf16.gmra.mxu0 %v7497
      %v7839 = vpop.f32.mrf.mxu0
      %v7840 = vadd.f32 %v7508, %v7839
      %v7841 = vpop.f32.mrf.mxu0
      %v7842 = vadd.f32 %v7512, %v7841
      %v7843 = vpop.f32.mrf.mxu0
      %v7844 = vadd.f32 %v7508, %v7843
      %v7845 = vpop.f32.mrf.mxu0
      %v7846 = vadd.f32 %v7512, %v7845
      %7847 = vmatprep.mubr.bf16.mxu0 %v7500
      %7848 = vmatmul.mubr.bf16.gmra.mxu0 %v7499
      %v7849 = vpop.f32.mrf.mxu0
      %v7850 = vadd.f32 %v7508, %v7849
      %v7851 = vpop.f32.mrf.mxu0
      %v7852 = vadd.f32 %v7512, %v7851
      %v7853 = vpop.f32.mrf.mxu0
      %v7854 = vadd.f32 %v7508, %v7853
      %v7855 = vpop.f32.mrf.mxu0
      %v7856 = vadd.f32 %v7512, %v7855
      %7857 = vmatprep.mubr.bf16.mxu0 %v7502
      %7858 = vmatmul.mubr.bf16.gmra.mxu0 %v7501
      %v7859 = vpop.f32.mrf.mxu0
      %v7860 = vadd.f32 %v7508, %v7859
      %v7861 = vpop.f32.mrf.mxu0
      %v7862 = vadd.f32 %v7512, %v7861
      %v7863 = vpop.f32.mrf.mxu0
      %v7864 = vadd.f32 %v7508, %v7863
      %v7865 = vpop.f32.mrf.mxu0
      %v7866 = vadd.f32 %v7512, %v7865
      %7867 = vdwg.mxu0
      %v7868 = vmax.f32 %v7710, 0.0
      %v7869 = vmax.f32 %v7712, 0.0
      %v7870 = vmax.f32 %v7714, 0.0
      %v7871 = vmax.f32 %v7716, 0.0
      %v7872 = vmax.f32 %v7720, 0.0
      %v7873 = vmax.f32 %v7722, 0.0
      %v7874 = vmax.f32 %v7724, 0.0
      %v7875 = vmax.f32 %v7726, 0.0
      %v7876 = vmax.f32 %v7730, 0.0
      %v7877 = vmax.f32 %v7732, 0.0
      %v7878 = vmax.f32 %v7734, 0.0
      %v7879 = vmax.f32 %v7736, 0.0
      %v7880 = vmax.f32 %v7740, 0.0
      %v7881 = vmax.f32 %v7742, 0.0
      %v7882 = vmax.f32 %v7744, 0.0
      %v7883 = vmax.f32 %v7746, 0.0
      %v7884 = vmax.f32 %v7750, 0.0
      %v7885 = vmax.f32 %v7752, 0.0
      %v7886 = vmax.f32 %v7754, 0.0
      %v7887 = vmax.f32 %v7756, 0.0
      %v7888 = vmax.f32 %v7760, 0.0
      %v7889 = vmax.f32 %v7762, 0.0
      %v7890 = vmax.f32 %v7764, 0.0
      %v7891 = vmax.f32 %v7766, 0.0
      %v7892 = vmax.f32 %v7770, 0.0
      %v7893 = vmax.f32 %v7772, 0.0
      %v7894 = vmax.f32 %v7774, 0.0
      %v7895 = vmax.f32 %v7776, 0.0
      %v7896 = vmax.f32 %v7780, 0.0
      %v7897 = vmax.f32 %v7782, 0.0
      %v7898 = vmax.f32 %v7784, 0.0
      %v7899 = vmax.f32 %v7786, 0.0
      %v7900 = vmax.f32 %v7790, 0.0
      %v7901 = vmax.f32 %v7792, 0.0
      %v7902 = vmax.f32 %v7794, 0.0
      %v7903 = vmax.f32 %v7796, 0.0
      %v7904 = vmax.f32 %v7800, 0.0
      %v7905 = vmax.f32 %v7802, 0.0
      %v7906 = vmax.f32 %v7804, 0.0
      %v7907 = vmax.f32 %v7806, 0.0
      %v7908 = vmax.f32 %v7810, 0.0
      %v7909 = vmax.f32 %v7812, 0.0
      %v7910 = vmax.f32 %v7814, 0.0
      %v7911 = vmax.f32 %v7816, 0.0
      %v7912 = vmax.f32 %v7820, 0.0
      %v7913 = vmax.f32 %v7822, 0.0
      %v7914 = vmax.f32 %v7824, 0.0
      %v7915 = vmax.f32 %v7826, 0.0
      %v7916 = vmax.f32 %v7830, 0.0
      %v7917 = vmax.f32 %v7832, 0.0
      %v7918 = vmax.f32 %v7834, 0.0
      %v7919 = vmax.f32 %v7836, 0.0
      %v7920 = vmax.f32 %v7840, 0.0
      %v7921 = vmax.f32 %v7842, 0.0
      %v7922 = vmax.f32 %v7844, 0.0
      %v7923 = vmax.f32 %v7846, 0.0
      %v7924 = vmax.f32 %v7850, 0.0
      %v7925 = vmax.f32 %v7852, 0.0
      %v7926 = vmax.f32 %v7854, 0.0
      %v7927 = vmax.f32 %v7856, 0.0
      %v7928 = vmax.f32 %v7860, 0.0
      %v7929 = vmax.f32 %v7862, 0.0
      %v7930 = vmax.f32 %v7864, 0.0
      %v7931 = vmax.f32 %v7866, 0.0
      %v7932 = vld [vmem:[%s2243] sm:$0xff]
      %v7933 = vld [vmem:[%s2243 + $0x8] sm:$0xff]
      %v7934 = vld [vmem:[%s2243 + $0x10] sm:$0xff]
      %v7935 = vld [vmem:[%s2243 + $0x18] sm:$0xff]
      %v7936 = vld [vmem:[%s2243 + $0x20] sm:$0xff]
      %v7937 = vld [vmem:[%s2243 + $0x28] sm:$0xff]
      %v7938 = vld [vmem:[%s2243 + $0x30] sm:$0xff]
      %v7939 = vld [vmem:[%s2243 + $0x38] sm:$0xff]
      %v7940 = vld [vmem:[%s2243 + $0x40] sm:$0xff]
      %v7941 = vld [vmem:[%s2243 + $0x48] sm:$0xff]
      %v7942 = vld [vmem:[%s2243 + $0x50] sm:$0xff]
      %v7943 = vld [vmem:[%s2243 + $0x58] sm:$0xff]
      %v7944 = vld [vmem:[%s2243 + $0x60] sm:$0xff]
      %v7945 = vld [vmem:[%s2243 + $0x68] sm:$0xff]
      %v7946 = vld [vmem:[%s2243 + $0x70] sm:$0xff]
      %v7947 = vld [vmem:[%s2243 + $0x78] sm:$0xff]
      %v7948 = vld [vmem:[%s2243 + $0x80] sm:$0xff]
      %v7949 = vld [vmem:[%s2243 + $0x88] sm:$0xff]
      %v7950 = vld [vmem:[%s2243 + $0x90] sm:$0xff]
      %v7951 = vld [vmem:[%s2243 + $0x98] sm:$0xff]
      %v7952 = vld [vmem:[%s2243 + $0xa0] sm:$0xff]
      %v7953 = vld [vmem:[%s2243 + $0xa8] sm:$0xff]
      %v7954 = vld [vmem:[%s2243 + $0xb0] sm:$0xff]
      %v7955 = vld [vmem:[%s2243 + $0xb8] sm:$0xff]
      %v7956 = vld [vmem:[%s2243 + $0xc0] sm:$0xff]
      %v7957 = vld [vmem:[%s2243 + $0xc8] sm:$0xff]
      %v7958 = vld [vmem:[%s2243 + $0xd0] sm:$0xff]
      %v7959 = vld [vmem:[%s2243 + $0xd8] sm:$0xff]
      %v7960 = vld [vmem:[%s2243 + $0xe0] sm:$0xff]
      %v7961 = vld [vmem:[%s2243 + $0xe8] sm:$0xff]
      %v7962 = vld [vmem:[%s2243 + $0xf0] sm:$0xff]
      %v7963 = vld [vmem:[%s2243 + $0xf8] sm:$0xff]
      %v7964 = vpack.c.bf16 %v7870, %v7868
      %v7965 = vpack.c.bf16 %v7871, %v7869
      %v7966 = vpack.c.bf16 %v7874, %v7872
      %v7967 = vpack.c.bf16 %v7875, %v7873
      %v7968 = vpack.c.bf16 %v7878, %v7876
      %v7969 = vpack.c.bf16 %v7879, %v7877
      %v7970 = vpack.c.bf16 %v7882, %v7880
      %v7971 = vpack.c.bf16 %v7883, %v7881
      %v7972 = vpack.c.bf16 %v7886, %v7884
      %v7973 = vpack.c.bf16 %v7887, %v7885
      %v7974 = vpack.c.bf16 %v7890, %v7888
      %v7975 = vpack.c.bf16 %v7891, %v7889
      %v7976 = vpack.c.bf16 %v7894, %v7892
      %v7977 = vpack.c.bf16 %v7895, %v7893
      %v7978 = vpack.c.bf16 %v7898, %v7896
      %v7979 = vpack.c.bf16 %v7899, %v7897
      %v7980 = vpack.c.bf16 %v7902, %v7900
      %v7981 = vpack.c.bf16 %v7903, %v7901
      %v7982 = vpack.c.bf16 %v7906, %v7904
      %v7983 = vpack.c.bf16 %v7907, %v7905
      %v7984 = vpack.c.bf16 %v7910, %v7908
      %v7985 = vpack.c.bf16 %v7911, %v7909
      %v7986 = vpack.c.bf16 %v7914, %v7912
      %v7987 = vpack.c.bf16 %v7915, %v7913
      %v7988 = vpack.c.bf16 %v7918, %v7916
      %v7989 = vpack.c.bf16 %v7919, %v7917
      %v7990 = vpack.c.bf16 %v7922, %v7920
      %v7991 = vpack.c.bf16 %v7923, %v7921
      %v7992 = vpack.c.bf16 %v7926, %v7924
      %v7993 = vpack.c.bf16 %v7927, %v7925
      %v7994 = vpack.c.bf16 %v7930, %v7928
      %v7995 = vpack.c.bf16 %v7931, %v7929
      %v7996 = vld [vmem:[%s2308] ss:$8 sm:$0x3]
      %v7998 = vlaneseq
      %v7999 = vshrl.u32 %v7998, 7
      %v8000 = vsub.s32 0, %v7999
      %v8001 = vrot.slane %v7996, %v8000
      %v8002 = vlaneseq
      %v8003 = vshrl.u32 %v8002, 7
      %v8004 = vsub.s32 1, %v8003
      %v8005 = vrot.slane %v7996, %v8004
      %v8040 = vunpack.c.l.b16 %v7932
      %v8041 = vunpack.c.h.b16 %v7932
      %v8042 = vunpack.c.l.b16 %v7933
      %v8043 = vunpack.c.h.b16 %v7933
      %v8044 = vunpack.c.l.b16 %v7934
      %v8045 = vunpack.c.h.b16 %v7934
      %v8046 = vunpack.c.l.b16 %v7935
      %v8047 = vunpack.c.h.b16 %v7935
      %v8048 = vunpack.c.l.b16 %v7936
      %v8049 = vunpack.c.h.b16 %v7936
      %v8050 = vunpack.c.l.b16 %v7937
      %v8051 = vunpack.c.h.b16 %v7937
      %v8052 = vunpack.c.l.b16 %v7938
      %v8053 = vunpack.c.h.b16 %v7938
      %v8054 = vunpack.c.l.b16 %v7939
      %v8055 = vunpack.c.h.b16 %v7939
      %v8056 = vunpack.c.l.b16 %v7940
      %v8057 = vunpack.c.h.b16 %v7940
      %v8058 = vunpack.c.l.b16 %v7941
      %v8059 = vunpack.c.h.b16 %v7941
      %v8060 = vunpack.c.l.b16 %v7942
      %v8061 = vunpack.c.h.b16 %v7942
      %v8062 = vunpack.c.l.b16 %v7943
      %v8063 = vunpack.c.h.b16 %v7943
      %v8064 = vunpack.c.l.b16 %v7944
      %v8065 = vunpack.c.h.b16 %v7944
      %v8066 = vunpack.c.l.b16 %v7945
      %v8067 = vunpack.c.h.b16 %v7945
      %v8068 = vunpack.c.l.b16 %v7946
      %v8069 = vunpack.c.h.b16 %v7946
      %v8070 = vunpack.c.l.b16 %v7947
      %v8071 = vunpack.c.h.b16 %v7947
      %v8072 = vunpack.c.l.b16 %v7948
      %v8073 = vunpack.c.h.b16 %v7948
      %v8074 = vunpack.c.l.b16 %v7949
      %v8075 = vunpack.c.h.b16 %v7949
      %v8076 = vunpack.c.l.b16 %v7950
      %v8077 = vunpack.c.h.b16 %v7950
      %v8078 = vunpack.c.l.b16 %v7951
      %v8079 = vunpack.c.h.b16 %v7951
      %v8080 = vunpack.c.l.b16 %v7952
      %v8081 = vunpack.c.h.b16 %v7952
      %v8082 = vunpack.c.l.b16 %v7953
      %v8083 = vunpack.c.h.b16 %v7953
      %v8084 = vunpack.c.l.b16 %v7954
      %v8085 = vunpack.c.h.b16 %v7954
      %v8086 = vunpack.c.l.b16 %v7955
      %v8087 = vunpack.c.h.b16 %v7955
      %v8088 = vunpack.c.l.b16 %v7956
      %v8089 = vunpack.c.h.b16 %v7956
      %v8090 = vunpack.c.l.b16 %v7957
      %v8091 = vunpack.c.h.b16 %v7957
      %v8092 = vunpack.c.l.b16 %v7958
      %v8093 = vunpack.c.h.b16 %v7958
      %v8094 = vunpack.c.l.b16 %v7959
      %v8095 = vunpack.c.h.b16 %v7959
      %v8096 = vunpack.c.l.b16 %v7960
      %v8097 = vunpack.c.h.b16 %v7960
      %v8098 = vunpack.c.l.b16 %v7961
      %v8099 = vunpack.c.h.b16 %v7961
      %v8100 = vunpack.c.l.b16 %v7962
      %v8101 = vunpack.c.h.b16 %v7962
      %v8102 = vunpack.c.l.b16 %v7963
      %v8103 = vunpack.c.h.b16 %v7963
      %v8104 = vpack.c.b16 %v8042, %v8040
      %v8105 = vpack.c.b16 %v8043, %v8041
      %v8106 = vpack.c.b16 %v8046, %v8044
      %v8107 = vpack.c.b16 %v8047, %v8045
      %v8108 = vpack.c.b16 %v8050, %v8048
      %v8109 = vpack.c.b16 %v8051, %v8049
      %v8110 = vpack.c.b16 %v8054, %v8052
      %v8111 = vpack.c.b16 %v8055, %v8053
      %v8112 = vpack.c.b16 %v8058, %v8056
      %v8113 = vpack.c.b16 %v8059, %v8057
      %v8114 = vpack.c.b16 %v8062, %v8060
      %v8115 = vpack.c.b16 %v8063, %v8061
      %v8116 = vpack.c.b16 %v8066, %v8064
      %v8117 = vpack.c.b16 %v8067, %v8065
      %v8118 = vpack.c.b16 %v8070, %v8068
      %v8119 = vpack.c.b16 %v8071, %v8069
      %v8120 = vpack.c.b16 %v8074, %v8072
      %v8121 = vpack.c.b16 %v8075, %v8073
      %v8122 = vpack.c.b16 %v8078, %v8076
      %v8123 = vpack.c.b16 %v8079, %v8077
      %v8124 = vpack.c.b16 %v8082, %v8080
      %v8125 = vpack.c.b16 %v8083, %v8081
      %v8126 = vpack.c.b16 %v8086, %v8084
      %v8127 = vpack.c.b16 %v8087, %v8085
      %v8128 = vpack.c.b16 %v8090, %v8088
      %v8129 = vpack.c.b16 %v8091, %v8089
      %v8130 = vpack.c.b16 %v8094, %v8092
      %v8131 = vpack.c.b16 %v8095, %v8093
      %v8132 = vpack.c.b16 %v8098, %v8096
      %v8133 = vpack.c.b16 %v8099, %v8097
      %v8134 = vpack.c.b16 %v8102, %v8100
      %v8135 = vpack.c.b16 %v8103, %v8101
      %8168 = vmatprep.subr.bf16.mxu0 %v8119
      %8169 = vmatpush1.bf16.msra.mxu0 %v8118
      %8170 = vmatprep.subr.bf16.mxu0 %v8117
      %8171 = vmatpush1.bf16.msra.mxu0 %v8116
      %8172 = vmatprep.subr.bf16.mxu0 %v8115
      %8173 = vmatpush1.bf16.msra.mxu0 %v8114
      %8174 = vmatprep.subr.bf16.mxu0 %v8113
      %8175 = vmatpush1.bf16.msra.mxu0 %v8112
      %8176 = vmatprep.subr.bf16.mxu0 %v8111
      %8177 = vmatpush1.bf16.msra.mxu0 %v8110
      %8178 = vmatprep.subr.bf16.mxu0 %v8109
      %8179 = vmatpush1.bf16.msra.mxu0 %v8108
      %8180 = vmatprep.subr.bf16.mxu0 %v8107
      %8181 = vmatpush1.bf16.msra.mxu0 %v8106
      %8182 = vmatprep.subr.bf16.mxu0 %v8105
      %8183 = vmatpush1.bf16.msra.mxu0 %v8104
      %8184 = vmatprep.subr.bf16.mxu0 %v8135
      %8185 = vmatpush2.bf16.msra.mxu0 %v8134
      %8186 = vmatprep.subr.bf16.mxu0 %v8133
      %8187 = vmatpush2.bf16.msra.mxu0 %v8132
      %8188 = vmatprep.subr.bf16.mxu0 %v8131
      %8189 = vmatpush2.bf16.msra.mxu0 %v8130
      %8190 = vmatprep.subr.bf16.mxu0 %v8129
      %8191 = vmatpush2.bf16.msra.mxu0 %v8128
      %8192 = vmatprep.subr.bf16.mxu0 %v8127
      %8193 = vmatpush2.bf16.msra.mxu0 %v8126
      %8194 = vmatprep.subr.bf16.mxu0 %v8125
      %8195 = vmatpush2.bf16.msra.mxu0 %v8124
      %8196 = vmatprep.subr.bf16.mxu0 %v8123
      %8197 = vmatpush2.bf16.msra.mxu0 %v8122
      %8198 = vmatprep.subr.bf16.mxu0 %v8121
      %8199 = vmatpush2.bf16.msra.mxu0 %v8120
      %8200 = vmatprep.mubr.bf16.mxu0 %v7965
      %8201 = vmatmul.mubr.bf16.gmra.mxu0 %v7964
      %v8202 = vpop.f32.mrf.mxu0
      %v8203 = vadd.f32 %v8001, %v8202
      %v8204 = vpop.f32.mrf.mxu0
      %v8205 = vadd.f32 %v8005, %v8204
      %v8206 = vpop.f32.mrf.mxu0
      %v8207 = vadd.f32 %v8001, %v8206
      %v8208 = vpop.f32.mrf.mxu0
      %v8209 = vadd.f32 %v8005, %v8208
      %8210 = vmatprep.mubr.bf16.mxu0 %v7967
      %8211 = vmatmul.mubr.bf16.gmra.mxu0 %v7966
      %v8212 = vpop.f32.mrf.mxu0
      %v8213 = vadd.f32 %v8001, %v8212
      %v8214 = vpop.f32.mrf.mxu0
      %v8215 = vadd.f32 %v8005, %v8214
      %v8216 = vpop.f32.mrf.mxu0
      %v8217 = vadd.f32 %v8001, %v8216
      %v8218 = vpop.f32.mrf.mxu0
      %v8219 = vadd.f32 %v8005, %v8218
      %8220 = vmatprep.mubr.bf16.mxu0 %v7969
      %8221 = vmatmul.mubr.bf16.gmra.mxu0 %v7968
      %v8222 = vpop.f32.mrf.mxu0
      %v8223 = vadd.f32 %v8001, %v8222
      %v8224 = vpop.f32.mrf.mxu0
      %v8225 = vadd.f32 %v8005, %v8224
      %v8226 = vpop.f32.mrf.mxu0
      %v8227 = vadd.f32 %v8001, %v8226
      %v8228 = vpop.f32.mrf.mxu0
      %v8229 = vadd.f32 %v8005, %v8228
      %8230 = vmatprep.mubr.bf16.mxu0 %v7971
      %8231 = vmatmul.mubr.bf16.gmra.mxu0 %v7970
      %v8232 = vpop.f32.mrf.mxu0
      %v8233 = vadd.f32 %v8001, %v8232
      %v8234 = vpop.f32.mrf.mxu0
      %v8235 = vadd.f32 %v8005, %v8234
      %v8236 = vpop.f32.mrf.mxu0
      %v8237 = vadd.f32 %v8001, %v8236
      %v8238 = vpop.f32.mrf.mxu0
      %v8239 = vadd.f32 %v8005, %v8238
      %8240 = vmatprep.mubr.bf16.mxu0 %v7973
      %8241 = vmatmul.mubr.bf16.gmra.mxu0 %v7972
      %v8242 = vpop.f32.mrf.mxu0
      %v8243 = vadd.f32 %v8001, %v8242
      %v8244 = vpop.f32.mrf.mxu0
      %v8245 = vadd.f32 %v8005, %v8244
      %v8246 = vpop.f32.mrf.mxu0
      %v8247 = vadd.f32 %v8001, %v8246
      %v8248 = vpop.f32.mrf.mxu0
      %v8249 = vadd.f32 %v8005, %v8248
      %8250 = vmatprep.mubr.bf16.mxu0 %v7975
      %8251 = vmatmul.mubr.bf16.gmra.mxu0 %v7974
      %v8252 = vpop.f32.mrf.mxu0
      %v8253 = vadd.f32 %v8001, %v8252
      %v8254 = vpop.f32.mrf.mxu0
      %v8255 = vadd.f32 %v8005, %v8254
      %v8256 = vpop.f32.mrf.mxu0
      %v8257 = vadd.f32 %v8001, %v8256
      %v8258 = vpop.f32.mrf.mxu0
      %v8259 = vadd.f32 %v8005, %v8258
      %8260 = vmatprep.mubr.bf16.mxu0 %v7977
      %8261 = vmatmul.mubr.bf16.gmra.mxu0 %v7976
      %v8262 = vpop.f32.mrf.mxu0
      %v8263 = vadd.f32 %v8001, %v8262
      %v8264 = vpop.f32.mrf.mxu0
      %v8265 = vadd.f32 %v8005, %v8264
      %v8266 = vpop.f32.mrf.mxu0
      %v8267 = vadd.f32 %v8001, %v8266
      %v8268 = vpop.f32.mrf.mxu0
      %v8269 = vadd.f32 %v8005, %v8268
      %8270 = vmatprep.mubr.bf16.mxu0 %v7979
      %8271 = vmatmul.mubr.bf16.gmra.mxu0 %v7978
      %v8272 = vpop.f32.mrf.mxu0
      %v8273 = vadd.f32 %v8001, %v8272
      %v8274 = vpop.f32.mrf.mxu0
      %v8275 = vadd.f32 %v8005, %v8274
      %v8276 = vpop.f32.mrf.mxu0
      %v8277 = vadd.f32 %v8001, %v8276
      %v8278 = vpop.f32.mrf.mxu0
      %v8279 = vadd.f32 %v8005, %v8278
      %8280 = vmatprep.mubr.bf16.mxu0 %v7981
      %8281 = vmatmul.mubr.bf16.gmra.mxu0 %v7980
      %v8282 = vpop.f32.mrf.mxu0
      %v8283 = vadd.f32 %v8001, %v8282
      %v8284 = vpop.f32.mrf.mxu0
      %v8285 = vadd.f32 %v8005, %v8284
      %v8286 = vpop.f32.mrf.mxu0
      %v8287 = vadd.f32 %v8001, %v8286
      %v8288 = vpop.f32.mrf.mxu0
      %v8289 = vadd.f32 %v8005, %v8288
      %8290 = vmatprep.mubr.bf16.mxu0 %v7983
      %8291 = vmatmul.mubr.bf16.gmra.mxu0 %v7982
      %v8292 = vpop.f32.mrf.mxu0
      %v8293 = vadd.f32 %v8001, %v8292
      %v8294 = vpop.f32.mrf.mxu0
      %v8295 = vadd.f32 %v8005, %v8294
      %v8296 = vpop.f32.mrf.mxu0
      %v8297 = vadd.f32 %v8001, %v8296
      %v8298 = vpop.f32.mrf.mxu0
      %v8299 = vadd.f32 %v8005, %v8298
      %8300 = vmatprep.mubr.bf16.mxu0 %v7985
      %8301 = vmatmul.mubr.bf16.gmra.mxu0 %v7984
      %v8302 = vpop.f32.mrf.mxu0
      %v8303 = vadd.f32 %v8001, %v8302
      %v8304 = vpop.f32.mrf.mxu0
      %v8305 = vadd.f32 %v8005, %v8304
      %v8306 = vpop.f32.mrf.mxu0
      %v8307 = vadd.f32 %v8001, %v8306
      %v8308 = vpop.f32.mrf.mxu0
      %v8309 = vadd.f32 %v8005, %v8308
      %8310 = vmatprep.mubr.bf16.mxu0 %v7987
      %8311 = vmatmul.mubr.bf16.gmra.mxu0 %v7986
      %v8312 = vpop.f32.mrf.mxu0
      %v8313 = vadd.f32 %v8001, %v8312
      %v8314 = vpop.f32.mrf.mxu0
      %v8315 = vadd.f32 %v8005, %v8314
      %v8316 = vpop.f32.mrf.mxu0
      %v8317 = vadd.f32 %v8001, %v8316
      %v8318 = vpop.f32.mrf.mxu0
      %v8319 = vadd.f32 %v8005, %v8318
      %8320 = vmatprep.mubr.bf16.mxu0 %v7989
      %8321 = vmatmul.mubr.bf16.gmra.mxu0 %v7988
      %v8322 = vpop.f32.mrf.mxu0
      %v8323 = vadd.f32 %v8001, %v8322
      %v8324 = vpop.f32.mrf.mxu0
      %v8325 = vadd.f32 %v8005, %v8324
      %v8326 = vpop.f32.mrf.mxu0
      %v8327 = vadd.f32 %v8001, %v8326
      %v8328 = vpop.f32.mrf.mxu0
      %v8329 = vadd.f32 %v8005, %v8328
      %8330 = vmatprep.mubr.bf16.mxu0 %v7991
      %8331 = vmatmul.mubr.bf16.gmra.mxu0 %v7990
      %v8332 = vpop.f32.mrf.mxu0
      %v8333 = vadd.f32 %v8001, %v8332
      %v8334 = vpop.f32.mrf.mxu0
      %v8335 = vadd.f32 %v8005, %v8334
      %v8336 = vpop.f32.mrf.mxu0
      %v8337 = vadd.f32 %v8001, %v8336
      %v8338 = vpop.f32.mrf.mxu0
      %v8339 = vadd.f32 %v8005, %v8338
      %8340 = vmatprep.mubr.bf16.mxu0 %v7993
      %8341 = vmatmul.mubr.bf16.gmra.mxu0 %v7992
      %v8342 = vpop.f32.mrf.mxu0
      %v8343 = vadd.f32 %v8001, %v8342
      %v8344 = vpop.f32.mrf.mxu0
      %v8345 = vadd.f32 %v8005, %v8344
      %v8346 = vpop.f32.mrf.mxu0
      %v8347 = vadd.f32 %v8001, %v8346
      %v8348 = vpop.f32.mrf.mxu0
      %v8349 = vadd.f32 %v8005, %v8348
      %8350 = vmatprep.mubr.bf16.mxu0 %v7995
      %8351 = vmatmul.mubr.bf16.gmra.mxu0 %v7994
      %v8352 = vpop.f32.mrf.mxu0
      %v8353 = vadd.f32 %v8001, %v8352
      %v8354 = vpop.f32.mrf.mxu0
      %v8355 = vadd.f32 %v8005, %v8354
      %v8356 = vpop.f32.mrf.mxu0
      %v8357 = vadd.f32 %v8001, %v8356
      %v8358 = vpop.f32.mrf.mxu0
      %v8359 = vadd.f32 %v8005, %v8358
      %8360 = vdwg.mxu0
      %v8361 = vmax.f32 %v8203, 0.0
      %v8362 = vmax.f32 %v8205, 0.0
      %v8363 = vmax.f32 %v8207, 0.0
      %v8364 = vmax.f32 %v8209, 0.0
      %v8365 = vmax.f32 %v8213, 0.0
      %v8366 = vmax.f32 %v8215, 0.0
      %v8367 = vmax.f32 %v8217, 0.0
      %v8368 = vmax.f32 %v8219, 0.0
      %v8369 = vmax.f32 %v8223, 0.0
      %v8370 = vmax.f32 %v8225, 0.0
      %v8371 = vmax.f32 %v8227, 0.0
      %v8372 = vmax.f32 %v8229, 0.0
      %v8373 = vmax.f32 %v8233, 0.0
      %v8374 = vmax.f32 %v8235, 0.0
      %v8375 = vmax.f32 %v8237, 0.0
      %v8376 = vmax.f32 %v8239, 0.0
      %v8377 = vmax.f32 %v8243, 0.0
      %v8378 = vmax.f32 %v8245, 0.0
      %v8379 = vmax.f32 %v8247, 0.0
      %v8380 = vmax.f32 %v8249, 0.0
      %v8381 = vmax.f32 %v8253, 0.0
      %v8382 = vmax.f32 %v8255, 0.0
      %v8383 = vmax.f32 %v8257, 0.0
      %v8384 = vmax.f32 %v8259, 0.0
      %v8385 = vmax.f32 %v8263, 0.0
      %v8386 = vmax.f32 %v8265, 0.0
      %v8387 = vmax.f32 %v8267, 0.0
      %v8388 = vmax.f32 %v8269, 0.0
      %v8389 = vmax.f32 %v8273, 0.0
      %v8390 = vmax.f32 %v8275, 0.0
      %v8391 = vmax.f32 %v8277, 0.0
      %v8392 = vmax.f32 %v8279, 0.0
      %v8393 = vmax.f32 %v8283, 0.0
      %v8394 = vmax.f32 %v8285, 0.0
      %v8395 = vmax.f32 %v8287, 0.0
      %v8396 = vmax.f32 %v8289, 0.0
      %v8397 = vmax.f32 %v8293, 0.0
      %v8398 = vmax.f32 %v8295, 0.0
      %v8399 = vmax.f32 %v8297, 0.0
      %v8400 = vmax.f32 %v8299, 0.0
      %v8401 = vmax.f32 %v8303, 0.0
      %v8402 = vmax.f32 %v8305, 0.0
      %v8403 = vmax.f32 %v8307, 0.0
      %v8404 = vmax.f32 %v8309, 0.0
      %v8405 = vmax.f32 %v8313, 0.0
      %v8406 = vmax.f32 %v8315, 0.0
      %v8407 = vmax.f32 %v8317, 0.0
      %v8408 = vmax.f32 %v8319, 0.0
      %v8409 = vmax.f32 %v8323, 0.0
      %v8410 = vmax.f32 %v8325, 0.0
      %v8411 = vmax.f32 %v8327, 0.0
      %v8412 = vmax.f32 %v8329, 0.0
      %v8413 = vmax.f32 %v8333, 0.0
      %v8414 = vmax.f32 %v8335, 0.0
      %v8415 = vmax.f32 %v8337, 0.0
      %v8416 = vmax.f32 %v8339, 0.0
      %v8417 = vmax.f32 %v8343, 0.0
      %v8418 = vmax.f32 %v8345, 0.0
      %v8419 = vmax.f32 %v8347, 0.0
      %v8420 = vmax.f32 %v8349, 0.0
      %v8421 = vmax.f32 %v8353, 0.0
      %v8422 = vmax.f32 %v8355, 0.0
      %v8423 = vmax.f32 %v8357, 0.0
      %v8424 = vmax.f32 %v8359, 0.0
      %v8425 = vld [vmem:[%s2738] sm:$0xff]
      %v8426 = vld [vmem:[%s2738 + $0x8] sm:$0xff]
      %v8427 = vld [vmem:[%s2738 + $0x10] sm:$0xff]
      %v8428 = vld [vmem:[%s2738 + $0x18] sm:$0xff]
      %v8429 = vld [vmem:[%s2738 + $0x20] sm:$0xff]
      %v8430 = vld [vmem:[%s2738 + $0x28] sm:$0xff]
      %v8431 = vld [vmem:[%s2738 + $0x30] sm:$0xff]
      %v8432 = vld [vmem:[%s2738 + $0x38] sm:$0xff]
      %v8433 = vld [vmem:[%s2738 + $0x40] sm:$0xff]
      %v8434 = vld [vmem:[%s2738 + $0x48] sm:$0xff]
      %v8435 = vld [vmem:[%s2738 + $0x50] sm:$0xff]
      %v8436 = vld [vmem:[%s2738 + $0x58] sm:$0xff]
      %v8437 = vld [vmem:[%s2738 + $0x60] sm:$0xff]
      %v8438 = vld [vmem:[%s2738 + $0x68] sm:$0xff]
      %v8439 = vld [vmem:[%s2738 + $0x70] sm:$0xff]
      %v8440 = vld [vmem:[%s2738 + $0x78] sm:$0xff]
      %v8441 = vld [vmem:[%s2738 + $0x80] sm:$0xff]
      %v8442 = vld [vmem:[%s2738 + $0x88] sm:$0xff]
      %v8443 = vld [vmem:[%s2738 + $0x90] sm:$0xff]
      %v8444 = vld [vmem:[%s2738 + $0x98] sm:$0xff]
      %v8445 = vld [vmem:[%s2738 + $0xa0] sm:$0xff]
      %v8446 = vld [vmem:[%s2738 + $0xa8] sm:$0xff]
      %v8447 = vld [vmem:[%s2738 + $0xb0] sm:$0xff]
      %v8448 = vld [vmem:[%s2738 + $0xb8] sm:$0xff]
      %v8449 = vld [vmem:[%s2738 + $0xc0] sm:$0xff]
      %v8450 = vld [vmem:[%s2738 + $0xc8] sm:$0xff]
      %v8451 = vld [vmem:[%s2738 + $0xd0] sm:$0xff]
      %v8452 = vld [vmem:[%s2738 + $0xd8] sm:$0xff]
      %v8453 = vld [vmem:[%s2738 + $0xe0] sm:$0xff]
      %v8454 = vld [vmem:[%s2738 + $0xe8] sm:$0xff]
      %v8455 = vld [vmem:[%s2738 + $0xf0] sm:$0xff]
      %v8456 = vld [vmem:[%s2738 + $0xf8] sm:$0xff]
      %v8457 = vpack.c.bf16 %v8363, %v8361
      %v8458 = vpack.c.bf16 %v8364, %v8362
      %v8459 = vpack.c.bf16 %v8367, %v8365
      %v8460 = vpack.c.bf16 %v8368, %v8366
      %v8461 = vpack.c.bf16 %v8371, %v8369
      %v8462 = vpack.c.bf16 %v8372, %v8370
      %v8463 = vpack.c.bf16 %v8375, %v8373
      %v8464 = vpack.c.bf16 %v8376, %v8374
      %v8465 = vpack.c.bf16 %v8379, %v8377
      %v8466 = vpack.c.bf16 %v8380, %v8378
      %v8467 = vpack.c.bf16 %v8383, %v8381
      %v8468 = vpack.c.bf16 %v8384, %v8382
      %v8469 = vpack.c.bf16 %v8387, %v8385
      %v8470 = vpack.c.bf16 %v8388, %v8386
      %v8471 = vpack.c.bf16 %v8391, %v8389
      %v8472 = vpack.c.bf16 %v8392, %v8390
      %v8473 = vpack.c.bf16 %v8395, %v8393
      %v8474 = vpack.c.bf16 %v8396, %v8394
      %v8475 = vpack.c.bf16 %v8399, %v8397
      %v8476 = vpack.c.bf16 %v8400, %v8398
      %v8477 = vpack.c.bf16 %v8403, %v8401
      %v8478 = vpack.c.bf16 %v8404, %v8402
      %v8479 = vpack.c.bf16 %v8407, %v8405
      %v8480 = vpack.c.bf16 %v8408, %v8406
      %v8481 = vpack.c.bf16 %v8411, %v8409
      %v8482 = vpack.c.bf16 %v8412, %v8410
      %v8483 = vpack.c.bf16 %v8415, %v8413
      %v8484 = vpack.c.bf16 %v8416, %v8414
      %v8485 = vpack.c.bf16 %v8419, %v8417
      %v8486 = vpack.c.bf16 %v8420, %v8418
      %v8487 = vpack.c.bf16 %v8423, %v8421
      %v8488 = vpack.c.bf16 %v8424, %v8422
      %v8489 = vld [vmem:[%s2803] ss:$8 sm:$0x3]
      %v8491 = vlaneseq
      %v8492 = vshrl.u32 %v8491, 7
      %v8493 = vsub.s32 0, %v8492
      %v8494 = vrot.slane %v8489, %v8493
      %v8495 = vlaneseq
      %v8496 = vshrl.u32 %v8495, 7
      %v8497 = vsub.s32 1, %v8496
      %v8498 = vrot.slane %v8489, %v8497
      %v8533 = vunpack.c.l.b16 %v8425
      %v8534 = vunpack.c.h.b16 %v8425
      %v8535 = vunpack.c.l.b16 %v8426
      %v8536 = vunpack.c.h.b16 %v8426
      %v8537 = vunpack.c.l.b16 %v8427
      %v8538 = vunpack.c.h.b16 %v8427
      %v8539 = vunpack.c.l.b16 %v8428
      %v8540 = vunpack.c.h.b16 %v8428
      %v8541 = vunpack.c.l.b16 %v8429
      %v8542 = vunpack.c.h.b16 %v8429
      %v8543 = vunpack.c.l.b16 %v8430
      %v8544 = vunpack.c.h.b16 %v8430
      %v8545 = vunpack.c.l.b16 %v8431
      %v8546 = vunpack.c.h.b16 %v8431
      %v8547 = vunpack.c.l.b16 %v8432
      %v8548 = vunpack.c.h.b16 %v8432
      %v8549 = vunpack.c.l.b16 %v8433
      %v8550 = vunpack.c.h.b16 %v8433
      %v8551 = vunpack.c.l.b16 %v8434
      %v8552 = vunpack.c.h.b16 %v8434
      %v8553 = vunpack.c.l.b16 %v8435
      %v8554 = vunpack.c.h.b16 %v8435
      %v8555 = vunpack.c.l.b16 %v8436
      %v8556 = vunpack.c.h.b16 %v8436
      %v8557 = vunpack.c.l.b16 %v8437
      %v8558 = vunpack.c.h.b16 %v8437
      %v8559 = vunpack.c.l.b16 %v8438
      %v8560 = vunpack.c.h.b16 %v8438
      %v8561 = vunpack.c.l.b16 %v8439
      %v8562 = vunpack.c.h.b16 %v8439
      %v8563 = vunpack.c.l.b16 %v8440
      %v8564 = vunpack.c.h.b16 %v8440
      %v8565 = vunpack.c.l.b16 %v8441
      %v8566 = vunpack.c.h.b16 %v8441
      %v8567 = vunpack.c.l.b16 %v8442
      %v8568 = vunpack.c.h.b16 %v8442
      %v8569 = vunpack.c.l.b16 %v8443
      %v8570 = vunpack.c.h.b16 %v8443
      %v8571 = vunpack.c.l.b16 %v8444
      %v8572 = vunpack.c.h.b16 %v8444
      %v8573 = vunpack.c.l.b16 %v8445
      %v8574 = vunpack.c.h.b16 %v8445
      %v8575 = vunpack.c.l.b16 %v8446
      %v8576 = vunpack.c.h.b16 %v8446
      %v8577 = vunpack.c.l.b16 %v8447
      %v8578 = vunpack.c.h.b16 %v8447
      %v8579 = vunpack.c.l.b16 %v8448
      %v8580 = vunpack.c.h.b16 %v8448
      %v8581 = vunpack.c.l.b16 %v8449
      %v8582 = vunpack.c.h.b16 %v8449
      %v8583 = vunpack.c.l.b16 %v8450
      %v8584 = vunpack.c.h.b16 %v8450
      %v8585 = vunpack.c.l.b16 %v8451
      %v8586 = vunpack.c.h.b16 %v8451
      %v8587 = vunpack.c.l.b16 %v8452
      %v8588 = vunpack.c.h.b16 %v8452
      %v8589 = vunpack.c.l.b16 %v8453
      %v8590 = vunpack.c.h.b16 %v8453
      %v8591 = vunpack.c.l.b16 %v8454
      %v8592 = vunpack.c.h.b16 %v8454
      %v8593 = vunpack.c.l.b16 %v8455
      %v8594 = vunpack.c.h.b16 %v8455
      %v8595 = vunpack.c.l.b16 %v8456
      %v8596 = vunpack.c.h.b16 %v8456
      %v8597 = vpack.c.b16 %v8535, %v8533
      %v8598 = vpack.c.b16 %v8536, %v8534
      %v8599 = vpack.c.b16 %v8539, %v8537
      %v8600 = vpack.c.b16 %v8540, %v8538
      %v8601 = vpack.c.b16 %v8543, %v8541
      %v8602 = vpack.c.b16 %v8544, %v8542
      %v8603 = vpack.c.b16 %v8547, %v8545
      %v8604 = vpack.c.b16 %v8548, %v8546
      %v8605 = vpack.c.b16 %v8551, %v8549
      %v8606 = vpack.c.b16 %v8552, %v8550
      %v8607 = vpack.c.b16 %v8555, %v8553
      %v8608 = vpack.c.b16 %v8556, %v8554
      %v8609 = vpack.c.b16 %v8559, %v8557
      %v8610 = vpack.c.b16 %v8560, %v8558
      %v8611 = vpack.c.b16 %v8563, %v8561
      %v8612 = vpack.c.b16 %v8564, %v8562
      %v8613 = vpack.c.b16 %v8567, %v8565
      %v8614 = vpack.c.b16 %v8568, %v8566
      %v8615 = vpack.c.b16 %v8571, %v8569
      %v8616 = vpack.c.b16 %v8572, %v8570
      %v8617 = vpack.c.b16 %v8575, %v8573
      %v8618 = vpack.c.b16 %v8576, %v8574
      %v8619 = vpack.c.b16 %v8579, %v8577
      %v8620 = vpack.c.b16 %v8580, %v8578
      %v8621 = vpack.c.b16 %v8583, %v8581
      %v8622 = vpack.c.b16 %v8584, %v8582
      %v8623 = vpack.c.b16 %v8587, %v8585
      %v8624 = vpack.c.b16 %v8588, %v8586
      %v8625 = vpack.c.b16 %v8591, %v8589
      %v8626 = vpack.c.b16 %v8592, %v8590
      %v8627 = vpack.c.b16 %v8595, %v8593
      %v8628 = vpack.c.b16 %v8596, %v8594
      %8661 = vmatprep.subr.bf16.mxu0 %v8612
      %8662 = vmatpush1.bf16.msra.mxu0 %v8611
      %8663 = vmatprep.subr.bf16.mxu0 %v8610
      %8664 = vmatpush1.bf16.msra.mxu0 %v8609
      %8665 = vmatprep.subr.bf16.mxu0 %v8608
      %8666 = vmatpush1.bf16.msra.mxu0 %v8607
      %8667 = vmatprep.subr.bf16.mxu0 %v8606
      %8668 = vmatpush1.bf16.msra.mxu0 %v8605
      %8669 = vmatprep.subr.bf16.mxu0 %v8604
      %8670 = vmatpush1.bf16.msra.mxu0 %v8603
      %8671 = vmatprep.subr.bf16.mxu0 %v8602
      %8672 = vmatpush1.bf16.msra.mxu0 %v8601
      %8673 = vmatprep.subr.bf16.mxu0 %v8600
      %8674 = vmatpush1.bf16.msra.mxu0 %v8599
      %8675 = vmatprep.subr.bf16.mxu0 %v8598
      %8676 = vmatpush1.bf16.msra.mxu0 %v8597
      %8677 = vmatprep.subr.bf16.mxu0 %v8628
      %8678 = vmatpush2.bf16.msra.mxu0 %v8627
      %8679 = vmatprep.subr.bf16.mxu0 %v8626
      %8680 = vmatpush2.bf16.msra.mxu0 %v8625
      %8681 = vmatprep.subr.bf16.mxu0 %v8624
      %8682 = vmatpush2.bf16.msra.mxu0 %v8623
      %8683 = vmatprep.subr.bf16.mxu0 %v8622
      %8684 = vmatpush2.bf16.msra.mxu0 %v8621
      %8685 = vmatprep.subr.bf16.mxu0 %v8620
      %8686 = vmatpush2.bf16.msra.mxu0 %v8619
      %8687 = vmatprep.subr.bf16.mxu0 %v8618
      %8688 = vmatpush2.bf16.msra.mxu0 %v8617
      %8689 = vmatprep.subr.bf16.mxu0 %v8616
      %8690 = vmatpush2.bf16.msra.mxu0 %v8615
      %8691 = vmatprep.subr.bf16.mxu0 %v8614
      %8692 = vmatpush2.bf16.msra.mxu0 %v8613
      %8693 = vmatprep.mubr.bf16.mxu0 %v8458
      %8694 = vmatmul.mubr.bf16.gmra.mxu0 %v8457
      %v8695 = vpop.f32.mrf.mxu0
      %v8696 = vadd.f32 %v8494, %v8695
      %v8697 = vpop.f32.mrf.mxu0
      %v8698 = vadd.f32 %v8498, %v8697
      %v8699 = vpop.f32.mrf.mxu0
      %v8700 = vadd.f32 %v8494, %v8699
      %v8701 = vpop.f32.mrf.mxu0
      %v8702 = vadd.f32 %v8498, %v8701
      %8703 = vmatprep.mubr.bf16.mxu0 %v8460
      %8704 = vmatmul.mubr.bf16.gmra.mxu0 %v8459
      %v8705 = vpop.f32.mrf.mxu0
      %v8706 = vadd.f32 %v8494, %v8705
      %v8707 = vpop.f32.mrf.mxu0
      %v8708 = vadd.f32 %v8498, %v8707
      %v8709 = vpop.f32.mrf.mxu0
      %v8710 = vadd.f32 %v8494, %v8709
      %v8711 = vpop.f32.mrf.mxu0
      %v8712 = vadd.f32 %v8498, %v8711
      %8713 = vmatprep.mubr.bf16.mxu0 %v8462
      %8714 = vmatmul.mubr.bf16.gmra.mxu0 %v8461
      %v8715 = vpop.f32.mrf.mxu0
      %v8716 = vadd.f32 %v8494, %v8715
      %v8717 = vpop.f32.mrf.mxu0
      %v8718 = vadd.f32 %v8498, %v8717
      %v8719 = vpop.f32.mrf.mxu0
      %v8720 = vadd.f32 %v8494, %v8719
      %v8721 = vpop.f32.mrf.mxu0
      %v8722 = vadd.f32 %v8498, %v8721
      %8723 = vmatprep.mubr.bf16.mxu0 %v8464
      %8724 = vmatmul.mubr.bf16.gmra.mxu0 %v8463
      %v8725 = vpop.f32.mrf.mxu0
      %v8726 = vadd.f32 %v8494, %v8725
      %v8727 = vpop.f32.mrf.mxu0
      %v8728 = vadd.f32 %v8498, %v8727
      %v8729 = vpop.f32.mrf.mxu0
      %v8730 = vadd.f32 %v8494, %v8729
      %v8731 = vpop.f32.mrf.mxu0
      %v8732 = vadd.f32 %v8498, %v8731
      %8733 = vmatprep.mubr.bf16.mxu0 %v8466
      %8734 = vmatmul.mubr.bf16.gmra.mxu0 %v8465
      %v8735 = vpop.f32.mrf.mxu0
      %v8736 = vadd.f32 %v8494, %v8735
      %v8737 = vpop.f32.mrf.mxu0
      %v8738 = vadd.f32 %v8498, %v8737
      %v8739 = vpop.f32.mrf.mxu0
      %v8740 = vadd.f32 %v8494, %v8739
      %v8741 = vpop.f32.mrf.mxu0
      %v8742 = vadd.f32 %v8498, %v8741
      %8743 = vmatprep.mubr.bf16.mxu0 %v8468
      %8744 = vmatmul.mubr.bf16.gmra.mxu0 %v8467
      %v8745 = vpop.f32.mrf.mxu0
      %v8746 = vadd.f32 %v8494, %v8745
      %v8747 = vpop.f32.mrf.mxu0
      %v8748 = vadd.f32 %v8498, %v8747
      %v8749 = vpop.f32.mrf.mxu0
      %v8750 = vadd.f32 %v8494, %v8749
      %v8751 = vpop.f32.mrf.mxu0
      %v8752 = vadd.f32 %v8498, %v8751
      %8753 = vmatprep.mubr.bf16.mxu0 %v8470
      %8754 = vmatmul.mubr.bf16.gmra.mxu0 %v8469
      %v8755 = vpop.f32.mrf.mxu0
      %v8756 = vadd.f32 %v8494, %v8755
      %v8757 = vpop.f32.mrf.mxu0
      %v8758 = vadd.f32 %v8498, %v8757
      %v8759 = vpop.f32.mrf.mxu0
      %v8760 = vadd.f32 %v8494, %v8759
      %v8761 = vpop.f32.mrf.mxu0
      %v8762 = vadd.f32 %v8498, %v8761
      %8763 = vmatprep.mubr.bf16.mxu0 %v8472
      %8764 = vmatmul.mubr.bf16.gmra.mxu0 %v8471
      %v8765 = vpop.f32.mrf.mxu0
      %v8766 = vadd.f32 %v8494, %v8765
      %v8767 = vpop.f32.mrf.mxu0
      %v8768 = vadd.f32 %v8498, %v8767
      %v8769 = vpop.f32.mrf.mxu0
      %v8770 = vadd.f32 %v8494, %v8769
      %v8771 = vpop.f32.mrf.mxu0
      %v8772 = vadd.f32 %v8498, %v8771
      %8773 = vmatprep.mubr.bf16.mxu0 %v8474
      %8774 = vmatmul.mubr.bf16.gmra.mxu0 %v8473
      %v8775 = vpop.f32.mrf.mxu0
      %v8776 = vadd.f32 %v8494, %v8775
      %v8777 = vpop.f32.mrf.mxu0
      %v8778 = vadd.f32 %v8498, %v8777
      %v8779 = vpop.f32.mrf.mxu0
      %v8780 = vadd.f32 %v8494, %v8779
      %v8781 = vpop.f32.mrf.mxu0
      %v8782 = vadd.f32 %v8498, %v8781
      %8783 = vmatprep.mubr.bf16.mxu0 %v8476
      %8784 = vmatmul.mubr.bf16.gmra.mxu0 %v8475
      %v8785 = vpop.f32.mrf.mxu0
      %v8786 = vadd.f32 %v8494, %v8785
      %v8787 = vpop.f32.mrf.mxu0
      %v8788 = vadd.f32 %v8498, %v8787
      %v8789 = vpop.f32.mrf.mxu0
      %v8790 = vadd.f32 %v8494, %v8789
      %v8791 = vpop.f32.mrf.mxu0
      %v8792 = vadd.f32 %v8498, %v8791
      %8793 = vmatprep.mubr.bf16.mxu0 %v8478
      %8794 = vmatmul.mubr.bf16.gmra.mxu0 %v8477
      %v8795 = vpop.f32.mrf.mxu0
      %v8796 = vadd.f32 %v8494, %v8795
      %v8797 = vpop.f32.mrf.mxu0
      %v8798 = vadd.f32 %v8498, %v8797
      %v8799 = vpop.f32.mrf.mxu0
      %v8800 = vadd.f32 %v8494, %v8799
      %v8801 = vpop.f32.mrf.mxu0
      %v8802 = vadd.f32 %v8498, %v8801
      %8803 = vmatprep.mubr.bf16.mxu0 %v8480
      %8804 = vmatmul.mubr.bf16.gmra.mxu0 %v8479
      %v8805 = vpop.f32.mrf.mxu0
      %v8806 = vadd.f32 %v8494, %v8805
      %v8807 = vpop.f32.mrf.mxu0
      %v8808 = vadd.f32 %v8498, %v8807
      %v8809 = vpop.f32.mrf.mxu0
      %v8810 = vadd.f32 %v8494, %v8809
      %v8811 = vpop.f32.mrf.mxu0
      %v8812 = vadd.f32 %v8498, %v8811
      %8813 = vmatprep.mubr.bf16.mxu0 %v8482
      %8814 = vmatmul.mubr.bf16.gmra.mxu0 %v8481
      %v8815 = vpop.f32.mrf.mxu0
      %v8816 = vadd.f32 %v8494, %v8815
      %v8817 = vpop.f32.mrf.mxu0
      %v8818 = vadd.f32 %v8498, %v8817
      %v8819 = vpop.f32.mrf.mxu0
      %v8820 = vadd.f32 %v8494, %v8819
      %v8821 = vpop.f32.mrf.mxu0
      %v8822 = vadd.f32 %v8498, %v8821
      %8823 = vmatprep.mubr.bf16.mxu0 %v8484
      %8824 = vmatmul.mubr.bf16.gmra.mxu0 %v8483
      %v8825 = vpop.f32.mrf.mxu0
      %v8826 = vadd.f32 %v8494, %v8825
      %v8827 = vpop.f32.mrf.mxu0
      %v8828 = vadd.f32 %v8498, %v8827
      %v8829 = vpop.f32.mrf.mxu0
      %v8830 = vadd.f32 %v8494, %v8829
      %v8831 = vpop.f32.mrf.mxu0
      %v8832 = vadd.f32 %v8498, %v8831
      %8833 = vmatprep.mubr.bf16.mxu0 %v8486
      %8834 = vmatmul.mubr.bf16.gmra.mxu0 %v8485
      %v8835 = vpop.f32.mrf.mxu0
      %v8836 = vadd.f32 %v8494, %v8835
      %v8837 = vpop.f32.mrf.mxu0
      %v8838 = vadd.f32 %v8498, %v8837
      %v8839 = vpop.f32.mrf.mxu0
      %v8840 = vadd.f32 %v8494, %v8839
      %v8841 = vpop.f32.mrf.mxu0
      %v8842 = vadd.f32 %v8498, %v8841
      %8843 = vmatprep.mubr.bf16.mxu0 %v8488
      %8844 = vmatmul.mubr.bf16.gmra.mxu0 %v8487
      %v8845 = vpop.f32.mrf.mxu0
      %v8846 = vadd.f32 %v8494, %v8845
      %v8847 = vpop.f32.mrf.mxu0
      %v8848 = vadd.f32 %v8498, %v8847
      %v8849 = vpop.f32.mrf.mxu0
      %v8850 = vadd.f32 %v8494, %v8849
      %v8851 = vpop.f32.mrf.mxu0
      %v8852 = vadd.f32 %v8498, %v8851
      %8853 = vdwg.mxu0
      %v8854 = vmax.f32 %v8696, 0.0
      %v8855 = vmax.f32 %v8698, 0.0
      %v8856 = vmax.f32 %v8700, 0.0
      %v8857 = vmax.f32 %v8702, 0.0
      %v8858 = vmax.f32 %v8706, 0.0
      %v8859 = vmax.f32 %v8708, 0.0
      %v8860 = vmax.f32 %v8710, 0.0
      %v8861 = vmax.f32 %v8712, 0.0
      %v8862 = vmax.f32 %v8716, 0.0
      %v8863 = vmax.f32 %v8718, 0.0
      %v8864 = vmax.f32 %v8720, 0.0
      %v8865 = vmax.f32 %v8722, 0.0
      %v8866 = vmax.f32 %v8726, 0.0
      %v8867 = vmax.f32 %v8728, 0.0
      %v8868 = vmax.f32 %v8730, 0.0
      %v8869 = vmax.f32 %v8732, 0.0
      %v8870 = vmax.f32 %v8736, 0.0
      %v8871 = vmax.f32 %v8738, 0.0
      %v8872 = vmax.f32 %v8740, 0.0
      %v8873 = vmax.f32 %v8742, 0.0
      %v8874 = vmax.f32 %v8746, 0.0
      %v8875 = vmax.f32 %v8748, 0.0
      %v8876 = vmax.f32 %v8750, 0.0
      %v8877 = vmax.f32 %v8752, 0.0
      %v8878 = vmax.f32 %v8756, 0.0
      %v8879 = vmax.f32 %v8758, 0.0
      %v8880 = vmax.f32 %v8760, 0.0
      %v8881 = vmax.f32 %v8762, 0.0
      %v8882 = vmax.f32 %v8766, 0.0
      %v8883 = vmax.f32 %v8768, 0.0
      %v8884 = vmax.f32 %v8770, 0.0
      %v8885 = vmax.f32 %v8772, 0.0
      %v8886 = vmax.f32 %v8776, 0.0
      %v8887 = vmax.f32 %v8778, 0.0
      %v8888 = vmax.f32 %v8780, 0.0
      %v8889 = vmax.f32 %v8782, 0.0
      %v8890 = vmax.f32 %v8786, 0.0
      %v8891 = vmax.f32 %v8788, 0.0
      %v8892 = vmax.f32 %v8790, 0.0
      %v8893 = vmax.f32 %v8792, 0.0
      %v8894 = vmax.f32 %v8796, 0.0
      %v8895 = vmax.f32 %v8798, 0.0
      %v8896 = vmax.f32 %v8800, 0.0
      %v8897 = vmax.f32 %v8802, 0.0
      %v8898 = vmax.f32 %v8806, 0.0
      %v8899 = vmax.f32 %v8808, 0.0
      %v8900 = vmax.f32 %v8810, 0.0
      %v8901 = vmax.f32 %v8812, 0.0
      %v8902 = vmax.f32 %v8816, 0.0
      %v8903 = vmax.f32 %v8818, 0.0
      %v8904 = vmax.f32 %v8820, 0.0
      %v8905 = vmax.f32 %v8822, 0.0
      %v8906 = vmax.f32 %v8826, 0.0
      %v8907 = vmax.f32 %v8828, 0.0
      %v8908 = vmax.f32 %v8830, 0.0
      %v8909 = vmax.f32 %v8832, 0.0
      %v8910 = vmax.f32 %v8836, 0.0
      %v8911 = vmax.f32 %v8838, 0.0
      %v8912 = vmax.f32 %v8840, 0.0
      %v8913 = vmax.f32 %v8842, 0.0
      %v8914 = vmax.f32 %v8846, 0.0
      %v8915 = vmax.f32 %v8848, 0.0
      %v8916 = vmax.f32 %v8850, 0.0
      %v8917 = vmax.f32 %v8852, 0.0
      %v8918 = vld [vmem:[%s3233] sm:$0xff]
      %v8919 = vld [vmem:[%s3233 + $0x8] sm:$0xff]
      %v8920 = vld [vmem:[%s3233 + $0x10] sm:$0xff]
      %v8921 = vld [vmem:[%s3233 + $0x18] sm:$0xff]
      %v8922 = vld [vmem:[%s3233 + $0x20] sm:$0xff]
      %v8923 = vld [vmem:[%s3233 + $0x28] sm:$0xff]
      %v8924 = vld [vmem:[%s3233 + $0x30] sm:$0xff]
      %v8925 = vld [vmem:[%s3233 + $0x38] sm:$0xff]
      %v8926 = vld [vmem:[%s3233 + $0x40] sm:$0xff]
      %v8927 = vld [vmem:[%s3233 + $0x48] sm:$0xff]
      %v8928 = vld [vmem:[%s3233 + $0x50] sm:$0xff]
      %v8929 = vld [vmem:[%s3233 + $0x58] sm:$0xff]
      %v8930 = vld [vmem:[%s3233 + $0x60] sm:$0xff]
      %v8931 = vld [vmem:[%s3233 + $0x68] sm:$0xff]
      %v8932 = vld [vmem:[%s3233 + $0x70] sm:$0xff]
      %v8933 = vld [vmem:[%s3233 + $0x78] sm:$0xff]
      %v8934 = vld [vmem:[%s3233 + $0x80] sm:$0xff]
      %v8935 = vld [vmem:[%s3233 + $0x88] sm:$0xff]
      %v8936 = vld [vmem:[%s3233 + $0x90] sm:$0xff]
      %v8937 = vld [vmem:[%s3233 + $0x98] sm:$0xff]
      %v8938 = vld [vmem:[%s3233 + $0xa0] sm:$0xff]
      %v8939 = vld [vmem:[%s3233 + $0xa8] sm:$0xff]
      %v8940 = vld [vmem:[%s3233 + $0xb0] sm:$0xff]
      %v8941 = vld [vmem:[%s3233 + $0xb8] sm:$0xff]
      %v8942 = vld [vmem:[%s3233 + $0xc0] sm:$0xff]
      %v8943 = vld [vmem:[%s3233 + $0xc8] sm:$0xff]
      %v8944 = vld [vmem:[%s3233 + $0xd0] sm:$0xff]
      %v8945 = vld [vmem:[%s3233 + $0xd8] sm:$0xff]
      %v8946 = vld [vmem:[%s3233 + $0xe0] sm:$0xff]
      %v8947 = vld [vmem:[%s3233 + $0xe8] sm:$0xff]
      %v8948 = vld [vmem:[%s3233 + $0xf0] sm:$0xff]
      %v8949 = vld [vmem:[%s3233 + $0xf8] sm:$0xff]
      %v8950 = vpack.c.bf16 %v8856, %v8854
      %v8951 = vpack.c.bf16 %v8857, %v8855
      %v8952 = vpack.c.bf16 %v8860, %v8858
      %v8953 = vpack.c.bf16 %v8861, %v8859
      %v8954 = vpack.c.bf16 %v8864, %v8862
      %v8955 = vpack.c.bf16 %v8865, %v8863
      %v8956 = vpack.c.bf16 %v8868, %v8866
      %v8957 = vpack.c.bf16 %v8869, %v8867
      %v8958 = vpack.c.bf16 %v8872, %v8870
      %v8959 = vpack.c.bf16 %v8873, %v8871
      %v8960 = vpack.c.bf16 %v8876, %v8874
      %v8961 = vpack.c.bf16 %v8877, %v8875
      %v8962 = vpack.c.bf16 %v8880, %v8878
      %v8963 = vpack.c.bf16 %v8881, %v8879
      %v8964 = vpack.c.bf16 %v8884, %v8882
      %v8965 = vpack.c.bf16 %v8885, %v8883
      %v8966 = vpack.c.bf16 %v8888, %v8886
      %v8967 = vpack.c.bf16 %v8889, %v8887
      %v8968 = vpack.c.bf16 %v8892, %v8890
      %v8969 = vpack.c.bf16 %v8893, %v8891
      %v8970 = vpack.c.bf16 %v8896, %v8894
      %v8971 = vpack.c.bf16 %v8897, %v8895
      %v8972 = vpack.c.bf16 %v8900, %v8898
      %v8973 = vpack.c.bf16 %v8901, %v8899
      %v8974 = vpack.c.bf16 %v8904, %v8902
      %v8975 = vpack.c.bf16 %v8905, %v8903
      %v8976 = vpack.c.bf16 %v8908, %v8906
      %v8977 = vpack.c.bf16 %v8909, %v8907
      %v8978 = vpack.c.bf16 %v8912, %v8910
      %v8979 = vpack.c.bf16 %v8913, %v8911
      %v8980 = vpack.c.bf16 %v8916, %v8914
      %v8981 = vpack.c.bf16 %v8917, %v8915
      %v8982 = vld [vmem:[%s5] ss:$4 sm:$0x3]
      %v8984 = vlaneseq
      %v8985 = vshrl.u32 %v8984, 7
      %v8986 = vsub.s32 0, %v8985
      %v8987 = vrot.slane %v8982, %v8986
      %v8988 = vlaneseq
      %v8989 = vshrl.u32 %v8988, 7
      %v8990 = vsub.s32 1, %v8989
      %v8991 = vrot.slane %v8982, %v8990
      %v8994 = vmul.f32 %v6038, %v8987
      %v8995 = vmul.f32 %v6038, %v8991
      %v8996 = vmul.f32 %v6043, %v8987
      %v8997 = vmul.f32 %v6043, %v8991
      %v8998 = vmul.f32 %v6048, %v8987
      %v8999 = vmul.f32 %v6048, %v8991
      %v9000 = vmul.f32 %v6053, %v8987
      %v9001 = vmul.f32 %v6053, %v8991
      %v9002 = vmul.f32 %v6058, %v8987
      %v9003 = vmul.f32 %v6058, %v8991
      %v9004 = vmul.f32 %v6063, %v8987
      %v9005 = vmul.f32 %v6063, %v8991
      %v9006 = vmul.f32 %v6068, %v8987
      %v9007 = vmul.f32 %v6068, %v8991
      %v9008 = vmul.f32 %v6073, %v8987
      %v9009 = vmul.f32 %v6073, %v8991
      %v9010 = vmul.f32 %v6078, %v8987
      %v9011 = vmul.f32 %v6078, %v8991
      %v9012 = vmul.f32 %v6083, %v8987
      %v9013 = vmul.f32 %v6083, %v8991
      %v9014 = vmul.f32 %v6088, %v8987
      %v9015 = vmul.f32 %v6088, %v8991
      %v9016 = vmul.f32 %v6093, %v8987
      %v9017 = vmul.f32 %v6093, %v8991
      %v9018 = vmul.f32 %v6098, %v8987
      %v9019 = vmul.f32 %v6098, %v8991
      %v9020 = vmul.f32 %v6103, %v8987
      %v9021 = vmul.f32 %v6103, %v8991
      %v9022 = vmul.f32 %v6108, %v8987
      %v9023 = vmul.f32 %v6108, %v8991
      %v9024 = vmul.f32 %v6113, %v8987
      %v9025 = vmul.f32 %v6113, %v8991
      %v9026 = vmul.f32 %v6118, %v8987
      %v9027 = vmul.f32 %v6118, %v8991
      %v9028 = vmul.f32 %v6123, %v8987
      %v9029 = vmul.f32 %v6123, %v8991
      %v9030 = vmul.f32 %v6128, %v8987
      %v9031 = vmul.f32 %v6128, %v8991
      %v9032 = vmul.f32 %v6133, %v8987
      %v9033 = vmul.f32 %v6133, %v8991
      %v9034 = vmul.f32 %v6138, %v8987
      %v9035 = vmul.f32 %v6138, %v8991
      %v9036 = vmul.f32 %v6143, %v8987
      %v9037 = vmul.f32 %v6143, %v8991
      %v9038 = vmul.f32 %v6148, %v8987
      %v9039 = vmul.f32 %v6148, %v8991
      %v9040 = vmul.f32 %v6153, %v8987
      %v9041 = vmul.f32 %v6153, %v8991
      %v9042 = vmul.f32 %v6158, %v8987
      %v9043 = vmul.f32 %v6158, %v8991
      %v9044 = vmul.f32 %v6163, %v8987
      %v9045 = vmul.f32 %v6163, %v8991
      %v9046 = vmul.f32 %v6168, %v8987
      %v9047 = vmul.f32 %v6168, %v8991
      %v9048 = vmul.f32 %v6173, %v8987
      %v9049 = vmul.f32 %v6173, %v8991
      %v9050 = vmul.f32 %v6178, %v8987
      %v9051 = vmul.f32 %v6178, %v8991
      %v9052 = vmul.f32 %v6183, %v8987
      %v9053 = vmul.f32 %v6183, %v8991
      %v9054 = vmul.f32 %v6188, %v8987
      %v9055 = vmul.f32 %v6188, %v8991
      %v9056 = vmul.f32 %v6193, %v8987
      %v9057 = vmul.f32 %v6193, %v8991
      %v9058 = vld [vmem:[%s3374] ss:$4 sm:$0x3]
      %v9060 = vlaneseq
      %v9061 = vshrl.u32 %v9060, 7
      %v9062 = vsub.s32 0, %v9061
      %v9063 = vrot.slane %v9058, %v9062
      %v9064 = vlaneseq
      %v9065 = vshrl.u32 %v9064, 7
      %v9066 = vsub.s32 1, %v9065
      %v9067 = vrot.slane %v9058, %v9066
      %v9070 = vmul.f32 %v6273, %v9063
      %v9071 = vmul.f32 %v6273, %v9067
      %v9072 = vmul.f32 %v6277, %v9063
      %v9073 = vmul.f32 %v6277, %v9067
      %v9074 = vmul.f32 %v6281, %v9063
      %v9075 = vmul.f32 %v6281, %v9067
      %v9076 = vmul.f32 %v6285, %v9063
      %v9077 = vmul.f32 %v6285, %v9067
      %v9078 = vmul.f32 %v6289, %v9063
      %v9079 = vmul.f32 %v6289, %v9067
      %v9080 = vmul.f32 %v6293, %v9063
      %v9081 = vmul.f32 %v6293, %v9067
      %v9082 = vmul.f32 %v6297, %v9063
      %v9083 = vmul.f32 %v6297, %v9067
      %v9084 = vmul.f32 %v6301, %v9063
      %v9085 = vmul.f32 %v6301, %v9067
      %v9086 = vmul.f32 %v6305, %v9063
      %v9087 = vmul.f32 %v6305, %v9067
      %v9088 = vmul.f32 %v6309, %v9063
      %v9089 = vmul.f32 %v6309, %v9067
      %v9090 = vmul.f32 %v6313, %v9063
      %v9091 = vmul.f32 %v6313, %v9067
      %v9092 = vmul.f32 %v6317, %v9063
      %v9093 = vmul.f32 %v6317, %v9067
      %v9094 = vmul.f32 %v6321, %v9063
      %v9095 = vmul.f32 %v6321, %v9067
      %v9096 = vmul.f32 %v6325, %v9063
      %v9097 = vmul.f32 %v6325, %v9067
      %v9098 = vmul.f32 %v6329, %v9063
      %v9099 = vmul.f32 %v6329, %v9067
      %v9100 = vmul.f32 %v6333, %v9063
      %v9101 = vmul.f32 %v6333, %v9067
      %v9102 = vmul.f32 %v6337, %v9063
      %v9103 = vmul.f32 %v6337, %v9067
      %v9104 = vmul.f32 %v6341, %v9063
      %v9105 = vmul.f32 %v6341, %v9067
      %v9106 = vmul.f32 %v6345, %v9063
      %v9107 = vmul.f32 %v6345, %v9067
      %v9108 = vmul.f32 %v6349, %v9063
      %v9109 = vmul.f32 %v6349, %v9067
      %v9110 = vmul.f32 %v6353, %v9063
      %v9111 = vmul.f32 %v6353, %v9067
      %v9112 = vmul.f32 %v6357, %v9063
      %v9113 = vmul.f32 %v6357, %v9067
      %v9114 = vmul.f32 %v6361, %v9063
      %v9115 = vmul.f32 %v6361, %v9067
      %v9116 = vmul.f32 %v6365, %v9063
      %v9117 = vmul.f32 %v6365, %v9067
      %v9118 = vmul.f32 %v6369, %v9063
      %v9119 = vmul.f32 %v6369, %v9067
      %v9120 = vmul.f32 %v6373, %v9063
      %v9121 = vmul.f32 %v6373, %v9067
      %v9122 = vmul.f32 %v6377, %v9063
      %v9123 = vmul.f32 %v6377, %v9067
      %v9124 = vmul.f32 %v6381, %v9063
      %v9125 = vmul.f32 %v6381, %v9067
      %v9126 = vmul.f32 %v6385, %v9063
      %v9127 = vmul.f32 %v6385, %v9067
      %v9128 = vmul.f32 %v6389, %v9063
      %v9129 = vmul.f32 %v6389, %v9067
      %v9130 = vmul.f32 %v6393, %v9063
      %v9131 = vmul.f32 %v6393, %v9067
      %v9132 = vmul.f32 %v6397, %v9063
      %v9133 = vmul.f32 %v6397, %v9067
      %v9134 = vadd.f32 %v8994, %v9070
      %v9135 = vadd.f32 %v8995, %v9071
      %v9136 = vadd.f32 %v8996, %v9072
      %v9137 = vadd.f32 %v8997, %v9073
      %v9138 = vadd.f32 %v8998, %v9074
      %v9139 = vadd.f32 %v8999, %v9075
      %v9140 = vadd.f32 %v9000, %v9076
      %v9141 = vadd.f32 %v9001, %v9077
      %v9142 = vadd.f32 %v9002, %v9078
      %v9143 = vadd.f32 %v9003, %v9079
      %v9144 = vadd.f32 %v9004, %v9080
      %v9145 = vadd.f32 %v9005, %v9081
      %v9146 = vadd.f32 %v9006, %v9082
      %v9147 = vadd.f32 %v9007, %v9083
      %v9148 = vadd.f32 %v9008, %v9084
      %v9149 = vadd.f32 %v9009, %v9085
      %v9150 = vadd.f32 %v9010, %v9086
      %v9151 = vadd.f32 %v9011, %v9087
      %v9152 = vadd.f32 %v9012, %v9088
      %v9153 = vadd.f32 %v9013, %v9089
      %v9154 = vadd.f32 %v9014, %v9090
      %v9155 = vadd.f32 %v9015, %v9091
      %v9156 = vadd.f32 %v9016, %v9092
      %v9157 = vadd.f32 %v9017, %v9093
      %v9158 = vadd.f32 %v9018, %v9094
      %v9159 = vadd.f32 %v9019, %v9095
      %v9160 = vadd.f32 %v9020, %v9096
      %v9161 = vadd.f32 %v9021, %v9097
      %v9162 = vadd.f32 %v9022, %v9098
      %v9163 = vadd.f32 %v9023, %v9099
      %v9164 = vadd.f32 %v9024, %v9100
      %v9165 = vadd.f32 %v9025, %v9101
      %v9166 = vadd.f32 %v9026, %v9102
      %v9167 = vadd.f32 %v9027, %v9103
      %v9168 = vadd.f32 %v9028, %v9104
      %v9169 = vadd.f32 %v9029, %v9105
      %v9170 = vadd.f32 %v9030, %v9106
      %v9171 = vadd.f32 %v9031, %v9107
      %v9172 = vadd.f32 %v9032, %v9108
      %v9173 = vadd.f32 %v9033, %v9109
      %v9174 = vadd.f32 %v9034, %v9110
      %v9175 = vadd.f32 %v9035, %v9111
      %v9176 = vadd.f32 %v9036, %v9112
      %v9177 = vadd.f32 %v9037, %v9113
      %v9178 = vadd.f32 %v9038, %v9114
      %v9179 = vadd.f32 %v9039, %v9115
      %v9180 = vadd.f32 %v9040, %v9116
      %v9181 = vadd.f32 %v9041, %v9117
      %v9182 = vadd.f32 %v9042, %v9118
      %v9183 = vadd.f32 %v9043, %v9119
      %v9184 = vadd.f32 %v9044, %v9120
      %v9185 = vadd.f32 %v9045, %v9121
      %v9186 = vadd.f32 %v9046, %v9122
      %v9187 = vadd.f32 %v9047, %v9123
      %v9188 = vadd.f32 %v9048, %v9124
      %v9189 = vadd.f32 %v9049, %v9125
      %v9190 = vadd.f32 %v9050, %v9126
      %v9191 = vadd.f32 %v9051, %v9127
      %v9192 = vadd.f32 %v9052, %v9128
      %v9193 = vadd.f32 %v9053, %v9129
      %v9194 = vadd.f32 %v9054, %v9130
      %v9195 = vadd.f32 %v9055, %v9131
      %v9196 = vadd.f32 %v9056, %v9132
      %v9197 = vadd.f32 %v9057, %v9133
      %v9198 = vld [vmem:[%s3515] ss:$4 sm:$0x3]
      %v9200 = vlaneseq
      %v9201 = vshrl.u32 %v9200, 7
      %v9202 = vsub.s32 0, %v9201
      %v9203 = vrot.slane %v9198, %v9202
      %v9204 = vlaneseq
      %v9205 = vshrl.u32 %v9204, 7
      %v9206 = vsub.s32 1, %v9205
      %v9207 = vrot.slane %v9198, %v9206
      %v9210 = vmul.f32 %v6541, %v9203
      %v9211 = vmul.f32 %v6541, %v9207
      %v9212 = vmul.f32 %v6545, %v9203
      %v9213 = vmul.f32 %v6545, %v9207
      %v9214 = vmul.f32 %v6549, %v9203
      %v9215 = vmul.f32 %v6549, %v9207
      %v9216 = vmul.f32 %v6553, %v9203
      %v9217 = vmul.f32 %v6553, %v9207
      %v9218 = vmul.f32 %v6557, %v9203
      %v9219 = vmul.f32 %v6557, %v9207
      %v9220 = vmul.f32 %v6561, %v9203
      %v9221 = vmul.f32 %v6561, %v9207
      %v9222 = vmul.f32 %v6565, %v9203
      %v9223 = vmul.f32 %v6565, %v9207
      %v9224 = vmul.f32 %v6569, %v9203
      %v9225 = vmul.f32 %v6569, %v9207
      %v9226 = vmul.f32 %v6573, %v9203
      %v9227 = vmul.f32 %v6573, %v9207
      %v9228 = vmul.f32 %v6577, %v9203
      %v9229 = vmul.f32 %v6577, %v9207
      %v9230 = vmul.f32 %v6581, %v9203
      %v9231 = vmul.f32 %v6581, %v9207
      %v9232 = vmul.f32 %v6585, %v9203
      %v9233 = vmul.f32 %v6585, %v9207
      %v9234 = vmul.f32 %v6589, %v9203
      %v9235 = vmul.f32 %v6589, %v9207
      %v9236 = vmul.f32 %v6593, %v9203
      %v9237 = vmul.f32 %v6593, %v9207
      %v9238 = vmul.f32 %v6597, %v9203
      %v9239 = vmul.f32 %v6597, %v9207
      %v9240 = vmul.f32 %v6601, %v9203
      %v9241 = vmul.f32 %v6601, %v9207
      %v9242 = vmul.f32 %v6605, %v9203
      %v9243 = vmul.f32 %v6605, %v9207
      %v9244 = vmul.f32 %v6609, %v9203
      %v9245 = vmul.f32 %v6609, %v9207
      %v9246 = vmul.f32 %v6613, %v9203
      %v9247 = vmul.f32 %v6613, %v9207
      %v9248 = vmul.f32 %v6617, %v9203
      %v9249 = vmul.f32 %v6617, %v9207
      %v9250 = vmul.f32 %v6621, %v9203
      %v9251 = vmul.f32 %v6621, %v9207
      %v9252 = vmul.f32 %v6625, %v9203
      %v9253 = vmul.f32 %v6625, %v9207
      %v9254 = vmul.f32 %v6629, %v9203
      %v9255 = vmul.f32 %v6629, %v9207
      %v9256 = vmul.f32 %v6633, %v9203
      %v9257 = vmul.f32 %v6633, %v9207
      %v9258 = vmul.f32 %v6637, %v9203
      %v9259 = vmul.f32 %v6637, %v9207
      %v9260 = vmul.f32 %v6641, %v9203
      %v9261 = vmul.f32 %v6641, %v9207
      %v9262 = vmul.f32 %v6645, %v9203
      %v9263 = vmul.f32 %v6645, %v9207
      %v9264 = vmul.f32 %v6649, %v9203
      %v9265 = vmul.f32 %v6649, %v9207
      %v9266 = vmul.f32 %v6653, %v9203
      %v9267 = vmul.f32 %v6653, %v9207
      %v9268 = vmul.f32 %v6657, %v9203
      %v9269 = vmul.f32 %v6657, %v9207
      %v9270 = vmul.f32 %v6661, %v9203
      %v9271 = vmul.f32 %v6661, %v9207
      %v9272 = vmul.f32 %v6665, %v9203
      %v9273 = vmul.f32 %v6665, %v9207
      %v9274 = vadd.f32 %v9134, %v9210
      %v9275 = vadd.f32 %v9135, %v9211
      %v9276 = vadd.f32 %v9136, %v9212
      %v9277 = vadd.f32 %v9137, %v9213
      %v9278 = vadd.f32 %v9138, %v9214
      %v9279 = vadd.f32 %v9139, %v9215
      %v9280 = vadd.f32 %v9140, %v9216
      %v9281 = vadd.f32 %v9141, %v9217
      %v9282 = vadd.f32 %v9142, %v9218
      %v9283 = vadd.f32 %v9143, %v9219
      %v9284 = vadd.f32 %v9144, %v9220
      %v9285 = vadd.f32 %v9145, %v9221
      %v9286 = vadd.f32 %v9146, %v9222
      %v9287 = vadd.f32 %v9147, %v9223
      %v9288 = vadd.f32 %v9148, %v9224
      %v9289 = vadd.f32 %v9149, %v9225
      %v9290 = vadd.f32 %v9150, %v9226
      %v9291 = vadd.f32 %v9151, %v9227
      %v9292 = vadd.f32 %v9152, %v9228
      %v9293 = vadd.f32 %v9153, %v9229
      %v9294 = vadd.f32 %v9154, %v9230
      %v9295 = vadd.f32 %v9155, %v9231
      %v9296 = vadd.f32 %v9156, %v9232
      %v9297 = vadd.f32 %v9157, %v9233
      %v9298 = vadd.f32 %v9158, %v9234
      %v9299 = vadd.f32 %v9159, %v9235
      %v9300 = vadd.f32 %v9160, %v9236
      %v9301 = vadd.f32 %v9161, %v9237
      %v9302 = vadd.f32 %v9162, %v9238
      %v9303 = vadd.f32 %v9163, %v9239
      %v9304 = vadd.f32 %v9164, %v9240
      %v9305 = vadd.f32 %v9165, %v9241
      %v9306 = vadd.f32 %v9166, %v9242
      %v9307 = vadd.f32 %v9167, %v9243
      %v9308 = vadd.f32 %v9168, %v9244
      %v9309 = vadd.f32 %v9169, %v9245
      %v9310 = vadd.f32 %v9170, %v9246
      %v9311 = vadd.f32 %v9171, %v9247
      %v9312 = vadd.f32 %v9172, %v9248
      %v9313 = vadd.f32 %v9173, %v9249
      %v9314 = vadd.f32 %v9174, %v9250
      %v9315 = vadd.f32 %v9175, %v9251
      %v9316 = vadd.f32 %v9176, %v9252
      %v9317 = vadd.f32 %v9177, %v9253
      %v9318 = vadd.f32 %v9178, %v9254
      %v9319 = vadd.f32 %v9179, %v9255
      %v9320 = vadd.f32 %v9180, %v9256
      %v9321 = vadd.f32 %v9181, %v9257
      %v9322 = vadd.f32 %v9182, %v9258
      %v9323 = vadd.f32 %v9183, %v9259
      %v9324 = vadd.f32 %v9184, %v9260
      %v9325 = vadd.f32 %v9185, %v9261
      %v9326 = vadd.f32 %v9186, %v9262
      %v9327 = vadd.f32 %v9187, %v9263
      %v9328 = vadd.f32 %v9188, %v9264
      %v9329 = vadd.f32 %v9189, %v9265
      %v9330 = vadd.f32 %v9190, %v9266
      %v9331 = vadd.f32 %v9191, %v9267
      %v9332 = vadd.f32 %v9192, %v9268
      %v9333 = vadd.f32 %v9193, %v9269
      %v9334 = vadd.f32 %v9194, %v9270
      %v9335 = vadd.f32 %v9195, %v9271
      %v9336 = vadd.f32 %v9196, %v9272
      %v9337 = vadd.f32 %v9197, %v9273
      %v9370 = vunpack.c.l.b16 %v8918
      %v9371 = vunpack.c.h.b16 %v8918
      %v9372 = vunpack.c.l.b16 %v8919
      %v9373 = vunpack.c.h.b16 %v8919
      %v9374 = vunpack.c.l.b16 %v8920
      %v9375 = vunpack.c.h.b16 %v8920
      %v9376 = vunpack.c.l.b16 %v8921
      %v9377 = vunpack.c.h.b16 %v8921
      %v9378 = vunpack.c.l.b16 %v8922
      %v9379 = vunpack.c.h.b16 %v8922
      %v9380 = vunpack.c.l.b16 %v8923
      %v9381 = vunpack.c.h.b16 %v8923
      %v9382 = vunpack.c.l.b16 %v8924
      %v9383 = vunpack.c.h.b16 %v8924
      %v9384 = vunpack.c.l.b16 %v8925
      %v9385 = vunpack.c.h.b16 %v8925
      %v9386 = vunpack.c.l.b16 %v8926
      %v9387 = vunpack.c.h.b16 %v8926
      %v9388 = vunpack.c.l.b16 %v8927
      %v9389 = vunpack.c.h.b16 %v8927
      %v9390 = vunpack.c.l.b16 %v8928
      %v9391 = vunpack.c.h.b16 %v8928
      %v9392 = vunpack.c.l.b16 %v8929
      %v9393 = vunpack.c.h.b16 %v8929
      %v9394 = vunpack.c.l.b16 %v8930
      %v9395 = vunpack.c.h.b16 %v8930
      %v9396 = vunpack.c.l.b16 %v8931
      %v9397 = vunpack.c.h.b16 %v8931
      %v9398 = vunpack.c.l.b16 %v8932
      %v9399 = vunpack.c.h.b16 %v8932
      %v9400 = vunpack.c.l.b16 %v8933
      %v9401 = vunpack.c.h.b16 %v8933
      %v9402 = vunpack.c.l.b16 %v8934
      %v9403 = vunpack.c.h.b16 %v8934
      %v9404 = vunpack.c.l.b16 %v8935
      %v9405 = vunpack.c.h.b16 %v8935
      %v9406 = vunpack.c.l.b16 %v8936
      %v9407 = vunpack.c.h.b16 %v8936
      %v9408 = vunpack.c.l.b16 %v8937
      %v9409 = vunpack.c.h.b16 %v8937
      %v9410 = vunpack.c.l.b16 %v8938
      %v9411 = vunpack.c.h.b16 %v8938
      %v9412 = vunpack.c.l.b16 %v8939
      %v9413 = vunpack.c.h.b16 %v8939
      %v9414 = vunpack.c.l.b16 %v8940
      %v9415 = vunpack.c.h.b16 %v8940
      %v9416 = vunpack.c.l.b16 %v8941
      %v9417 = vunpack.c.h.b16 %v8941
      %v9418 = vunpack.c.l.b16 %v8942
      %v9419 = vunpack.c.h.b16 %v8942
      %v9420 = vunpack.c.l.b16 %v8943
      %v9421 = vunpack.c.h.b16 %v8943
      %v9422 = vunpack.c.l.b16 %v8944
      %v9423 = vunpack.c.h.b16 %v8944
      %v9424 = vunpack.c.l.b16 %v8945
      %v9425 = vunpack.c.h.b16 %v8945
      %v9426 = vunpack.c.l.b16 %v8946
      %v9427 = vunpack.c.h.b16 %v8946
      %v9428 = vunpack.c.l.b16 %v8947
      %v9429 = vunpack.c.h.b16 %v8947
      %v9430 = vunpack.c.l.b16 %v8948
      %v9431 = vunpack.c.h.b16 %v8948
      %v9432 = vunpack.c.l.b16 %v8949
      %v9433 = vunpack.c.h.b16 %v8949
      %v9434 = vpack.c.b16 %v9372, %v9370
      %v9435 = vpack.c.b16 %v9373, %v9371
      %v9436 = vpack.c.b16 %v9376, %v9374
      %v9437 = vpack.c.b16 %v9377, %v9375
      %v9438 = vpack.c.b16 %v9380, %v9378
      %v9439 = vpack.c.b16 %v9381, %v9379
      %v9440 = vpack.c.b16 %v9384, %v9382
      %v9441 = vpack.c.b16 %v9385, %v9383
      %v9442 = vpack.c.b16 %v9388, %v9386
      %v9443 = vpack.c.b16 %v9389, %v9387
      %v9444 = vpack.c.b16 %v9392, %v9390
      %v9445 = vpack.c.b16 %v9393, %v9391
      %v9446 = vpack.c.b16 %v9396, %v9394
      %v9447 = vpack.c.b16 %v9397, %v9395
      %v9448 = vpack.c.b16 %v9400, %v9398
      %v9449 = vpack.c.b16 %v9401, %v9399
      %v9450 = vpack.c.b16 %v9404, %v9402
      %v9451 = vpack.c.b16 %v9405, %v9403
      %v9452 = vpack.c.b16 %v9408, %v9406
      %v9453 = vpack.c.b16 %v9409, %v9407
      %v9454 = vpack.c.b16 %v9412, %v9410
      %v9455 = vpack.c.b16 %v9413, %v9411
      %v9456 = vpack.c.b16 %v9416, %v9414
      %v9457 = vpack.c.b16 %v9417, %v9415
      %v9458 = vpack.c.b16 %v9420, %v9418
      %v9459 = vpack.c.b16 %v9421, %v9419
      %v9460 = vpack.c.b16 %v9424, %v9422
      %v9461 = vpack.c.b16 %v9425, %v9423
      %v9462 = vpack.c.b16 %v9428, %v9426
      %v9463 = vpack.c.b16 %v9429, %v9427
      %v9464 = vpack.c.b16 %v9432, %v9430
      %v9465 = vpack.c.b16 %v9433, %v9431
      %9498 = vmatprep.subr.bf16.mxu0 %v9449
      %9499 = vmatpush1.bf16.msra.mxu0 %v9448
      %9500 = vmatprep.subr.bf16.mxu0 %v9447
      %9501 = vmatpush1.bf16.msra.mxu0 %v9446
      %9502 = vmatprep.subr.bf16.mxu0 %v9445
      %9503 = vmatpush1.bf16.msra.mxu0 %v9444
      %9504 = vmatprep.subr.bf16.mxu0 %v9443
      %9505 = vmatpush1.bf16.msra.mxu0 %v9442
      %9506 = vmatprep.subr.bf16.mxu0 %v9441
      %9507 = vmatpush1.bf16.msra.mxu0 %v9440
      %9508 = vmatprep.subr.bf16.mxu0 %v9439
      %9509 = vmatpush1.bf16.msra.mxu0 %v9438
      %9510 = vmatprep.subr.bf16.mxu0 %v9437
      %9511 = vmatpush1.bf16.msra.mxu0 %v9436
      %9512 = vmatprep.subr.bf16.mxu0 %v9435
      %9513 = vmatpush1.bf16.msra.mxu0 %v9434
      %9514 = vmatprep.subr.bf16.mxu0 %v9465
      %9515 = vmatpush2.bf16.msra.mxu0 %v9464
      %9516 = vmatprep.subr.bf16.mxu0 %v9463
      %9517 = vmatpush2.bf16.msra.mxu0 %v9462
      %9518 = vmatprep.subr.bf16.mxu0 %v9461
      %9519 = vmatpush2.bf16.msra.mxu0 %v9460
      %9520 = vmatprep.subr.bf16.mxu0 %v9459
      %9521 = vmatpush2.bf16.msra.mxu0 %v9458
      %9522 = vmatprep.subr.bf16.mxu0 %v9457
      %9523 = vmatpush2.bf16.msra.mxu0 %v9456
      %9524 = vmatprep.subr.bf16.mxu0 %v9455
      %9525 = vmatpush2.bf16.msra.mxu0 %v9454
      %9526 = vmatprep.subr.bf16.mxu0 %v9453
      %9527 = vmatpush2.bf16.msra.mxu0 %v9452
      %9528 = vmatprep.subr.bf16.mxu0 %v9451
      %9529 = vmatpush2.bf16.msra.mxu0 %v9450
      %9530 = vmatprep.mubr.bf16.mxu0 %v8951
      %9531 = vmatmul.mubr.bf16.gmra.mxu0 %v8950
      %v9532 = vpop.f32.mrf.mxu0
      %v9533 = vadd.f32 %v9274, %v9532
      %v9534 = vpop.f32.mrf.mxu0
      %v9535 = vadd.f32 %v9275, %v9534
      %v9536 = vpop.f32.mrf.mxu0
      %v9537 = vadd.f32 %v9276, %v9536
      %v9538 = vpop.f32.mrf.mxu0
      %v9539 = vadd.f32 %v9277, %v9538
      %9540 = vmatprep.mubr.bf16.mxu0 %v8953
      %9541 = vmatmul.mubr.bf16.gmra.mxu0 %v8952
      %v9542 = vpop.f32.mrf.mxu0
      %v9543 = vadd.f32 %v9278, %v9542
      %v9544 = vpop.f32.mrf.mxu0
      %v9545 = vadd.f32 %v9279, %v9544
      %v9546 = vpop.f32.mrf.mxu0
      %v9547 = vadd.f32 %v9280, %v9546
      %v9548 = vpop.f32.mrf.mxu0
      %v9549 = vadd.f32 %v9281, %v9548
      %9550 = vmatprep.mubr.bf16.mxu0 %v8955
      %9551 = vmatmul.mubr.bf16.gmra.mxu0 %v8954
      %v9552 = vpop.f32.mrf.mxu0
      %v9553 = vadd.f32 %v9282, %v9552
      %v9554 = vpop.f32.mrf.mxu0
      %v9555 = vadd.f32 %v9283, %v9554
      %v9556 = vpop.f32.mrf.mxu0
      %v9557 = vadd.f32 %v9284, %v9556
      %v9558 = vpop.f32.mrf.mxu0
      %v9559 = vadd.f32 %v9285, %v9558
      %9560 = vmatprep.mubr.bf16.mxu0 %v8957
      %9561 = vmatmul.mubr.bf16.gmra.mxu0 %v8956
      %v9562 = vpop.f32.mrf.mxu0
      %v9563 = vadd.f32 %v9286, %v9562
      %v9564 = vpop.f32.mrf.mxu0
      %v9565 = vadd.f32 %v9287, %v9564
      %v9566 = vpop.f32.mrf.mxu0
      %v9567 = vadd.f32 %v9288, %v9566
      %v9568 = vpop.f32.mrf.mxu0
      %v9569 = vadd.f32 %v9289, %v9568
      %9570 = vmatprep.mubr.bf16.mxu0 %v8959
      %9571 = vmatmul.mubr.bf16.gmra.mxu0 %v8958
      %v9572 = vpop.f32.mrf.mxu0
      %v9573 = vadd.f32 %v9290, %v9572
      %v9574 = vpop.f32.mrf.mxu0
      %v9575 = vadd.f32 %v9291, %v9574
      %v9576 = vpop.f32.mrf.mxu0
      %v9577 = vadd.f32 %v9292, %v9576
      %v9578 = vpop.f32.mrf.mxu0
      %v9579 = vadd.f32 %v9293, %v9578
      %9580 = vmatprep.mubr.bf16.mxu0 %v8961
      %9581 = vmatmul.mubr.bf16.gmra.mxu0 %v8960
      %v9582 = vpop.f32.mrf.mxu0
      %v9583 = vadd.f32 %v9294, %v9582
      %v9584 = vpop.f32.mrf.mxu0
      %v9585 = vadd.f32 %v9295, %v9584
      %v9586 = vpop.f32.mrf.mxu0
      %v9587 = vadd.f32 %v9296, %v9586
      %v9588 = vpop.f32.mrf.mxu0
      %v9589 = vadd.f32 %v9297, %v9588
      %9590 = vmatprep.mubr.bf16.mxu0 %v8963
      %9591 = vmatmul.mubr.bf16.gmra.mxu0 %v8962
      %v9592 = vpop.f32.mrf.mxu0
      %v9593 = vadd.f32 %v9298, %v9592
      %v9594 = vpop.f32.mrf.mxu0
      %v9595 = vadd.f32 %v9299, %v9594
      %v9596 = vpop.f32.mrf.mxu0
      %v9597 = vadd.f32 %v9300, %v9596
      %v9598 = vpop.f32.mrf.mxu0
      %v9599 = vadd.f32 %v9301, %v9598
      %9600 = vmatprep.mubr.bf16.mxu0 %v8965
      %9601 = vmatmul.mubr.bf16.gmra.mxu0 %v8964
      %v9602 = vpop.f32.mrf.mxu0
      %v9603 = vadd.f32 %v9302, %v9602
      %v9604 = vpop.f32.mrf.mxu0
      %v9605 = vadd.f32 %v9303, %v9604
      %v9606 = vpop.f32.mrf.mxu0
      %v9607 = vadd.f32 %v9304, %v9606
      %v9608 = vpop.f32.mrf.mxu0
      %v9609 = vadd.f32 %v9305, %v9608
      %9610 = vmatprep.mubr.bf16.mxu0 %v8967
      %9611 = vmatmul.mubr.bf16.gmra.mxu0 %v8966
      %v9612 = vpop.f32.mrf.mxu0
      %v9613 = vadd.f32 %v9306, %v9612
      %v9614 = vpop.f32.mrf.mxu0
      %v9615 = vadd.f32 %v9307, %v9614
      %v9616 = vpop.f32.mrf.mxu0
      %v9617 = vadd.f32 %v9308, %v9616
      %v9618 = vpop.f32.mrf.mxu0
      %v9619 = vadd.f32 %v9309, %v9618
      %9620 = vmatprep.mubr.bf16.mxu0 %v8969
      %9621 = vmatmul.mubr.bf16.gmra.mxu0 %v8968
      %v9622 = vpop.f32.mrf.mxu0
      %v9623 = vadd.f32 %v9310, %v9622
      %v9624 = vpop.f32.mrf.mxu0
      %v9625 = vadd.f32 %v9311, %v9624
      %v9626 = vpop.f32.mrf.mxu0
      %v9627 = vadd.f32 %v9312, %v9626
      %v9628 = vpop.f32.mrf.mxu0
      %v9629 = vadd.f32 %v9313, %v9628
      %9630 = vmatprep.mubr.bf16.mxu0 %v8971
      %9631 = vmatmul.mubr.bf16.gmra.mxu0 %v8970
      %v9632 = vpop.f32.mrf.mxu0
      %v9633 = vadd.f32 %v9314, %v9632
      %v9634 = vpop.f32.mrf.mxu0
      %v9635 = vadd.f32 %v9315, %v9634
      %v9636 = vpop.f32.mrf.mxu0
      %v9637 = vadd.f32 %v9316, %v9636
      %v9638 = vpop.f32.mrf.mxu0
      %v9639 = vadd.f32 %v9317, %v9638
      %9640 = vmatprep.mubr.bf16.mxu0 %v8973
      %9641 = vmatmul.mubr.bf16.gmra.mxu0 %v8972
      %v9642 = vpop.f32.mrf.mxu0
      %v9643 = vadd.f32 %v9318, %v9642
      %v9644 = vpop.f32.mrf.mxu0
      %v9645 = vadd.f32 %v9319, %v9644
      %v9646 = vpop.f32.mrf.mxu0
      %v9647 = vadd.f32 %v9320, %v9646
      %v9648 = vpop.f32.mrf.mxu0
      %v9649 = vadd.f32 %v9321, %v9648
      %9650 = vmatprep.mubr.bf16.mxu0 %v8975
      %9651 = vmatmul.mubr.bf16.gmra.mxu0 %v8974
      %v9652 = vpop.f32.mrf.mxu0
      %v9653 = vadd.f32 %v9322, %v9652
      %v9654 = vpop.f32.mrf.mxu0
      %v9655 = vadd.f32 %v9323, %v9654
      %v9656 = vpop.f32.mrf.mxu0
      %v9657 = vadd.f32 %v9324, %v9656
      %v9658 = vpop.f32.mrf.mxu0
      %v9659 = vadd.f32 %v9325, %v9658
      %9660 = vmatprep.mubr.bf16.mxu0 %v8977
      %9661 = vmatmul.mubr.bf16.gmra.mxu0 %v8976
      %v9662 = vpop.f32.mrf.mxu0
      %v9663 = vadd.f32 %v9326, %v9662
      %v9664 = vpop.f32.mrf.mxu0
      %v9665 = vadd.f32 %v9327, %v9664
      %v9666 = vpop.f32.mrf.mxu0
      %v9667 = vadd.f32 %v9328, %v9666
      %v9668 = vpop.f32.mrf.mxu0
      %v9669 = vadd.f32 %v9329, %v9668
      %9670 = vmatprep.mubr.bf16.mxu0 %v8979
      %9671 = vmatmul.mubr.bf16.gmra.mxu0 %v8978
      %v9672 = vpop.f32.mrf.mxu0
      %v9673 = vadd.f32 %v9330, %v9672
      %v9674 = vpop.f32.mrf.mxu0
      %v9675 = vadd.f32 %v9331, %v9674
      %v9676 = vpop.f32.mrf.mxu0
      %v9677 = vadd.f32 %v9332, %v9676
      %v9678 = vpop.f32.mrf.mxu0
      %v9679 = vadd.f32 %v9333, %v9678
      %9680 = vmatprep.mubr.bf16.mxu0 %v8981
      %9681 = vmatmul.mubr.bf16.gmra.mxu0 %v8980
      %v9682 = vpop.f32.mrf.mxu0
      %v9683 = vadd.f32 %v9334, %v9682
      %v9684 = vpop.f32.mrf.mxu0
      %v9685 = vadd.f32 %v9335, %v9684
      %v9686 = vpop.f32.mrf.mxu0
      %v9687 = vadd.f32 %v9336, %v9686
      %v9688 = vpop.f32.mrf.mxu0
      %v9689 = vadd.f32 %v9337, %v9688
      %9690 = vdwg.mxu0
      %v9691 = vld [vmem:[%s4009] ss:$8 sm:$0x3]
      %v9693 = vlaneseq
      %v9694 = vshrl.u32 %v9693, 7
      %v9695 = vsub.s32 0, %v9694
      %v9696 = vrot.slane %v9691, %v9695
      %v9697 = vlaneseq
      %v9698 = vshrl.u32 %v9697, 7
      %v9699 = vsub.s32 1, %v9698
      %v9700 = vrot.slane %v9691, %v9699
      %v9703 = vadd.f32 %v9533, %v9696
      %v9704 = vadd.f32 %v9535, %v9700
      %v9705 = vadd.f32 %v9537, %v9696
      %v9706 = vadd.f32 %v9539, %v9700
      %v9707 = vadd.f32 %v9543, %v9696
      %v9708 = vadd.f32 %v9545, %v9700
      %v9709 = vadd.f32 %v9547, %v9696
      %v9710 = vadd.f32 %v9549, %v9700
      %v9711 = vadd.f32 %v9553, %v9696
      %v9712 = vadd.f32 %v9555, %v9700
      %v9713 = vadd.f32 %v9557, %v9696
      %v9714 = vadd.f32 %v9559, %v9700
      %v9715 = vadd.f32 %v9563, %v9696
      %v9716 = vadd.f32 %v9565, %v9700
      %v9717 = vadd.f32 %v9567, %v9696
      %v9718 = vadd.f32 %v9569, %v9700
      %v9719 = vadd.f32 %v9573, %v9696
      %v9720 = vadd.f32 %v9575, %v9700
      %v9721 = vadd.f32 %v9577, %v9696
      %v9722 = vadd.f32 %v9579, %v9700
      %v9723 = vadd.f32 %v9583, %v9696
      %v9724 = vadd.f32 %v9585, %v9700
      %v9725 = vadd.f32 %v9587, %v9696
      %v9726 = vadd.f32 %v9589, %v9700
      %v9727 = vadd.f32 %v9593, %v9696
      %v9728 = vadd.f32 %v9595, %v9700
      %v9729 = vadd.f32 %v9597, %v9696
      %v9730 = vadd.f32 %v9599, %v9700
      %v9731 = vadd.f32 %v9603, %v9696
      %v9732 = vadd.f32 %v9605, %v9700
      %v9733 = vadd.f32 %v9607, %v9696
      %v9734 = vadd.f32 %v9609, %v9700
      %v9735 = vadd.f32 %v9613, %v9696
      %v9736 = vadd.f32 %v9615, %v9700
      %v9737 = vadd.f32 %v9617, %v9696
      %v9738 = vadd.f32 %v9619, %v9700
      %v9739 = vadd.f32 %v9623, %v9696
      %v9740 = vadd.f32 %v9625, %v9700
      %v9741 = vadd.f32 %v9627, %v9696
      %v9742 = vadd.f32 %v9629, %v9700
      %v9743 = vadd.f32 %v9633, %v9696
      %v9744 = vadd.f32 %v9635, %v9700
      %v9745 = vadd.f32 %v9637, %v9696
      %v9746 = vadd.f32 %v9639, %v9700
      %v9747 = vadd.f32 %v9643, %v9696
      %v9748 = vadd.f32 %v9645, %v9700
      %v9749 = vadd.f32 %v9647, %v9696
      %v9750 = vadd.f32 %v9649, %v9700
      %v9751 = vadd.f32 %v9653, %v9696
      %v9752 = vadd.f32 %v9655, %v9700
      %v9753 = vadd.f32 %v9657, %v9696
      %v9754 = vadd.f32 %v9659, %v9700
      %v9755 = vadd.f32 %v9663, %v9696
      %v9756 = vadd.f32 %v9665, %v9700
      %v9757 = vadd.f32 %v9667, %v9696
      %v9758 = vadd.f32 %v9669, %v9700
      %v9759 = vadd.f32 %v9673, %v9696
      %v9760 = vadd.f32 %v9675, %v9700
      %v9761 = vadd.f32 %v9677, %v9696
      %v9762 = vadd.f32 %v9679, %v9700
      %v9763 = vadd.f32 %v9683, %v9696
      %v9764 = vadd.f32 %v9685, %v9700
      %v9765 = vadd.f32 %v9687, %v9696
      %v9766 = vadd.f32 %v9689, %v9700
      %v9767 = vmax.f32 %v9703, 0.0
      %v9768 = vmax.f32 %v9704, 0.0
      %v9769 = vmax.f32 %v9705, 0.0
      %v9770 = vmax.f32 %v9706, 0.0
      %v9771 = vmax.f32 %v9707, 0.0
      %v9772 = vmax.f32 %v9708, 0.0
      %v9773 = vmax.f32 %v9709, 0.0
      %v9774 = vmax.f32 %v9710, 0.0
      %v9775 = vmax.f32 %v9711, 0.0
      %v9776 = vmax.f32 %v9712, 0.0
      %v9777 = vmax.f32 %v9713, 0.0
      %v9778 = vmax.f32 %v9714, 0.0
      %v9779 = vmax.f32 %v9715, 0.0
      %v9780 = vmax.f32 %v9716, 0.0
      %v9781 = vmax.f32 %v9717, 0.0
      %v9782 = vmax.f32 %v9718, 0.0
      %v9783 = vmax.f32 %v9719, 0.0
      %v9784 = vmax.f32 %v9720, 0.0
      %v9785 = vmax.f32 %v9721, 0.0
      %v9786 = vmax.f32 %v9722, 0.0
      %v9787 = vmax.f32 %v9723, 0.0
      %v9788 = vmax.f32 %v9724, 0.0
      %v9789 = vmax.f32 %v9725, 0.0
      %v9790 = vmax.f32 %v9726, 0.0
      %v9791 = vmax.f32 %v9727, 0.0
      %v9792 = vmax.f32 %v9728, 0.0
      %v9793 = vmax.f32 %v9729, 0.0
      %v9794 = vmax.f32 %v9730, 0.0
      %v9795 = vmax.f32 %v9731, 0.0
      %v9796 = vmax.f32 %v9732, 0.0
      %v9797 = vmax.f32 %v9733, 0.0
      %v9798 = vmax.f32 %v9734, 0.0
      %v9799 = vmax.f32 %v9735, 0.0
      %v9800 = vmax.f32 %v9736, 0.0
      %v9801 = vmax.f32 %v9737, 0.0
      %v9802 = vmax.f32 %v9738, 0.0
      %v9803 = vmax.f32 %v9739, 0.0
      %v9804 = vmax.f32 %v9740, 0.0
      %v9805 = vmax.f32 %v9741, 0.0
      %v9806 = vmax.f32 %v9742, 0.0
      %v9807 = vmax.f32 %v9743, 0.0
      %v9808 = vmax.f32 %v9744, 0.0
      %v9809 = vmax.f32 %v9745, 0.0
      %v9810 = vmax.f32 %v9746, 0.0
      %v9811 = vmax.f32 %v9747, 0.0
      %v9812 = vmax.f32 %v9748, 0.0
      %v9813 = vmax.f32 %v9749, 0.0
      %v9814 = vmax.f32 %v9750, 0.0
      %v9815 = vmax.f32 %v9751, 0.0
      %v9816 = vmax.f32 %v9752, 0.0
      %v9817 = vmax.f32 %v9753, 0.0
      %v9818 = vmax.f32 %v9754, 0.0
      %v9819 = vmax.f32 %v9755, 0.0
      %v9820 = vmax.f32 %v9756, 0.0
      %v9821 = vmax.f32 %v9757, 0.0
      %v9822 = vmax.f32 %v9758, 0.0
      %v9823 = vmax.f32 %v9759, 0.0
      %v9824 = vmax.f32 %v9760, 0.0
      %v9825 = vmax.f32 %v9761, 0.0
      %v9826 = vmax.f32 %v9762, 0.0
      %v9827 = vmax.f32 %v9763, 0.0
      %v9828 = vmax.f32 %v9764, 0.0
      %v9829 = vmax.f32 %v9765, 0.0
      %v9830 = vmax.f32 %v9766, 0.0
      %v9831 = vld [vmem:[%s4150] sm:$0xff]
      %v9832 = vld [vmem:[%s4150 + $0x8] sm:$0xff]
      %v9833 = vld [vmem:[%s4150 + $0x10] sm:$0xff]
      %v9834 = vld [vmem:[%s4150 + $0x18] sm:$0xff]
      %v9835 = vld [vmem:[%s4150 + $0x20] sm:$0xff]
      %v9836 = vld [vmem:[%s4150 + $0x28] sm:$0xff]
      %v9837 = vld [vmem:[%s4150 + $0x30] sm:$0xff]
      %v9838 = vld [vmem:[%s4150 + $0x38] sm:$0xff]
      %v9839 = vld [vmem:[%s4150 + $0x40] sm:$0xff]
      %v9840 = vld [vmem:[%s4150 + $0x48] sm:$0xff]
      %v9841 = vld [vmem:[%s4150 + $0x50] sm:$0xff]
      %v9842 = vld [vmem:[%s4150 + $0x58] sm:$0xff]
      %v9843 = vld [vmem:[%s4150 + $0x60] sm:$0xff]
      %v9844 = vld [vmem:[%s4150 + $0x68] sm:$0xff]
      %v9845 = vld [vmem:[%s4150 + $0x70] sm:$0xff]
      %v9846 = vld [vmem:[%s4150 + $0x78] sm:$0xff]
      %v9847 = vld [vmem:[%s4150 + $0x80] sm:$0xff]
      %v9848 = vld [vmem:[%s4150 + $0x88] sm:$0xff]
      %v9849 = vld [vmem:[%s4150 + $0x90] sm:$0xff]
      %v9850 = vld [vmem:[%s4150 + $0x98] sm:$0xff]
      %v9851 = vld [vmem:[%s4150 + $0xa0] sm:$0xff]
      %v9852 = vld [vmem:[%s4150 + $0xa8] sm:$0xff]
      %v9853 = vld [vmem:[%s4150 + $0xb0] sm:$0xff]
      %v9854 = vld [vmem:[%s4150 + $0xb8] sm:$0xff]
      %v9855 = vld [vmem:[%s4150 + $0xc0] sm:$0xff]
      %v9856 = vld [vmem:[%s4150 + $0xc8] sm:$0xff]
      %v9857 = vld [vmem:[%s4150 + $0xd0] sm:$0xff]
      %v9858 = vld [vmem:[%s4150 + $0xd8] sm:$0xff]
      %v9859 = vld [vmem:[%s4150 + $0xe0] sm:$0xff]
      %v9860 = vld [vmem:[%s4150 + $0xe8] sm:$0xff]
      %v9861 = vld [vmem:[%s4150 + $0xf0] sm:$0xff]
      %v9862 = vld [vmem:[%s4150 + $0xf8] sm:$0xff]
      %v9863 = vpack.c.bf16 %v9769, %v9767
      %v9864 = vpack.c.bf16 %v9770, %v9768
      %v9865 = vpack.c.bf16 %v9773, %v9771
      %v9866 = vpack.c.bf16 %v9774, %v9772
      %v9867 = vpack.c.bf16 %v9777, %v9775
      %v9868 = vpack.c.bf16 %v9778, %v9776
      %v9869 = vpack.c.bf16 %v9781, %v9779
      %v9870 = vpack.c.bf16 %v9782, %v9780
      %v9871 = vpack.c.bf16 %v9785, %v9783
      %v9872 = vpack.c.bf16 %v9786, %v9784
      %v9873 = vpack.c.bf16 %v9789, %v9787
      %v9874 = vpack.c.bf16 %v9790, %v9788
      %v9875 = vpack.c.bf16 %v9793, %v9791
      %v9876 = vpack.c.bf16 %v9794, %v9792
      %v9877 = vpack.c.bf16 %v9797, %v9795
      %v9878 = vpack.c.bf16 %v9798, %v9796
      %v9879 = vpack.c.bf16 %v9801, %v9799
      %v9880 = vpack.c.bf16 %v9802, %v9800
      %v9881 = vpack.c.bf16 %v9805, %v9803
      %v9882 = vpack.c.bf16 %v9806, %v9804
      %v9883 = vpack.c.bf16 %v9809, %v9807
      %v9884 = vpack.c.bf16 %v9810, %v9808
      %v9885 = vpack.c.bf16 %v9813, %v9811
      %v9886 = vpack.c.bf16 %v9814, %v9812
      %v9887 = vpack.c.bf16 %v9817, %v9815
      %v9888 = vpack.c.bf16 %v9818, %v9816
      %v9889 = vpack.c.bf16 %v9821, %v9819
      %v9890 = vpack.c.bf16 %v9822, %v9820
      %v9891 = vpack.c.bf16 %v9825, %v9823
      %v9892 = vpack.c.bf16 %v9826, %v9824
      %v9893 = vpack.c.bf16 %v9829, %v9827
      %v9894 = vpack.c.bf16 %v9830, %v9828
      %v9895 = vld [vmem:[%s4215] ss:$8 sm:$0x3]
      %v9897 = vlaneseq
      %v9898 = vshrl.u32 %v9897, 7
      %v9899 = vsub.s32 0, %v9898
      %v9900 = vrot.slane %v9895, %v9899
      %v9901 = vlaneseq
      %v9902 = vshrl.u32 %v9901, 7
      %v9903 = vsub.s32 1, %v9902
      %v9904 = vrot.slane %v9895, %v9903
      %v9939 = vunpack.c.l.b16 %v9831
      %v9940 = vunpack.c.h.b16 %v9831
      %v9941 = vunpack.c.l.b16 %v9832
      %v9942 = vunpack.c.h.b16 %v9832
      %v9943 = vunpack.c.l.b16 %v9833
      %v9944 = vunpack.c.h.b16 %v9833
      %v9945 = vunpack.c.l.b16 %v9834
      %v9946 = vunpack.c.h.b16 %v9834
      %v9947 = vunpack.c.l.b16 %v9835
      %v9948 = vunpack.c.h.b16 %v9835
      %v9949 = vunpack.c.l.b16 %v9836
      %v9950 = vunpack.c.h.b16 %v9836
      %v9951 = vunpack.c.l.b16 %v9837
      %v9952 = vunpack.c.h.b16 %v9837
      %v9953 = vunpack.c.l.b16 %v9838
      %v9954 = vunpack.c.h.b16 %v9838
      %v9955 = vunpack.c.l.b16 %v9839
      %v9956 = vunpack.c.h.b16 %v9839
      %v9957 = vunpack.c.l.b16 %v9840
      %v9958 = vunpack.c.h.b16 %v9840
      %v9959 = vunpack.c.l.b16 %v9841
      %v9960 = vunpack.c.h.b16 %v9841
      %v9961 = vunpack.c.l.b16 %v9842
      %v9962 = vunpack.c.h.b16 %v9842
      %v9963 = vunpack.c.l.b16 %v9843
      %v9964 = vunpack.c.h.b16 %v9843
      %v9965 = vunpack.c.l.b16 %v9844
      %v9966 = vunpack.c.h.b16 %v9844
      %v9967 = vunpack.c.l.b16 %v9845
      %v9968 = vunpack.c.h.b16 %v9845
      %v9969 = vunpack.c.l.b16 %v9846
      %v9970 = vunpack.c.h.b16 %v9846
      %v9971 = vunpack.c.l.b16 %v9847
      %v9972 = vunpack.c.h.b16 %v9847
      %v9973 = vunpack.c.l.b16 %v9848
      %v9974 = vunpack.c.h.b16 %v9848
      %v9975 = vunpack.c.l.b16 %v9849
      %v9976 = vunpack.c.h.b16 %v9849
      %v9977 = vunpack.c.l.b16 %v9850
      %v9978 = vunpack.c.h.b16 %v9850
      %v9979 = vunpack.c.l.b16 %v9851
      %v9980 = vunpack.c.h.b16 %v9851
      %v9981 = vunpack.c.l.b16 %v9852
      %v9982 = vunpack.c.h.b16 %v9852
      %v9983 = vunpack.c.l.b16 %v9853
      %v9984 = vunpack.c.h.b16 %v9853
      %v9985 = vunpack.c.l.b16 %v9854
      %v9986 = vunpack.c.h.b16 %v9854
      %v9987 = vunpack.c.l.b16 %v9855
      %v9988 = vunpack.c.h.b16 %v9855
      %v9989 = vunpack.c.l.b16 %v9856
      %v9990 = vunpack.c.h.b16 %v9856
      %v9991 = vunpack.c.l.b16 %v9857
      %v9992 = vunpack.c.h.b16 %v9857
      %v9993 = vunpack.c.l.b16 %v9858
      %v9994 = vunpack.c.h.b16 %v9858
      %v9995 = vunpack.c.l.b16 %v9859
      %v9996 = vunpack.c.h.b16 %v9859
      %v9997 = vunpack.c.l.b16 %v9860
      %v9998 = vunpack.c.h.b16 %v9860
      %v9999 = vunpack.c.l.b16 %v9861
      %v10000 = vunpack.c.h.b16 %v9861
      %v10001 = vunpack.c.l.b16 %v9862
      %v10002 = vunpack.c.h.b16 %v9862
      %v10003 = vpack.c.b16 %v9941, %v9939
      %v10004 = vpack.c.b16 %v9942, %v9940
      %v10005 = vpack.c.b16 %v9945, %v9943
      %v10006 = vpack.c.b16 %v9946, %v9944
      %v10007 = vpack.c.b16 %v9949, %v9947
      %v10008 = vpack.c.b16 %v9950, %v9948
      %v10009 = vpack.c.b16 %v9953, %v9951
      %v10010 = vpack.c.b16 %v9954, %v9952
      %v10011 = vpack.c.b16 %v9957, %v9955
      %v10012 = vpack.c.b16 %v9958, %v9956
      %v10013 = vpack.c.b16 %v9961, %v9959
      %v10014 = vpack.c.b16 %v9962, %v9960
      %v10015 = vpack.c.b16 %v9965, %v9963
      %v10016 = vpack.c.b16 %v9966, %v9964
      %v10017 = vpack.c.b16 %v9969, %v9967
      %v10018 = vpack.c.b16 %v9970, %v9968
      %v10019 = vpack.c.b16 %v9973, %v9971
      %v10020 = vpack.c.b16 %v9974, %v9972
      %v10021 = vpack.c.b16 %v9977, %v9975
      %v10022 = vpack.c.b16 %v9978, %v9976
      %v10023 = vpack.c.b16 %v9981, %v9979
      %v10024 = vpack.c.b16 %v9982, %v9980
      %v10025 = vpack.c.b16 %v9985, %v9983
      %v10026 = vpack.c.b16 %v9986, %v9984
      %v10027 = vpack.c.b16 %v9989, %v9987
      %v10028 = vpack.c.b16 %v9990, %v9988
      %v10029 = vpack.c.b16 %v9993, %v9991
      %v10030 = vpack.c.b16 %v9994, %v9992
      %v10031 = vpack.c.b16 %v9997, %v9995
      %v10032 = vpack.c.b16 %v9998, %v9996
      %v10033 = vpack.c.b16 %v10001, %v9999
      %v10034 = vpack.c.b16 %v10002, %v10000
      %10067 = vmatprep.subr.bf16.mxu0 %v10018
      %10068 = vmatpush1.bf16.msra.mxu0 %v10017
      %10069 = vmatprep.subr.bf16.mxu0 %v10016
      %10070 = vmatpush1.bf16.msra.mxu0 %v10015
      %10071 = vmatprep.subr.bf16.mxu0 %v10014
      %10072 = vmatpush1.bf16.msra.mxu0 %v10013
      %10073 = vmatprep.subr.bf16.mxu0 %v10012
      %10074 = vmatpush1.bf16.msra.mxu0 %v10011
      %10075 = vmatprep.subr.bf16.mxu0 %v10010
      %10076 = vmatpush1.bf16.msra.mxu0 %v10009
      %10077 = vmatprep.subr.bf16.mxu0 %v10008
      %10078 = vmatpush1.bf16.msra.mxu0 %v10007
      %10079 = vmatprep.subr.bf16.mxu0 %v10006
      %10080 = vmatpush1.bf16.msra.mxu0 %v10005
      %10081 = vmatprep.subr.bf16.mxu0 %v10004
      %10082 = vmatpush1.bf16.msra.mxu0 %v10003
      %10083 = vmatprep.subr.bf16.mxu0 %v10034
      %10084 = vmatpush2.bf16.msra.mxu0 %v10033
      %10085 = vmatprep.subr.bf16.mxu0 %v10032
      %10086 = vmatpush2.bf16.msra.mxu0 %v10031
      %10087 = vmatprep.subr.bf16.mxu0 %v10030
      %10088 = vmatpush2.bf16.msra.mxu0 %v10029
      %10089 = vmatprep.subr.bf16.mxu0 %v10028
      %10090 = vmatpush2.bf16.msra.mxu0 %v10027
      %10091 = vmatprep.subr.bf16.mxu0 %v10026
      %10092 = vmatpush2.bf16.msra.mxu0 %v10025
      %10093 = vmatprep.subr.bf16.mxu0 %v10024
      %10094 = vmatpush2.bf16.msra.mxu0 %v10023
      %10095 = vmatprep.subr.bf16.mxu0 %v10022
      %10096 = vmatpush2.bf16.msra.mxu0 %v10021
      %10097 = vmatprep.subr.bf16.mxu0 %v10020
      %10098 = vmatpush2.bf16.msra.mxu0 %v10019
      %10099 = vmatprep.mubr.bf16.mxu0 %v9864
      %10100 = vmatmul.mubr.bf16.gmra.mxu0 %v9863
      %v10101 = vpop.f32.mrf.mxu0
      %v10102 = vadd.f32 %v9900, %v10101
      %v10103 = vpop.f32.mrf.mxu0
      %v10104 = vadd.f32 %v9904, %v10103
      %v10105 = vpop.f32.mrf.mxu0
      %v10106 = vadd.f32 %v9900, %v10105
      %v10107 = vpop.f32.mrf.mxu0
      %v10108 = vadd.f32 %v9904, %v10107
      %10109 = vmatprep.mubr.bf16.mxu0 %v9866
      %10110 = vmatmul.mubr.bf16.gmra.mxu0 %v9865
      %v10111 = vpop.f32.mrf.mxu0
      %v10112 = vadd.f32 %v9900, %v10111
      %v10113 = vpop.f32.mrf.mxu0
      %v10114 = vadd.f32 %v9904, %v10113
      %v10115 = vpop.f32.mrf.mxu0
      %v10116 = vadd.f32 %v9900, %v10115
      %v10117 = vpop.f32.mrf.mxu0
      %v10118 = vadd.f32 %v9904, %v10117
      %10119 = vmatprep.mubr.bf16.mxu0 %v9868
      %10120 = vmatmul.mubr.bf16.gmra.mxu0 %v9867
      %v10121 = vpop.f32.mrf.mxu0
      %v10122 = vadd.f32 %v9900, %v10121
      %v10123 = vpop.f32.mrf.mxu0
      %v10124 = vadd.f32 %v9904, %v10123
      %v10125 = vpop.f32.mrf.mxu0
      %v10126 = vadd.f32 %v9900, %v10125
      %v10127 = vpop.f32.mrf.mxu0
      %v10128 = vadd.f32 %v9904, %v10127
      %10129 = vmatprep.mubr.bf16.mxu0 %v9870
      %10130 = vmatmul.mubr.bf16.gmra.mxu0 %v9869
      %v10131 = vpop.f32.mrf.mxu0
      %v10132 = vadd.f32 %v9900, %v10131
      %v10133 = vpop.f32.mrf.mxu0
      %v10134 = vadd.f32 %v9904, %v10133
      %v10135 = vpop.f32.mrf.mxu0
      %v10136 = vadd.f32 %v9900, %v10135
      %v10137 = vpop.f32.mrf.mxu0
      %v10138 = vadd.f32 %v9904, %v10137
      %10139 = vmatprep.mubr.bf16.mxu0 %v9872
      %10140 = vmatmul.mubr.bf16.gmra.mxu0 %v9871
      %v10141 = vpop.f32.mrf.mxu0
      %v10142 = vadd.f32 %v9900, %v10141
      %v10143 = vpop.f32.mrf.mxu0
      %v10144 = vadd.f32 %v9904, %v10143
      %v10145 = vpop.f32.mrf.mxu0
      %v10146 = vadd.f32 %v9900, %v10145
      %v10147 = vpop.f32.mrf.mxu0
      %v10148 = vadd.f32 %v9904, %v10147
      %10149 = vmatprep.mubr.bf16.mxu0 %v9874
      %10150 = vmatmul.mubr.bf16.gmra.mxu0 %v9873
      %v10151 = vpop.f32.mrf.mxu0
      %v10152 = vadd.f32 %v9900, %v10151
      %v10153 = vpop.f32.mrf.mxu0
      %v10154 = vadd.f32 %v9904, %v10153
      %v10155 = vpop.f32.mrf.mxu0
      %v10156 = vadd.f32 %v9900, %v10155
      %v10157 = vpop.f32.mrf.mxu0
      %v10158 = vadd.f32 %v9904, %v10157
      %10159 = vmatprep.mubr.bf16.mxu0 %v9876
      %10160 = vmatmul.mubr.bf16.gmra.mxu0 %v9875
      %v10161 = vpop.f32.mrf.mxu0
      %v10162 = vadd.f32 %v9900, %v10161
      %v10163 = vpop.f32.mrf.mxu0
      %v10164 = vadd.f32 %v9904, %v10163
      %v10165 = vpop.f32.mrf.mxu0
      %v10166 = vadd.f32 %v9900, %v10165
      %v10167 = vpop.f32.mrf.mxu0
      %v10168 = vadd.f32 %v9904, %v10167
      %10169 = vmatprep.mubr.bf16.mxu0 %v9878
      %10170 = vmatmul.mubr.bf16.gmra.mxu0 %v9877
      %v10171 = vpop.f32.mrf.mxu0
      %v10172 = vadd.f32 %v9900, %v10171
      %v10173 = vpop.f32.mrf.mxu0
      %v10174 = vadd.f32 %v9904, %v10173
      %v10175 = vpop.f32.mrf.mxu0
      %v10176 = vadd.f32 %v9900, %v10175
      %v10177 = vpop.f32.mrf.mxu0
      %v10178 = vadd.f32 %v9904, %v10177
      %10179 = vmatprep.mubr.bf16.mxu0 %v9880
      %10180 = vmatmul.mubr.bf16.gmra.mxu0 %v9879
      %v10181 = vpop.f32.mrf.mxu0
      %v10182 = vadd.f32 %v9900, %v10181
      %v10183 = vpop.f32.mrf.mxu0
      %v10184 = vadd.f32 %v9904, %v10183
      %v10185 = vpop.f32.mrf.mxu0
      %v10186 = vadd.f32 %v9900, %v10185
      %v10187 = vpop.f32.mrf.mxu0
      %v10188 = vadd.f32 %v9904, %v10187
      %10189 = vmatprep.mubr.bf16.mxu0 %v9882
      %10190 = vmatmul.mubr.bf16.gmra.mxu0 %v9881
      %v10191 = vpop.f32.mrf.mxu0
      %v10192 = vadd.f32 %v9900, %v10191
      %v10193 = vpop.f32.mrf.mxu0
      %v10194 = vadd.f32 %v9904, %v10193
      %v10195 = vpop.f32.mrf.mxu0
      %v10196 = vadd.f32 %v9900, %v10195
      %v10197 = vpop.f32.mrf.mxu0
      %v10198 = vadd.f32 %v9904, %v10197
      %10199 = vmatprep.mubr.bf16.mxu0 %v9884
      %10200 = vmatmul.mubr.bf16.gmra.mxu0 %v9883
      %v10201 = vpop.f32.mrf.mxu0
      %v10202 = vadd.f32 %v9900, %v10201
      %v10203 = vpop.f32.mrf.mxu0
      %v10204 = vadd.f32 %v9904, %v10203
      %v10205 = vpop.f32.mrf.mxu0
      %v10206 = vadd.f32 %v9900, %v10205
      %v10207 = vpop.f32.mrf.mxu0
      %v10208 = vadd.f32 %v9904, %v10207
      %10209 = vmatprep.mubr.bf16.mxu0 %v9886
      %10210 = vmatmul.mubr.bf16.gmra.mxu0 %v9885
      %v10211 = vpop.f32.mrf.mxu0
      %v10212 = vadd.f32 %v9900, %v10211
      %v10213 = vpop.f32.mrf.mxu0
      %v10214 = vadd.f32 %v9904, %v10213
      %v10215 = vpop.f32.mrf.mxu0
      %v10216 = vadd.f32 %v9900, %v10215
      %v10217 = vpop.f32.mrf.mxu0
      %v10218 = vadd.f32 %v9904, %v10217
      %10219 = vmatprep.mubr.bf16.mxu0 %v9888
      %10220 = vmatmul.mubr.bf16.gmra.mxu0 %v9887
      %v10221 = vpop.f32.mrf.mxu0
      %v10222 = vadd.f32 %v9900, %v10221
      %v10223 = vpop.f32.mrf.mxu0
      %v10224 = vadd.f32 %v9904, %v10223
      %v10225 = vpop.f32.mrf.mxu0
      %v10226 = vadd.f32 %v9900, %v10225
      %v10227 = vpop.f32.mrf.mxu0
      %v10228 = vadd.f32 %v9904, %v10227
      %10229 = vmatprep.mubr.bf16.mxu0 %v9890
      %10230 = vmatmul.mubr.bf16.gmra.mxu0 %v9889
      %v10231 = vpop.f32.mrf.mxu0
      %v10232 = vadd.f32 %v9900, %v10231
      %v10233 = vpop.f32.mrf.mxu0
      %v10234 = vadd.f32 %v9904, %v10233
      %v10235 = vpop.f32.mrf.mxu0
      %v10236 = vadd.f32 %v9900, %v10235
      %v10237 = vpop.f32.mrf.mxu0
      %v10238 = vadd.f32 %v9904, %v10237
      %10239 = vmatprep.mubr.bf16.mxu0 %v9892
      %10240 = vmatmul.mubr.bf16.gmra.mxu0 %v9891
      %v10241 = vpop.f32.mrf.mxu0
      %v10242 = vadd.f32 %v9900, %v10241
      %v10243 = vpop.f32.mrf.mxu0
      %v10244 = vadd.f32 %v9904, %v10243
      %v10245 = vpop.f32.mrf.mxu0
      %v10246 = vadd.f32 %v9900, %v10245
      %v10247 = vpop.f32.mrf.mxu0
      %v10248 = vadd.f32 %v9904, %v10247
      %10249 = vmatprep.mubr.bf16.mxu0 %v9894
      %10250 = vmatmul.mubr.bf16.gmra.mxu0 %v9893
      %v10251 = vpop.f32.mrf.mxu0
      %v10252 = vadd.f32 %v9900, %v10251
      %v10253 = vpop.f32.mrf.mxu0
      %v10254 = vadd.f32 %v9904, %v10253
      %v10255 = vpop.f32.mrf.mxu0
      %v10256 = vadd.f32 %v9900, %v10255
      %v10257 = vpop.f32.mrf.mxu0
      %v10258 = vadd.f32 %v9904, %v10257
      %10259 = vdwg.mxu0
      %v10260 = vmax.f32 %v10102, 0.0
      %v10261 = vmax.f32 %v10104, 0.0
      %v10262 = vmax.f32 %v10106, 0.0
      %v10263 = vmax.f32 %v10108, 0.0
      %v10264 = vmax.f32 %v10112, 0.0
      %v10265 = vmax.f32 %v10114, 0.0
      %v10266 = vmax.f32 %v10116, 0.0
      %v10267 = vmax.f32 %v10118, 0.0
      %v10268 = vmax.f32 %v10122, 0.0
      %v10269 = vmax.f32 %v10124, 0.0
      %v10270 = vmax.f32 %v10126, 0.0
      %v10271 = vmax.f32 %v10128, 0.0
      %v10272 = vmax.f32 %v10132, 0.0
      %v10273 = vmax.f32 %v10134, 0.0
      %v10274 = vmax.f32 %v10136, 0.0
      %v10275 = vmax.f32 %v10138, 0.0
      %v10276 = vmax.f32 %v10142, 0.0
      %v10277 = vmax.f32 %v10144, 0.0
      %v10278 = vmax.f32 %v10146, 0.0
      %v10279 = vmax.f32 %v10148, 0.0
      %v10280 = vmax.f32 %v10152, 0.0
      %v10281 = vmax.f32 %v10154, 0.0
      %v10282 = vmax.f32 %v10156, 0.0
      %v10283 = vmax.f32 %v10158, 0.0
      %v10284 = vmax.f32 %v10162, 0.0
      %v10285 = vmax.f32 %v10164, 0.0
      %v10286 = vmax.f32 %v10166, 0.0
      %v10287 = vmax.f32 %v10168, 0.0
      %v10288 = vmax.f32 %v10172, 0.0
      %v10289 = vmax.f32 %v10174, 0.0
      %v10290 = vmax.f32 %v10176, 0.0
      %v10291 = vmax.f32 %v10178, 0.0
      %v10292 = vmax.f32 %v10182, 0.0
      %v10293 = vmax.f32 %v10184, 0.0
      %v10294 = vmax.f32 %v10186, 0.0
      %v10295 = vmax.f32 %v10188, 0.0
      %v10296 = vmax.f32 %v10192, 0.0
      %v10297 = vmax.f32 %v10194, 0.0
      %v10298 = vmax.f32 %v10196, 0.0
      %v10299 = vmax.f32 %v10198, 0.0
      %v10300 = vmax.f32 %v10202, 0.0
      %v10301 = vmax.f32 %v10204, 0.0
      %v10302 = vmax.f32 %v10206, 0.0
      %v10303 = vmax.f32 %v10208, 0.0
      %v10304 = vmax.f32 %v10212, 0.0
      %v10305 = vmax.f32 %v10214, 0.0
      %v10306 = vmax.f32 %v10216, 0.0
      %v10307 = vmax.f32 %v10218, 0.0
      %v10308 = vmax.f32 %v10222, 0.0
      %v10309 = vmax.f32 %v10224, 0.0
      %v10310 = vmax.f32 %v10226, 0.0
      %v10311 = vmax.f32 %v10228, 0.0
      %v10312 = vmax.f32 %v10232, 0.0
      %v10313 = vmax.f32 %v10234, 0.0
      %v10314 = vmax.f32 %v10236, 0.0
      %v10315 = vmax.f32 %v10238, 0.0
      %v10316 = vmax.f32 %v10242, 0.0
      %v10317 = vmax.f32 %v10244, 0.0
      %v10318 = vmax.f32 %v10246, 0.0
      %v10319 = vmax.f32 %v10248, 0.0
      %v10320 = vmax.f32 %v10252, 0.0
      %v10321 = vmax.f32 %v10254, 0.0
      %v10322 = vmax.f32 %v10256, 0.0
      %v10323 = vmax.f32 %v10258, 0.0
      %v10324 = vld [vmem:[%s4645] sm:$0xff]
      %v10325 = vld [vmem:[%s4645 + $0x8] sm:$0xff]
      %v10326 = vld [vmem:[%s4645 + $0x10] sm:$0xff]
      %v10327 = vld [vmem:[%s4645 + $0x18] sm:$0xff]
      %v10328 = vld [vmem:[%s4645 + $0x20] sm:$0xff]
      %v10329 = vld [vmem:[%s4645 + $0x28] sm:$0xff]
      %v10330 = vld [vmem:[%s4645 + $0x30] sm:$0xff]
      %v10331 = vld [vmem:[%s4645 + $0x38] sm:$0xff]
      %v10332 = vld [vmem:[%s4645 + $0x40] sm:$0xff]
      %v10333 = vld [vmem:[%s4645 + $0x48] sm:$0xff]
      %v10334 = vld [vmem:[%s4645 + $0x50] sm:$0xff]
      %v10335 = vld [vmem:[%s4645 + $0x58] sm:$0xff]
      %v10336 = vld [vmem:[%s4645 + $0x60] sm:$0xff]
      %v10337 = vld [vmem:[%s4645 + $0x68] sm:$0xff]
      %v10338 = vld [vmem:[%s4645 + $0x70] sm:$0xff]
      %v10339 = vld [vmem:[%s4645 + $0x78] sm:$0xff]
      %v10340 = vld [vmem:[%s4645 + $0x80] sm:$0xff]
      %v10341 = vld [vmem:[%s4645 + $0x88] sm:$0xff]
      %v10342 = vld [vmem:[%s4645 + $0x90] sm:$0xff]
      %v10343 = vld [vmem:[%s4645 + $0x98] sm:$0xff]
      %v10344 = vld [vmem:[%s4645 + $0xa0] sm:$0xff]
      %v10345 = vld [vmem:[%s4645 + $0xa8] sm:$0xff]
      %v10346 = vld [vmem:[%s4645 + $0xb0] sm:$0xff]
      %v10347 = vld [vmem:[%s4645 + $0xb8] sm:$0xff]
      %v10348 = vld [vmem:[%s4645 + $0xc0] sm:$0xff]
      %v10349 = vld [vmem:[%s4645 + $0xc8] sm:$0xff]
      %v10350 = vld [vmem:[%s4645 + $0xd0] sm:$0xff]
      %v10351 = vld [vmem:[%s4645 + $0xd8] sm:$0xff]
      %v10352 = vld [vmem:[%s4645 + $0xe0] sm:$0xff]
      %v10353 = vld [vmem:[%s4645 + $0xe8] sm:$0xff]
      %v10354 = vld [vmem:[%s4645 + $0xf0] sm:$0xff]
      %v10355 = vld [vmem:[%s4645 + $0xf8] sm:$0xff]
      %v10356 = vpack.c.bf16 %v10262, %v10260
      %v10357 = vpack.c.bf16 %v10263, %v10261
      %v10358 = vpack.c.bf16 %v10266, %v10264
      %v10359 = vpack.c.bf16 %v10267, %v10265
      %v10360 = vpack.c.bf16 %v10270, %v10268
      %v10361 = vpack.c.bf16 %v10271, %v10269
      %v10362 = vpack.c.bf16 %v10274, %v10272
      %v10363 = vpack.c.bf16 %v10275, %v10273
      %v10364 = vpack.c.bf16 %v10278, %v10276
      %v10365 = vpack.c.bf16 %v10279, %v10277
      %v10366 = vpack.c.bf16 %v10282, %v10280
      %v10367 = vpack.c.bf16 %v10283, %v10281
      %v10368 = vpack.c.bf16 %v10286, %v10284
      %v10369 = vpack.c.bf16 %v10287, %v10285
      %v10370 = vpack.c.bf16 %v10290, %v10288
      %v10371 = vpack.c.bf16 %v10291, %v10289
      %v10372 = vpack.c.bf16 %v10294, %v10292
      %v10373 = vpack.c.bf16 %v10295, %v10293
      %v10374 = vpack.c.bf16 %v10298, %v10296
      %v10375 = vpack.c.bf16 %v10299, %v10297
      %v10376 = vpack.c.bf16 %v10302, %v10300
      %v10377 = vpack.c.bf16 %v10303, %v10301
      %v10378 = vpack.c.bf16 %v10306, %v10304
      %v10379 = vpack.c.bf16 %v10307, %v10305
      %v10380 = vpack.c.bf16 %v10310, %v10308
      %v10381 = vpack.c.bf16 %v10311, %v10309
      %v10382 = vpack.c.bf16 %v10314, %v10312
      %v10383 = vpack.c.bf16 %v10315, %v10313
      %v10384 = vpack.c.bf16 %v10318, %v10316
      %v10385 = vpack.c.bf16 %v10319, %v10317
      %v10386 = vpack.c.bf16 %v10322, %v10320
      %v10387 = vpack.c.bf16 %v10323, %v10321
      %v10388 = vld [vmem:[%s4710] ss:$8 sm:$0x3]
      %v10390 = vlaneseq
      %v10391 = vshrl.u32 %v10390, 7
      %v10392 = vsub.s32 0, %v10391
      %v10393 = vrot.slane %v10388, %v10392
      %v10394 = vlaneseq
      %v10395 = vshrl.u32 %v10394, 7
      %v10396 = vsub.s32 1, %v10395
      %v10397 = vrot.slane %v10388, %v10396
      %v10432 = vunpack.c.l.b16 %v10324
      %v10433 = vunpack.c.h.b16 %v10324
      %v10434 = vunpack.c.l.b16 %v10325
      %v10435 = vunpack.c.h.b16 %v10325
      %v10436 = vunpack.c.l.b16 %v10326
      %v10437 = vunpack.c.h.b16 %v10326
      %v10438 = vunpack.c.l.b16 %v10327
      %v10439 = vunpack.c.h.b16 %v10327
      %v10440 = vunpack.c.l.b16 %v10328
      %v10441 = vunpack.c.h.b16 %v10328
      %v10442 = vunpack.c.l.b16 %v10329
      %v10443 = vunpack.c.h.b16 %v10329
      %v10444 = vunpack.c.l.b16 %v10330
      %v10445 = vunpack.c.h.b16 %v10330
      %v10446 = vunpack.c.l.b16 %v10331
      %v10447 = vunpack.c.h.b16 %v10331
      %v10448 = vunpack.c.l.b16 %v10332
      %v10449 = vunpack.c.h.b16 %v10332
      %v10450 = vunpack.c.l.b16 %v10333
      %v10451 = vunpack.c.h.b16 %v10333
      %v10452 = vunpack.c.l.b16 %v10334
      %v10453 = vunpack.c.h.b16 %v10334
      %v10454 = vunpack.c.l.b16 %v10335
      %v10455 = vunpack.c.h.b16 %v10335
      %v10456 = vunpack.c.l.b16 %v10336
      %v10457 = vunpack.c.h.b16 %v10336
      %v10458 = vunpack.c.l.b16 %v10337
      %v10459 = vunpack.c.h.b16 %v10337
      %v10460 = vunpack.c.l.b16 %v10338
      %v10461 = vunpack.c.h.b16 %v10338
      %v10462 = vunpack.c.l.b16 %v10339
      %v10463 = vunpack.c.h.b16 %v10339
      %v10464 = vunpack.c.l.b16 %v10340
      %v10465 = vunpack.c.h.b16 %v10340
      %v10466 = vunpack.c.l.b16 %v10341
      %v10467 = vunpack.c.h.b16 %v10341
      %v10468 = vunpack.c.l.b16 %v10342
      %v10469 = vunpack.c.h.b16 %v10342
      %v10470 = vunpack.c.l.b16 %v10343
      %v10471 = vunpack.c.h.b16 %v10343
      %v10472 = vunpack.c.l.b16 %v10344
      %v10473 = vunpack.c.h.b16 %v10344
      %v10474 = vunpack.c.l.b16 %v10345
      %v10475 = vunpack.c.h.b16 %v10345
      %v10476 = vunpack.c.l.b16 %v10346
      %v10477 = vunpack.c.h.b16 %v10346
      %v10478 = vunpack.c.l.b16 %v10347
      %v10479 = vunpack.c.h.b16 %v10347
      %v10480 = vunpack.c.l.b16 %v10348
      %v10481 = vunpack.c.h.b16 %v10348
      %v10482 = vunpack.c.l.b16 %v10349
      %v10483 = vunpack.c.h.b16 %v10349
      %v10484 = vunpack.c.l.b16 %v10350
      %v10485 = vunpack.c.h.b16 %v10350
      %v10486 = vunpack.c.l.b16 %v10351
      %v10487 = vunpack.c.h.b16 %v10351
      %v10488 = vunpack.c.l.b16 %v10352
      %v10489 = vunpack.c.h.b16 %v10352
      %v10490 = vunpack.c.l.b16 %v10353
      %v10491 = vunpack.c.h.b16 %v10353
      %v10492 = vunpack.c.l.b16 %v10354
      %v10493 = vunpack.c.h.b16 %v10354
      %v10494 = vunpack.c.l.b16 %v10355
      %v10495 = vunpack.c.h.b16 %v10355
      %v10496 = vpack.c.b16 %v10434, %v10432
      %v10497 = vpack.c.b16 %v10435, %v10433
      %v10498 = vpack.c.b16 %v10438, %v10436
      %v10499 = vpack.c.b16 %v10439, %v10437
      %v10500 = vpack.c.b16 %v10442, %v10440
      %v10501 = vpack.c.b16 %v10443, %v10441
      %v10502 = vpack.c.b16 %v10446, %v10444
      %v10503 = vpack.c.b16 %v10447, %v10445
      %v10504 = vpack.c.b16 %v10450, %v10448
      %v10505 = vpack.c.b16 %v10451, %v10449
      %v10506 = vpack.c.b16 %v10454, %v10452
      %v10507 = vpack.c.b16 %v10455, %v10453
      %v10508 = vpack.c.b16 %v10458, %v10456
      %v10509 = vpack.c.b16 %v10459, %v10457
      %v10510 = vpack.c.b16 %v10462, %v10460
      %v10511 = vpack.c.b16 %v10463, %v10461
      %v10512 = vpack.c.b16 %v10466, %v10464
      %v10513 = vpack.c.b16 %v10467, %v10465
      %v10514 = vpack.c.b16 %v10470, %v10468
      %v10515 = vpack.c.b16 %v10471, %v10469
      %v10516 = vpack.c.b16 %v10474, %v10472
      %v10517 = vpack.c.b16 %v10475, %v10473
      %v10518 = vpack.c.b16 %v10478, %v10476
      %v10519 = vpack.c.b16 %v10479, %v10477
      %v10520 = vpack.c.b16 %v10482, %v10480
      %v10521 = vpack.c.b16 %v10483, %v10481
      %v10522 = vpack.c.b16 %v10486, %v10484
      %v10523 = vpack.c.b16 %v10487, %v10485
      %v10524 = vpack.c.b16 %v10490, %v10488
      %v10525 = vpack.c.b16 %v10491, %v10489
      %v10526 = vpack.c.b16 %v10494, %v10492
      %v10527 = vpack.c.b16 %v10495, %v10493
      %10560 = vmatprep.subr.bf16.mxu0 %v10511
      %10561 = vmatpush1.bf16.msra.mxu0 %v10510
      %10562 = vmatprep.subr.bf16.mxu0 %v10509
      %10563 = vmatpush1.bf16.msra.mxu0 %v10508
      %10564 = vmatprep.subr.bf16.mxu0 %v10507
      %10565 = vmatpush1.bf16.msra.mxu0 %v10506
      %10566 = vmatprep.subr.bf16.mxu0 %v10505
      %10567 = vmatpush1.bf16.msra.mxu0 %v10504
      %10568 = vmatprep.subr.bf16.mxu0 %v10503
      %10569 = vmatpush1.bf16.msra.mxu0 %v10502
      %10570 = vmatprep.subr.bf16.mxu0 %v10501
      %10571 = vmatpush1.bf16.msra.mxu0 %v10500
      %10572 = vmatprep.subr.bf16.mxu0 %v10499
      %10573 = vmatpush1.bf16.msra.mxu0 %v10498
      %10574 = vmatprep.subr.bf16.mxu0 %v10497
      %10575 = vmatpush1.bf16.msra.mxu0 %v10496
      %10576 = vmatprep.subr.bf16.mxu0 %v10527
      %10577 = vmatpush2.bf16.msra.mxu0 %v10526
      %10578 = vmatprep.subr.bf16.mxu0 %v10525
      %10579 = vmatpush2.bf16.msra.mxu0 %v10524
      %10580 = vmatprep.subr.bf16.mxu0 %v10523
      %10581 = vmatpush2.bf16.msra.mxu0 %v10522
      %10582 = vmatprep.subr.bf16.mxu0 %v10521
      %10583 = vmatpush2.bf16.msra.mxu0 %v10520
      %10584 = vmatprep.subr.bf16.mxu0 %v10519
      %10585 = vmatpush2.bf16.msra.mxu0 %v10518
      %10586 = vmatprep.subr.bf16.mxu0 %v10517
      %10587 = vmatpush2.bf16.msra.mxu0 %v10516
      %10588 = vmatprep.subr.bf16.mxu0 %v10515
      %10589 = vmatpush2.bf16.msra.mxu0 %v10514
      %10590 = vmatprep.subr.bf16.mxu0 %v10513
      %10591 = vmatpush2.bf16.msra.mxu0 %v10512
      %10592 = vmatprep.mubr.bf16.mxu0 %v10357
      %10593 = vmatmul.mubr.bf16.gmra.mxu0 %v10356
      %v10594 = vpop.f32.mrf.mxu0
      %v10595 = vadd.f32 %v10393, %v10594
      %v10596 = vpop.f32.mrf.mxu0
      %v10597 = vadd.f32 %v10397, %v10596
      %v10598 = vpop.f32.mrf.mxu0
      %v10599 = vadd.f32 %v10393, %v10598
      %v10600 = vpop.f32.mrf.mxu0
      %v10601 = vadd.f32 %v10397, %v10600
      %10602 = vmatprep.mubr.bf16.mxu0 %v10359
      %10603 = vmatmul.mubr.bf16.gmra.mxu0 %v10358
      %v10604 = vpop.f32.mrf.mxu0
      %v10605 = vadd.f32 %v10393, %v10604
      %v10606 = vpop.f32.mrf.mxu0
      %v10607 = vadd.f32 %v10397, %v10606
      %v10608 = vpop.f32.mrf.mxu0
      %v10609 = vadd.f32 %v10393, %v10608
      %v10610 = vpop.f32.mrf.mxu0
      %v10611 = vadd.f32 %v10397, %v10610
      %10612 = vmatprep.mubr.bf16.mxu0 %v10361
      %10613 = vmatmul.mubr.bf16.gmra.mxu0 %v10360
      %v10614 = vpop.f32.mrf.mxu0
      %v10615 = vadd.f32 %v10393, %v10614
      %v10616 = vpop.f32.mrf.mxu0
      %v10617 = vadd.f32 %v10397, %v10616
      %v10618 = vpop.f32.mrf.mxu0
      %v10619 = vadd.f32 %v10393, %v10618
      %v10620 = vpop.f32.mrf.mxu0
      %v10621 = vadd.f32 %v10397, %v10620
      %10622 = vmatprep.mubr.bf16.mxu0 %v10363
      %10623 = vmatmul.mubr.bf16.gmra.mxu0 %v10362
      %v10624 = vpop.f32.mrf.mxu0
      %v10625 = vadd.f32 %v10393, %v10624
      %v10626 = vpop.f32.mrf.mxu0
      %v10627 = vadd.f32 %v10397, %v10626
      %v10628 = vpop.f32.mrf.mxu0
      %v10629 = vadd.f32 %v10393, %v10628
      %v10630 = vpop.f32.mrf.mxu0
      %v10631 = vadd.f32 %v10397, %v10630
      %10632 = vmatprep.mubr.bf16.mxu0 %v10365
      %10633 = vmatmul.mubr.bf16.gmra.mxu0 %v10364
      %v10634 = vpop.f32.mrf.mxu0
      %v10635 = vadd.f32 %v10393, %v10634
      %v10636 = vpop.f32.mrf.mxu0
      %v10637 = vadd.f32 %v10397, %v10636
      %v10638 = vpop.f32.mrf.mxu0
      %v10639 = vadd.f32 %v10393, %v10638
      %v10640 = vpop.f32.mrf.mxu0
      %v10641 = vadd.f32 %v10397, %v10640
      %10642 = vmatprep.mubr.bf16.mxu0 %v10367
      %10643 = vmatmul.mubr.bf16.gmra.mxu0 %v10366
      %v10644 = vpop.f32.mrf.mxu0
      %v10645 = vadd.f32 %v10393, %v10644
      %v10646 = vpop.f32.mrf.mxu0
      %v10647 = vadd.f32 %v10397, %v10646
      %v10648 = vpop.f32.mrf.mxu0
      %v10649 = vadd.f32 %v10393, %v10648
      %v10650 = vpop.f32.mrf.mxu0
      %v10651 = vadd.f32 %v10397, %v10650
      %10652 = vmatprep.mubr.bf16.mxu0 %v10369
      %10653 = vmatmul.mubr.bf16.gmra.mxu0 %v10368
      %v10654 = vpop.f32.mrf.mxu0
      %v10655 = vadd.f32 %v10393, %v10654
      %v10656 = vpop.f32.mrf.mxu0
      %v10657 = vadd.f32 %v10397, %v10656
      %v10658 = vpop.f32.mrf.mxu0
      %v10659 = vadd.f32 %v10393, %v10658
      %v10660 = vpop.f32.mrf.mxu0
      %v10661 = vadd.f32 %v10397, %v10660
      %10662 = vmatprep.mubr.bf16.mxu0 %v10371
      %10663 = vmatmul.mubr.bf16.gmra.mxu0 %v10370
      %v10664 = vpop.f32.mrf.mxu0
      %v10665 = vadd.f32 %v10393, %v10664
      %v10666 = vpop.f32.mrf.mxu0
      %v10667 = vadd.f32 %v10397, %v10666
      %v10668 = vpop.f32.mrf.mxu0
      %v10669 = vadd.f32 %v10393, %v10668
      %v10670 = vpop.f32.mrf.mxu0
      %v10671 = vadd.f32 %v10397, %v10670
      %10672 = vmatprep.mubr.bf16.mxu0 %v10373
      %10673 = vmatmul.mubr.bf16.gmra.mxu0 %v10372
      %v10674 = vpop.f32.mrf.mxu0
      %v10675 = vadd.f32 %v10393, %v10674
      %v10676 = vpop.f32.mrf.mxu0
      %v10677 = vadd.f32 %v10397, %v10676
      %v10678 = vpop.f32.mrf.mxu0
      %v10679 = vadd.f32 %v10393, %v10678
      %v10680 = vpop.f32.mrf.mxu0
      %v10681 = vadd.f32 %v10397, %v10680
      %10682 = vmatprep.mubr.bf16.mxu0 %v10375
      %10683 = vmatmul.mubr.bf16.gmra.mxu0 %v10374
      %v10684 = vpop.f32.mrf.mxu0
      %v10685 = vadd.f32 %v10393, %v10684
      %v10686 = vpop.f32.mrf.mxu0
      %v10687 = vadd.f32 %v10397, %v10686
      %v10688 = vpop.f32.mrf.mxu0
      %v10689 = vadd.f32 %v10393, %v10688
      %v10690 = vpop.f32.mrf.mxu0
      %v10691 = vadd.f32 %v10397, %v10690
      %10692 = vmatprep.mubr.bf16.mxu0 %v10377
      %10693 = vmatmul.mubr.bf16.gmra.mxu0 %v10376
      %v10694 = vpop.f32.mrf.mxu0
      %v10695 = vadd.f32 %v10393, %v10694
      %v10696 = vpop.f32.mrf.mxu0
      %v10697 = vadd.f32 %v10397, %v10696
      %v10698 = vpop.f32.mrf.mxu0
      %v10699 = vadd.f32 %v10393, %v10698
      %v10700 = vpop.f32.mrf.mxu0
      %v10701 = vadd.f32 %v10397, %v10700
      %10702 = vmatprep.mubr.bf16.mxu0 %v10379
      %10703 = vmatmul.mubr.bf16.gmra.mxu0 %v10378
      %v10704 = vpop.f32.mrf.mxu0
      %v10705 = vadd.f32 %v10393, %v10704
      %v10706 = vpop.f32.mrf.mxu0
      %v10707 = vadd.f32 %v10397, %v10706
      %v10708 = vpop.f32.mrf.mxu0
      %v10709 = vadd.f32 %v10393, %v10708
      %v10710 = vpop.f32.mrf.mxu0
      %v10711 = vadd.f32 %v10397, %v10710
      %10712 = vmatprep.mubr.bf16.mxu0 %v10381
      %10713 = vmatmul.mubr.bf16.gmra.mxu0 %v10380
      %v10714 = vpop.f32.mrf.mxu0
      %v10715 = vadd.f32 %v10393, %v10714
      %v10716 = vpop.f32.mrf.mxu0
      %v10717 = vadd.f32 %v10397, %v10716
      %v10718 = vpop.f32.mrf.mxu0
      %v10719 = vadd.f32 %v10393, %v10718
      %v10720 = vpop.f32.mrf.mxu0
      %v10721 = vadd.f32 %v10397, %v10720
      %10722 = vmatprep.mubr.bf16.mxu0 %v10383
      %10723 = vmatmul.mubr.bf16.gmra.mxu0 %v10382
      %v10724 = vpop.f32.mrf.mxu0
      %v10725 = vadd.f32 %v10393, %v10724
      %v10726 = vpop.f32.mrf.mxu0
      %v10727 = vadd.f32 %v10397, %v10726
      %v10728 = vpop.f32.mrf.mxu0
      %v10729 = vadd.f32 %v10393, %v10728
      %v10730 = vpop.f32.mrf.mxu0
      %v10731 = vadd.f32 %v10397, %v10730
      %10732 = vmatprep.mubr.bf16.mxu0 %v10385
      %10733 = vmatmul.mubr.bf16.gmra.mxu0 %v10384
      %v10734 = vpop.f32.mrf.mxu0
      %v10735 = vadd.f32 %v10393, %v10734
      %v10736 = vpop.f32.mrf.mxu0
      %v10737 = vadd.f32 %v10397, %v10736
      %v10738 = vpop.f32.mrf.mxu0
      %v10739 = vadd.f32 %v10393, %v10738
      %v10740 = vpop.f32.mrf.mxu0
      %v10741 = vadd.f32 %v10397, %v10740
      %10742 = vmatprep.mubr.bf16.mxu0 %v10387
      %10743 = vmatmul.mubr.bf16.gmra.mxu0 %v10386
      %v10744 = vpop.f32.mrf.mxu0
      %v10745 = vadd.f32 %v10393, %v10744
      %v10746 = vpop.f32.mrf.mxu0
      %v10747 = vadd.f32 %v10397, %v10746
      %v10748 = vpop.f32.mrf.mxu0
      %v10749 = vadd.f32 %v10393, %v10748
      %v10750 = vpop.f32.mrf.mxu0
      %v10751 = vadd.f32 %v10397, %v10750
      %10752 = vdwg.mxu0
      %v10753 = vmax.f32 %v10595, 0.0
      %v10754 = vmax.f32 %v10597, 0.0
      %v10755 = vmax.f32 %v10599, 0.0
      %v10756 = vmax.f32 %v10601, 0.0
      %v10757 = vmax.f32 %v10605, 0.0
      %v10758 = vmax.f32 %v10607, 0.0
      %v10759 = vmax.f32 %v10609, 0.0
      %v10760 = vmax.f32 %v10611, 0.0
      %v10761 = vmax.f32 %v10615, 0.0
      %v10762 = vmax.f32 %v10617, 0.0
      %v10763 = vmax.f32 %v10619, 0.0
      %v10764 = vmax.f32 %v10621, 0.0
      %v10765 = vmax.f32 %v10625, 0.0
      %v10766 = vmax.f32 %v10627, 0.0
      %v10767 = vmax.f32 %v10629, 0.0
      %v10768 = vmax.f32 %v10631, 0.0
      %v10769 = vmax.f32 %v10635, 0.0
      %v10770 = vmax.f32 %v10637, 0.0
      %v10771 = vmax.f32 %v10639, 0.0
      %v10772 = vmax.f32 %v10641, 0.0
      %v10773 = vmax.f32 %v10645, 0.0
      %v10774 = vmax.f32 %v10647, 0.0
      %v10775 = vmax.f32 %v10649, 0.0
      %v10776 = vmax.f32 %v10651, 0.0
      %v10777 = vmax.f32 %v10655, 0.0
      %v10778 = vmax.f32 %v10657, 0.0
      %v10779 = vmax.f32 %v10659, 0.0
      %v10780 = vmax.f32 %v10661, 0.0
      %v10781 = vmax.f32 %v10665, 0.0
      %v10782 = vmax.f32 %v10667, 0.0
      %v10783 = vmax.f32 %v10669, 0.0
      %v10784 = vmax.f32 %v10671, 0.0
      %v10785 = vmax.f32 %v10675, 0.0
      %v10786 = vmax.f32 %v10677, 0.0
      %v10787 = vmax.f32 %v10679, 0.0
      %v10788 = vmax.f32 %v10681, 0.0
      %v10789 = vmax.f32 %v10685, 0.0
      %v10790 = vmax.f32 %v10687, 0.0
      %v10791 = vmax.f32 %v10689, 0.0
      %v10792 = vmax.f32 %v10691, 0.0
      %v10793 = vmax.f32 %v10695, 0.0
      %v10794 = vmax.f32 %v10697, 0.0
      %v10795 = vmax.f32 %v10699, 0.0
      %v10796 = vmax.f32 %v10701, 0.0
      %v10797 = vmax.f32 %v10705, 0.0
      %v10798 = vmax.f32 %v10707, 0.0
      %v10799 = vmax.f32 %v10709, 0.0
      %v10800 = vmax.f32 %v10711, 0.0
      %v10801 = vmax.f32 %v10715, 0.0
      %v10802 = vmax.f32 %v10717, 0.0
      %v10803 = vmax.f32 %v10719, 0.0
      %v10804 = vmax.f32 %v10721, 0.0
      %v10805 = vmax.f32 %v10725, 0.0
      %v10806 = vmax.f32 %v10727, 0.0
      %v10807 = vmax.f32 %v10729, 0.0
      %v10808 = vmax.f32 %v10731, 0.0
      %v10809 = vmax.f32 %v10735, 0.0
      %v10810 = vmax.f32 %v10737, 0.0
      %v10811 = vmax.f32 %v10739, 0.0
      %v10812 = vmax.f32 %v10741, 0.0
      %v10813 = vmax.f32 %v10745, 0.0
      %v10814 = vmax.f32 %v10747, 0.0
      %v10815 = vmax.f32 %v10749, 0.0
      %v10816 = vmax.f32 %v10751, 0.0
      %v10817 = vld [vmem:[%s6] ss:$4 sm:$0x3]
      %v10819 = vlaneseq
      %v10820 = vshrl.u32 %v10819, 7
      %v10821 = vsub.s32 0, %v10820
      %v10822 = vrot.slane %v10817, %v10821
      %v10823 = vlaneseq
      %v10824 = vshrl.u32 %v10823, 7
      %v10825 = vsub.s32 1, %v10824
      %v10826 = vrot.slane %v10817, %v10825
      %v10829 = vmul.f32 %v10753, %v10822
      %v10830 = vmul.f32 %v10754, %v10826
      %v10831 = vmul.f32 %v10755, %v10822
      %v10832 = vmul.f32 %v10756, %v10826
      %v10833 = vmul.f32 %v10757, %v10822
      %v10834 = vmul.f32 %v10758, %v10826
      %v10835 = vmul.f32 %v10759, %v10822
      %v10836 = vmul.f32 %v10760, %v10826
      %v10837 = vmul.f32 %v10761, %v10822
      %v10838 = vmul.f32 %v10762, %v10826
      %v10839 = vmul.f32 %v10763, %v10822
      %v10840 = vmul.f32 %v10764, %v10826
      %v10841 = vmul.f32 %v10765, %v10822
      %v10842 = vmul.f32 %v10766, %v10826
      %v10843 = vmul.f32 %v10767, %v10822
      %v10844 = vmul.f32 %v10768, %v10826
      %v10845 = vmul.f32 %v10769, %v10822
      %v10846 = vmul.f32 %v10770, %v10826
      %v10847 = vmul.f32 %v10771, %v10822
      %v10848 = vmul.f32 %v10772, %v10826
      %v10849 = vmul.f32 %v10773, %v10822
      %v10850 = vmul.f32 %v10774, %v10826
      %v10851 = vmul.f32 %v10775, %v10822
      %v10852 = vmul.f32 %v10776, %v10826
      %v10853 = vmul.f32 %v10777, %v10822
      %v10854 = vmul.f32 %v10778, %v10826
      %v10855 = vmul.f32 %v10779, %v10822
      %v10856 = vmul.f32 %v10780, %v10826
      %v10857 = vmul.f32 %v10781, %v10822
      %v10858 = vmul.f32 %v10782, %v10826
      %v10859 = vmul.f32 %v10783, %v10822
      %v10860 = vmul.f32 %v10784, %v10826
      %v10861 = vmul.f32 %v10785, %v10822
      %v10862 = vmul.f32 %v10786, %v10826
      %v10863 = vmul.f32 %v10787, %v10822
      %v10864 = vmul.f32 %v10788, %v10826
      %v10865 = vmul.f32 %v10789, %v10822
      %v10866 = vmul.f32 %v10790, %v10826
      %v10867 = vmul.f32 %v10791, %v10822
      %v10868 = vmul.f32 %v10792, %v10826
      %v10869 = vmul.f32 %v10793, %v10822
      %v10870 = vmul.f32 %v10794, %v10826
      %v10871 = vmul.f32 %v10795, %v10822
      %v10872 = vmul.f32 %v10796, %v10826
      %v10873 = vmul.f32 %v10797, %v10822
      %v10874 = vmul.f32 %v10798, %v10826
      %v10875 = vmul.f32 %v10799, %v10822
      %v10876 = vmul.f32 %v10800, %v10826
      %v10877 = vmul.f32 %v10801, %v10822
      %v10878 = vmul.f32 %v10802, %v10826
      %v10879 = vmul.f32 %v10803, %v10822
      %v10880 = vmul.f32 %v10804, %v10826
      %v10881 = vmul.f32 %v10805, %v10822
      %v10882 = vmul.f32 %v10806, %v10826
      %v10883 = vmul.f32 %v10807, %v10822
      %v10884 = vmul.f32 %v10808, %v10826
      %v10885 = vmul.f32 %v10809, %v10822
      %v10886 = vmul.f32 %v10810, %v10826
      %v10887 = vmul.f32 %v10811, %v10822
      %v10888 = vmul.f32 %v10812, %v10826
      %v10889 = vmul.f32 %v10813, %v10822
      %v10890 = vmul.f32 %v10814, %v10826
      %v10891 = vmul.f32 %v10815, %v10822
      %v10892 = vmul.f32 %v10816, %v10826
      %v10893 = vadd.f32 %v10829, %v10830
      %10894 = vadd.xlane.f32.xlu0 %v10893
      %v10895 = vpop.xlane.xlu0 %10894
      %v10896 = vadd.f32 %v10831, %v10832
      %10897 = vadd.xlane.f32.xlu0 %v10896
      %v10898 = vpop.xlane.xlu0 %10897
      %v10899 = vadd.f32 %v10833, %v10834
      %10900 = vadd.xlane.f32.xlu0 %v10899
      %v10901 = vpop.xlane.xlu0 %10900
      %v10902 = vadd.f32 %v10835, %v10836
      %10903 = vadd.xlane.f32.xlu0 %v10902
      %v10904 = vpop.xlane.xlu0 %10903
      %v10905 = vadd.f32 %v10837, %v10838
      %10906 = vadd.xlane.f32.xlu0 %v10905
      %v10907 = vpop.xlane.xlu0 %10906
      %v10908 = vadd.f32 %v10839, %v10840
      %10909 = vadd.xlane.f32.xlu0 %v10908
      %v10910 = vpop.xlane.xlu0 %10909
      %v10911 = vadd.f32 %v10841, %v10842
      %10912 = vadd.xlane.f32.xlu0 %v10911
      %v10913 = vpop.xlane.xlu0 %10912
      %v10914 = vadd.f32 %v10843, %v10844
      %10915 = vadd.xlane.f32.xlu0 %v10914
      %v10916 = vpop.xlane.xlu0 %10915
      %v10917 = vadd.f32 %v10845, %v10846
      %10918 = vadd.xlane.f32.xlu0 %v10917
      %v10919 = vpop.xlane.xlu0 %10918
      %v10920 = vadd.f32 %v10847, %v10848
      %10921 = vadd.xlane.f32.xlu0 %v10920
      %v10922 = vpop.xlane.xlu0 %10921
      %v10923 = vadd.f32 %v10849, %v10850
      %10924 = vadd.xlane.f32.xlu0 %v10923
      %v10925 = vpop.xlane.xlu0 %10924
      %v10926 = vadd.f32 %v10851, %v10852
      %10927 = vadd.xlane.f32.xlu0 %v10926
      %v10928 = vpop.xlane.xlu0 %10927
      %v10929 = vadd.f32 %v10853, %v10854
      %10930 = vadd.xlane.f32.xlu0 %v10929
      %v10931 = vpop.xlane.xlu0 %10930
      %v10932 = vadd.f32 %v10855, %v10856
      %10933 = vadd.xlane.f32.xlu0 %v10932
      %v10934 = vpop.xlane.xlu0 %10933
      %v10935 = vadd.f32 %v10857, %v10858
      %10936 = vadd.xlane.f32.xlu0 %v10935
      %v10937 = vpop.xlane.xlu0 %10936
      %v10938 = vadd.f32 %v10859, %v10860
      %10939 = vadd.xlane.f32.xlu0 %v10938
      %v10940 = vpop.xlane.xlu0 %10939
      %v10941 = vadd.f32 %v10861, %v10862
      %10942 = vadd.xlane.f32.xlu0 %v10941
      %v10943 = vpop.xlane.xlu0 %10942
      %v10944 = vadd.f32 %v10863, %v10864
      %10945 = vadd.xlane.f32.xlu0 %v10944
      %v10946 = vpop.xlane.xlu0 %10945
      %v10947 = vadd.f32 %v10865, %v10866
      %10948 = vadd.xlane.f32.xlu0 %v10947
      %v10949 = vpop.xlane.xlu0 %10948
      %v10950 = vadd.f32 %v10867, %v10868
      %10951 = vadd.xlane.f32.xlu0 %v10950
      %v10952 = vpop.xlane.xlu0 %10951
      %v10953 = vadd.f32 %v10869, %v10870
      %10954 = vadd.xlane.f32.xlu0 %v10953
      %v10955 = vpop.xlane.xlu0 %10954
      %v10956 = vadd.f32 %v10871, %v10872
      %10957 = vadd.xlane.f32.xlu0 %v10956
      %v10958 = vpop.xlane.xlu0 %10957
      %v10959 = vadd.f32 %v10873, %v10874
      %10960 = vadd.xlane.f32.xlu0 %v10959
      %v10961 = vpop.xlane.xlu0 %10960
      %v10962 = vadd.f32 %v10875, %v10876
      %10963 = vadd.xlane.f32.xlu0 %v10962
      %v10964 = vpop.xlane.xlu0 %10963
      %v10965 = vadd.f32 %v10877, %v10878
      %10966 = vadd.xlane.f32.xlu0 %v10965
      %v10967 = vpop.xlane.xlu0 %10966
      %v10968 = vadd.f32 %v10879, %v10880
      %10969 = vadd.xlane.f32.xlu0 %v10968
      %v10970 = vpop.xlane.xlu0 %10969
      %v10971 = vadd.f32 %v10881, %v10882
      %10972 = vadd.xlane.f32.xlu0 %v10971
      %v10973 = vpop.xlane.xlu0 %10972
      %v10974 = vadd.f32 %v10883, %v10884
      %10975 = vadd.xlane.f32.xlu0 %v10974
      %v10976 = vpop.xlane.xlu0 %10975
      %v10977 = vadd.f32 %v10885, %v10886
      %10978 = vadd.xlane.f32.xlu0 %v10977
      %v10979 = vpop.xlane.xlu0 %10978
      %v10980 = vadd.f32 %v10887, %v10888
      %10981 = vadd.xlane.f32.xlu0 %v10980
      %v10982 = vpop.xlane.xlu0 %10981
      %v10983 = vadd.f32 %v10889, %v10890
      %10984 = vadd.xlane.f32.xlu0 %v10983
      %v10985 = vpop.xlane.xlu0 %10984
      %v10986 = vadd.f32 %v10891, %v10892
      %10987 = vadd.xlane.f32.xlu0 %v10986
      %v10988 = vpop.xlane.xlu0 %10987
      %v10989 = vld [vmem:[%s5312] ss:$4 sm:$0x3]
      %v10991 = vlaneseq
      %v10992 = vshrl.u32 %v10991, 7
      %v10993 = vsub.s32 0, %v10992
      %v10994 = vrot.slane %v10989, %v10993
      %v10995 = vlaneseq
      %v10996 = vshrl.u32 %v10995, 7
      %v10997 = vsub.s32 1, %v10996
      %v10998 = vrot.slane %v10989, %v10997
      %v11001 = vmul.f32 %v10753, %v10994
      %v11002 = vmul.f32 %v10754, %v10998
      %v11003 = vmul.f32 %v10755, %v10994
      %v11004 = vmul.f32 %v10756, %v10998
      %v11005 = vmul.f32 %v10757, %v10994
      %v11006 = vmul.f32 %v10758, %v10998
      %v11007 = vmul.f32 %v10759, %v10994
      %v11008 = vmul.f32 %v10760, %v10998
      %v11009 = vmul.f32 %v10761, %v10994
      %v11010 = vmul.f32 %v10762, %v10998
      %v11011 = vmul.f32 %v10763, %v10994
      %v11012 = vmul.f32 %v10764, %v10998
      %v11013 = vmul.f32 %v10765, %v10994
      %v11014 = vmul.f32 %v10766, %v10998
      %v11015 = vmul.f32 %v10767, %v10994
      %v11016 = vmul.f32 %v10768, %v10998
      %v11017 = vmul.f32 %v10769, %v10994
      %v11018 = vmul.f32 %v10770, %v10998
      %v11019 = vmul.f32 %v10771, %v10994
      %v11020 = vmul.f32 %v10772, %v10998
      %v11021 = vmul.f32 %v10773, %v10994
      %v11022 = vmul.f32 %v10774, %v10998
      %v11023 = vmul.f32 %v10775, %v10994
      %v11024 = vmul.f32 %v10776, %v10998
      %v11025 = vmul.f32 %v10777, %v10994
      %v11026 = vmul.f32 %v10778, %v10998
      %v11027 = vmul.f32 %v10779, %v10994
      %v11028 = vmul.f32 %v10780, %v10998
      %v11029 = vmul.f32 %v10781, %v10994
      %v11030 = vmul.f32 %v10782, %v10998
      %v11031 = vmul.f32 %v10783, %v10994
      %v11032 = vmul.f32 %v10784, %v10998
      %v11033 = vmul.f32 %v10785, %v10994
      %v11034 = vmul.f32 %v10786, %v10998
      %v11035 = vmul.f32 %v10787, %v10994
      %v11036 = vmul.f32 %v10788, %v10998
      %v11037 = vmul.f32 %v10789, %v10994
      %v11038 = vmul.f32 %v10790, %v10998
      %v11039 = vmul.f32 %v10791, %v10994
      %v11040 = vmul.f32 %v10792, %v10998
      %v11041 = vmul.f32 %v10793, %v10994
      %v11042 = vmul.f32 %v10794, %v10998
      %v11043 = vmul.f32 %v10795, %v10994
      %v11044 = vmul.f32 %v10796, %v10998
      %v11045 = vmul.f32 %v10797, %v10994
      %v11046 = vmul.f32 %v10798, %v10998
      %v11047 = vmul.f32 %v10799, %v10994
      %v11048 = vmul.f32 %v10800, %v10998
      %v11049 = vmul.f32 %v10801, %v10994
      %v11050 = vmul.f32 %v10802, %v10998
      %v11051 = vmul.f32 %v10803, %v10994
      %v11052 = vmul.f32 %v10804, %v10998
      %v11053 = vmul.f32 %v10805, %v10994
      %v11054 = vmul.f32 %v10806, %v10998
      %v11055 = vmul.f32 %v10807, %v10994
      %v11056 = vmul.f32 %v10808, %v10998
      %v11057 = vmul.f32 %v10809, %v10994
      %v11058 = vmul.f32 %v10810, %v10998
      %v11059 = vmul.f32 %v10811, %v10994
      %v11060 = vmul.f32 %v10812, %v10998
      %v11061 = vmul.f32 %v10813, %v10994
      %v11062 = vmul.f32 %v10814, %v10998
      %v11063 = vmul.f32 %v10815, %v10994
      %v11064 = vmul.f32 %v10816, %v10998
      %v11065 = vadd.f32 %v11001, %v11002
      %11066 = vadd.xlane.f32.xlu0 %v11065
      %v11067 = vpop.xlane.xlu0 %11066
      %v11068 = vadd.f32 %v11003, %v11004
      %11069 = vadd.xlane.f32.xlu0 %v11068
      %v11070 = vpop.xlane.xlu0 %11069
      %v11071 = vadd.f32 %v11005, %v11006
      %11072 = vadd.xlane.f32.xlu0 %v11071
      %v11073 = vpop.xlane.xlu0 %11072
      %v11074 = vadd.f32 %v11007, %v11008
      %11075 = vadd.xlane.f32.xlu0 %v11074
      %v11076 = vpop.xlane.xlu0 %11075
      %v11077 = vadd.f32 %v11009, %v11010
      %11078 = vadd.xlane.f32.xlu0 %v11077
      %v11079 = vpop.xlane.xlu0 %11078
      %v11080 = vadd.f32 %v11011, %v11012
      %11081 = vadd.xlane.f32.xlu0 %v11080
      %v11082 = vpop.xlane.xlu0 %11081
      %v11083 = vadd.f32 %v11013, %v11014
      %11084 = vadd.xlane.f32.xlu0 %v11083
      %v11085 = vpop.xlane.xlu0 %11084
      %v11086 = vadd.f32 %v11015, %v11016
      %11087 = vadd.xlane.f32.xlu0 %v11086
      %v11088 = vpop.xlane.xlu0 %11087
      %v11089 = vadd.f32 %v11017, %v11018
      %11090 = vadd.xlane.f32.xlu0 %v11089
      %v11091 = vpop.xlane.xlu0 %11090
      %v11092 = vadd.f32 %v11019, %v11020
      %11093 = vadd.xlane.f32.xlu0 %v11092
      %v11094 = vpop.xlane.xlu0 %11093
      %v11095 = vadd.f32 %v11021, %v11022
      %11096 = vadd.xlane.f32.xlu0 %v11095
      %v11097 = vpop.xlane.xlu0 %11096
      %v11098 = vadd.f32 %v11023, %v11024
      %11099 = vadd.xlane.f32.xlu0 %v11098
      %v11100 = vpop.xlane.xlu0 %11099
      %v11101 = vadd.f32 %v11025, %v11026
      %11102 = vadd.xlane.f32.xlu0 %v11101
      %v11103 = vpop.xlane.xlu0 %11102
      %v11104 = vadd.f32 %v11027, %v11028
      %11105 = vadd.xlane.f32.xlu0 %v11104
      %v11106 = vpop.xlane.xlu0 %11105
      %v11107 = vadd.f32 %v11029, %v11030
      %11108 = vadd.xlane.f32.xlu0 %v11107
      %v11109 = vpop.xlane.xlu0 %11108
      %v11110 = vadd.f32 %v11031, %v11032
      %11111 = vadd.xlane.f32.xlu0 %v11110
      %v11112 = vpop.xlane.xlu0 %11111
      %v11113 = vadd.f32 %v11033, %v11034
      %11114 = vadd.xlane.f32.xlu0 %v11113
      %v11115 = vpop.xlane.xlu0 %11114
      %v11116 = vadd.f32 %v11035, %v11036
      %11117 = vadd.xlane.f32.xlu0 %v11116
      %v11118 = vpop.xlane.xlu0 %11117
      %v11119 = vadd.f32 %v11037, %v11038
      %11120 = vadd.xlane.f32.xlu0 %v11119
      %v11121 = vpop.xlane.xlu0 %11120
      %v11122 = vadd.f32 %v11039, %v11040
      %11123 = vadd.xlane.f32.xlu0 %v11122
      %v11124 = vpop.xlane.xlu0 %11123
      %v11125 = vadd.f32 %v11041, %v11042
      %11126 = vadd.xlane.f32.xlu0 %v11125
      %v11127 = vpop.xlane.xlu0 %11126
      %v11128 = vadd.f32 %v11043, %v11044
      %11129 = vadd.xlane.f32.xlu0 %v11128
      %v11130 = vpop.xlane.xlu0 %11129
      %v11131 = vadd.f32 %v11045, %v11046
      %11132 = vadd.xlane.f32.xlu0 %v11131
      %v11133 = vpop.xlane.xlu0 %11132
      %v11134 = vadd.f32 %v11047, %v11048
      %11135 = vadd.xlane.f32.xlu0 %v11134
      %v11136 = vpop.xlane.xlu0 %11135
      %v11137 = vadd.f32 %v11049, %v11050
      %11138 = vadd.xlane.f32.xlu0 %v11137
      %v11139 = vpop.xlane.xlu0 %11138
      %v11140 = vadd.f32 %v11051, %v11052
      %11141 = vadd.xlane.f32.xlu0 %v11140
      %v11142 = vpop.xlane.xlu0 %11141
      %v11143 = vadd.f32 %v11053, %v11054
      %11144 = vadd.xlane.f32.xlu0 %v11143
      %v11145 = vpop.xlane.xlu0 %11144
      %v11146 = vadd.f32 %v11055, %v11056
      %11147 = vadd.xlane.f32.xlu0 %v11146
      %v11148 = vpop.xlane.xlu0 %11147
      %v11149 = vadd.f32 %v11057, %v11058
      %11150 = vadd.xlane.f32.xlu0 %v11149
      %v11151 = vpop.xlane.xlu0 %11150
      %v11152 = vadd.f32 %v11059, %v11060
      %11153 = vadd.xlane.f32.xlu0 %v11152
      %v11154 = vpop.xlane.xlu0 %11153
      %v11155 = vadd.f32 %v11061, %v11062
      %11156 = vadd.xlane.f32.xlu0 %v11155
      %v11157 = vpop.xlane.xlu0 %11156
      %v11158 = vadd.f32 %v11063, %v11064
      %11159 = vadd.xlane.f32.xlu0 %v11158
      %v11160 = vpop.xlane.xlu0 %11159
      %v11161 = vld [vmem:[%s5485] ss:$4 sm:$0x3]
      %v11163 = vlaneseq
      %v11164 = vshrl.u32 %v11163, 7
      %v11165 = vsub.s32 0, %v11164
      %v11166 = vrot.slane %v11161, %v11165
      %v11167 = vlaneseq
      %v11168 = vshrl.u32 %v11167, 7
      %v11169 = vsub.s32 1, %v11168
      %v11170 = vrot.slane %v11161, %v11169
      %v11173 = vmul.f32 %v10753, %v11166
      %v11174 = vmul.f32 %v10754, %v11170
      %v11175 = vmul.f32 %v10755, %v11166
      %v11176 = vmul.f32 %v10756, %v11170
      %v11177 = vmul.f32 %v10757, %v11166
      %v11178 = vmul.f32 %v10758, %v11170
      %v11179 = vmul.f32 %v10759, %v11166
      %v11180 = vmul.f32 %v10760, %v11170
      %v11181 = vmul.f32 %v10761, %v11166
      %v11182 = vmul.f32 %v10762, %v11170
      %v11183 = vmul.f32 %v10763, %v11166
      %v11184 = vmul.f32 %v10764, %v11170
      %v11185 = vmul.f32 %v10765, %v11166
      %v11186 = vmul.f32 %v10766, %v11170
      %v11187 = vmul.f32 %v10767, %v11166
      %v11188 = vmul.f32 %v10768, %v11170
      %v11189 = vmul.f32 %v10769, %v11166
      %v11190 = vmul.f32 %v10770, %v11170
      %v11191 = vmul.f32 %v10771, %v11166
      %v11192 = vmul.f32 %v10772, %v11170
      %v11193 = vmul.f32 %v10773, %v11166
      %v11194 = vmul.f32 %v10774, %v11170
      %v11195 = vmul.f32 %v10775, %v11166
      %v11196 = vmul.f32 %v10776, %v11170
      %v11197 = vmul.f32 %v10777, %v11166
      %v11198 = vmul.f32 %v10778, %v11170
      %v11199 = vmul.f32 %v10779, %v11166
      %v11200 = vmul.f32 %v10780, %v11170
      %v11201 = vmul.f32 %v10781, %v11166
      %v11202 = vmul.f32 %v10782, %v11170
      %v11203 = vmul.f32 %v10783, %v11166
      %v11204 = vmul.f32 %v10784, %v11170
      %v11205 = vmul.f32 %v10785, %v11166
      %v11206 = vmul.f32 %v10786, %v11170
      %v11207 = vmul.f32 %v10787, %v11166
      %v11208 = vmul.f32 %v10788, %v11170
      %v11209 = vmul.f32 %v10789, %v11166
      %v11210 = vmul.f32 %v10790, %v11170
      %v11211 = vmul.f32 %v10791, %v11166
      %v11212 = vmul.f32 %v10792, %v11170
      %v11213 = vmul.f32 %v10793, %v11166
      %v11214 = vmul.f32 %v10794, %v11170
      %v11215 = vmul.f32 %v10795, %v11166
      %v11216 = vmul.f32 %v10796, %v11170
      %v11217 = vmul.f32 %v10797, %v11166
      %v11218 = vmul.f32 %v10798, %v11170
      %v11219 = vmul.f32 %v10799, %v11166
      %v11220 = vmul.f32 %v10800, %v11170
      %v11221 = vmul.f32 %v10801, %v11166
      %v11222 = vmul.f32 %v10802, %v11170
      %v11223 = vmul.f32 %v10803, %v11166
      %v11224 = vmul.f32 %v10804, %v11170
      %v11225 = vmul.f32 %v10805, %v11166
      %v11226 = vmul.f32 %v10806, %v11170
      %v11227 = vmul.f32 %v10807, %v11166
      %v11228 = vmul.f32 %v10808, %v11170
      %v11229 = vmul.f32 %v10809, %v11166
      %v11230 = vmul.f32 %v10810, %v11170
      %v11231 = vmul.f32 %v10811, %v11166
      %v11232 = vmul.f32 %v10812, %v11170
      %v11233 = vmul.f32 %v10813, %v11166
      %v11234 = vmul.f32 %v10814, %v11170
      %v11235 = vmul.f32 %v10815, %v11166
      %v11236 = vmul.f32 %v10816, %v11170
      %v11237 = vadd.f32 %v11173, %v11174
      %11238 = vadd.xlane.f32.xlu0 %v11237
      %v11239 = vpop.xlane.xlu0 %11238
      %v11240 = vadd.f32 %v11175, %v11176
      %11241 = vadd.xlane.f32.xlu0 %v11240
      %v11242 = vpop.xlane.xlu0 %11241
      %v11243 = vadd.f32 %v11177, %v11178
      %11244 = vadd.xlane.f32.xlu0 %v11243
      %v11245 = vpop.xlane.xlu0 %11244
      %v11246 = vadd.f32 %v11179, %v11180
      %11247 = vadd.xlane.f32.xlu0 %v11246
      %v11248 = vpop.xlane.xlu0 %11247
      %v11249 = vadd.f32 %v11181, %v11182
      %11250 = vadd.xlane.f32.xlu0 %v11249
      %v11251 = vpop.xlane.xlu0 %11250
      %v11252 = vadd.f32 %v11183, %v11184
      %11253 = vadd.xlane.f32.xlu0 %v11252
      %v11254 = vpop.xlane.xlu0 %11253
      %v11255 = vadd.f32 %v11185, %v11186
      %11256 = vadd.xlane.f32.xlu0 %v11255
      %v11257 = vpop.xlane.xlu0 %11256
      %v11258 = vadd.f32 %v11187, %v11188
      %11259 = vadd.xlane.f32.xlu0 %v11258
      %v11260 = vpop.xlane.xlu0 %11259
      %v11261 = vadd.f32 %v11189, %v11190
      %11262 = vadd.xlane.f32.xlu0 %v11261
      %v11263 = vpop.xlane.xlu0 %11262
      %v11264 = vadd.f32 %v11191, %v11192
      %11265 = vadd.xlane.f32.xlu0 %v11264
      %v11266 = vpop.xlane.xlu0 %11265
      %v11267 = vadd.f32 %v11193, %v11194
      %11268 = vadd.xlane.f32.xlu0 %v11267
      %v11269 = vpop.xlane.xlu0 %11268
      %v11270 = vadd.f32 %v11195, %v11196
      %11271 = vadd.xlane.f32.xlu0 %v11270
      %v11272 = vpop.xlane.xlu0 %11271
      %v11273 = vadd.f32 %v11197, %v11198
      %11274 = vadd.xlane.f32.xlu0 %v11273
      %v11275 = vpop.xlane.xlu0 %11274
      %v11276 = vadd.f32 %v11199, %v11200
      %11277 = vadd.xlane.f32.xlu0 %v11276
      %v11278 = vpop.xlane.xlu0 %11277
      %v11279 = vadd.f32 %v11201, %v11202
      %11280 = vadd.xlane.f32.xlu0 %v11279
      %v11281 = vpop.xlane.xlu0 %11280
      %v11282 = vadd.f32 %v11203, %v11204
      %11283 = vadd.xlane.f32.xlu0 %v11282
      %v11284 = vpop.xlane.xlu0 %11283
      %v11285 = vadd.f32 %v11205, %v11206
      %11286 = vadd.xlane.f32.xlu0 %v11285
      %v11287 = vpop.xlane.xlu0 %11286
      %v11288 = vadd.f32 %v11207, %v11208
      %11289 = vadd.xlane.f32.xlu0 %v11288
      %v11290 = vpop.xlane.xlu0 %11289
      %v11291 = vadd.f32 %v11209, %v11210
      %11292 = vadd.xlane.f32.xlu0 %v11291
      %v11293 = vpop.xlane.xlu0 %11292
      %v11294 = vadd.f32 %v11211, %v11212
      %11295 = vadd.xlane.f32.xlu0 %v11294
      %v11296 = vpop.xlane.xlu0 %11295
      %v11297 = vadd.f32 %v11213, %v11214
      %11298 = vadd.xlane.f32.xlu0 %v11297
      %v11299 = vpop.xlane.xlu0 %11298
      %v11300 = vadd.f32 %v11215, %v11216
      %11301 = vadd.xlane.f32.xlu0 %v11300
      %v11302 = vpop.xlane.xlu0 %11301
      %v11303 = vadd.f32 %v11217, %v11218
      %11304 = vadd.xlane.f32.xlu0 %v11303
      %v11305 = vpop.xlane.xlu0 %11304
      %v11306 = vadd.f32 %v11219, %v11220
      %11307 = vadd.xlane.f32.xlu0 %v11306
      %v11308 = vpop.xlane.xlu0 %11307
      %v11309 = vadd.f32 %v11221, %v11222
      %11310 = vadd.xlane.f32.xlu0 %v11309
      %v11311 = vpop.xlane.xlu0 %11310
      %v11312 = vadd.f32 %v11223, %v11224
      %11313 = vadd.xlane.f32.xlu0 %v11312
      %v11314 = vpop.xlane.xlu0 %11313
      %v11315 = vadd.f32 %v11225, %v11226
      %11316 = vadd.xlane.f32.xlu0 %v11315
      %v11317 = vpop.xlane.xlu0 %11316
      %v11318 = vadd.f32 %v11227, %v11228
      %11319 = vadd.xlane.f32.xlu0 %v11318
      %v11320 = vpop.xlane.xlu0 %11319
      %v11321 = vadd.f32 %v11229, %v11230
      %11322 = vadd.xlane.f32.xlu0 %v11321
      %v11323 = vpop.xlane.xlu0 %11322
      %v11324 = vadd.f32 %v11231, %v11232
      %11325 = vadd.xlane.f32.xlu0 %v11324
      %v11326 = vpop.xlane.xlu0 %11325
      %v11327 = vadd.f32 %v11233, %v11234
      %11328 = vadd.xlane.f32.xlu0 %v11327
      %v11329 = vpop.xlane.xlu0 %11328
      %v11330 = vadd.f32 %v11235, %v11236
      %11331 = vadd.xlane.f32.xlu0 %v11330
      %v11332 = vpop.xlane.xlu0 %11331
      %v11333 = vld [vmem:[%s5658] ss:$4 sm:$0x3]
      %v11335 = vlaneseq
      %v11336 = vshrl.u32 %v11335, 7
      %v11337 = vsub.s32 0, %v11336
      %v11338 = vrot.slane %v11333, %v11337
      %v11339 = vlaneseq
      %v11340 = vshrl.u32 %v11339, 7
      %v11341 = vsub.s32 1, %v11340
      %v11342 = vrot.slane %v11333, %v11341
      %v11345 = vmul.f32 %v10753, %v11338
      %v11346 = vmul.f32 %v10754, %v11342
      %v11347 = vmul.f32 %v10755, %v11338
      %v11348 = vmul.f32 %v10756, %v11342
      %v11349 = vmul.f32 %v10757, %v11338
      %v11350 = vmul.f32 %v10758, %v11342
      %v11351 = vmul.f32 %v10759, %v11338
      %v11352 = vmul.f32 %v10760, %v11342
      %v11353 = vmul.f32 %v10761, %v11338
      %v11354 = vmul.f32 %v10762, %v11342
      %v11355 = vmul.f32 %v10763, %v11338
      %v11356 = vmul.f32 %v10764, %v11342
      %v11357 = vmul.f32 %v10765, %v11338
      %v11358 = vmul.f32 %v10766, %v11342
      %v11359 = vmul.f32 %v10767, %v11338
      %v11360 = vmul.f32 %v10768, %v11342
      %v11361 = vmul.f32 %v10769, %v11338
      %v11362 = vmul.f32 %v10770, %v11342
      %v11363 = vmul.f32 %v10771, %v11338
      %v11364 = vmul.f32 %v10772, %v11342
      %v11365 = vmul.f32 %v10773, %v11338
      %v11366 = vmul.f32 %v10774, %v11342
      %v11367 = vmul.f32 %v10775, %v11338
      %v11368 = vmul.f32 %v10776, %v11342
      %v11369 = vmul.f32 %v10777, %v11338
      %v11370 = vmul.f32 %v10778, %v11342
      %v11371 = vmul.f32 %v10779, %v11338
      %v11372 = vmul.f32 %v10780, %v11342
      %v11373 = vmul.f32 %v10781, %v11338
      %v11374 = vmul.f32 %v10782, %v11342
      %v11375 = vmul.f32 %v10783, %v11338
      %v11376 = vmul.f32 %v10784, %v11342
      %v11377 = vmul.f32 %v10785, %v11338
      %v11378 = vmul.f32 %v10786, %v11342
      %v11379 = vmul.f32 %v10787, %v11338
      %v11380 = vmul.f32 %v10788, %v11342
      %v11381 = vmul.f32 %v10789, %v11338
      %v11382 = vmul.f32 %v10790, %v11342
      %v11383 = vmul.f32 %v10791, %v11338
      %v11384 = vmul.f32 %v10792, %v11342
      %v11385 = vmul.f32 %v10793, %v11338
      %v11386 = vmul.f32 %v10794, %v11342
      %v11387 = vmul.f32 %v10795, %v11338
      %v11388 = vmul.f32 %v10796, %v11342
      %v11389 = vmul.f32 %v10797, %v11338
      %v11390 = vmul.f32 %v10798, %v11342
      %v11391 = vmul.f32 %v10799, %v11338
      %v11392 = vmul.f32 %v10800, %v11342
      %v11393 = vmul.f32 %v10801, %v11338
      %v11394 = vmul.f32 %v10802, %v11342
      %v11395 = vmul.f32 %v10803, %v11338
      %v11396 = vmul.f32 %v10804, %v11342
      %v11397 = vmul.f32 %v10805, %v11338
      %v11398 = vmul.f32 %v10806, %v11342
      %v11399 = vmul.f32 %v10807, %v11338
      %v11400 = vmul.f32 %v10808, %v11342
      %v11401 = vmul.f32 %v10809, %v11338
      %v11402 = vmul.f32 %v10810, %v11342
      %v11403 = vmul.f32 %v10811, %v11338
      %v11404 = vmul.f32 %v10812, %v11342
      %v11405 = vmul.f32 %v10813, %v11338
      %v11406 = vmul.f32 %v10814, %v11342
      %v11407 = vmul.f32 %v10815, %v11338
      %v11408 = vmul.f32 %v10816, %v11342
      %v11409 = vadd.f32 %v11345, %v11346
      %11410 = vadd.xlane.f32.xlu0 %v11409
      %v11411 = vpop.xlane.xlu0 %11410
      %v11412 = vadd.f32 %v11347, %v11348
      %11413 = vadd.xlane.f32.xlu0 %v11412
      %v11414 = vpop.xlane.xlu0 %11413
      %v11415 = vadd.f32 %v11349, %v11350
      %11416 = vadd.xlane.f32.xlu0 %v11415
      %v11417 = vpop.xlane.xlu0 %11416
      %v11418 = vadd.f32 %v11351, %v11352
      %11419 = vadd.xlane.f32.xlu0 %v11418
      %v11420 = vpop.xlane.xlu0 %11419
      %v11421 = vadd.f32 %v11353, %v11354
      %11422 = vadd.xlane.f32.xlu0 %v11421
      %v11423 = vpop.xlane.xlu0 %11422
      %v11424 = vadd.f32 %v11355, %v11356
      %11425 = vadd.xlane.f32.xlu0 %v11424
      %v11426 = vpop.xlane.xlu0 %11425
      %v11427 = vadd.f32 %v11357, %v11358
      %11428 = vadd.xlane.f32.xlu0 %v11427
      %v11429 = vpop.xlane.xlu0 %11428
      %v11430 = vadd.f32 %v11359, %v11360
      %11431 = vadd.xlane.f32.xlu0 %v11430
      %v11432 = vpop.xlane.xlu0 %11431
      %v11433 = vadd.f32 %v11361, %v11362
      %11434 = vadd.xlane.f32.xlu0 %v11433
      %v11435 = vpop.xlane.xlu0 %11434
      %v11436 = vadd.f32 %v11363, %v11364
      %11437 = vadd.xlane.f32.xlu0 %v11436
      %v11438 = vpop.xlane.xlu0 %11437
      %v11439 = vadd.f32 %v11365, %v11366
      %11440 = vadd.xlane.f32.xlu0 %v11439
      %v11441 = vpop.xlane.xlu0 %11440
      %v11442 = vadd.f32 %v11367, %v11368
      %11443 = vadd.xlane.f32.xlu0 %v11442
      %v11444 = vpop.xlane.xlu0 %11443
      %v11445 = vadd.f32 %v11369, %v11370
      %11446 = vadd.xlane.f32.xlu0 %v11445
      %v11447 = vpop.xlane.xlu0 %11446
      %v11448 = vadd.f32 %v11371, %v11372
      %11449 = vadd.xlane.f32.xlu0 %v11448
      %v11450 = vpop.xlane.xlu0 %11449
      %v11451 = vadd.f32 %v11373, %v11374
      %11452 = vadd.xlane.f32.xlu0 %v11451
      %v11453 = vpop.xlane.xlu0 %11452
      %v11454 = vadd.f32 %v11375, %v11376
      %11455 = vadd.xlane.f32.xlu0 %v11454
      %v11456 = vpop.xlane.xlu0 %11455
      %v11457 = vadd.f32 %v11377, %v11378
      %11458 = vadd.xlane.f32.xlu0 %v11457
      %v11459 = vpop.xlane.xlu0 %11458
      %v11460 = vadd.f32 %v11379, %v11380
      %11461 = vadd.xlane.f32.xlu0 %v11460
      %v11462 = vpop.xlane.xlu0 %11461
      %v11463 = vadd.f32 %v11381, %v11382
      %11464 = vadd.xlane.f32.xlu0 %v11463
      %v11465 = vpop.xlane.xlu0 %11464
      %v11466 = vadd.f32 %v11383, %v11384
      %11467 = vadd.xlane.f32.xlu0 %v11466
      %v11468 = vpop.xlane.xlu0 %11467
      %v11469 = vadd.f32 %v11385, %v11386
      %11470 = vadd.xlane.f32.xlu0 %v11469
      %v11471 = vpop.xlane.xlu0 %11470
      %v11472 = vadd.f32 %v11387, %v11388
      %11473 = vadd.xlane.f32.xlu0 %v11472
      %v11474 = vpop.xlane.xlu0 %11473
      %v11475 = vadd.f32 %v11389, %v11390
      %11476 = vadd.xlane.f32.xlu0 %v11475
      %v11477 = vpop.xlane.xlu0 %11476
      %v11478 = vadd.f32 %v11391, %v11392
      %11479 = vadd.xlane.f32.xlu0 %v11478
      %v11480 = vpop.xlane.xlu0 %11479
      %v11481 = vadd.f32 %v11393, %v11394
      %11482 = vadd.xlane.f32.xlu0 %v11481
      %v11483 = vpop.xlane.xlu0 %11482
      %v11484 = vadd.f32 %v11395, %v11396
      %11485 = vadd.xlane.f32.xlu0 %v11484
      %v11486 = vpop.xlane.xlu0 %11485
      %v11487 = vadd.f32 %v11397, %v11398
      %11488 = vadd.xlane.f32.xlu0 %v11487
      %v11489 = vpop.xlane.xlu0 %11488
      %v11490 = vadd.f32 %v11399, %v11400
      %11491 = vadd.xlane.f32.xlu0 %v11490
      %v11492 = vpop.xlane.xlu0 %11491
      %v11493 = vadd.f32 %v11401, %v11402
      %11494 = vadd.xlane.f32.xlu0 %v11493
      %v11495 = vpop.xlane.xlu0 %11494
      %v11496 = vadd.f32 %v11403, %v11404
      %11497 = vadd.xlane.f32.xlu0 %v11496
      %v11498 = vpop.xlane.xlu0 %11497
      %v11499 = vadd.f32 %v11405, %v11406
      %11500 = vadd.xlane.f32.xlu0 %v11499
      %v11501 = vpop.xlane.xlu0 %11500
      %v11502 = vadd.f32 %v11407, %v11408
      %11503 = vadd.xlane.f32.xlu0 %v11502
      %v11504 = vpop.xlane.xlu0 %11503
      %v11505 = vsel %vm5831, %v10895, %v11067
      %v11506 = vsel %vm5831, %v10898, %v11070
      %v11507 = vsel %vm5831, %v10901, %v11073
      %v11508 = vsel %vm5831, %v10904, %v11076
      %v11509 = vsel %vm5831, %v10907, %v11079
      %v11510 = vsel %vm5831, %v10910, %v11082
      %v11511 = vsel %vm5831, %v10913, %v11085
      %v11512 = vsel %vm5831, %v10916, %v11088
      %v11513 = vsel %vm5831, %v10919, %v11091
      %v11514 = vsel %vm5831, %v10922, %v11094
      %v11515 = vsel %vm5831, %v10925, %v11097
      %v11516 = vsel %vm5831, %v10928, %v11100
      %v11517 = vsel %vm5831, %v10931, %v11103
      %v11518 = vsel %vm5831, %v10934, %v11106
      %v11519 = vsel %vm5831, %v10937, %v11109
      %v11520 = vsel %vm5831, %v10940, %v11112
      %v11521 = vsel %vm5831, %v10943, %v11115
      %v11522 = vsel %vm5831, %v10946, %v11118
      %v11523 = vsel %vm5831, %v10949, %v11121
      %v11524 = vsel %vm5831, %v10952, %v11124
      %v11525 = vsel %vm5831, %v10955, %v11127
      %v11526 = vsel %vm5831, %v10958, %v11130
      %v11527 = vsel %vm5831, %v10961, %v11133
      %v11528 = vsel %vm5831, %v10964, %v11136
      %v11529 = vsel %vm5831, %v10967, %v11139
      %v11530 = vsel %vm5831, %v10970, %v11142
      %v11531 = vsel %vm5831, %v10973, %v11145
      %v11532 = vsel %vm5831, %v10976, %v11148
      %v11533 = vsel %vm5831, %v10979, %v11151
      %v11534 = vsel %vm5831, %v10982, %v11154
      %v11535 = vsel %vm5831, %v10985, %v11157
      %v11536 = vsel %vm5831, %v10988, %v11160
      %v11537 = vsel %vm5864, %v11505, %v11239
      %v11538 = vsel %vm5864, %v11506, %v11242
      %v11539 = vsel %vm5864, %v11507, %v11245
      %v11540 = vsel %vm5864, %v11508, %v11248
      %v11541 = vsel %vm5864, %v11509, %v11251
      %v11542 = vsel %vm5864, %v11510, %v11254
      %v11543 = vsel %vm5864, %v11511, %v11257
      %v11544 = vsel %vm5864, %v11512, %v11260
      %v11545 = vsel %vm5864, %v11513, %v11263
      %v11546 = vsel %vm5864, %v11514, %v11266
      %v11547 = vsel %vm5864, %v11515, %v11269
      %v11548 = vsel %vm5864, %v11516, %v11272
      %v11549 = vsel %vm5864, %v11517, %v11275
      %v11550 = vsel %vm5864, %v11518, %v11278
      %v11551 = vsel %vm5864, %v11519, %v11281
      %v11552 = vsel %vm5864, %v11520, %v11284
      %v11553 = vsel %vm5864, %v11521, %v11287
      %v11554 = vsel %vm5864, %v11522, %v11290
      %v11555 = vsel %vm5864, %v11523, %v11293
      %v11556 = vsel %vm5864, %v11524, %v11296
      %v11557 = vsel %vm5864, %v11525, %v11299
      %v11558 = vsel %vm5864, %v11526, %v11302
      %v11559 = vsel %vm5864, %v11527, %v11305
      %v11560 = vsel %vm5864, %v11528, %v11308
      %v11561 = vsel %vm5864, %v11529, %v11311
      %v11562 = vsel %vm5864, %v11530, %v11314
      %v11563 = vsel %vm5864, %v11531, %v11317
      %v11564 = vsel %vm5864, %v11532, %v11320
      %v11565 = vsel %vm5864, %v11533, %v11323
      %v11566 = vsel %vm5864, %v11534, %v11326
      %v11567 = vsel %vm5864, %v11535, %v11329
      %v11568 = vsel %vm5864, %v11536, %v11332
      %v11569 = vsel %vm5897, %v11537, %v11411
      %v11570 = vsel %vm5897, %v11538, %v11414
      %v11571 = vsel %vm5897, %v11539, %v11417
      %v11572 = vsel %vm5897, %v11540, %v11420
      %v11573 = vsel %vm5897, %v11541, %v11423
      %v11574 = vsel %vm5897, %v11542, %v11426
      %v11575 = vsel %vm5897, %v11543, %v11429
      %v11576 = vsel %vm5897, %v11544, %v11432
      %v11577 = vsel %vm5897, %v11545, %v11435
      %v11578 = vsel %vm5897, %v11546, %v11438
      %v11579 = vsel %vm5897, %v11547, %v11441
      %v11580 = vsel %vm5897, %v11548, %v11444
      %v11581 = vsel %vm5897, %v11549, %v11447
      %v11582 = vsel %vm5897, %v11550, %v11450
      %v11583 = vsel %vm5897, %v11551, %v11453
      %v11584 = vsel %vm5897, %v11552, %v11456
      %v11585 = vsel %vm5897, %v11553, %v11459
      %v11586 = vsel %vm5897, %v11554, %v11462
      %v11587 = vsel %vm5897, %v11555, %v11465
      %v11588 = vsel %vm5897, %v11556, %v11468
      %v11589 = vsel %vm5897, %v11557, %v11471
      %v11590 = vsel %vm5897, %v11558, %v11474
      %v11591 = vsel %vm5897, %v11559, %v11477
      %v11592 = vsel %vm5897, %v11560, %v11480
      %v11593 = vsel %vm5897, %v11561, %v11483
      %v11594 = vsel %vm5897, %v11562, %v11486
      %v11595 = vsel %vm5897, %v11563, %v11489
      %v11596 = vsel %vm5897, %v11564, %v11492
      %v11597 = vsel %vm5897, %v11565, %v11495
      %v11598 = vsel %vm5897, %v11566, %v11498
      %v11599 = vsel %vm5897, %v11567, %v11501
      %v11600 = vsel %vm5897, %v11568, %v11504
      %v11601 = vld [vmem:[%s7] sm:$0x1]
      %v11603 = vlaneseq
      %v11604 = vshrl.u32 %v11603, 7
      %v11605 = vsub.s32 0, %v11604
      %v11606 = vrot.slane %v11601, %v11605
      %v11608 = vadd.f32 %v11569, %v11606
      %v11609 = vadd.f32 %v11570, %v11606
      %v11610 = vadd.f32 %v11571, %v11606
      %v11611 = vadd.f32 %v11572, %v11606
      %v11612 = vadd.f32 %v11573, %v11606
      %v11613 = vadd.f32 %v11574, %v11606
      %v11614 = vadd.f32 %v11575, %v11606
      %v11615 = vadd.f32 %v11576, %v11606
      %v11616 = vadd.f32 %v11577, %v11606
      %v11617 = vadd.f32 %v11578, %v11606
      %v11618 = vadd.f32 %v11579, %v11606
      %v11619 = vadd.f32 %v11580, %v11606
      %v11620 = vadd.f32 %v11581, %v11606
      %v11621 = vadd.f32 %v11582, %v11606
      %v11622 = vadd.f32 %v11583, %v11606
      %v11623 = vadd.f32 %v11584, %v11606
      %v11624 = vadd.f32 %v11585, %v11606
      %v11625 = vadd.f32 %v11586, %v11606
      %v11626 = vadd.f32 %v11587, %v11606
      %v11627 = vadd.f32 %v11588, %v11606
      %v11628 = vadd.f32 %v11589, %v11606
      %v11629 = vadd.f32 %v11590, %v11606
      %v11630 = vadd.f32 %v11591, %v11606
      %v11631 = vadd.f32 %v11592, %v11606
      %v11632 = vadd.f32 %v11593, %v11606
      %v11633 = vadd.f32 %v11594, %v11606
      %v11634 = vadd.f32 %v11595, %v11606
      %v11635 = vadd.f32 %v11596, %v11606
      %v11636 = vadd.f32 %v11597, %v11606
      %v11637 = vadd.f32 %v11598, %v11606
      %v11638 = vadd.f32 %v11599, %v11606
      %v11639 = vadd.f32 %v11600, %v11606
      %11640 = vst.msk [vmem:[%s307 + $0x100] sm:$0xff] %vm5969, %v11608
      %11641 = vst.msk [vmem:[%s307 + $0x108] sm:$0xff] %vm5969, %v11609
      %11642 = vst.msk [vmem:[%s307 + $0x110] sm:$0xff] %vm5969, %v11610
      %11643 = vst.msk [vmem:[%s307 + $0x118] sm:$0xff] %vm5969, %v11611
      %11644 = vst.msk [vmem:[%s307 + $0x120] sm:$0xff] %vm5969, %v11612
      %11645 = vst.msk [vmem:[%s307 + $0x128] sm:$0xff] %vm5969, %v11613
      %11646 = vst.msk [vmem:[%s307 + $0x130] sm:$0xff] %vm5969, %v11614
      %11647 = vst.msk [vmem:[%s307 + $0x138] sm:$0xff] %vm5969, %v11615
      %11648 = vst.msk [vmem:[%s307 + $0x140] sm:$0xff] %vm5969, %v11616
      %11649 = vst.msk [vmem:[%s307 + $0x148] sm:$0xff] %vm5969, %v11617
      %11650 = vst.msk [vmem:[%s307 + $0x150] sm:$0xff] %vm5969, %v11618
      %11651 = vst.msk [vmem:[%s307 + $0x158] sm:$0xff] %vm5969, %v11619
      %11652 = vst.msk [vmem:[%s307 + $0x160] sm:$0xff] %vm5969, %v11620
      %11653 = vst.msk [vmem:[%s307 + $0x168] sm:$0xff] %vm5969, %v11621
      %11654 = vst.msk [vmem:[%s307 + $0x170] sm:$0xff] %vm5969, %v11622
      %11655 = vst.msk [vmem:[%s307 + $0x178] sm:$0xff] %vm5969, %v11623
      %11656 = vst.msk [vmem:[%s307 + $0x180] sm:$0xff] %vm5969, %v11624
      %11657 = vst.msk [vmem:[%s307 + $0x188] sm:$0xff] %vm5969, %v11625
      %11658 = vst.msk [vmem:[%s307 + $0x190] sm:$0xff] %vm5969, %v11626
      %11659 = vst.msk [vmem:[%s307 + $0x198] sm:$0xff] %vm5969, %v11627
      %11660 = vst.msk [vmem:[%s307 + $0x1a0] sm:$0xff] %vm5969, %v11628
      %11661 = vst.msk [vmem:[%s307 + $0x1a8] sm:$0xff] %vm5969, %v11629
      %11662 = vst.msk [vmem:[%s307 + $0x1b0] sm:$0xff] %vm5969, %v11630
      %11663 = vst.msk [vmem:[%s307 + $0x1b8] sm:$0xff] %vm5969, %v11631
      %11664 = vst.msk [vmem:[%s307 + $0x1c0] sm:$0xff] %vm5969, %v11632
      %11665 = vst.msk [vmem:[%s307 + $0x1c8] sm:$0xff] %vm5969, %v11633
      %11666 = vst.msk [vmem:[%s307 + $0x1d0] sm:$0xff] %vm5969, %v11634
      %11667 = vst.msk [vmem:[%s307 + $0x1d8] sm:$0xff] %vm5969, %v11635
      %11668 = vst.msk [vmem:[%s307 + $0x1e0] sm:$0xff] %vm5969, %v11636
      %11669 = vst.msk [vmem:[%s307 + $0x1e8] sm:$0xff] %vm5969, %v11637
      %11670 = vst.msk [vmem:[%s307 + $0x1f0] sm:$0xff] %vm5969, %v11638
      %11671 = vst.msk [vmem:[%s307 + $0x1f8] sm:$0xff] %vm5969, %v11639
      %s11672 = smul.u32 64, %s19
      %p11673 = scmp.lt.s32.totalorder %s11672, 127
      %s11674 = scalar_select %p11673, %s11672, 127
      %s11675 = smul.addr %s11674, 8
      %s11676 = scalar_lea.vmem %s8, %s11675
      // Predicated region
      $region53: #{_nerf_pallas_impl.1} parent=51 // pred_check
        %p11677 = pneg %p210
      $region54: #{_nerf_pallas_impl.1} parent=51 // pred_check_branch
        %11679 = sbr.rel (%p11677) target = $region56
      $region55: #{_nerf_pallas_impl.1} parent=51 // pred_region
        %s11680 = smul.u32 64, %s19
      $region56: #{_nerf_pallas_impl.1} parent=51 // pred_fallthru
        _
    $region52: #{_nerf_pallas_impl.1} parent=5 // pred_fallthru
      _
    %p11681 = scmp.le.s32.totalorder 2, %s14
    // Predicated region
    $region57: #{_nerf_pallas_impl.1} parent=5 // pred_check
      %p11682 = pneg %p11681
    $region58: #{_nerf_pallas_impl.1} parent=5 // pred_check_branch
      %11684 = sbr.rel (%p11682) target = $region60
    $region59: #{_nerf_pallas_impl.1} parent=5 // pred_region
      %s11685 = ssub.s32 %s14, 2
      // Predicated region
      $region61: #{_nerf_pallas_impl.1} parent=59 // pred_check
        %p11686 = pneg %p216
      $region62: #{_nerf_pallas_impl.1} parent=59 // pred_check_branch
        %11688 = sbr.rel (%p11686) target = $region64
      $region63: #{_nerf_pallas_impl.1} parent=59 // pred_region
        %s11689 = smul.u32 64, %s20
        %p11690 = scmp.lt.s32.totalorder %s11689, 127
        %s11691 = scalar_select %p11690, %s11689, 127
        %s11692 = smul.addr %s11691, 8
        %s11693 = scalar_lea.vmem %s8, %s11692
      $region64: #{_nerf_pallas_impl.1} parent=59 // pred_fallthru
        _
    $region60: #{_nerf_pallas_impl.1} parent=5 // pred_fallthru
      _
  $region6: #{_nerf_pallas_impl.1} parent=0 // loop_footer
    %s18 = sadd.s32 1, %s14
  $region7: #{_nerf_pallas_impl.1} parent=0 // loop_footer_branch
    %13 = sbr.rel target = $region3
  $region8: #{_nerf_pallas_impl.1} parent=0 // loop_exit
    _

</llo_original>
